<compile_context>
chip_gen: v7x
topology: tpu7x:2x2x1
jax: 0.10.0
libtpu: 0.0.40
codegen_flags: <defaults>
</compile_context>

<pallas_src>
import functools

import jax
import jax.numpy as jnp
from jax import lax
from jax.experimental import pallas as pl
from jax.experimental.pallas import tpu as pltpu

EPS = 1e-5  # BatchNorm eps


def _silu(y):
    return y * (1.0 / (1.0 + jnp.exp(-y)))


# ------------------------------ Pallas kernel --------------------------------

def _psa_kernel(
    x_ref,                       # (N, c1)        bf16 flattened NHWC input
    w_cv1_ref, b_cv1_ref,        # (c1, 2c) bf16, (1, 2c) f32
    w_q_ref, b_q_ref,            # (c, nh*kd) bf16 (scale folded), (1, nh*kd) f32
    w_k_ref, b_k_ref,            # (c, nh*kd) bf16, (1, nh*kd) f32
    w_v_ref, b_v_ref,            # (c, c) bf16,   (1, c) f32
    w_pe_ref, b_pe_ref,          # (9, c) f32,    (1, c) f32   (VPU taps)
    w_proj_ref, b_proj_ref,      # (c, c) bf16,   (1, c) f32
    w_f1_ref, b_f1_ref,          # (c, 2c) bf16,  (1, 2c) f32
    w_f2_ref, b_f2_ref,          # (2c, c) bf16,  (1, c) f32
    w_cv2_ref, b_cv2_ref,        # (2c, c1) bf16, (1, c1) f32
    o_ref,                       # (N, c1) f32
    *, H, W, num_heads, key_dim, head_dim,
):
    f32 = jnp.float32
    bf16 = jnp.bfloat16
    c = num_heads * head_dim
    N = H * W

    x = x_ref[...]                                               # bf16 (N, c1)

    # -- cv1: 1x1 conv + folded BN + SiLU; split into a / b --------------------
    y = jnp.dot(x, w_cv1_ref[...], preferred_element_type=f32) + b_cv1_ref[...]
    y = _silu(y)
    a = y[:, :c]                                                 # (N, c) f32
    b0 = y[:, c:]                                                # (N, c) f32
    b0_bf = b0.astype(bf16)

    # -- q / k / v projections (folded BN, no act). Weights are pre-split so
    #    each output slab is contiguous; softmax scale is folded into w_q/b_q.
    q_all = jnp.dot(b0_bf, w_q_ref[...], preferred_element_type=f32) + b_q_ref[...]
    k_all = jnp.dot(b0_bf, w_k_ref[...], preferred_element_type=f32) + b_k_ref[...]
    v_all = jnp.dot(b0_bf, w_v_ref[...], preferred_element_type=f32) + b_v_ref[...]

    # -- pe: depthwise 3x3 conv (folded BN) on v in flattened (N, c) layout ----
    #    Each tap is an XLU roll of v plus edge masks generated in-kernel.
    ridx = lax.broadcasted_iota(jnp.int32, (N, 1), 0)            # position index
    col = ridx % W
    m_left = (col > 0).astype(f32)                               # dx = -1 valid
    m_right = (col < W - 1).astype(f32)                          # dx = +1 valid
    m_top = (ridx >= W).astype(f32)                              # dy = -1 valid
    m_bot = (ridx < N - W).astype(f32)                           # dy = +1 valid
    col_masks = (m_left, None, m_right)
    row_masks = (m_top, None, m_bot)

    w_pe = w_pe_ref[...]                                         # (9, c) f32
    pe = None
    for i in range(3):                                           # dy = i - 1
        for j in range(3):                                       # dx = j - 1
            off = (i - 1) * W + (j - 1)
            win = v_all if off == 0 else pltpu.roll(v_all, shift=(-off) % N, axis=0)
            m = row_masks[i]
            if col_masks[j] is not None:
                m = col_masks[j] if m is None else m * col_masks[j]
            if m is not None:
                win = win * m
            term = win * w_pe[i * 3 + j:i * 3 + j + 1, :]
            pe = term if pe is None else pe + term
    pe = pe + b_pe_ref[...]                                      # (N, c) f32

    # -- attention + proj:  (av + pe) @ W_proj = pe @ W_proj + sum_h av_h @ W_h
    w_proj = w_proj_ref[...]                                     # (c, c) bf16
    att = jnp.dot(pe.astype(bf16), w_proj, preferred_element_type=f32)
    for h in range(num_heads):                                   # nh = c // 64 (1 here)
        q = q_all[:, h * key_dim:(h + 1) * key_dim]              # (N, kd)
        k = k_all[:, h * key_dim:(h + 1) * key_dim]              # (N, kd)
        v = v_all[:, h * head_dim:(h + 1) * head_dim]            # (N, hd)
        s = lax.dot_general(q.astype(bf16), k.astype(bf16),
                            (((1,), (1,)), ((), ())),
                            preferred_element_type=f32)          # (N, N) f32
        s = s - jnp.max(s, axis=-1, keepdims=True)
        p = jnp.exp(s)
        l = jnp.sum(p, axis=-1, keepdims=True)                   # (N, 1)
        av = jnp.dot(p.astype(bf16), v.astype(bf16),
                     preferred_element_type=f32)                 # (N, hd)
        av = av * pl.reciprocal(l, approx=True)                  # deferred softmax norm
        att = att + jnp.dot(av.astype(bf16),
                            w_proj[h * head_dim:(h + 1) * head_dim, :],
                            preferred_element_type=f32)
    b1 = b0 + att + b_proj_ref[...]                              # residual

    # -- ffn: 1x1 (c->2c)+SiLU, 1x1 (2c->c) no act, residual --------------------
    h1 = _silu(jnp.dot(b1.astype(bf16), w_f1_ref[...],
                       preferred_element_type=f32) + b_f1_ref[...])
    b2 = b1 + jnp.dot(h1.astype(bf16), w_f2_ref[...],
                      preferred_element_type=f32) + b_f2_ref[...]

    # -- cv2 on concat(a, b2): single K = 2c contraction + SiLU -----------------
    cat = jnp.concatenate([a.astype(bf16), b2.astype(bf16)], axis=-1)   # (N, 2c)
    out = jnp.dot(cat, w_cv2_ref[...], preferred_element_type=f32) + b_cv2_ref[...]
    o_ref[...] = _silu(out)


# --------------------------------- wrapper -----------------------------------

def psa_forward(x_nchw, kp, cfg):
    B, c1, H, W = x_nchw.shape
    N = H * W
    c, nh = cfg["c"], cfg["num_heads"]
    kd, hd = cfg["key_dim"], cfg["head_dim"]

    # TODO(synk): keep surrounding model NHWC so these HBM transposes vanish.
    x = jnp.transpose(x_nchw, (0, 2, 3, 1)).reshape(B, N, c1).astype(jnp.bfloat16)

    kernel = functools.partial(_psa_kernel, H=H, W=W,
                               num_heads=nh, key_dim=kd, head_dim=hd)

    weights = [kp["cv1_w"], kp["cv1_b"],
               kp["q_w"], kp["q_b"], kp["k_w"], kp["k_b"], kp["v_w"], kp["v_b"],
               kp["pe_w"], kp["pe_b"], kp["proj_w"], kp["proj_b"],
               kp["f1_w"], kp["f1_b"], kp["f2_w"], kp["f2_b"],
               kp["cv2_w"], kp["cv2_b"]]

    def _full(arr):
        return pl.BlockSpec(arr.shape, lambda b: (0, 0))

    flops = 2 * B * N * (c1 * 2 * c                      # cv1
                         + c * (2 * nh * kd + c)         # q/k/v
                         + nh * N * (kd + hd)            # scores + p@v
                         + 9 * c                         # pe taps (VPU)
                         + 2 * c * c                     # proj (pe + av paths)
                         + 2 * (c * 2 * c)               # ffn
                         + 2 * c * c1)                   # cv2
    transcendentals = B * N * (nh * N + 5 * c + c1)
    bytes_accessed = (int(x.size) * 2 + B * N * c1 * 4
                      + sum(int(w.size) * int(w.dtype.itemsize) for w in weights))

    out = pl.pallas_call(
        kernel,
        out_shape=jax.ShapeDtypeStruct((B, N, c1), jnp.float32),
        grid=(B,),
        in_specs=([pl.BlockSpec((None, N, c1), lambda b: (b, 0, 0))]
                  + [_full(w) for w in weights]),
        out_specs=pl.BlockSpec((None, N, c1), lambda b: (b, 0, 0)),
        compiler_params=pltpu.CompilerParams(
            dimension_semantics=("parallel",)),
        cost_estimate=pl.CostEstimate(flops=int(flops),
                                      transcendentals=int(transcendentals),
                                      bytes_accessed=int(bytes_accessed)),
    )(x, *weights)

    return jnp.transpose(out.reshape(B, H, W, c1), (0, 3, 1, 2))   # -> NCHW


# ------------------------- parameter setup (glue) -----------------------------

def _init_conv_bn(key, cin, cout, k, groups=1):
    kw, kg, kb, km, kv = jax.random.split(key, 5)
    fan = (cin // groups) * k * k
    return {
        "w": jax.random.normal(kw, (cout, cin // groups, k, k), jnp.float32) * fan ** -0.5,
        "gamma": jax.random.uniform(kg, (cout,), jnp.float32, 0.5, 1.5),
        "beta": jax.random.normal(kb, (cout,), jnp.float32) * 0.1,
        "mean": jax.random.normal(km, (cout,), jnp.float32) * 0.1,
        "var": jax.random.uniform(kv, (cout,), jnp.float32, 0.5, 1.5),
    }


def _fold(p):
    scale = p["gamma"] / jnp.sqrt(p["var"] + EPS)
    w = p["w"] * scale[:, None, None, None]
    b = p["beta"] - p["mean"] * scale
    return w, b


def init_psa_params(key, c1, e=0.5):
    c = int(c1 * e)
    assert c % 64 == 0, "PSA needs c = int(c1*e) multiple of 64 (num_heads = c // 64)"
    num_heads = c // 64
    head_dim = c // num_heads
    key_dim = head_dim // 2                        # attn_ratio = 0.5
    h_ch = c + num_heads * key_dim * 2
    scale = float(key_dim) ** -0.5

    ks = jax.random.split(key, 7)
    raw = {
        "cv1":  _init_conv_bn(ks[0], c1, 2 * c, 1),
        "qkv":  _init_conv_bn(ks[1], c, h_ch, 1),
        "pe":   _init_conv_bn(ks[2], c, c, 3, groups=c),
        "proj": _init_conv_bn(ks[3], c, c, 1),
        "ffn1": _init_conv_bn(ks[4], c, 2 * c, 1),
        "ffn2": _init_conv_bn(ks[5], 2 * c, c, 1),
        "cv2":  _init_conv_bn(ks[6], 2 * c, c1, 1),
    }

    def fold_1x1(p):
        w, b = _fold(p)
        return jnp.transpose(w[:, :, 0, 0]), b.reshape(1, -1)   # (cin,cout), (1,cout)

    cv1_w, cv1_b = fold_1x1(raw["cv1"])
    qkv_w, qkv_b = fold_1x1(raw["qkv"])                          # (c, h_ch)
    proj_w, proj_b = fold_1x1(raw["proj"])
    f1_w, f1_b = fold_1x1(raw["ffn1"])
    f2_w, f2_b = fold_1x1(raw["ffn2"])
    cv2_w, cv2_b = fold_1x1(raw["cv2"])                          # (2c, c1)

    w_pe, b_pe = _fold(raw["pe"])                                # (c, 1, 3, 3)
    pe_mat = jnp.transpose(w_pe[:, 0, :, :], (1, 2, 0)).reshape(9, c)

    # Re-order the qkv columns into contiguous Q | K | V slabs (heads contiguous
    # within each) and fold the softmax scale into the Q weights/bias.
    per = 2 * key_dim + head_dim
    q_w = jnp.concatenate([qkv_w[:, h * per:h * per + key_dim]
                           for h in range(num_heads)], axis=1) * scale
    k_w = jnp.concatenate([qkv_w[:, h * per + key_dim:h * per + 2 * key_dim]
                           for h in range(num_heads)], axis=1)
    v_w = jnp.concatenate([qkv_w[:, h * per + 2 * key_dim:(h + 1) * per]
                           for h in range(num_heads)], axis=1)
    q_b = jnp.concatenate([qkv_b[:, h * per:h * per + key_dim]
                           for h in range(num_heads)], axis=1) * scale
    k_b = jnp.concatenate([qkv_b[:, h * per + key_dim:h * per + 2 * key_dim]
                           for h in range(num_heads)], axis=1)
    v_b = jnp.concatenate([qkv_b[:, h * per + 2 * key_dim:(h + 1) * per]
                           for h in range(num_heads)], axis=1)

    bf16 = jnp.bfloat16
    kp = {
        "cv1_w": cv1_w.astype(bf16), "cv1_b": cv1_b,
        "q_w": q_w.astype(bf16), "q_b": q_b,
        "k_w": k_w.astype(bf16), "k_b": k_b,
        "v_w": v_w.astype(bf16), "v_b": v_b,
        "pe_w": pe_mat, "pe_b": b_pe.reshape(1, c),              # f32 (VPU taps)
        "proj_w": proj_w.astype(bf16), "proj_b": proj_b,
        "f1_w": f1_w.astype(bf16), "f1_b": f1_b,
        "f2_w": f2_w.astype(bf16), "f2_b": f2_b,
        "cv2_w": cv2_w.astype(bf16), "cv2_b": cv2_b,
    }
    cfg = {"c": c, "num_heads": num_heads, "head_dim": head_dim,
           "key_dim": key_dim, "scale": scale}
    return kp, raw, cfg


# --------------------------- pure-JAX reference --------------------------------

def _conv_bn_ref(x, p, act, k=1, groups=1):
    pad = k // 2
    y = lax.conv_general_dilated(
        x, p["w"], window_strides=(1, 1), padding=[(pad, pad), (pad, pad)],
        dimension_numbers=("NCHW", "OIHW", "NCHW"),
        feature_group_count=groups, precision=lax.Precision.HIGHEST)
    scale = p["gamma"] / jnp.sqrt(p["var"] + EPS)
    shift = p["beta"] - p["mean"] * scale
    y = y * scale[None, :, None, None] + shift[None, :, None, None]
    return y * jax.nn.sigmoid(y) if act else y


def psa_ref(x, raw, cfg):
    c, nh = cfg["c"], cfg["num_heads"]
    kd, hd = cfg["key_dim"], cfg["head_dim"]
    B, _, H, W = x.shape
    N = H * W

    y = _conv_bn_ref(x, raw["cv1"], act=True)
    a, b = y[:, :c], y[:, c:]

    qkv = _conv_bn_ref(b, raw["qkv"], act=False).reshape(B, nh, 2 * kd + hd, N)
    q, k, v = qkv[:, :, :kd], qkv[:, :, kd:2 * kd], qkv[:, :, 2 * kd:]
    attn = jnp.einsum("bhdn,bhdm->bhnm", q, k,
                      precision=lax.Precision.HIGHEST) * cfg["scale"]
    attn = jax.nn.softmax(attn, axis=-1)
    av = jnp.einsum("bhdm,bhnm->bhdn", v, attn,
                    precision=lax.Precision.HIGHEST).reshape(B, c, H, W)
    pe = _conv_bn_ref(v.reshape(B, c, H, W), raw["pe"], act=False, k=3, groups=c)
    b = b + _conv_bn_ref(av + pe, raw["proj"], act=False)

    ff = _conv_bn_ref(b, raw["ffn1"], act=True)
    ff = _conv_bn_ref(ff, raw["ffn2"], act=False)
    b = b + ff

    return _conv_bn_ref(jnp.concatenate([a, b], axis=1), raw["cv2"], act=True)


# ------------------------------------ main -------------------------------------

if __name__ == "__main__":
    # PSA requires num_heads = c // 64 >= 1, so c1 = 128 (c = 64, 1 head).
    B, c1, H, W = 2, 128, 16, 16

    key = jax.random.PRNGKey(0)
    kx, kparam = jax.random.split(key)
    x = jax.random.normal(kx, (B, c1, H, W), jnp.float32)      # NCHW like PyTorch

    kp, raw, cfg = init_psa_params(kparam, c1, e=0.5)

    fwd = jax.jit(lambda xx, pp: psa_forward(xx, pp, cfg))
    out = jax.block_until_ready(fwd(x, kp))
    ref = jax.block_until_ready(psa_ref(x, raw, cfg))

    assert out.shape == (B, c1, H, W), out.shape
    # bf16 MXU operands vs. an f32 HIGHEST-precision reference -> relaxed tol.
    err = float(jnp.max(jnp.abs(out - ref)))
    assert jnp.allclose(out, ref, rtol=5e-2, atol=5e-2), err
    print("KERNEL_OK")
</pallas_src>

<mosaic_0001>
module attributes {stable_mosaic.version = 11 : i64} {
  func.func @_psa_kernel(%arg0: i32, %arg1: memref<1x256x128xbf16, #tpu.memory_space<vmem>>, %arg2: memref<128x128xbf16, #tpu.memory_space<vmem>>, %arg3: memref<1x128xf32, #tpu.memory_space<vmem>>, %arg4: memref<64x32xbf16, #tpu.memory_space<vmem>>, %arg5: memref<1x32xf32, #tpu.memory_space<vmem>>, %arg6: memref<64x32xbf16, #tpu.memory_space<vmem>>, %arg7: memref<1x32xf32, #tpu.memory_space<vmem>>, %arg8: memref<64x64xbf16, #tpu.memory_space<vmem>>, %arg9: memref<1x64xf32, #tpu.memory_space<vmem>>, %arg10: memref<9x64xf32, #tpu.memory_space<vmem>>, %arg11: memref<1x64xf32, #tpu.memory_space<vmem>>, %arg12: memref<64x64xbf16, #tpu.memory_space<vmem>>, %arg13: memref<1x64xf32, #tpu.memory_space<vmem>>, %arg14: memref<64x128xbf16, #tpu.memory_space<vmem>>, %arg15: memref<1x128xf32, #tpu.memory_space<vmem>>, %arg16: memref<128x64xbf16, #tpu.memory_space<vmem>>, %arg17: memref<1x64xf32, #tpu.memory_space<vmem>>, %arg18: memref<128x128xbf16, #tpu.memory_space<vmem>>, %arg19: memref<1x128xf32, #tpu.memory_space<vmem>>, %arg20: memref<1x256x128xf32, #tpu.memory_space<vmem>>) attributes {dimension_semantics = [#tpu.dimension_semantics<parallel>], iteration_bounds = array<i64: 2>, scalar_prefetch = 0 : i64, scratch_operands = 0 : i64, tpu.core_type = #tpu.core_type<tc>, window_params = [{transform_indices = @transform_0, window_bounds = array<i64: 1, 256, 128>}, {pipeline_mode = #tpu.pipeline_mode<synchronous>, transform_indices = @transform_1, window_bounds = array<i64: 128, 128>}, {pipeline_mode = #tpu.pipeline_mode<synchronous>, transform_indices = @transform_2, window_bounds = array<i64: 1, 128>}, {pipeline_mode = #tpu.pipeline_mode<synchronous>, transform_indices = @transform_3, window_bounds = array<i64: 64, 32>}, {pipeline_mode = #tpu.pipeline_mode<synchronous>, transform_indices = @transform_4, window_bounds = array<i64: 1, 32>}, {pipeline_mode = #tpu.pipeline_mode<synchronous>, transform_indices = @transform_5, window_bounds = array<i64: 64, 32>}, {pipeline_mode = #tpu.pipeline_mode<synchronous>, transform_indices = @transform_6, window_bounds = array<i64: 1, 32>}, {pipeline_mode = #tpu.pipeline_mode<synchronous>, transform_indices = @transform_7, window_bounds = array<i64: 64, 64>}, {pipeline_mode = #tpu.pipeline_mode<synchronous>, transform_indices = @transform_8, window_bounds = array<i64: 1, 64>}, {pipeline_mode = #tpu.pipeline_mode<synchronous>, transform_indices = @transform_9, window_bounds = array<i64: 9, 64>}, {pipeline_mode = #tpu.pipeline_mode<synchronous>, transform_indices = @transform_10, window_bounds = array<i64: 1, 64>}, {pipeline_mode = #tpu.pipeline_mode<synchronous>, transform_indices = @transform_11, window_bounds = array<i64: 64, 64>}, {pipeline_mode = #tpu.pipeline_mode<synchronous>, transform_indices = @transform_12, window_bounds = array<i64: 1, 64>}, {pipeline_mode = #tpu.pipeline_mode<synchronous>, transform_indices = @transform_13, window_bounds = array<i64: 64, 128>}, {pipeline_mode = #tpu.pipeline_mode<synchronous>, transform_indices = @transform_14, window_bounds = array<i64: 1, 128>}, {pipeline_mode = #tpu.pipeline_mode<synchronous>, transform_indices = @transform_15, window_bounds = array<i64: 128, 64>}, {pipeline_mode = #tpu.pipeline_mode<synchronous>, transform_indices = @transform_16, window_bounds = array<i64: 1, 64>}, {pipeline_mode = #tpu.pipeline_mode<synchronous>, transform_indices = @transform_17, window_bounds = array<i64: 128, 128>}, {pipeline_mode = #tpu.pipeline_mode<synchronous>, transform_indices = @transform_18, window_bounds = array<i64: 1, 128>}, {transform_indices = @transform_19, window_bounds = array<i64: 1, 256, 128>}]} {
    %c0 = arith.constant 0 : index
    %c0_0 = arith.constant 0 : index
    %c0_1 = arith.constant 0 : index
    %0 = vector.load %arg1[%c0, %c0_0, %c0_1] : memref<1x256x128xbf16, #tpu.memory_space<vmem>>, vector<1x256x128xbf16>
    %1 = vector.shape_cast %0 : vector<1x256x128xbf16> to vector<256x128xbf16>
    %c0_2 = arith.constant 0 : index
    %c0_3 = arith.constant 0 : index
    %2 = vector.load %arg2[%c0_2, %c0_3] : memref<128x128xbf16, #tpu.memory_space<vmem>>, vector<128x128xbf16>
    %cst = arith.constant dense<0.000000e+00> : vector<256x128xf32>
    %3 = tpu.matmul %1, %2, %cst {dimension_numbers = #tpu.dot_dimension_numbers<[1], [0], [0], [1], [0, 0, 1, 1], [], []>} : vector<256x128xbf16>, vector<128x128xbf16>, vector<256x128xf32> -> vector<256x128xf32>
    %c0_4 = arith.constant 0 : index
    %c0_5 = arith.constant 0 : index
    %4 = vector.load %arg3[%c0_4, %c0_5] : memref<1x128xf32, #tpu.memory_space<vmem>>, vector<1x128xf32>
    %5 = vector.broadcast %4 : vector<1x128xf32> to vector<256x128xf32>
    %6 = arith.addf %3, %5 : vector<256x128xf32>
    %cst_6 = arith.constant 0.000000e+00 : f32
    %7 = vector.broadcast %cst_6 : f32 to vector<256x128xf32>
    %8 = arith.subf %7, %6 : vector<256x128xf32>
    %9 = math.exp %8 : vector<256x128xf32>
    %cst_7 = arith.constant 1.000000e+00 : f32
    %10 = vector.broadcast %cst_7 : f32 to vector<256x128xf32>
    %11 = arith.addf %10, %9 : vector<256x128xf32>
    %cst_8 = arith.constant 1.000000e+00 : f32
    %12 = vector.broadcast %cst_8 : f32 to vector<256x128xf32>
    %13 = arith.divf %12, %11 : vector<256x128xf32>
    %14 = arith.mulf %6, %13 : vector<256x128xf32>
    %15 = vector.extract_strided_slice %14 {offsets = [0, 0], sizes = [256, 64], strides = [1, 1]} : vector<256x128xf32> to vector<256x64xf32>
    %16 = vector.extract_strided_slice %14 {offsets = [0, 64], sizes = [256, 64], strides = [1, 1]} : vector<256x128xf32> to vector<256x64xf32>
    %17 = arith.truncf %16 : vector<256x64xf32> to vector<256x64xbf16>
    %c0_9 = arith.constant 0 : index
    %c0_10 = arith.constant 0 : index
    %18 = vector.load %arg4[%c0_9, %c0_10] : memref<64x32xbf16, #tpu.memory_space<vmem>>, vector<64x32xbf16>
    %cst_11 = arith.constant dense<0.000000e+00> : vector<256x32xf32>
    %19 = tpu.matmul %17, %18, %cst_11 {dimension_numbers = #tpu.dot_dimension_numbers<[1], [0], [0], [1], [0, 0, 1, 1], [], []>} : vector<256x64xbf16>, vector<64x32xbf16>, vector<256x32xf32> -> vector<256x32xf32>
    %c0_12 = arith.constant 0 : index
    %c0_13 = arith.constant 0 : index
    %20 = vector.load %arg5[%c0_12, %c0_13] : memref<1x32xf32, #tpu.memory_space<vmem>>, vector<1x32xf32>
    %21 = vector.broadcast %20 : vector<1x32xf32> to vector<256x32xf32>
    %22 = arith.addf %19, %21 : vector<256x32xf32>
    %c0_14 = arith.constant 0 : index
    %c0_15 = arith.constant 0 : index
    %23 = vector.load %arg6[%c0_14, %c0_15] : memref<64x32xbf16, #tpu.memory_space<vmem>>, vector<64x32xbf16>
    %cst_16 = arith.constant dense<0.000000e+00> : vector<256x32xf32>
    %24 = tpu.matmul %17, %23, %cst_16 {dimension_numbers = #tpu.dot_dimension_numbers<[1], [0], [0], [1], [0, 0, 1, 1], [], []>} : vector<256x64xbf16>, vector<64x32xbf16>, vector<256x32xf32> -> vector<256x32xf32>
    %c0_17 = arith.constant 0 : index
    %c0_18 = arith.constant 0 : index
    %25 = vector.load %arg7[%c0_17, %c0_18] : memref<1x32xf32, #tpu.memory_space<vmem>>, vector<1x32xf32>
    %26 = vector.broadcast %25 : vector<1x32xf32> to vector<256x32xf32>
    %27 = arith.addf %24, %26 : vector<256x32xf32>
    %c0_19 = arith.constant 0 : index
    %c0_20 = arith.constant 0 : index
    %28 = vector.load %arg8[%c0_19, %c0_20] : memref<64x64xbf16, #tpu.memory_space<vmem>>, vector<64x64xbf16>
    %cst_21 = arith.constant dense<0.000000e+00> : vector<256x64xf32>
    %29 = tpu.matmul %17, %28, %cst_21 {dimension_numbers = #tpu.dot_dimension_numbers<[1], [0], [0], [1], [0, 0, 1, 1], [], []>} : vector<256x64xbf16>, vector<64x64xbf16>, vector<256x64xf32> -> vector<256x64xf32>
    %c0_22 = arith.constant 0 : index
    %c0_23 = arith.constant 0 : index
    %30 = vector.load %arg9[%c0_22, %c0_23] : memref<1x64xf32, #tpu.memory_space<vmem>>, vector<1x64xf32>
    %31 = vector.broadcast %30 : vector<1x64xf32> to vector<256x64xf32>
    %32 = arith.addf %29, %31 : vector<256x64xf32>
    %33 = tpu.iota {dimensions = array<i32: 0>} : vector<256x1xi32>
    %c16_i32 = arith.constant 16 : i32
    %c0_i32 = arith.constant 0 : i32
    %34 = arith.cmpi eq, %c16_i32, %c0_i32 : i32
    %c1_i32 = arith.constant 1 : i32
    %35 = arith.select %34, %c1_i32, %c16_i32 : i32
    %36 = vector.broadcast %35 : i32 to vector<256x1xi32>
    %37 = arith.remsi %33, %36 : vector<256x1xi32>
    %c0_i32_24 = arith.constant 0 : i32
    %38 = vector.broadcast %c0_i32_24 : i32 to vector<256x1xi32>
    %39 = arith.cmpi ne, %37, %38 : vector<256x1xi32>
    %c0_i32_25 = arith.constant 0 : i32
    %40 = vector.broadcast %c0_i32_25 : i32 to vector<256x1xi32>
    %41 = arith.cmpi slt, %37, %40 : vector<256x1xi32>
    %c0_i32_26 = arith.constant 0 : i32
    %42 = arith.cmpi slt, %35, %c0_i32_26 : i32
    %43 = vector.broadcast %42 : i1 to vector<256x1xi1>
    %44 = vector.broadcast %43 : vector<256x1xi1> to vector<256x1xi1>
    %45 = arith.xori %41, %44 : vector<256x1xi1>
    %46 = arith.andi %45, %39 : vector<256x1xi1>
    %47 = vector.broadcast %35 : i32 to vector<256x1xi32>
    %48 = arith.addi %37, %47 : vector<256x1xi32>
    %49 = arith.select %46, %48, %37 : vector<256x1xi1>, vector<256x1xi32>
    %c0_i32_27 = arith.constant 0 : i32
    %50 = vector.broadcast %c0_i32_27 : i32 to vector<256x1xi32>
    %51 = arith.cmpi sgt, %49, %50 : vector<256x1xi32>
    %52 = arith.extui %51 : vector<256x1xi1> to vector<256x1xi32>
    %53 = arith.sitofp %52 : vector<256x1xi32> to vector<256x1xf32>
    %c15_i32 = arith.constant 15 : i32
    %54 = vector.broadcast %c15_i32 : i32 to vector<256x1xi32>
    %55 = arith.cmpi slt, %49, %54 : vector<256x1xi32>
    %56 = arith.extui %55 : vector<256x1xi1> to vector<256x1xi32>
    %57 = arith.sitofp %56 : vector<256x1xi32> to vector<256x1xf32>
    %c16_i32_28 = arith.constant 16 : i32
    %58 = vector.broadcast %c16_i32_28 : i32 to vector<256x1xi32>
    %59 = arith.cmpi sge, %33, %58 : vector<256x1xi32>
    %60 = arith.extui %59 : vector<256x1xi1> to vector<256x1xi32>
    %61 = arith.sitofp %60 : vector<256x1xi32> to vector<256x1xf32>
    %c240_i32 = arith.constant 240 : i32
    %62 = vector.broadcast %c240_i32 : i32 to vector<256x1xi32>
    %63 = arith.cmpi slt, %33, %62 : vector<256x1xi32>
    %64 = arith.extui %63 : vector<256x1xi1> to vector<256x1xi32>
    %65 = arith.sitofp %64 : vector<256x1xi32> to vector<256x1xf32>
    %c0_29 = arith.constant 0 : index
    %c0_30 = arith.constant 0 : index
    %66 = vector.load %arg10[%c0_29, %c0_30] : memref<9x64xf32, #tpu.memory_space<vmem>>, vector<9x64xf32>
    %c17_i32 = arith.constant 17 : i32
    %67 = tpu.dynamic_rotate %32 by %c17_i32 dim 0 : vector<256x64xf32>, i32 -> vector<256x64xf32>
    %68 = arith.mulf %61, %53 : vector<256x1xf32>
    %69 = vector.broadcast %68 : vector<256x1xf32> to vector<256x64xf32>
    %70 = arith.mulf %67, %69 : vector<256x64xf32>
    %71 = vector.extract_strided_slice %66 {offsets = [0, 0], sizes = [1, 64], strides = [1, 1]} : vector<9x64xf32> to vector<1x64xf32>
    %72 = vector.broadcast %71 : vector<1x64xf32> to vector<256x64xf32>
    %73 = arith.mulf %70, %72 : vector<256x64xf32>
    %c16_i32_31 = arith.constant 16 : i32
    %74 = tpu.dynamic_rotate %32 by %c16_i32_31 dim 0 : vector<256x64xf32>, i32 -> vector<256x64xf32>
    %75 = vector.broadcast %61 : vector<256x1xf32> to vector<256x64xf32>
    %76 = arith.mulf %74, %75 : vector<256x64xf32>
    %77 = vector.extract_strided_slice %66 {offsets = [1, 0], sizes = [1, 64], strides = [1, 1]} : vector<9x64xf32> to vector<1x64xf32>
    %78 = vector.broadcast %77 : vector<1x64xf32> to vector<256x64xf32>
    %79 = arith.mulf %76, %78 : vector<256x64xf32>
    %80 = arith.addf %73, %79 : vector<256x64xf32>
    %c15_i32_32 = arith.constant 15 : i32
    %81 = tpu.dynamic_rotate %32 by %c15_i32_32 dim 0 : vector<256x64xf32>, i32 -> vector<256x64xf32>
    %82 = arith.mulf %61, %57 : vector<256x1xf32>
    %83 = vector.broadcast %82 : vector<256x1xf32> to vector<256x64xf32>
    %84 = arith.mulf %81, %83 : vector<256x64xf32>
    %85 = vector.extract_strided_slice %66 {offsets = [2, 0], sizes = [1, 64], strides = [1, 1]} : vector<9x64xf32> to vector<1x64xf32>
    %86 = vector.broadcast %85 : vector<1x64xf32> to vector<256x64xf32>
    %87 = arith.mulf %84, %86 : vector<256x64xf32>
    %88 = arith.addf %80, %87 : vector<256x64xf32>
    %c1_i32_33 = arith.constant 1 : i32
    %89 = tpu.dynamic_rotate %32 by %c1_i32_33 dim 0 : vector<256x64xf32>, i32 -> vector<256x64xf32>
    %90 = vector.broadcast %53 : vector<256x1xf32> to vector<256x64xf32>
    %91 = arith.mulf %89, %90 : vector<256x64xf32>
    %92 = vector.extract_strided_slice %66 {offsets = [3, 0], sizes = [1, 64], strides = [1, 1]} : vector<9x64xf32> to vector<1x64xf32>
    %93 = vector.broadcast %92 : vector<1x64xf32> to vector<256x64xf32>
    %94 = arith.mulf %91, %93 : vector<256x64xf32>
    %95 = arith.addf %88, %94 : vector<256x64xf32>
    %96 = vector.extract_strided_slice %66 {offsets = [4, 0], sizes = [1, 64], strides = [1, 1]} : vector<9x64xf32> to vector<1x64xf32>
    %97 = vector.broadcast %96 : vector<1x64xf32> to vector<256x64xf32>
    %98 = arith.mulf %32, %97 : vector<256x64xf32>
    %99 = arith.addf %95, %98 : vector<256x64xf32>
    %c255_i32 = arith.constant 255 : i32
    %100 = tpu.dynamic_rotate %32 by %c255_i32 dim 0 : vector<256x64xf32>, i32 -> vector<256x64xf32>
    %101 = vector.broadcast %57 : vector<256x1xf32> to vector<256x64xf32>
    %102 = arith.mulf %100, %101 : vector<256x64xf32>
    %103 = vector.extract_strided_slice %66 {offsets = [5, 0], sizes = [1, 64], strides = [1, 1]} : vector<9x64xf32> to vector<1x64xf32>
    %104 = vector.broadcast %103 : vector<1x64xf32> to vector<256x64xf32>
    %105 = arith.mulf %102, %104 : vector<256x64xf32>
    %106 = arith.addf %99, %105 : vector<256x64xf32>
    %c241_i32 = arith.constant 241 : i32
    %107 = tpu.dynamic_rotate %32 by %c241_i32 dim 0 : vector<256x64xf32>, i32 -> vector<256x64xf32>
    %108 = arith.mulf %65, %53 : vector<256x1xf32>
    %109 = vector.broadcast %108 : vector<256x1xf32> to vector<256x64xf32>
    %110 = arith.mulf %107, %109 : vector<256x64xf32>
    %111 = vector.extract_strided_slice %66 {offsets = [6, 0], sizes = [1, 64], strides = [1, 1]} : vector<9x64xf32> to vector<1x64xf32>
    %112 = vector.broadcast %111 : vector<1x64xf32> to vector<256x64xf32>
    %113 = arith.mulf %110, %112 : vector<256x64xf32>
    %114 = arith.addf %106, %113 : vector<256x64xf32>
    %c240_i32_34 = arith.constant 240 : i32
    %115 = tpu.dynamic_rotate %32 by %c240_i32_34 dim 0 : vector<256x64xf32>, i32 -> vector<256x64xf32>
    %116 = vector.broadcast %65 : vector<256x1xf32> to vector<256x64xf32>
    %117 = arith.mulf %115, %116 : vector<256x64xf32>
    %118 = vector.extract_strided_slice %66 {offsets = [7, 0], sizes = [1, 64], strides = [1, 1]} : vector<9x64xf32> to vector<1x64xf32>
    %119 = vector.broadcast %118 : vector<1x64xf32> to vector<256x64xf32>
    %120 = arith.mulf %117, %119 : vector<256x64xf32>
    %121 = arith.addf %114, %120 : vector<256x64xf32>
    %c239_i32 = arith.constant 239 : i32
    %122 = tpu.dynamic_rotate %32 by %c239_i32 dim 0 : vector<256x64xf32>, i32 -> vector<256x64xf32>
    %123 = arith.mulf %65, %57 : vector<256x1xf32>
    %124 = vector.broadcast %123 : vector<256x1xf32> to vector<256x64xf32>
    %125 = arith.mulf %122, %124 : vector<256x64xf32>
    %126 = vector.extract_strided_slice %66 {offsets = [8, 0], sizes = [1, 64], strides = [1, 1]} : vector<9x64xf32> to vector<1x64xf32>
    %127 = vector.broadcast %126 : vector<1x64xf32> to vector<256x64xf32>
    %128 = arith.mulf %125, %127 : vector<256x64xf32>
    %129 = arith.addf %121, %128 : vector<256x64xf32>
    %c0_35 = arith.constant 0 : index
    %c0_36 = arith.constant 0 : index
    %130 = vector.load %arg11[%c0_35, %c0_36] : memref<1x64xf32, #tpu.memory_space<vmem>>, vector<1x64xf32>
    %131 = vector.broadcast %130 : vector<1x64xf32> to vector<256x64xf32>
    %132 = arith.addf %129, %131 : vector<256x64xf32>
    %c0_37 = arith.constant 0 : index
    %c0_38 = arith.constant 0 : index
    %133 = vector.load %arg12[%c0_37, %c0_38] : memref<64x64xbf16, #tpu.memory_space<vmem>>, vector<64x64xbf16>
    %134 = arith.truncf %132 : vector<256x64xf32> to vector<256x64xbf16>
    %cst_39 = arith.constant dense<0.000000e+00> : vector<256x64xf32>
    %135 = tpu.matmul %134, %133, %cst_39 {dimension_numbers = #tpu.dot_dimension_numbers<[1], [0], [0], [1], [0, 0, 1, 1], [], []>} : vector<256x64xbf16>, vector<64x64xbf16>, vector<256x64xf32> -> vector<256x64xf32>
    %136 = arith.truncf %22 : vector<256x32xf32> to vector<256x32xbf16>
    %137 = arith.truncf %27 : vector<256x32xf32> to vector<256x32xbf16>
    %cst_40 = arith.constant dense<0.000000e+00> : vector<256x256xf32>
    %138 = tpu.matmul %136, %137, %cst_40 {dimension_numbers = #tpu.dot_dimension_numbers<[1], [1], [0], [0], [0, 0, 1, 0], [], []>} : vector<256x32xbf16>, vector<256x32xbf16>, vector<256x256xf32> -> vector<256x256xf32>
    %cst_41 = arith.constant dense<0xFF800000> : vector<256xf32>
    %139 = vector.multi_reduction <maximumf>, %138, %cst_41 [1] : vector<256x256xf32> to vector<256xf32>
    %140 = vector.shape_cast %139 : vector<256xf32> to vector<256x1xf32>
    %141 = vector.broadcast %140 : vector<256x1xf32> to vector<256x256xf32>
    %142 = arith.subf %138, %141 : vector<256x256xf32>
    %143 = math.exp %142 : vector<256x256xf32>
    %cst_42 = arith.constant dense<0.000000e+00> : vector<256xf32>
    %144 = vector.multi_reduction <add>, %143, %cst_42 [1] : vector<256x256xf32> to vector<256xf32>
    %145 = vector.shape_cast %144 : vector<256xf32> to vector<256x1xf32>
    %146 = arith.truncf %143 : vector<256x256xf32> to vector<256x256xbf16>
    %147 = arith.truncf %32 : vector<256x64xf32> to vector<256x64xbf16>
    %cst_43 = arith.constant dense<0.000000e+00> : vector<256x64xf32>
    %148 = tpu.matmul %146, %147, %cst_43 {dimension_numbers = #tpu.dot_dimension_numbers<[1], [0], [0], [1], [0, 0, 1, 1], [], []>} : vector<256x256xbf16>, vector<256x64xbf16>, vector<256x64xf32> -> vector<256x64xf32>
    %149 = tpu.reciprocal %145 {approx = true} : vector<256x1xf32> -> vector<256x1xf32>
    %150 = vector.broadcast %149 : vector<256x1xf32> to vector<256x64xf32>
    %151 = arith.mulf %148, %150 : vector<256x64xf32>
    %152 = arith.truncf %151 : vector<256x64xf32> to vector<256x64xbf16>
    %cst_44 = arith.constant dense<0.000000e+00> : vector<256x64xf32>
    %153 = tpu.matmul %152, %133, %cst_44 {dimension_numbers = #tpu.dot_dimension_numbers<[1], [0], [0], [1], [0, 0, 1, 1], [], []>} : vector<256x64xbf16>, vector<64x64xbf16>, vector<256x64xf32> -> vector<256x64xf32>
    %154 = arith.addf %135, %153 : vector<256x64xf32>
    %155 = arith.addf %16, %154 : vector<256x64xf32>
    %c0_45 = arith.constant 0 : index
    %c0_46 = arith.constant 0 : index
    %156 = vector.load %arg13[%c0_45, %c0_46] : memref<1x64xf32, #tpu.memory_space<vmem>>, vector<1x64xf32>
    %157 = vector.broadcast %156 : vector<1x64xf32> to vector<256x64xf32>
    %158 = arith.addf %155, %157 : vector<256x64xf32>
    %159 = arith.truncf %158 : vector<256x64xf32> to vector<256x64xbf16>
    %c0_47 = arith.constant 0 : index
    %c0_48 = arith.constant 0 : index
    %160 = vector.load %arg14[%c0_47, %c0_48] : memref<64x128xbf16, #tpu.memory_space<vmem>>, vector<64x128xbf16>
    %cst_49 = arith.constant dense<0.000000e+00> : vector<256x128xf32>
    %161 = tpu.matmul %159, %160, %cst_49 {dimension_numbers = #tpu.dot_dimension_numbers<[1], [0], [0], [1], [0, 0, 1, 1], [], []>} : vector<256x64xbf16>, vector<64x128xbf16>, vector<256x128xf32> -> vector<256x128xf32>
    %c0_50 = arith.constant 0 : index
    %c0_51 = arith.constant 0 : index
    %162 = vector.load %arg15[%c0_50, %c0_51] : memref<1x128xf32, #tpu.memory_space<vmem>>, vector<1x128xf32>
    %163 = vector.broadcast %162 : vector<1x128xf32> to vector<256x128xf32>
    %164 = arith.addf %161, %163 : vector<256x128xf32>
    %cst_52 = arith.constant 0.000000e+00 : f32
    %165 = vector.broadcast %cst_52 : f32 to vector<256x128xf32>
    %166 = arith.subf %165, %164 : vector<256x128xf32>
    %167 = math.exp %166 : vector<256x128xf32>
    %cst_53 = arith.constant 1.000000e+00 : f32
    %168 = vector.broadcast %cst_53 : f32 to vector<256x128xf32>
    %169 = arith.addf %168, %167 : vector<256x128xf32>
    %cst_54 = arith.constant 1.000000e+00 : f32
    %170 = vector.broadcast %cst_54 : f32 to vector<256x128xf32>
    %171 = arith.divf %170, %169 : vector<256x128xf32>
    %172 = arith.mulf %164, %171 : vector<256x128xf32>
    %173 = arith.truncf %172 : vector<256x128xf32> to vector<256x128xbf16>
    %c0_55 = arith.constant 0 : index
    %c0_56 = arith.constant 0 : index
    %174 = vector.load %arg16[%c0_55, %c0_56] : memref<128x64xbf16, #tpu.memory_space<vmem>>, vector<128x64xbf16>
    %cst_57 = arith.constant dense<0.000000e+00> : vector<256x64xf32>
    %175 = tpu.matmul %173, %174, %cst_57 {dimension_numbers = #tpu.dot_dimension_numbers<[1], [0], [0], [1], [0, 0, 1, 1], [], []>} : vector<256x128xbf16>, vector<128x64xbf16>, vector<256x64xf32> -> vector<256x64xf32>
    %176 = arith.addf %158, %175 : vector<256x64xf32>
    %c0_58 = arith.constant 0 : index
    %c0_59 = arith.constant 0 : index
    %177 = vector.load %arg17[%c0_58, %c0_59] : memref<1x64xf32, #tpu.memory_space<vmem>>, vector<1x64xf32>
    %178 = vector.broadcast %177 : vector<1x64xf32> to vector<256x64xf32>
    %179 = arith.addf %176, %178 : vector<256x64xf32>
    %180 = arith.truncf %15 : vector<256x64xf32> to vector<256x64xbf16>
    %181 = arith.truncf %179 : vector<256x64xf32> to vector<256x64xbf16>
    %182 = tpu.concatenate %180, %181 in 1 : vector<256x64xbf16>, vector<256x64xbf16> -> vector<256x128xbf16>
    %c0_60 = arith.constant 0 : index
    %c0_61 = arith.constant 0 : index
    %183 = vector.load %arg18[%c0_60, %c0_61] : memref<128x128xbf16, #tpu.memory_space<vmem>>, vector<128x128xbf16>
    %cst_62 = arith.constant dense<0.000000e+00> : vector<256x128xf32>
    %184 = tpu.matmul %182, %183, %cst_62 {dimension_numbers = #tpu.dot_dimension_numbers<[1], [0], [0], [1], [0, 0, 1, 1], [], []>} : vector<256x128xbf16>, vector<128x128xbf16>, vector<256x128xf32> -> vector<256x128xf32>
    %c0_63 = arith.constant 0 : index
    %c0_64 = arith.constant 0 : index
    %185 = vector.load %arg19[%c0_63, %c0_64] : memref<1x128xf32, #tpu.memory_space<vmem>>, vector<1x128xf32>
    %186 = vector.broadcast %185 : vector<1x128xf32> to vector<256x128xf32>
    %187 = arith.addf %184, %186 : vector<256x128xf32>
    %cst_65 = arith.constant 0.000000e+00 : f32
    %188 = vector.broadcast %cst_65 : f32 to vector<256x128xf32>
    %189 = arith.subf %188, %187 : vector<256x128xf32>
    %190 = math.exp %189 : vector<256x128xf32>
    %cst_66 = arith.constant 1.000000e+00 : f32
    %191 = vector.broadcast %cst_66 : f32 to vector<256x128xf32>
    %192 = arith.addf %191, %190 : vector<256x128xf32>
    %cst_67 = arith.constant 1.000000e+00 : f32
    %193 = vector.broadcast %cst_67 : f32 to vector<256x128xf32>
    %194 = arith.divf %193, %192 : vector<256x128xf32>
    %195 = arith.mulf %187, %194 : vector<256x128xf32>
    %c0_68 = arith.constant 0 : index
    %c0_69 = arith.constant 0 : index
    %c0_70 = arith.constant 0 : index
    %196 = vector.load %arg20[%c0_68, %c0_69, %c0_70] : memref<1x256x128xf32, #tpu.memory_space<vmem>>, vector<1x256x128xf32>
    %197 = vector.shape_cast %196 : vector<1x256x128xf32> to vector<256x128xf32>
    %198 = vector.shape_cast %195 : vector<256x128xf32> to vector<1x256x128xf32>
    tpu.vector_store %arg20[%c0_68, %c0_69, %c0_70], %198 {strides = array<i32>} : memref<1x256x128xf32, #tpu.memory_space<vmem>>, vector<1x256x128xf32>,
    return
  }
  func.func @transform_0(%arg0: i32) -> (i32, i32, i32) {
    %c0_i32 = arith.constant 0 : i32
    %c0_i32_0 = arith.constant 0 : i32
    %c0_i32_1 = arith.constant 0 : i32
    return %arg0, %c0_i32, %c0_i32_0 : i32, i32, i32
  }
  func.func @transform_1(%arg0: i32) -> (i32, i32) {
    %c0_i32 = arith.constant 0 : i32
    %c0_i32_0 = arith.constant 0 : i32
    %c0_i32_1 = arith.constant 0 : i32
    return %c0_i32, %c0_i32_0 : i32, i32
  }
  func.func @transform_2(%arg0: i32) -> (i32, i32) {
    %c0_i32 = arith.constant 0 : i32
    %c0_i32_0 = arith.constant 0 : i32
    %c0_i32_1 = arith.constant 0 : i32
    return %c0_i32, %c0_i32_0 : i32, i32
  }
  func.func @transform_3(%arg0: i32) -> (i32, i32) {
    %c0_i32 = arith.constant 0 : i32
    %c0_i32_0 = arith.constant 0 : i32
    %c0_i32_1 = arith.constant 0 : i32
    return %c0_i32, %c0_i32_0 : i32, i32
  }
  func.func @transform_4(%arg0: i32) -> (i32, i32) {
    %c0_i32 = arith.constant 0 : i32
    %c0_i32_0 = arith.constant 0 : i32
    %c0_i32_1 = arith.constant 0 : i32
    return %c0_i32, %c0_i32_0 : i32, i32
  }
  func.func @transform_5(%arg0: i32) -> (i32, i32) {
    %c0_i32 = arith.constant 0 : i32
    %c0_i32_0 = arith.constant 0 : i32
    %c0_i32_1 = arith.constant 0 : i32
    return %c0_i32, %c0_i32_0 : i32, i32
  }
  func.func @transform_6(%arg0: i32) -> (i32, i32) {
    %c0_i32 = arith.constant 0 : i32
    %c0_i32_0 = arith.constant 0 : i32
    %c0_i32_1 = arith.constant 0 : i32
    return %c0_i32, %c0_i32_0 : i32, i32
  }
  func.func @transform_7(%arg0: i32) -> (i32, i32) {
    %c0_i32 = arith.constant 0 : i32
    %c0_i32_0 = arith.constant 0 : i32
    %c0_i32_1 = arith.constant 0 : i32
    return %c0_i32, %c0_i32_0 : i32, i32
  }
  func.func @transform_8(%arg0: i32) -> (i32, i32) {
    %c0_i32 = arith.constant 0 : i32
    %c0_i32_0 = arith.constant 0 : i32
    %c0_i32_1 = arith.constant 0 : i32
    return %c0_i32, %c0_i32_0 : i32, i32
  }
  func.func @transform_9(%arg0: i32) -> (i32, i32) {
    %c0_i32 = arith.constant 0 : i32
    %c0_i32_0 = arith.constant 0 : i32
    %c0_i32_1 = arith.constant 0 : i32
    return %c0_i32, %c0_i32_0 : i32, i32
  }
  func.func @transform_10(%arg0: i32) -> (i32, i32) {
    %c0_i32 = arith.constant 0 : i32
    %c0_i32_0 = arith.constant 0 : i32
    %c0_i32_1 = arith.constant 0 : i32
    return %c0_i32, %c0_i32_0 : i32, i32
  }
  func.func @transform_11(%arg0: i32) -> (i32, i32) {
    %c0_i32 = arith.constant 0 : i32
    %c0_i32_0 = arith.constant 0 : i32
    %c0_i32_1 = arith.constant 0 : i32
    return %c0_i32, %c0_i32_0 : i32, i32
  }
  func.func @transform_12(%arg0: i32) -> (i32, i32) {
    %c0_i32 = arith.constant 0 : i32
    %c0_i32_0 = arith.constant 0 : i32
    %c0_i32_1 = arith.constant 0 : i32
    return %c0_i32, %c0_i32_0 : i32, i32
  }
  func.func @transform_13(%arg0: i32) -> (i32, i32) {
    %c0_i32 = arith.constant 0 : i32
    %c0_i32_0 = arith.constant 0 : i32
    %c0_i32_1 = arith.constant 0 : i32
    return %c0_i32, %c0_i32_0 : i32, i32
  }
  func.func @transform_14(%arg0: i32) -> (i32, i32) {
    %c0_i32 = arith.constant 0 : i32
    %c0_i32_0 = arith.constant 0 : i32
    %c0_i32_1 = arith.constant 0 : i32
    return %c0_i32, %c0_i32_0 : i32, i32
  }
  func.func @transform_15(%arg0: i32) -> (i32, i32) {
    %c0_i32 = arith.constant 0 : i32
    %c0_i32_0 = arith.constant 0 : i32
    %c0_i32_1 = arith.constant 0 : i32
    return %c0_i32, %c0_i32_0 : i32, i32
  }
  func.func @transform_16(%arg0: i32) -> (i32, i32) {
    %c0_i32 = arith.constant 0 : i32
    %c0_i32_0 = arith.constant 0 : i32
    %c0_i32_1 = arith.constant 0 : i32
    return %c0_i32, %c0_i32_0 : i32, i32
  }
  func.func @transform_17(%arg0: i32) -> (i32, i32) {
    %c0_i32 = arith.constant 0 : i32
    %c0_i32_0 = arith.constant 0 : i32
    %c0_i32_1 = arith.constant 0 : i32
    return %c0_i32, %c0_i32_0 : i32, i32
  }
  func.func @transform_18(%arg0: i32) -> (i32, i32) {
    %c0_i32 = arith.constant 0 : i32
    %c0_i32_0 = arith.constant 0 : i32
    %c0_i32_1 = arith.constant 0 : i32
    return %c0_i32, %c0_i32_0 : i32, i32
  }
  func.func @transform_19(%arg0: i32) -> (i32, i32, i32) {
    %c0_i32 = arith.constant 0 : i32
    %c0_i32_0 = arith.constant 0 : i32
    %c0_i32_1 = arith.constant 0 : i32
    return %arg0, %c0_i32, %c0_i32_0 : i32, i32, i32
  }
}

</mosaic_0001>

<llo_original>
// kernel: _lambda_.1
$region0: #{_lambda_.1}
  #allocation0 [shape = 'u32[]', space=smem, size = 0x4, offset = 0x4, fixed_abs, tag = 'smem constant byte address 0x4 - core index']
  #allocation1 [shape = 'u32[144,128]{1,0:T(1,128)}', space=vmem, size = 0x12000, scoped, tag = 'internal scratch']
  %s0 = inlined_call_operand.vmem [shape: bf16[2,256,128], index: 0, kind: input, shape index: {}]
  %s1 = inlined_call_operand.vmem [shape: bf16[128,128], index: 1, kind: input, shape index: {}]
  %s2 = inlined_call_operand.vmem [shape: f32[1,128], index: 2, kind: input, shape index: {}]
  %s3 = inlined_call_operand.vmem [shape: bf16[64,32], index: 3, kind: input, shape index: {}]
  %s4 = inlined_call_operand.vmem [shape: f32[1,32], index: 4, kind: input, shape index: {}]
  %s5 = inlined_call_operand.vmem [shape: bf16[64,32], index: 5, kind: input, shape index: {}]
  %s6 = inlined_call_operand.vmem [shape: f32[1,32], index: 6, kind: input, shape index: {}]
  %s7 = inlined_call_operand.vmem [shape: bf16[64,64], index: 7, kind: input, shape index: {}]
  %s8 = inlined_call_operand.vmem [shape: f32[1,64], index: 8, kind: input, shape index: {}]
  %s9 = inlined_call_operand.vmem [shape: f32[9,64], index: 9, kind: input, shape index: {}]
  %s10 = inlined_call_operand.vmem [shape: f32[1,64], index: 10, kind: input, shape index: {}]
  %s11 = inlined_call_operand.vmem [shape: bf16[64,64], index: 11, kind: input, shape index: {}]
  %s12 = inlined_call_operand.vmem [shape: f32[1,64], index: 12, kind: input, shape index: {}]
  %s13 = inlined_call_operand.vmem [shape: bf16[64,128], index: 13, kind: input, shape index: {}]
  %s14 = inlined_call_operand.vmem [shape: f32[1,128], index: 14, kind: input, shape index: {}]
  %s15 = inlined_call_operand.vmem [shape: bf16[128,64], index: 15, kind: input, shape index: {}]
  %s16 = inlined_call_operand.vmem [shape: f32[1,64], index: 16, kind: input, shape index: {}]
  %s17 = inlined_call_operand.vmem [shape: bf16[128,128], index: 17, kind: input, shape index: {}]
  %s18 = inlined_call_operand.vmem [shape: f32[1,128], index: 18, kind: input, shape index: {}]
  %s19 = inlined_call_operand.hbm [shape: f32[2,256,128], index: 19, kind: output, shape index: {}]
  %s20 = sld [smem:[#allocation0]]
  $region109: #{_lambda_.1} parent=0
    _
  %s22 = ssub.s32 1, %s20
  %s23 = scalar_select 0, %s22, %s20
  $region1: #{_lambda_.1} parent=0
    #allocation2 [shape = 'u8[262144]{0}', space=vmem, size = 0x40000, scoped, tag = 'output window, operand 0']
    #allocation3 [shape = 's32[2]{0}', space=sflag, size = 0x8, scoped, tag = 'scoped memory for _lambda_.1']
    %24 = vsyncpa [#allocation3], 0
    %s25 = scalar_lea.sflag [#allocation3], 1
    %26 = vsyncpa %s25, 0
    loop: start=0, step=1, limit=4
    $region2: #{_lambda_.1} parent=1 // loop_pre_header
      _
    $region3: #{_lambda_.1} parent=1 // loop_header
      %s28 = sphi 0, %s32
      %p29 = scmp.ge.s32.totalorder %s28, 4
      %s38 = sphi 0, %s40
      %s41 = sphi 0, %s38
      %s42 = sphi 0, %s41
      %s58 = sphi 0, %s42
      %s62 = sphi 0, %s62
      %s64 = sphi 0, %s62
      %s65 = sphi 0, %s64
      %s79 = sphi 0, %s65
      %s83 = sphi 0, %s83
      %s85 = sphi 0, %s83
      %s86 = sphi 0, %s85
      %s100 = sphi 0, %s86
      %s104 = sphi 0, %s104
      %s106 = sphi 0, %s104
      %s107 = sphi 0, %s106
      %s121 = sphi 0, %s107
      %s125 = sphi 0, %s125
      %s127 = sphi 0, %s125
      %s128 = sphi 0, %s127
      %s142 = sphi 0, %s128
      %s146 = sphi 0, %s146
      %s148 = sphi 0, %s146
      %s149 = sphi 0, %s148
      %s163 = sphi 0, %s149
      %s167 = sphi 0, %s167
      %s169 = sphi 0, %s167
      %s170 = sphi 0, %s169
      %s184 = sphi 0, %s170
      %s188 = sphi 0, %s188
      %s190 = sphi 0, %s188
      %s191 = sphi 0, %s190
      %s205 = sphi 0, %s191
      %s209 = sphi 0, %s209
      %s211 = sphi 0, %s209
      %s212 = sphi 0, %s211
      %s226 = sphi 0, %s212
      %s230 = sphi 0, %s230
      %s232 = sphi 0, %s230
      %s233 = sphi 0, %s232
      %s247 = sphi 0, %s233
      %s251 = sphi 0, %s251
      %s253 = sphi 0, %s251
      %s254 = sphi 0, %s253
      %s268 = sphi 0, %s254
      %s272 = sphi 0, %s272
      %s274 = sphi 0, %s272
      %s275 = sphi 0, %s274
      %s289 = sphi 0, %s275
      %s293 = sphi 0, %s293
      %s295 = sphi 0, %s293
      %s296 = sphi 0, %s295
      %s310 = sphi 0, %s296
      %s314 = sphi 0, %s314
      %s316 = sphi 0, %s314
      %s317 = sphi 0, %s316
      %s331 = sphi 0, %s317
      %s335 = sphi 0, %s335
      %s337 = sphi 0, %s335
      %s338 = sphi 0, %s337
      %s352 = sphi 0, %s338
      %s356 = sphi 0, %s356
      %s358 = sphi 0, %s356
      %s359 = sphi 0, %s358
      %s373 = sphi 0, %s359
      %s377 = sphi 0, %s377
      %s379 = sphi 0, %s377
      %s380 = sphi 0, %s379
      %s394 = sphi 0, %s380
      %s398 = sphi 0, %s398
      %s400 = sphi 0, %s398
      %s401 = sphi 0, %s400
      %s415 = sphi 0, %s401
      %s419 = sphi 0, %s419
      %s421 = sphi 0, %s419
      %s422 = sphi 0, %s421
      %s436 = sphi 0, %s422
      %s442 = sphi 0, %s444
      %s445 = sphi 0, %s442
      %s446 = sphi 0, %s445
      %s462 = sphi 0, %s446
    $region4: #{_lambda_.1} parent=1 // loop_header_branch
      %31 = sbr.rel (%p29) target = $region8
    $region5: #{_lambda_.1} parent=1 // loop_body
      %s33 = ssub.s32 %s28, 1
      %s34 = ssub.s32 %s28, 2
      %s35 = sadd.s32 %s28, 1
      %s36 = ssub.s32 %s28, %s35
      %p37 = scmp.eq.s32.totalorder %s36, 0
      %s39 = sadd.s32 %s38, 1
      %s40 = scalar_select %p37, %s38, %s39
      %p43 = pneg %p37
      %p44 = scmp.eq.s32.totalorder %s28, 1
      %p45 = por %p43, %p44
      %p46 = scmp.ne.s32.totalorder %s38, %s41
      %p47 = scmp.eq.s32.totalorder %s28, 0
      %p48 = por %p46, %p47
      %p49 = scmp.ne.s32.totalorder %s38, %s41
      %p50 = scmp.eq.s32.totalorder %s33, 1
      %p51 = por %p49, %p50
      %p52 = scmp.ne.s32.totalorder %s41, %s42
      %p53 = scmp.eq.s32.totalorder %s33, 0
      %p54 = por %p52, %p53
      %p55 = scmp.ne.s32.totalorder %s41, %s42
      %p56 = scmp.eq.s32.totalorder %s34, 1
      %p57 = por %p55, %p56
      %p59 = scmp.ne.s32.totalorder %s42, %s58
      %p60 = scmp.eq.s32.totalorder %s34, 0
      %p61 = por %p59, %p60
      %s63 = sadd.s32 %s62, 1
      %p66 = scmp.eq.s32.totalorder %s28, 1
      %p67 = scmp.ne.s32.totalorder %s62, %s64
      %p68 = scmp.eq.s32.totalorder %s28, 0
      %p69 = por %p67, %p68
      %p70 = scmp.ne.s32.totalorder %s62, %s64
      %p71 = scmp.eq.s32.totalorder %s33, 1
      %p72 = por %p70, %p71
      %p73 = scmp.ne.s32.totalorder %s64, %s65
      %p74 = scmp.eq.s32.totalorder %s33, 0
      %p75 = por %p73, %p74
      %p76 = scmp.ne.s32.totalorder %s64, %s65
      %p77 = scmp.eq.s32.totalorder %s34, 1
      %p78 = por %p76, %p77
      %p80 = scmp.ne.s32.totalorder %s65, %s79
      %p81 = scmp.eq.s32.totalorder %s34, 0
      %p82 = por %p80, %p81
      %s84 = sadd.s32 %s83, 1
      %p87 = scmp.eq.s32.totalorder %s28, 1
      %p88 = scmp.ne.s32.totalorder %s83, %s85
      %p89 = scmp.eq.s32.totalorder %s28, 0
      %p90 = por %p88, %p89
      %p91 = scmp.ne.s32.totalorder %s83, %s85
      %p92 = scmp.eq.s32.totalorder %s33, 1
      %p93 = por %p91, %p92
      %p94 = scmp.ne.s32.totalorder %s85, %s86
      %p95 = scmp.eq.s32.totalorder %s33, 0
      %p96 = por %p94, %p95
      %p97 = scmp.ne.s32.totalorder %s85, %s86
      %p98 = scmp.eq.s32.totalorder %s34, 1
      %p99 = por %p97, %p98
      %p101 = scmp.ne.s32.totalorder %s86, %s100
      %p102 = scmp.eq.s32.totalorder %s34, 0
      %p103 = por %p101, %p102
      %s105 = sadd.s32 %s104, 1
      %p108 = scmp.eq.s32.totalorder %s28, 1
      %p109 = scmp.ne.s32.totalorder %s104, %s106
      %p110 = scmp.eq.s32.totalorder %s28, 0
      %p111 = por %p109, %p110
      %p112 = scmp.ne.s32.totalorder %s104, %s106
      %p113 = scmp.eq.s32.totalorder %s33, 1
      %p114 = por %p112, %p113
      %p115 = scmp.ne.s32.totalorder %s106, %s107
      %p116 = scmp.eq.s32.totalorder %s33, 0
      %p117 = por %p115, %p116
      %p118 = scmp.ne.s32.totalorder %s106, %s107
      %p119 = scmp.eq.s32.totalorder %s34, 1
      %p120 = por %p118, %p119
      %p122 = scmp.ne.s32.totalorder %s107, %s121
      %p123 = scmp.eq.s32.totalorder %s34, 0
      %p124 = por %p122, %p123
      %s126 = sadd.s32 %s125, 1
      %p129 = scmp.eq.s32.totalorder %s28, 1
      %p130 = scmp.ne.s32.totalorder %s125, %s127
      %p131 = scmp.eq.s32.totalorder %s28, 0
      %p132 = por %p130, %p131
      %p133 = scmp.ne.s32.totalorder %s125, %s127
      %p134 = scmp.eq.s32.totalorder %s33, 1
      %p135 = por %p133, %p134
      %p136 = scmp.ne.s32.totalorder %s127, %s128
      %p137 = scmp.eq.s32.totalorder %s33, 0
      %p138 = por %p136, %p137
      %p139 = scmp.ne.s32.totalorder %s127, %s128
      %p140 = scmp.eq.s32.totalorder %s34, 1
      %p141 = por %p139, %p140
      %p143 = scmp.ne.s32.totalorder %s128, %s142
      %p144 = scmp.eq.s32.totalorder %s34, 0
      %p145 = por %p143, %p144
      %s147 = sadd.s32 %s146, 1
      %p150 = scmp.eq.s32.totalorder %s28, 1
      %p151 = scmp.ne.s32.totalorder %s146, %s148
      %p152 = scmp.eq.s32.totalorder %s28, 0
      %p153 = por %p151, %p152
      %p154 = scmp.ne.s32.totalorder %s146, %s148
      %p155 = scmp.eq.s32.totalorder %s33, 1
      %p156 = por %p154, %p155
      %p157 = scmp.ne.s32.totalorder %s148, %s149
      %p158 = scmp.eq.s32.totalorder %s33, 0
      %p159 = por %p157, %p158
      %p160 = scmp.ne.s32.totalorder %s148, %s149
      %p161 = scmp.eq.s32.totalorder %s34, 1
      %p162 = por %p160, %p161
      %p164 = scmp.ne.s32.totalorder %s149, %s163
      %p165 = scmp.eq.s32.totalorder %s34, 0
      %p166 = por %p164, %p165
      %s168 = sadd.s32 %s167, 1
      %p171 = scmp.eq.s32.totalorder %s28, 1
      %p172 = scmp.ne.s32.totalorder %s167, %s169
      %p173 = scmp.eq.s32.totalorder %s28, 0
      %p174 = por %p172, %p173
      %p175 = scmp.ne.s32.totalorder %s167, %s169
      %p176 = scmp.eq.s32.totalorder %s33, 1
      %p177 = por %p175, %p176
      %p178 = scmp.ne.s32.totalorder %s169, %s170
      %p179 = scmp.eq.s32.totalorder %s33, 0
      %p180 = por %p178, %p179
      %p181 = scmp.ne.s32.totalorder %s169, %s170
      %p182 = scmp.eq.s32.totalorder %s34, 1
      %p183 = por %p181, %p182
      %p185 = scmp.ne.s32.totalorder %s170, %s184
      %p186 = scmp.eq.s32.totalorder %s34, 0
      %p187 = por %p185, %p186
      %s189 = sadd.s32 %s188, 1
      %p192 = scmp.eq.s32.totalorder %s28, 1
      %p193 = scmp.ne.s32.totalorder %s188, %s190
      %p194 = scmp.eq.s32.totalorder %s28, 0
      %p195 = por %p193, %p194
      %p196 = scmp.ne.s32.totalorder %s188, %s190
      %p197 = scmp.eq.s32.totalorder %s33, 1
      %p198 = por %p196, %p197
      %p199 = scmp.ne.s32.totalorder %s190, %s191
      %p200 = scmp.eq.s32.totalorder %s33, 0
      %p201 = por %p199, %p200
      %p202 = scmp.ne.s32.totalorder %s190, %s191
      %p203 = scmp.eq.s32.totalorder %s34, 1
      %p204 = por %p202, %p203
      %p206 = scmp.ne.s32.totalorder %s191, %s205
      %p207 = scmp.eq.s32.totalorder %s34, 0
      %p208 = por %p206, %p207
      %s210 = sadd.s32 %s209, 1
      %p213 = scmp.eq.s32.totalorder %s28, 1
      %p214 = scmp.ne.s32.totalorder %s209, %s211
      %p215 = scmp.eq.s32.totalorder %s28, 0
      %p216 = por %p214, %p215
      %p217 = scmp.ne.s32.totalorder %s209, %s211
      %p218 = scmp.eq.s32.totalorder %s33, 1
      %p219 = por %p217, %p218
      %p220 = scmp.ne.s32.totalorder %s211, %s212
      %p221 = scmp.eq.s32.totalorder %s33, 0
      %p222 = por %p220, %p221
      %p223 = scmp.ne.s32.totalorder %s211, %s212
      %p224 = scmp.eq.s32.totalorder %s34, 1
      %p225 = por %p223, %p224
      %p227 = scmp.ne.s32.totalorder %s212, %s226
      %p228 = scmp.eq.s32.totalorder %s34, 0
      %p229 = por %p227, %p228
      %s231 = sadd.s32 %s230, 1
      %p234 = scmp.eq.s32.totalorder %s28, 1
      %p235 = scmp.ne.s32.totalorder %s230, %s232
      %p236 = scmp.eq.s32.totalorder %s28, 0
      %p237 = por %p235, %p236
      %p238 = scmp.ne.s32.totalorder %s230, %s232
      %p239 = scmp.eq.s32.totalorder %s33, 1
      %p240 = por %p238, %p239
      %p241 = scmp.ne.s32.totalorder %s232, %s233
      %p242 = scmp.eq.s32.totalorder %s33, 0
      %p243 = por %p241, %p242
      %p244 = scmp.ne.s32.totalorder %s232, %s233
      %p245 = scmp.eq.s32.totalorder %s34, 1
      %p246 = por %p244, %p245
      %p248 = scmp.ne.s32.totalorder %s233, %s247
      %p249 = scmp.eq.s32.totalorder %s34, 0
      %p250 = por %p248, %p249
      %s252 = sadd.s32 %s251, 1
      %p255 = scmp.eq.s32.totalorder %s28, 1
      %p256 = scmp.ne.s32.totalorder %s251, %s253
      %p257 = scmp.eq.s32.totalorder %s28, 0
      %p258 = por %p256, %p257
      %p259 = scmp.ne.s32.totalorder %s251, %s253
      %p260 = scmp.eq.s32.totalorder %s33, 1
      %p261 = por %p259, %p260
      %p262 = scmp.ne.s32.totalorder %s253, %s254
      %p263 = scmp.eq.s32.totalorder %s33, 0
      %p264 = por %p262, %p263
      %p265 = scmp.ne.s32.totalorder %s253, %s254
      %p266 = scmp.eq.s32.totalorder %s34, 1
      %p267 = por %p265, %p266
      %p269 = scmp.ne.s32.totalorder %s254, %s268
      %p270 = scmp.eq.s32.totalorder %s34, 0
      %p271 = por %p269, %p270
      %s273 = sadd.s32 %s272, 1
      %p276 = scmp.eq.s32.totalorder %s28, 1
      %p277 = scmp.ne.s32.totalorder %s272, %s274
      %p278 = scmp.eq.s32.totalorder %s28, 0
      %p279 = por %p277, %p278
      %p280 = scmp.ne.s32.totalorder %s272, %s274
      %p281 = scmp.eq.s32.totalorder %s33, 1
      %p282 = por %p280, %p281
      %p283 = scmp.ne.s32.totalorder %s274, %s275
      %p284 = scmp.eq.s32.totalorder %s33, 0
      %p285 = por %p283, %p284
      %p286 = scmp.ne.s32.totalorder %s274, %s275
      %p287 = scmp.eq.s32.totalorder %s34, 1
      %p288 = por %p286, %p287
      %p290 = scmp.ne.s32.totalorder %s275, %s289
      %p291 = scmp.eq.s32.totalorder %s34, 0
      %p292 = por %p290, %p291
      %s294 = sadd.s32 %s293, 1
      %p297 = scmp.eq.s32.totalorder %s28, 1
      %p298 = scmp.ne.s32.totalorder %s293, %s295
      %p299 = scmp.eq.s32.totalorder %s28, 0
      %p300 = por %p298, %p299
      %p301 = scmp.ne.s32.totalorder %s293, %s295
      %p302 = scmp.eq.s32.totalorder %s33, 1
      %p303 = por %p301, %p302
      %p304 = scmp.ne.s32.totalorder %s295, %s296
      %p305 = scmp.eq.s32.totalorder %s33, 0
      %p306 = por %p304, %p305
      %p307 = scmp.ne.s32.totalorder %s295, %s296
      %p308 = scmp.eq.s32.totalorder %s34, 1
      %p309 = por %p307, %p308
      %p311 = scmp.ne.s32.totalorder %s296, %s310
      %p312 = scmp.eq.s32.totalorder %s34, 0
      %p313 = por %p311, %p312
      %s315 = sadd.s32 %s314, 1
      %p318 = scmp.eq.s32.totalorder %s28, 1
      %p319 = scmp.ne.s32.totalorder %s314, %s316
      %p320 = scmp.eq.s32.totalorder %s28, 0
      %p321 = por %p319, %p320
      %p322 = scmp.ne.s32.totalorder %s314, %s316
      %p323 = scmp.eq.s32.totalorder %s33, 1
      %p324 = por %p322, %p323
      %p325 = scmp.ne.s32.totalorder %s316, %s317
      %p326 = scmp.eq.s32.totalorder %s33, 0
      %p327 = por %p325, %p326
      %p328 = scmp.ne.s32.totalorder %s316, %s317
      %p329 = scmp.eq.s32.totalorder %s34, 1
      %p330 = por %p328, %p329
      %p332 = scmp.ne.s32.totalorder %s317, %s331
      %p333 = scmp.eq.s32.totalorder %s34, 0
      %p334 = por %p332, %p333
      %s336 = sadd.s32 %s335, 1
      %p339 = scmp.eq.s32.totalorder %s28, 1
      %p340 = scmp.ne.s32.totalorder %s335, %s337
      %p341 = scmp.eq.s32.totalorder %s28, 0
      %p342 = por %p340, %p341
      %p343 = scmp.ne.s32.totalorder %s335, %s337
      %p344 = scmp.eq.s32.totalorder %s33, 1
      %p345 = por %p343, %p344
      %p346 = scmp.ne.s32.totalorder %s337, %s338
      %p347 = scmp.eq.s32.totalorder %s33, 0
      %p348 = por %p346, %p347
      %p349 = scmp.ne.s32.totalorder %s337, %s338
      %p350 = scmp.eq.s32.totalorder %s34, 1
      %p351 = por %p349, %p350
      %p353 = scmp.ne.s32.totalorder %s338, %s352
      %p354 = scmp.eq.s32.totalorder %s34, 0
      %p355 = por %p353, %p354
      %s357 = sadd.s32 %s356, 1
      %p360 = scmp.eq.s32.totalorder %s28, 1
      %p361 = scmp.ne.s32.totalorder %s356, %s358
      %p362 = scmp.eq.s32.totalorder %s28, 0
      %p363 = por %p361, %p362
      %p364 = scmp.ne.s32.totalorder %s356, %s358
      %p365 = scmp.eq.s32.totalorder %s33, 1
      %p366 = por %p364, %p365
      %p367 = scmp.ne.s32.totalorder %s358, %s359
      %p368 = scmp.eq.s32.totalorder %s33, 0
      %p369 = por %p367, %p368
      %p370 = scmp.ne.s32.totalorder %s358, %s359
      %p371 = scmp.eq.s32.totalorder %s34, 1
      %p372 = por %p370, %p371
      %p374 = scmp.ne.s32.totalorder %s359, %s373
      %p375 = scmp.eq.s32.totalorder %s34, 0
      %p376 = por %p374, %p375
      %s378 = sadd.s32 %s377, 1
      %p381 = scmp.eq.s32.totalorder %s28, 1
      %p382 = scmp.ne.s32.totalorder %s377, %s379
      %p383 = scmp.eq.s32.totalorder %s28, 0
      %p384 = por %p382, %p383
      %p385 = scmp.ne.s32.totalorder %s377, %s379
      %p386 = scmp.eq.s32.totalorder %s33, 1
      %p387 = por %p385, %p386
      %p388 = scmp.ne.s32.totalorder %s379, %s380
      %p389 = scmp.eq.s32.totalorder %s33, 0
      %p390 = por %p388, %p389
      %p391 = scmp.ne.s32.totalorder %s379, %s380
      %p392 = scmp.eq.s32.totalorder %s34, 1
      %p393 = por %p391, %p392
      %p395 = scmp.ne.s32.totalorder %s380, %s394
      %p396 = scmp.eq.s32.totalorder %s34, 0
      %p397 = por %p395, %p396
      %s399 = sadd.s32 %s398, 1
      %p402 = scmp.eq.s32.totalorder %s28, 1
      %p403 = scmp.ne.s32.totalorder %s398, %s400
      %p404 = scmp.eq.s32.totalorder %s28, 0
      %p405 = por %p403, %p404
      %p406 = scmp.ne.s32.totalorder %s398, %s400
      %p407 = scmp.eq.s32.totalorder %s33, 1
      %p408 = por %p406, %p407
      %p409 = scmp.ne.s32.totalorder %s400, %s401
      %p410 = scmp.eq.s32.totalorder %s33, 0
      %p411 = por %p409, %p410
      %p412 = scmp.ne.s32.totalorder %s400, %s401
      %p413 = scmp.eq.s32.totalorder %s34, 1
      %p414 = por %p412, %p413
      %p416 = scmp.ne.s32.totalorder %s401, %s415
      %p417 = scmp.eq.s32.totalorder %s34, 0
      %p418 = por %p416, %p417
      %s420 = sadd.s32 %s419, 1
      %p423 = scmp.eq.s32.totalorder %s28, 1
      %p424 = scmp.ne.s32.totalorder %s419, %s421
      %p425 = scmp.eq.s32.totalorder %s28, 0
      %p426 = por %p424, %p425
      %p427 = scmp.ne.s32.totalorder %s419, %s421
      %p428 = scmp.eq.s32.totalorder %s33, 1
      %p429 = por %p427, %p428
      %p430 = scmp.ne.s32.totalorder %s421, %s422
      %p431 = scmp.eq.s32.totalorder %s33, 0
      %p432 = por %p430, %p431
      %p433 = scmp.ne.s32.totalorder %s421, %s422
      %p434 = scmp.eq.s32.totalorder %s34, 1
      %p435 = por %p433, %p434
      %p437 = scmp.ne.s32.totalorder %s422, %s436
      %p438 = scmp.eq.s32.totalorder %s34, 0
      %p439 = por %p437, %p438
      %s440 = ssub.s32 %s28, %s35
      %p441 = scmp.eq.s32.totalorder %s440, 0
      %s443 = sadd.s32 %s442, 1
      %s444 = scalar_select %p441, %s442, %s443
      %p447 = pneg %p441
      %p448 = scmp.eq.s32.totalorder %s28, 1
      %p449 = por %p447, %p448
      %p450 = scmp.ne.s32.totalorder %s442, %s445
      %p451 = scmp.eq.s32.totalorder %s28, 0
      %p452 = por %p450, %p451
      %p453 = scmp.ne.s32.totalorder %s442, %s445
      %p454 = scmp.eq.s32.totalorder %s33, 1
      %p455 = por %p453, %p454
      %p456 = scmp.ne.s32.totalorder %s445, %s446
      %p457 = scmp.eq.s32.totalorder %s33, 0
      %p458 = por %p456, %p457
      %p459 = scmp.ne.s32.totalorder %s445, %s446
      %p460 = scmp.eq.s32.totalorder %s34, 1
      %p461 = por %p459, %p460
      %p463 = scmp.ne.s32.totalorder %s446, %s462
      %p464 = scmp.eq.s32.totalorder %s34, 0
      %p465 = por %p463, %p464
      %p466 = scmp.le.s32.totalorder 1, %s28
      %p467 = scmp.lt.s32.totalorder %s28, 3
      %p468 = pnand %p466, %p467
      %p469 = pneg %p468
      // Predicated region
      $region9: #{_lambda_.1} parent=5 // pred_check
        _
      $region10: #{_lambda_.1} parent=5 // pred_check_branch
        %471 = sbr.rel (%p468) target = $region12
      $region11: #{_lambda_.1} parent=5 // pred_region
        %s472 = ssub.s32 %s28, 1
        // Predicated region
        $region13: #{_lambda_.1} parent=11 // pred_check
          %p473 = pneg %p75
        $region14: #{_lambda_.1} parent=11 // pred_check_branch
          %475 = sbr.rel (%p473) target = $region16
        $region15: #{_lambda_.1} parent=11 // pred_region
          _
        $region16: #{_lambda_.1} parent=11 // pred_fallthru
          _
        // Predicated region
        $region17: #{_lambda_.1} parent=11 // pred_check
          %p476 = pneg %p96
        $region18: #{_lambda_.1} parent=11 // pred_check_branch
          %478 = sbr.rel (%p476) target = $region20
        $region19: #{_lambda_.1} parent=11 // pred_region
          _
        $region20: #{_lambda_.1} parent=11 // pred_fallthru
          _
        // Predicated region
        $region21: #{_lambda_.1} parent=11 // pred_check
          %p479 = pneg %p117
        $region22: #{_lambda_.1} parent=11 // pred_check_branch
          %481 = sbr.rel (%p479) target = $region24
        $region23: #{_lambda_.1} parent=11 // pred_region
          _
        $region24: #{_lambda_.1} parent=11 // pred_fallthru
          _
        // Predicated region
        $region25: #{_lambda_.1} parent=11 // pred_check
          %p482 = pneg %p138
        $region26: #{_lambda_.1} parent=11 // pred_check_branch
          %484 = sbr.rel (%p482) target = $region28
        $region27: #{_lambda_.1} parent=11 // pred_region
          _
        $region28: #{_lambda_.1} parent=11 // pred_fallthru
          _
        // Predicated region
        $region29: #{_lambda_.1} parent=11 // pred_check
          %p485 = pneg %p159
        $region30: #{_lambda_.1} parent=11 // pred_check_branch
          %487 = sbr.rel (%p485) target = $region32
        $region31: #{_lambda_.1} parent=11 // pred_region
          _
        $region32: #{_lambda_.1} parent=11 // pred_fallthru
          _
        // Predicated region
        $region33: #{_lambda_.1} parent=11 // pred_check
          %p488 = pneg %p180
        $region34: #{_lambda_.1} parent=11 // pred_check_branch
          %490 = sbr.rel (%p488) target = $region36
        $region35: #{_lambda_.1} parent=11 // pred_region
          _
        $region36: #{_lambda_.1} parent=11 // pred_fallthru
          _
        // Predicated region
        $region37: #{_lambda_.1} parent=11 // pred_check
          %p491 = pneg %p201
        $region38: #{_lambda_.1} parent=11 // pred_check_branch
          %493 = sbr.rel (%p491) target = $region40
        $region39: #{_lambda_.1} parent=11 // pred_region
          _
        $region40: #{_lambda_.1} parent=11 // pred_fallthru
          _
        // Predicated region
        $region41: #{_lambda_.1} parent=11 // pred_check
          %p494 = pneg %p222
        $region42: #{_lambda_.1} parent=11 // pred_check_branch
          %496 = sbr.rel (%p494) target = $region44
        $region43: #{_lambda_.1} parent=11 // pred_region
          _
        $region44: #{_lambda_.1} parent=11 // pred_fallthru
          _
        // Predicated region
        $region45: #{_lambda_.1} parent=11 // pred_check
          %p497 = pneg %p243
        $region46: #{_lambda_.1} parent=11 // pred_check_branch
          %499 = sbr.rel (%p497) target = $region48
        $region47: #{_lambda_.1} parent=11 // pred_region
          _
        $region48: #{_lambda_.1} parent=11 // pred_fallthru
          _
        // Predicated region
        $region49: #{_lambda_.1} parent=11 // pred_check
          %p500 = pneg %p264
        $region50: #{_lambda_.1} parent=11 // pred_check_branch
          %502 = sbr.rel (%p500) target = $region52
        $region51: #{_lambda_.1} parent=11 // pred_region
          _
        $region52: #{_lambda_.1} parent=11 // pred_fallthru
          _
        // Predicated region
        $region53: #{_lambda_.1} parent=11 // pred_check
          %p503 = pneg %p285
        $region54: #{_lambda_.1} parent=11 // pred_check_branch
          %505 = sbr.rel (%p503) target = $region56
        $region55: #{_lambda_.1} parent=11 // pred_region
          _
        $region56: #{_lambda_.1} parent=11 // pred_fallthru
          _
        // Predicated region
        $region57: #{_lambda_.1} parent=11 // pred_check
          %p506 = pneg %p306
        $region58: #{_lambda_.1} parent=11 // pred_check_branch
          %508 = sbr.rel (%p506) target = $region60
        $region59: #{_lambda_.1} parent=11 // pred_region
          _
        $region60: #{_lambda_.1} parent=11 // pred_fallthru
          _
        // Predicated region
        $region61: #{_lambda_.1} parent=11 // pred_check
          %p509 = pneg %p327
        $region62: #{_lambda_.1} parent=11 // pred_check_branch
          %511 = sbr.rel (%p509) target = $region64
        $region63: #{_lambda_.1} parent=11 // pred_region
          _
        $region64: #{_lambda_.1} parent=11 // pred_fallthru
          _
        // Predicated region
        $region65: #{_lambda_.1} parent=11 // pred_check
          %p512 = pneg %p348
        $region66: #{_lambda_.1} parent=11 // pred_check_branch
          %514 = sbr.rel (%p512) target = $region68
        $region67: #{_lambda_.1} parent=11 // pred_region
          _
        $region68: #{_lambda_.1} parent=11 // pred_fallthru
          _
        // Predicated region
        $region69: #{_lambda_.1} parent=11 // pred_check
          %p515 = pneg %p369
        $region70: #{_lambda_.1} parent=11 // pred_check_branch
          %517 = sbr.rel (%p515) target = $region72
        $region71: #{_lambda_.1} parent=11 // pred_region
          _
        $region72: #{_lambda_.1} parent=11 // pred_fallthru
          _
        // Predicated region
        $region73: #{_lambda_.1} parent=11 // pred_check
          %p518 = pneg %p390
        $region74: #{_lambda_.1} parent=11 // pred_check_branch
          %520 = sbr.rel (%p518) target = $region76
        $region75: #{_lambda_.1} parent=11 // pred_region
          _
        $region76: #{_lambda_.1} parent=11 // pred_fallthru
          _
        // Predicated region
        $region77: #{_lambda_.1} parent=11 // pred_check
          %p521 = pneg %p411
        $region78: #{_lambda_.1} parent=11 // pred_check_branch
          %523 = sbr.rel (%p521) target = $region80
        $region79: #{_lambda_.1} parent=11 // pred_region
          _
        $region80: #{_lambda_.1} parent=11 // pred_fallthru
          _
        // Predicated region
        $region81: #{_lambda_.1} parent=11 // pred_check
          %p524 = pneg %p432
        $region82: #{_lambda_.1} parent=11 // pred_check_branch
          %526 = sbr.rel (%p524) target = $region84
        $region83: #{_lambda_.1} parent=11 // pred_region
          _
        $region84: #{_lambda_.1} parent=11 // pred_fallthru
          _
      $region12: #{_lambda_.1} parent=5 // pred_fallthru
        _
      %p527 = scmp.lt.s32.totalorder %s28, 2
      // Predicated region
      $region85: #{_lambda_.1} parent=5 // pred_check
        %p528 = pneg %p527
      $region86: #{_lambda_.1} parent=5 // pred_check_branch
        %530 = sbr.rel (%p528) target = $region88
      $region87: #{_lambda_.1} parent=5 // pred_region
        // Predicated region
        $region89: #{_lambda_.1} parent=87 // pred_check
          %p531 = pneg %p48
        $region90: #{_lambda_.1} parent=87 // pred_check_branch
          %533 = sbr.rel (%p531) target = $region92
        $region91: #{_lambda_.1} parent=87 // pred_region
          %p534 = scmp.lt.s32.totalorder %s28, 1
          %s535 = scalar_select %p534, %s28, 1
          %s536 = smul.addr %s535, 32
          %s537 = smul.addr %s536, 4
          %s538 = scalar_lea.vmem %s0, %s537
        $region92: #{_lambda_.1} parent=87 // pred_fallthru
          _
      $region88: #{_lambda_.1} parent=5 // pred_fallthru
        _
      %p539 = scmp.le.s32.totalorder 1, %s28
      %p540 = scmp.lt.s32.totalorder %s28, 3
      %p541 = pnand %p539, %p540
      %p542 = pneg %p541
      // Predicated region
      $region93: #{_lambda_.1} parent=5 // pred_check
        _
      $region94: #{_lambda_.1} parent=5 // pred_check_branch
        %544 = sbr.rel (%p541) target = $region96
      $region95: #{_lambda_.1} parent=5 // pred_region
        %s545 = ssub.s32 %s28, 1
        %p546 = scmp.lt.s32.totalorder %s33, 1
        %s547 = scalar_select %p546, %s33, 1
        %s548 = smul.addr %s547, 32
        %s549 = smul.addr %s548, 4
        %s550 = scalar_lea.vmem %s0, %s549
        %p551 = pneg %p54
        %p552 = pneg %p51
        %p553 = pneg %p75
        %p554 = pneg %p72
        %p555 = pneg %p96
        %p556 = pneg %p93
        %p557 = pneg %p117
        %p558 = pneg %p114
        %p559 = pneg %p138
        %p560 = pneg %p135
        %p561 = pneg %p159
        %p562 = pneg %p156
        %p563 = pneg %p180
        %p564 = pneg %p177
        %p565 = pneg %p201
        %p566 = pneg %p198
        %p567 = pneg %p222
        %p568 = pneg %p219
        %p569 = pneg %p243
        %p570 = pneg %p240
        %p571 = pneg %p264
        %p572 = pneg %p261
        %p573 = pneg %p285
        %p574 = pneg %p282
        %p575 = pneg %p306
        %p576 = pneg %p303
        %p577 = pneg %p327
        %p578 = pneg %p324
        %p579 = pneg %p348
        %p580 = pneg %p345
        %p581 = pneg %p369
        %p582 = pneg %p366
        %p583 = pneg %p390
        %p584 = pneg %p387
        %p585 = pneg %p411
        %p586 = pneg %p408
        %p587 = pneg %p432
        %p588 = pneg %p429
        %p589 = pneg %p458
        %p590 = pneg %p455
        %s591 = sand.u32 %s445, 1
        %s592 = scalar_lea.sflag [#allocation3], %s591
        %s593 = sand.u32 %s445, 1
        %s594 = smul.addr %s593, 256
        %s595 = scalar_lea.vmem [#allocation2], %s594
        %p596 = scmp.lt.s32.totalorder %s33, 1
        %s597 = scalar_select %p596, %s33, 1
        %s598 = smul.addr %s597, 32
        %s599 = smul.addr %s598, 4
        %s600 = scalar_lea.vmem %s0, %s599
        %v602 = vld [vmem:[%s600] sm:$0xf]
        %v603 = vld [vmem:[%s600 + $0x4] sm:$0xf]
        %v604 = vld [vmem:[%s600 + $0x8] sm:$0xf]
        %v605 = vld [vmem:[%s600 + $0xc] sm:$0xf]
        %v606 = vld [vmem:[%s600 + $0x10] sm:$0xf]
        %v607 = vld [vmem:[%s600 + $0x14] sm:$0xf]
        %v608 = vld [vmem:[%s600 + $0x18] sm:$0xf]
        %v609 = vld [vmem:[%s600 + $0x1c] sm:$0xf]
        %v610 = vld [vmem:[%s600 + $0x20] sm:$0xf]
        %v611 = vld [vmem:[%s600 + $0x24] sm:$0xf]
        %v612 = vld [vmem:[%s600 + $0x28] sm:$0xf]
        %v613 = vld [vmem:[%s600 + $0x2c] sm:$0xf]
        %v614 = vld [vmem:[%s600 + $0x30] sm:$0xf]
        %v615 = vld [vmem:[%s600 + $0x34] sm:$0xf]
        %v616 = vld [vmem:[%s600 + $0x38] sm:$0xf]
        %v617 = vld [vmem:[%s600 + $0x3c] sm:$0xf]
        %v618 = vld [vmem:[%s600 + $0x40] sm:$0xf]
        %v619 = vld [vmem:[%s600 + $0x44] sm:$0xf]
        %v620 = vld [vmem:[%s600 + $0x48] sm:$0xf]
        %v621 = vld [vmem:[%s600 + $0x4c] sm:$0xf]
        %v622 = vld [vmem:[%s600 + $0x50] sm:$0xf]
        %v623 = vld [vmem:[%s600 + $0x54] sm:$0xf]
        %v624 = vld [vmem:[%s600 + $0x58] sm:$0xf]
        %v625 = vld [vmem:[%s600 + $0x5c] sm:$0xf]
        %v626 = vld [vmem:[%s600 + $0x60] sm:$0xf]
        %v627 = vld [vmem:[%s600 + $0x64] sm:$0xf]
        %v628 = vld [vmem:[%s600 + $0x68] sm:$0xf]
        %v629 = vld [vmem:[%s600 + $0x6c] sm:$0xf]
        %v630 = vld [vmem:[%s600 + $0x70] sm:$0xf]
        %v631 = vld [vmem:[%s600 + $0x74] sm:$0xf]
        %v632 = vld [vmem:[%s600 + $0x78] sm:$0xf]
        %v633 = vld [vmem:[%s600 + $0x7c] sm:$0xf]
        %v634 = vld [vmem:[%s1] sm:$0xf]
        %v635 = vld [vmem:[%s1 + $0x4] sm:$0xf]
        %v636 = vld [vmem:[%s1 + $0x8] sm:$0xf]
        %v637 = vld [vmem:[%s1 + $0xc] sm:$0xf]
        %v638 = vld [vmem:[%s1 + $0x10] sm:$0xf]
        %v639 = vld [vmem:[%s1 + $0x14] sm:$0xf]
        %v640 = vld [vmem:[%s1 + $0x18] sm:$0xf]
        %v641 = vld [vmem:[%s1 + $0x1c] sm:$0xf]
        %v642 = vld [vmem:[%s1 + $0x20] sm:$0xf]
        %v643 = vld [vmem:[%s1 + $0x24] sm:$0xf]
        %v644 = vld [vmem:[%s1 + $0x28] sm:$0xf]
        %v645 = vld [vmem:[%s1 + $0x2c] sm:$0xf]
        %v646 = vld [vmem:[%s1 + $0x30] sm:$0xf]
        %v647 = vld [vmem:[%s1 + $0x34] sm:$0xf]
        %v648 = vld [vmem:[%s1 + $0x38] sm:$0xf]
        %v649 = vld [vmem:[%s1 + $0x3c] sm:$0xf]
        %v650 = vld [vmem:[%s2] sm:$0x1]
        %v652 = vlaneseq
        %v653 = vshrl.u32 %v652, 7
        %v654 = vsub.s32 0, %v653
        %v655 = vrot.slane %v650, %v654
        %v689 = vunpack.c.l.b16 %v602
        %v690 = vunpack.c.l.b16 %v603
        %v691 = vunpack.c.l.b16 %v604
        %v692 = vunpack.c.l.b16 %v605
        %v693 = vunpack.c.l.b16 %v606
        %v694 = vunpack.c.l.b16 %v607
        %v695 = vunpack.c.l.b16 %v608
        %v696 = vunpack.c.l.b16 %v609
        %v697 = vunpack.c.l.b16 %v610
        %v698 = vunpack.c.l.b16 %v611
        %v699 = vunpack.c.l.b16 %v612
        %v700 = vunpack.c.l.b16 %v613
        %v701 = vunpack.c.l.b16 %v614
        %v702 = vunpack.c.l.b16 %v615
        %v703 = vunpack.c.l.b16 %v616
        %v704 = vunpack.c.l.b16 %v617
        %v705 = vunpack.c.l.b16 %v618
        %v706 = vunpack.c.l.b16 %v619
        %v707 = vunpack.c.l.b16 %v620
        %v708 = vunpack.c.l.b16 %v621
        %v709 = vunpack.c.l.b16 %v622
        %v710 = vunpack.c.l.b16 %v623
        %v711 = vunpack.c.l.b16 %v624
        %v712 = vunpack.c.l.b16 %v625
        %v713 = vunpack.c.l.b16 %v626
        %v714 = vunpack.c.l.b16 %v627
        %v715 = vunpack.c.l.b16 %v628
        %v716 = vunpack.c.l.b16 %v629
        %v717 = vunpack.c.l.b16 %v630
        %v718 = vunpack.c.l.b16 %v631
        %v719 = vunpack.c.l.b16 %v632
        %v720 = vunpack.c.l.b16 %v633
        %v721 = vpack.c.b16 %v690, %v689
        %v722 = vpack.c.b16 %v692, %v691
        %v723 = vpack.c.b16 %v694, %v693
        %v724 = vpack.c.b16 %v696, %v695
        %v725 = vpack.c.b16 %v698, %v697
        %v726 = vpack.c.b16 %v700, %v699
        %v727 = vpack.c.b16 %v702, %v701
        %v728 = vpack.c.b16 %v704, %v703
        %v729 = vpack.c.b16 %v706, %v705
        %v730 = vpack.c.b16 %v708, %v707
        %v731 = vpack.c.b16 %v710, %v709
        %v732 = vpack.c.b16 %v712, %v711
        %v733 = vpack.c.b16 %v714, %v713
        %v734 = vpack.c.b16 %v716, %v715
        %v735 = vpack.c.b16 %v718, %v717
        %v736 = vpack.c.b16 %v720, %v719
        %v769 = vunpack.c.l.b16 %v634
        %v770 = vunpack.c.l.b16 %v635
        %v771 = vunpack.c.l.b16 %v636
        %v772 = vunpack.c.l.b16 %v637
        %v773 = vunpack.c.l.b16 %v638
        %v774 = vunpack.c.l.b16 %v639
        %v775 = vunpack.c.l.b16 %v640
        %v776 = vunpack.c.l.b16 %v641
        %v777 = vunpack.c.l.b16 %v642
        %v778 = vunpack.c.l.b16 %v643
        %v779 = vunpack.c.l.b16 %v644
        %v780 = vunpack.c.l.b16 %v645
        %v781 = vunpack.c.l.b16 %v646
        %v782 = vunpack.c.l.b16 %v647
        %v783 = vunpack.c.l.b16 %v648
        %v784 = vunpack.c.l.b16 %v649
        %v785 = vpack.c.b16 %v770, %v769
        %v786 = vpack.c.b16 %v772, %v771
        %v787 = vpack.c.b16 %v774, %v773
        %v788 = vpack.c.b16 %v776, %v775
        %v789 = vpack.c.b16 %v778, %v777
        %v790 = vpack.c.b16 %v780, %v779
        %v791 = vpack.c.b16 %v782, %v781
        %v792 = vpack.c.b16 %v784, %v783
        %801 = vmatprep.subr.bf16.mxu0 0
        %802 = vmatpush1.bf16.msra.mxu0 %v785
        %803 = vmatprep.subr.bf16.mxu0 0
        %804 = vmatpush1.bf16.msra.mxu0 %v786
        %805 = vmatprep.subr.bf16.mxu0 0
        %806 = vmatpush1.bf16.msra.mxu0 %v787
        %807 = vmatprep.subr.bf16.mxu0 0
        %808 = vmatpush1.bf16.msra.mxu0 %v788
        %809 = vmatprep.subr.bf16.mxu0 0
        %810 = vmatpush1.bf16.msra.mxu0 %v789
        %811 = vmatprep.subr.bf16.mxu0 0
        %812 = vmatpush1.bf16.msra.mxu0 %v790
        %813 = vmatprep.subr.bf16.mxu0 0
        %814 = vmatpush1.bf16.msra.mxu0 %v791
        %815 = vmatprep.subr.bf16.mxu0 0
        %816 = vmatpush1.bf16.msra.mxu0 %v792
        %817 = vmatprep.subr.bf16.mxu0 0
        %818 = vmatpush1.bf16.msra.mxu0 0
        %819 = vmatprep.subr.bf16.mxu0 0
        %820 = vmatpush1.bf16.msra.mxu0 0
        %821 = vmatprep.subr.bf16.mxu0 0
        %822 = vmatpush1.bf16.msra.mxu0 0
        %823 = vmatprep.subr.bf16.mxu0 0
        %824 = vmatpush1.bf16.msra.mxu0 0
        %825 = vmatprep.subr.bf16.mxu0 0
        %826 = vmatpush1.bf16.msra.mxu0 0
        %827 = vmatprep.subr.bf16.mxu0 0
        %828 = vmatpush1.bf16.msra.mxu0 0
        %829 = vmatprep.subr.bf16.mxu0 0
        %830 = vmatpush1.bf16.msra.mxu0 0
        %831 = vmatprep.subr.bf16.mxu0 0
        %832 = vmatpush1.bf16.msra.mxu0 0
        %833 = vmatprep.mubr.bf16.mxu0 0
        %834 = vmatmul.mubr.bf16.gmra.mrb[0].mxu0 %v721
        %v835 = vpop.f32.mrb[0].mxu0
        %v836 = vadd.f32 %v655, %v835
        %v837 = vpop.f32.mrb[0].mxu0
        %v838 = vpop.f32.mrb[0].mxu0
        %v839 = vadd.f32 %v655, %v838
        %v840 = vpop.f32.mrb[0].mxu0
        %841 = vmatprep.mubr.bf16.mxu0 0
        %842 = vmatmul.mubr.bf16.gmra.mrb[0].mxu0 %v722
        %v843 = vpop.f32.mrb[0].mxu0
        %v844 = vadd.f32 %v655, %v843
        %v845 = vpop.f32.mrb[0].mxu0
        %v846 = vpop.f32.mrb[0].mxu0
        %v847 = vadd.f32 %v655, %v846
        %v848 = vpop.f32.mrb[0].mxu0
        %849 = vmatprep.mubr.bf16.mxu0 0
        %850 = vmatmul.mubr.bf16.gmra.mrb[0].mxu0 %v723
        %v851 = vpop.f32.mrb[0].mxu0
        %v852 = vadd.f32 %v655, %v851
        %v853 = vpop.f32.mrb[0].mxu0
        %v854 = vpop.f32.mrb[0].mxu0
        %v855 = vadd.f32 %v655, %v854
        %v856 = vpop.f32.mrb[0].mxu0
        %857 = vmatprep.mubr.bf16.mxu0 0
        %858 = vmatmul.mubr.bf16.gmra.mrb[0].mxu0 %v724
        %v859 = vpop.f32.mrb[0].mxu0
        %v860 = vadd.f32 %v655, %v859
        %v861 = vpop.f32.mrb[0].mxu0
        %v862 = vpop.f32.mrb[0].mxu0
        %v863 = vadd.f32 %v655, %v862
        %v864 = vpop.f32.mrb[0].mxu0
        %865 = vmatprep.mubr.bf16.mxu0 0
        %866 = vmatmul.mubr.bf16.gmra.mrb[0].mxu0 %v725
        %v867 = vpop.f32.mrb[0].mxu0
        %v868 = vadd.f32 %v655, %v867
        %v869 = vpop.f32.mrb[0].mxu0
        %v870 = vpop.f32.mrb[0].mxu0
        %v871 = vadd.f32 %v655, %v870
        %v872 = vpop.f32.mrb[0].mxu0
        %873 = vmatprep.mubr.bf16.mxu0 0
        %874 = vmatmul.mubr.bf16.gmra.mrb[0].mxu0 %v726
        %v875 = vpop.f32.mrb[0].mxu0
        %v876 = vadd.f32 %v655, %v875
        %v877 = vpop.f32.mrb[0].mxu0
        %v878 = vpop.f32.mrb[0].mxu0
        %v879 = vadd.f32 %v655, %v878
        %v880 = vpop.f32.mrb[0].mxu0
        %881 = vmatprep.mubr.bf16.mxu0 0
        %882 = vmatmul.mubr.bf16.gmra.mrb[0].mxu0 %v727
        %v883 = vpop.f32.mrb[0].mxu0
        %v884 = vadd.f32 %v655, %v883
        %v885 = vpop.f32.mrb[0].mxu0
        %v886 = vpop.f32.mrb[0].mxu0
        %v887 = vadd.f32 %v655, %v886
        %v888 = vpop.f32.mrb[0].mxu0
        %889 = vmatprep.mubr.bf16.mxu0 0
        %890 = vmatmul.mubr.bf16.gmra.mrb[0].mxu0 %v728
        %v891 = vpop.f32.mrb[0].mxu0
        %v892 = vadd.f32 %v655, %v891
        %v893 = vpop.f32.mrb[0].mxu0
        %v894 = vpop.f32.mrb[0].mxu0
        %v895 = vadd.f32 %v655, %v894
        %v896 = vpop.f32.mrb[0].mxu0
        %897 = vmatprep.mubr.bf16.mxu0 0
        %898 = vmatmul.mubr.bf16.gmra.mrb[0].mxu0 %v729
        %v899 = vpop.f32.mrb[0].mxu0
        %v900 = vadd.f32 %v655, %v899
        %v901 = vpop.f32.mrb[0].mxu0
        %v902 = vpop.f32.mrb[0].mxu0
        %v903 = vadd.f32 %v655, %v902
        %v904 = vpop.f32.mrb[0].mxu0
        %905 = vmatprep.mubr.bf16.mxu0 0
        %906 = vmatmul.mubr.bf16.gmra.mrb[0].mxu0 %v730
        %v907 = vpop.f32.mrb[0].mxu0
        %v908 = vadd.f32 %v655, %v907
        %v909 = vpop.f32.mrb[0].mxu0
        %v910 = vpop.f32.mrb[0].mxu0
        %v911 = vadd.f32 %v655, %v910
        %v912 = vpop.f32.mrb[0].mxu0
        %913 = vmatprep.mubr.bf16.mxu0 0
        %914 = vmatmul.mubr.bf16.gmra.mrb[0].mxu0 %v731
        %v915 = vpop.f32.mrb[0].mxu0
        %v916 = vadd.f32 %v655, %v915
        %v917 = vpop.f32.mrb[0].mxu0
        %v918 = vpop.f32.mrb[0].mxu0
        %v919 = vadd.f32 %v655, %v918
        %v920 = vpop.f32.mrb[0].mxu0
        %921 = vmatprep.mubr.bf16.mxu0 0
        %922 = vmatmul.mubr.bf16.gmra.mrb[0].mxu0 %v732
        %v923 = vpop.f32.mrb[0].mxu0
        %v924 = vadd.f32 %v655, %v923
        %v925 = vpop.f32.mrb[0].mxu0
        %v926 = vpop.f32.mrb[0].mxu0
        %v927 = vadd.f32 %v655, %v926
        %v928 = vpop.f32.mrb[0].mxu0
        %929 = vmatprep.mubr.bf16.mxu0 0
        %930 = vmatmul.mubr.bf16.gmra.mrb[0].mxu0 %v733
        %v931 = vpop.f32.mrb[0].mxu0
        %v932 = vadd.f32 %v655, %v931
        %v933 = vpop.f32.mrb[0].mxu0
        %v934 = vpop.f32.mrb[0].mxu0
        %v935 = vadd.f32 %v655, %v934
        %v936 = vpop.f32.mrb[0].mxu0
        %937 = vmatprep.mubr.bf16.mxu0 0
        %938 = vmatmul.mubr.bf16.gmra.mrb[0].mxu0 %v734
        %v939 = vpop.f32.mrb[0].mxu0
        %v940 = vadd.f32 %v655, %v939
        %v941 = vpop.f32.mrb[0].mxu0
        %v942 = vpop.f32.mrb[0].mxu0
        %v943 = vadd.f32 %v655, %v942
        %v944 = vpop.f32.mrb[0].mxu0
        %945 = vmatprep.mubr.bf16.mxu0 0
        %946 = vmatmul.mubr.bf16.gmra.mrb[0].mxu0 %v735
        %v947 = vpop.f32.mrb[0].mxu0
        %v948 = vadd.f32 %v655, %v947
        %v949 = vpop.f32.mrb[0].mxu0
        %v950 = vpop.f32.mrb[0].mxu0
        %v951 = vadd.f32 %v655, %v950
        %v952 = vpop.f32.mrb[0].mxu0
        %953 = vmatprep.mubr.bf16.mxu0 0
        %954 = vmatmul.mubr.bf16.gmra.mrb[0].mxu0 %v736
        %v955 = vpop.f32.mrb[0].mxu0
        %v956 = vadd.f32 %v655, %v955
        %v957 = vpop.f32.mrb[0].mxu0
        %v958 = vpop.f32.mrb[0].mxu0
        %v959 = vadd.f32 %v655, %v958
        %v960 = vpop.f32.mrb[0].mxu0
        %961 = vdwg.mxu0
        %v962 = vsub.f32 0.0, %v836
        %v963 = vsub.f32 0.0, %v839
        %v964 = vsub.f32 0.0, %v844
        %v965 = vsub.f32 0.0, %v847
        %v966 = vsub.f32 0.0, %v852
        %v967 = vsub.f32 0.0, %v855
        %v968 = vsub.f32 0.0, %v860
        %v969 = vsub.f32 0.0, %v863
        %v970 = vsub.f32 0.0, %v868
        %v971 = vsub.f32 0.0, %v871
        %v972 = vsub.f32 0.0, %v876
        %v973 = vsub.f32 0.0, %v879
        %v974 = vsub.f32 0.0, %v884
        %v975 = vsub.f32 0.0, %v887
        %v976 = vsub.f32 0.0, %v892
        %v977 = vsub.f32 0.0, %v895
        %v978 = vsub.f32 0.0, %v900
        %v979 = vsub.f32 0.0, %v903
        %v980 = vsub.f32 0.0, %v908
        %v981 = vsub.f32 0.0, %v911
        %v982 = vsub.f32 0.0, %v916
        %v983 = vsub.f32 0.0, %v919
        %v984 = vsub.f32 0.0, %v924
        %v985 = vsub.f32 0.0, %v927
        %v986 = vsub.f32 0.0, %v932
        %v987 = vsub.f32 0.0, %v935
        %v988 = vsub.f32 0.0, %v940
        %v989 = vsub.f32 0.0, %v943
        %v990 = vsub.f32 0.0, %v948
        %v991 = vsub.f32 0.0, %v951
        %v992 = vsub.f32 0.0, %v956
        %v993 = vsub.f32 0.0, %v959
        %v994 = vmul.f32 %v962, 1.442695
        %v995 = vpow.pop %v994
        %v996 = vmul.f32 %v963, 1.442695
        %v997 = vpow.pop %v996
        %v998 = vmul.f32 %v964, 1.442695
        %v999 = vpow.pop %v998
        %v1000 = vmul.f32 %v965, 1.442695
        %v1001 = vpow.pop %v1000
        %v1002 = vmul.f32 %v966, 1.442695
        %v1003 = vpow.pop %v1002
        %v1004 = vmul.f32 %v967, 1.442695
        %v1005 = vpow.pop %v1004
        %v1006 = vmul.f32 %v968, 1.442695
        %v1007 = vpow.pop %v1006
        %v1008 = vmul.f32 %v969, 1.442695
        %v1009 = vpow.pop %v1008
        %v1010 = vmul.f32 %v970, 1.442695
        %v1011 = vpow.pop %v1010
        %v1012 = vmul.f32 %v971, 1.442695
        %v1013 = vpow.pop %v1012
        %v1014 = vmul.f32 %v972, 1.442695
        %v1015 = vpow.pop %v1014
        %v1016 = vmul.f32 %v973, 1.442695
        %v1017 = vpow.pop %v1016
        %v1018 = vmul.f32 %v974, 1.442695
        %v1019 = vpow.pop %v1018
        %v1020 = vmul.f32 %v975, 1.442695
        %v1021 = vpow.pop %v1020
        %v1022 = vmul.f32 %v976, 1.442695
        %v1023 = vpow.pop %v1022
        %v1024 = vmul.f32 %v977, 1.442695
        %v1025 = vpow.pop %v1024
        %v1026 = vmul.f32 %v978, 1.442695
        %v1027 = vpow.pop %v1026
        %v1028 = vmul.f32 %v979, 1.442695
        %v1029 = vpow.pop %v1028
        %v1030 = vmul.f32 %v980, 1.442695
        %v1031 = vpow.pop %v1030
        %v1032 = vmul.f32 %v981, 1.442695
        %v1033 = vpow.pop %v1032
        %v1034 = vmul.f32 %v982, 1.442695
        %v1035 = vpow.pop %v1034
        %v1036 = vmul.f32 %v983, 1.442695
        %v1037 = vpow.pop %v1036
        %v1038 = vmul.f32 %v984, 1.442695
        %v1039 = vpow.pop %v1038
        %v1040 = vmul.f32 %v985, 1.442695
        %v1041 = vpow.pop %v1040
        %v1042 = vmul.f32 %v986, 1.442695
        %v1043 = vpow.pop %v1042
        %v1044 = vmul.f32 %v987, 1.442695
        %v1045 = vpow.pop %v1044
        %v1046 = vmul.f32 %v988, 1.442695
        %v1047 = vpow.pop %v1046
        %v1048 = vmul.f32 %v989, 1.442695
        %v1049 = vpow.pop %v1048
        %v1050 = vmul.f32 %v990, 1.442695
        %v1051 = vpow.pop %v1050
        %v1052 = vmul.f32 %v991, 1.442695
        %v1053 = vpow.pop %v1052
        %v1054 = vmul.f32 %v992, 1.442695
        %v1055 = vpow.pop %v1054
        %v1056 = vmul.f32 %v993, 1.442695
        %v1057 = vpow.pop %v1056
        %v1058 = vadd.f32 %v995, 1.0
        %v1059 = vadd.f32 %v997, 1.0
        %v1060 = vadd.f32 %v999, 1.0
        %v1061 = vadd.f32 %v1001, 1.0
        %v1062 = vadd.f32 %v1003, 1.0
        %v1063 = vadd.f32 %v1005, 1.0
        %v1064 = vadd.f32 %v1007, 1.0
        %v1065 = vadd.f32 %v1009, 1.0
        %v1066 = vadd.f32 %v1011, 1.0
        %v1067 = vadd.f32 %v1013, 1.0
        %v1068 = vadd.f32 %v1015, 1.0
        %v1069 = vadd.f32 %v1017, 1.0
        %v1070 = vadd.f32 %v1019, 1.0
        %v1071 = vadd.f32 %v1021, 1.0
        %v1072 = vadd.f32 %v1023, 1.0
        %v1073 = vadd.f32 %v1025, 1.0
        %v1074 = vadd.f32 %v1027, 1.0
        %v1075 = vadd.f32 %v1029, 1.0
        %v1076 = vadd.f32 %v1031, 1.0
        %v1077 = vadd.f32 %v1033, 1.0
        %v1078 = vadd.f32 %v1035, 1.0
        %v1079 = vadd.f32 %v1037, 1.0
        %v1080 = vadd.f32 %v1039, 1.0
        %v1081 = vadd.f32 %v1041, 1.0
        %v1082 = vadd.f32 %v1043, 1.0
        %v1083 = vadd.f32 %v1045, 1.0
        %v1084 = vadd.f32 %v1047, 1.0
        %v1085 = vadd.f32 %v1049, 1.0
        %v1086 = vadd.f32 %v1051, 1.0
        %v1087 = vadd.f32 %v1053, 1.0
        %v1088 = vadd.f32 %v1055, 1.0
        %v1089 = vadd.f32 %v1057, 1.0
        %v1090 = vrcp.pop %v1058
        %v1091 = vmul.f32 1.0, %v1090
        %v1092 = vrcp.pop %v1059
        %v1093 = vmul.f32 1.0, %v1092
        %v1094 = vrcp.pop %v1060
        %v1095 = vmul.f32 1.0, %v1094
        %v1096 = vrcp.pop %v1061
        %v1097 = vmul.f32 1.0, %v1096
        %v1098 = vrcp.pop %v1062
        %v1099 = vmul.f32 1.0, %v1098
        %v1100 = vrcp.pop %v1063
        %v1101 = vmul.f32 1.0, %v1100
        %v1102 = vrcp.pop %v1064
        %v1103 = vmul.f32 1.0, %v1102
        %v1104 = vrcp.pop %v1065
        %v1105 = vmul.f32 1.0, %v1104
        %v1106 = vrcp.pop %v1066
        %v1107 = vmul.f32 1.0, %v1106
        %v1108 = vrcp.pop %v1067
        %v1109 = vmul.f32 1.0, %v1108
        %v1110 = vrcp.pop %v1068
        %v1111 = vmul.f32 1.0, %v1110
        %v1112 = vrcp.pop %v1069
        %v1113 = vmul.f32 1.0, %v1112
        %v1114 = vrcp.pop %v1070
        %v1115 = vmul.f32 1.0, %v1114
        %v1116 = vrcp.pop %v1071
        %v1117 = vmul.f32 1.0, %v1116
        %v1118 = vrcp.pop %v1072
        %v1119 = vmul.f32 1.0, %v1118
        %v1120 = vrcp.pop %v1073
        %v1121 = vmul.f32 1.0, %v1120
        %v1122 = vrcp.pop %v1074
        %v1123 = vmul.f32 1.0, %v1122
        %v1124 = vrcp.pop %v1075
        %v1125 = vmul.f32 1.0, %v1124
        %v1126 = vrcp.pop %v1076
        %v1127 = vmul.f32 1.0, %v1126
        %v1128 = vrcp.pop %v1077
        %v1129 = vmul.f32 1.0, %v1128
        %v1130 = vrcp.pop %v1078
        %v1131 = vmul.f32 1.0, %v1130
        %v1132 = vrcp.pop %v1079
        %v1133 = vmul.f32 1.0, %v1132
        %v1134 = vrcp.pop %v1080
        %v1135 = vmul.f32 1.0, %v1134
        %v1136 = vrcp.pop %v1081
        %v1137 = vmul.f32 1.0, %v1136
        %v1138 = vrcp.pop %v1082
        %v1139 = vmul.f32 1.0, %v1138
        %v1140 = vrcp.pop %v1083
        %v1141 = vmul.f32 1.0, %v1140
        %v1142 = vrcp.pop %v1084
        %v1143 = vmul.f32 1.0, %v1142
        %v1144 = vrcp.pop %v1085
        %v1145 = vmul.f32 1.0, %v1144
        %v1146 = vrcp.pop %v1086
        %v1147 = vmul.f32 1.0, %v1146
        %v1148 = vrcp.pop %v1087
        %v1149 = vmul.f32 1.0, %v1148
        %v1150 = vrcp.pop %v1088
        %v1151 = vmul.f32 1.0, %v1150
        %v1152 = vrcp.pop %v1089
        %v1153 = vmul.f32 1.0, %v1152
        %v1154 = vmul.f32 %v836, %v1091
        %v1155 = vmul.f32 %v839, %v1093
        %v1156 = vmul.f32 %v844, %v1095
        %v1157 = vmul.f32 %v847, %v1097
        %v1158 = vmul.f32 %v852, %v1099
        %v1159 = vmul.f32 %v855, %v1101
        %v1160 = vmul.f32 %v860, %v1103
        %v1161 = vmul.f32 %v863, %v1105
        %v1162 = vmul.f32 %v868, %v1107
        %v1163 = vmul.f32 %v871, %v1109
        %v1164 = vmul.f32 %v876, %v1111
        %v1165 = vmul.f32 %v879, %v1113
        %v1166 = vmul.f32 %v884, %v1115
        %v1167 = vmul.f32 %v887, %v1117
        %v1168 = vmul.f32 %v892, %v1119
        %v1169 = vmul.f32 %v895, %v1121
        %v1170 = vmul.f32 %v900, %v1123
        %v1171 = vmul.f32 %v903, %v1125
        %v1172 = vmul.f32 %v908, %v1127
        %v1173 = vmul.f32 %v911, %v1129
        %v1174 = vmul.f32 %v916, %v1131
        %v1175 = vmul.f32 %v919, %v1133
        %v1176 = vmul.f32 %v924, %v1135
        %v1177 = vmul.f32 %v927, %v1137
        %v1178 = vmul.f32 %v932, %v1139
        %v1179 = vmul.f32 %v935, %v1141
        %v1180 = vmul.f32 %v940, %v1143
        %v1181 = vmul.f32 %v943, %v1145
        %v1182 = vmul.f32 %v948, %v1147
        %v1183 = vmul.f32 %v951, %v1149
        %v1184 = vmul.f32 %v956, %v1151
        %v1185 = vmul.f32 %v959, %v1153
        %v1186 = vpack.c.bf16 %v1155, %v1154
        %v1187 = vpack.c.bf16 %v1157, %v1156
        %v1188 = vpack.c.bf16 %v1159, %v1158
        %v1189 = vpack.c.bf16 %v1161, %v1160
        %v1190 = vpack.c.bf16 %v1163, %v1162
        %v1191 = vpack.c.bf16 %v1165, %v1164
        %v1192 = vpack.c.bf16 %v1167, %v1166
        %v1193 = vpack.c.bf16 %v1169, %v1168
        %v1194 = vpack.c.bf16 %v1171, %v1170
        %v1195 = vpack.c.bf16 %v1173, %v1172
        %v1196 = vpack.c.bf16 %v1175, %v1174
        %v1197 = vpack.c.bf16 %v1177, %v1176
        %v1198 = vpack.c.bf16 %v1179, %v1178
        %v1199 = vpack.c.bf16 %v1181, %v1180
        %v1200 = vpack.c.bf16 %v1183, %v1182
        %v1201 = vpack.c.bf16 %v1185, %v1184
        %v1202 = vld [vmem:[%s3] sm:$0xf]
        %v1203 = vld [vmem:[%s3 + $0x4] sm:$0xf]
        %v1204 = vld [vmem:[%s3 + $0x8] sm:$0xf]
        %v1205 = vld [vmem:[%s3 + $0xc] sm:$0xf]
        %v1206 = vld [vmem:[%s3 + $0x10] sm:$0xf]
        %v1207 = vld [vmem:[%s3 + $0x14] sm:$0xf]
        %v1208 = vld [vmem:[%s3 + $0x18] sm:$0xf]
        %v1209 = vld [vmem:[%s3 + $0x1c] sm:$0xf]
        %v1210 = vld [vmem:[%s4] sm:$0x1]
        %v1212 = vlaneseq
        %v1213 = vshrl.u32 %v1212, 7
        %v1214 = vsub.s32 0, %v1213
        %v1215 = vrot.slane %v1210, %v1214
        %1233 = vrot.lane.b32.xlu0 %v1186, 64
        %v1234 = vpop.permute.xlu0 %1233
        %1235 = vrot.lane.b32.xlu0 %v1187, 64
        %v1236 = vpop.permute.xlu0 %1235
        %1237 = vrot.lane.b32.xlu0 %v1188, 64
        %v1238 = vpop.permute.xlu0 %1237
        %1239 = vrot.lane.b32.xlu0 %v1189, 64
        %v1240 = vpop.permute.xlu0 %1239
        %1241 = vrot.lane.b32.xlu0 %v1190, 64
        %v1242 = vpop.permute.xlu0 %1241
        %1243 = vrot.lane.b32.xlu0 %v1191, 64
        %v1244 = vpop.permute.xlu0 %1243
        %1245 = vrot.lane.b32.xlu0 %v1192, 64
        %v1246 = vpop.permute.xlu0 %1245
        %1247 = vrot.lane.b32.xlu0 %v1193, 64
        %v1248 = vpop.permute.xlu0 %1247
        %1249 = vrot.lane.b32.xlu0 %v1194, 64
        %v1250 = vpop.permute.xlu0 %1249
        %1251 = vrot.lane.b32.xlu0 %v1195, 64
        %v1252 = vpop.permute.xlu0 %1251
        %1253 = vrot.lane.b32.xlu0 %v1196, 64
        %v1254 = vpop.permute.xlu0 %1253
        %1255 = vrot.lane.b32.xlu0 %v1197, 64
        %v1256 = vpop.permute.xlu0 %1255
        %1257 = vrot.lane.b32.xlu0 %v1198, 64
        %v1258 = vpop.permute.xlu0 %1257
        %1259 = vrot.lane.b32.xlu0 %v1199, 64
        %v1260 = vpop.permute.xlu0 %1259
        %1261 = vrot.lane.b32.xlu0 %v1200, 64
        %v1262 = vpop.permute.xlu0 %1261
        %1263 = vrot.lane.b32.xlu0 %v1201, 64
        %v1264 = vpop.permute.xlu0 %1263
        %v1273 = vunpack.c.l.b16 %v1202
        %v1274 = vunpack.c.l.b16 %v1203
        %v1275 = vunpack.c.l.b16 %v1204
        %v1276 = vunpack.c.l.b16 %v1205
        %v1277 = vunpack.c.l.b16 %v1206
        %v1278 = vunpack.c.l.b16 %v1207
        %v1279 = vunpack.c.l.b16 %v1208
        %v1280 = vunpack.c.l.b16 %v1209
        %v1281 = vpack.c.b16 %v1274, %v1273
        %v1282 = vpack.c.b16 %v1276, %v1275
        %v1283 = vpack.c.b16 %v1278, %v1277
        %v1284 = vpack.c.b16 %v1280, %v1279
        %vm1289 = vcmask 523264
        %v1291 = vsel %vm1289, %v1234, 0
        %v1294 = vsel %vm1289, %v1236, 0
        %v1297 = vsel %vm1289, %v1238, 0
        %v1300 = vsel %vm1289, %v1240, 0
        %v1303 = vsel %vm1289, %v1242, 0
        %v1306 = vsel %vm1289, %v1244, 0
        %v1309 = vsel %vm1289, %v1246, 0
        %v1312 = vsel %vm1289, %v1248, 0
        %v1315 = vsel %vm1289, %v1250, 0
        %v1318 = vsel %vm1289, %v1252, 0
        %v1321 = vsel %vm1289, %v1254, 0
        %v1324 = vsel %vm1289, %v1256, 0
        %v1327 = vsel %vm1289, %v1258, 0
        %v1330 = vsel %vm1289, %v1260, 0
        %v1333 = vsel %vm1289, %v1262, 0
        %v1336 = vsel %vm1289, %v1264, 0
        %1338 = vmatprep.subr.bf16.mxu0 0
        %1339 = vmatpush1.bf16.msra.mxu0 %v1281
        %1340 = vmatprep.subr.bf16.mxu0 0
        %1341 = vmatpush1.bf16.msra.mxu0 %v1282
        %1342 = vmatprep.subr.bf16.mxu0 0
        %1343 = vmatpush1.bf16.msra.mxu0 %v1283
        %1344 = vmatprep.subr.bf16.mxu0 0
        %1345 = vmatpush1.bf16.msra.mxu0 %v1284
        %1346 = vmatprep.subr.bf16.mxu0 0
        %1347 = vmatpush1.bf16.msra.mxu0 0
        %1348 = vmatprep.subr.bf16.mxu0 0
        %1349 = vmatpush1.bf16.msra.mxu0 0
        %1350 = vmatprep.subr.bf16.mxu0 0
        %1351 = vmatpush1.bf16.msra.mxu0 0
        %1352 = vmatprep.subr.bf16.mxu0 0
        %1353 = vmatpush1.bf16.msra.mxu0 0
        %1354 = vmatprep.subr.bf16.mxu0 0
        %1355 = vmatpush1.bf16.msra.mxu0 0
        %1356 = vmatprep.subr.bf16.mxu0 0
        %1357 = vmatpush1.bf16.msra.mxu0 0
        %1358 = vmatprep.subr.bf16.mxu0 0
        %1359 = vmatpush1.bf16.msra.mxu0 0
        %1360 = vmatprep.subr.bf16.mxu0 0
        %1361 = vmatpush1.bf16.msra.mxu0 0
        %1362 = vmatprep.subr.bf16.mxu0 0
        %1363 = vmatpush1.bf16.msra.mxu0 0
        %1364 = vmatprep.subr.bf16.mxu0 0
        %1365 = vmatpush1.bf16.msra.mxu0 0
        %1366 = vmatprep.subr.bf16.mxu0 0
        %1367 = vmatpush1.bf16.msra.mxu0 0
        %1368 = vmatprep.subr.bf16.mxu0 0
        %1369 = vmatpush1.bf16.msra.mxu0 0
        %1370 = vmatprep.mubr.bf16.mxu0 0
        %1371 = vmatmul.mubr.bf16.gmra.mrb[0].mxu0 %v1291
        %v1372 = vpop.f32.mrb[0].mxu0
        %v1373 = vadd.f32 %v1215, %v1372
        %v1374 = vpop.f32.mrb[0].mxu0
        %v1375 = vpop.f32.mrb[0].mxu0
        %v1376 = vadd.f32 %v1215, %v1375
        %v1377 = vpop.f32.mrb[0].mxu0
        %1378 = vmatprep.mubr.bf16.mxu0 0
        %1379 = vmatmul.mubr.bf16.gmra.mrb[0].mxu0 %v1294
        %v1380 = vpop.f32.mrb[0].mxu0
        %v1381 = vadd.f32 %v1215, %v1380
        %v1382 = vpop.f32.mrb[0].mxu0
        %v1383 = vpop.f32.mrb[0].mxu0
        %v1384 = vadd.f32 %v1215, %v1383
        %v1385 = vpop.f32.mrb[0].mxu0
        %1386 = vmatprep.mubr.bf16.mxu0 0
        %1387 = vmatmul.mubr.bf16.gmra.mrb[0].mxu0 %v1297
        %v1388 = vpop.f32.mrb[0].mxu0
        %v1389 = vadd.f32 %v1215, %v1388
        %v1390 = vpop.f32.mrb[0].mxu0
        %v1391 = vpop.f32.mrb[0].mxu0
        %v1392 = vadd.f32 %v1215, %v1391
        %v1393 = vpop.f32.mrb[0].mxu0
        %1394 = vmatprep.mubr.bf16.mxu0 0
        %1395 = vmatmul.mubr.bf16.gmra.mrb[0].mxu0 %v1300
        %v1396 = vpop.f32.mrb[0].mxu0
        %v1397 = vadd.f32 %v1215, %v1396
        %v1398 = vpop.f32.mrb[0].mxu0
        %v1399 = vpop.f32.mrb[0].mxu0
        %v1400 = vadd.f32 %v1215, %v1399
        %v1401 = vpop.f32.mrb[0].mxu0
        %1402 = vmatprep.mubr.bf16.mxu0 0
        %1403 = vmatmul.mubr.bf16.gmra.mrb[0].mxu0 %v1303
        %v1404 = vpop.f32.mrb[0].mxu0
        %v1405 = vadd.f32 %v1215, %v1404
        %v1406 = vpop.f32.mrb[0].mxu0
        %v1407 = vpop.f32.mrb[0].mxu0
        %v1408 = vadd.f32 %v1215, %v1407
        %v1409 = vpop.f32.mrb[0].mxu0
        %1410 = vmatprep.mubr.bf16.mxu0 0
        %1411 = vmatmul.mubr.bf16.gmra.mrb[0].mxu0 %v1306
        %v1412 = vpop.f32.mrb[0].mxu0
        %v1413 = vadd.f32 %v1215, %v1412
        %v1414 = vpop.f32.mrb[0].mxu0
        %v1415 = vpop.f32.mrb[0].mxu0
        %v1416 = vadd.f32 %v1215, %v1415
        %v1417 = vpop.f32.mrb[0].mxu0
        %1418 = vmatprep.mubr.bf16.mxu0 0
        %1419 = vmatmul.mubr.bf16.gmra.mrb[0].mxu0 %v1309
        %v1420 = vpop.f32.mrb[0].mxu0
        %v1421 = vadd.f32 %v1215, %v1420
        %v1422 = vpop.f32.mrb[0].mxu0
        %v1423 = vpop.f32.mrb[0].mxu0
        %v1424 = vadd.f32 %v1215, %v1423
        %v1425 = vpop.f32.mrb[0].mxu0
        %1426 = vmatprep.mubr.bf16.mxu0 0
        %1427 = vmatmul.mubr.bf16.gmra.mrb[0].mxu0 %v1312
        %v1428 = vpop.f32.mrb[0].mxu0
        %v1429 = vadd.f32 %v1215, %v1428
        %v1430 = vpop.f32.mrb[0].mxu0
        %v1431 = vpop.f32.mrb[0].mxu0
        %v1432 = vadd.f32 %v1215, %v1431
        %v1433 = vpop.f32.mrb[0].mxu0
        %1434 = vmatprep.mubr.bf16.mxu0 0
        %1435 = vmatmul.mubr.bf16.gmra.mrb[0].mxu0 %v1315
        %v1436 = vpop.f32.mrb[0].mxu0
        %v1437 = vadd.f32 %v1215, %v1436
        %v1438 = vpop.f32.mrb[0].mxu0
        %v1439 = vpop.f32.mrb[0].mxu0
        %v1440 = vadd.f32 %v1215, %v1439
        %v1441 = vpop.f32.mrb[0].mxu0
        %1442 = vmatprep.mubr.bf16.mxu0 0
        %1443 = vmatmul.mubr.bf16.gmra.mrb[0].mxu0 %v1318
        %v1444 = vpop.f32.mrb[0].mxu0
        %v1445 = vadd.f32 %v1215, %v1444
        %v1446 = vpop.f32.mrb[0].mxu0
        %v1447 = vpop.f32.mrb[0].mxu0
        %v1448 = vadd.f32 %v1215, %v1447
        %v1449 = vpop.f32.mrb[0].mxu0
        %1450 = vmatprep.mubr.bf16.mxu0 0
        %1451 = vmatmul.mubr.bf16.gmra.mrb[0].mxu0 %v1321
        %v1452 = vpop.f32.mrb[0].mxu0
        %v1453 = vadd.f32 %v1215, %v1452
        %v1454 = vpop.f32.mrb[0].mxu0
        %v1455 = vpop.f32.mrb[0].mxu0
        %v1456 = vadd.f32 %v1215, %v1455
        %v1457 = vpop.f32.mrb[0].mxu0
        %1458 = vmatprep.mubr.bf16.mxu0 0
        %1459 = vmatmul.mubr.bf16.gmra.mrb[0].mxu0 %v1324
        %v1460 = vpop.f32.mrb[0].mxu0
        %v1461 = vadd.f32 %v1215, %v1460
        %v1462 = vpop.f32.mrb[0].mxu0
        %v1463 = vpop.f32.mrb[0].mxu0
        %v1464 = vadd.f32 %v1215, %v1463
        %v1465 = vpop.f32.mrb[0].mxu0
        %1466 = vmatprep.mubr.bf16.mxu0 0
        %1467 = vmatmul.mubr.bf16.gmra.mrb[0].mxu0 %v1327
        %v1468 = vpop.f32.mrb[0].mxu0
        %v1469 = vadd.f32 %v1215, %v1468
        %v1470 = vpop.f32.mrb[0].mxu0
        %v1471 = vpop.f32.mrb[0].mxu0
        %v1472 = vadd.f32 %v1215, %v1471
        %v1473 = vpop.f32.mrb[0].mxu0
        %1474 = vmatprep.mubr.bf16.mxu0 0
        %1475 = vmatmul.mubr.bf16.gmra.mrb[0].mxu0 %v1330
        %v1476 = vpop.f32.mrb[0].mxu0
        %v1477 = vadd.f32 %v1215, %v1476
        %v1478 = vpop.f32.mrb[0].mxu0
        %v1479 = vpop.f32.mrb[0].mxu0
        %v1480 = vadd.f32 %v1215, %v1479
        %v1481 = vpop.f32.mrb[0].mxu0
        %1482 = vmatprep.mubr.bf16.mxu0 0
        %1483 = vmatmul.mubr.bf16.gmra.mrb[0].mxu0 %v1333
        %v1484 = vpop.f32.mrb[0].mxu0
        %v1485 = vadd.f32 %v1215, %v1484
        %v1486 = vpop.f32.mrb[0].mxu0
        %v1487 = vpop.f32.mrb[0].mxu0
        %v1488 = vadd.f32 %v1215, %v1487
        %v1489 = vpop.f32.mrb[0].mxu0
        %1490 = vmatprep.mubr.bf16.mxu0 0
        %1491 = vmatmul.mubr.bf16.gmra.mrb[0].mxu0 %v1336
        %v1492 = vpop.f32.mrb[0].mxu0
        %v1493 = vadd.f32 %v1215, %v1492
        %v1494 = vpop.f32.mrb[0].mxu0
        %v1495 = vpop.f32.mrb[0].mxu0
        %v1496 = vadd.f32 %v1215, %v1495
        %v1497 = vpop.f32.mrb[0].mxu0
        %1498 = vdwg.mxu0
        %v1499 = vld [vmem:[%s5] sm:$0xf]
        %v1500 = vld [vmem:[%s5 + $0x4] sm:$0xf]
        %v1501 = vld [vmem:[%s5 + $0x8] sm:$0xf]
        %v1502 = vld [vmem:[%s5 + $0xc] sm:$0xf]
        %v1503 = vld [vmem:[%s5 + $0x10] sm:$0xf]
        %v1504 = vld [vmem:[%s5 + $0x14] sm:$0xf]
        %v1505 = vld [vmem:[%s5 + $0x18] sm:$0xf]
        %v1506 = vld [vmem:[%s5 + $0x1c] sm:$0xf]
        %v1507 = vld [vmem:[%s6] sm:$0x1]
        %v1509 = vlaneseq
        %v1510 = vshrl.u32 %v1509, 7
        %v1511 = vsub.s32 0, %v1510
        %v1512 = vrot.slane %v1507, %v1511
        %v1522 = vunpack.c.l.b16 %v1499
        %v1523 = vunpack.c.l.b16 %v1500
        %v1524 = vunpack.c.l.b16 %v1501
        %v1525 = vunpack.c.l.b16 %v1502
        %v1526 = vunpack.c.l.b16 %v1503
        %v1527 = vunpack.c.l.b16 %v1504
        %v1528 = vunpack.c.l.b16 %v1505
        %v1529 = vunpack.c.l.b16 %v1506
        %v1530 = vpack.c.b16 %v1523, %v1522
        %v1531 = vpack.c.b16 %v1525, %v1524
        %v1532 = vpack.c.b16 %v1527, %v1526
        %v1533 = vpack.c.b16 %v1529, %v1528
        %1538 = vmatprep.subr.bf16.mxu0 0
        %1539 = vmatpush1.bf16.msra.mxu0 %v1530
        %1540 = vmatprep.subr.bf16.mxu0 0
        %1541 = vmatpush1.bf16.msra.mxu0 %v1531
        %1542 = vmatprep.subr.bf16.mxu0 0
        %1543 = vmatpush1.bf16.msra.mxu0 %v1532
        %1544 = vmatprep.subr.bf16.mxu0 0
        %1545 = vmatpush1.bf16.msra.mxu0 %v1533
        %1546 = vmatprep.subr.bf16.mxu0 0
        %1547 = vmatpush1.bf16.msra.mxu0 0
        %1548 = vmatprep.subr.bf16.mxu0 0
        %1549 = vmatpush1.bf16.msra.mxu0 0
        %1550 = vmatprep.subr.bf16.mxu0 0
        %1551 = vmatpush1.bf16.msra.mxu0 0
        %1552 = vmatprep.subr.bf16.mxu0 0
        %1553 = vmatpush1.bf16.msra.mxu0 0
        %1554 = vmatprep.subr.bf16.mxu0 0
        %1555 = vmatpush1.bf16.msra.mxu0 0
        %1556 = vmatprep.subr.bf16.mxu0 0
        %1557 = vmatpush1.bf16.msra.mxu0 0
        %1558 = vmatprep.subr.bf16.mxu0 0
        %1559 = vmatpush1.bf16.msra.mxu0 0
        %1560 = vmatprep.subr.bf16.mxu0 0
        %1561 = vmatpush1.bf16.msra.mxu0 0
        %1562 = vmatprep.subr.bf16.mxu0 0
        %1563 = vmatpush1.bf16.msra.mxu0 0
        %1564 = vmatprep.subr.bf16.mxu0 0
        %1565 = vmatpush1.bf16.msra.mxu0 0
        %1566 = vmatprep.subr.bf16.mxu0 0
        %1567 = vmatpush1.bf16.msra.mxu0 0
        %1568 = vmatprep.subr.bf16.mxu0 0
        %1569 = vmatpush1.bf16.msra.mxu0 0
        %1570 = vmatprep.mubr.bf16.mxu0 0
        %1571 = vmatmul.mubr.bf16.gmra.mrb[0].mxu0 %v1291
        %v1572 = vpop.f32.mrb[0].mxu0
        %v1573 = vadd.f32 %v1512, %v1572
        %v1574 = vpop.f32.mrb[0].mxu0
        %v1575 = vpop.f32.mrb[0].mxu0
        %v1576 = vadd.f32 %v1512, %v1575
        %v1577 = vpop.f32.mrb[0].mxu0
        %1578 = vmatprep.mubr.bf16.mxu0 0
        %1579 = vmatmul.mubr.bf16.gmra.mrb[0].mxu0 %v1294
        %v1580 = vpop.f32.mrb[0].mxu0
        %v1581 = vadd.f32 %v1512, %v1580
        %v1582 = vpop.f32.mrb[0].mxu0
        %v1583 = vpop.f32.mrb[0].mxu0
        %v1584 = vadd.f32 %v1512, %v1583
        %v1585 = vpop.f32.mrb[0].mxu0
        %1586 = vmatprep.mubr.bf16.mxu0 0
        %1587 = vmatmul.mubr.bf16.gmra.mrb[0].mxu0 %v1297
        %v1588 = vpop.f32.mrb[0].mxu0
        %v1589 = vadd.f32 %v1512, %v1588
        %v1590 = vpop.f32.mrb[0].mxu0
        %v1591 = vpop.f32.mrb[0].mxu0
        %v1592 = vadd.f32 %v1512, %v1591
        %v1593 = vpop.f32.mrb[0].mxu0
        %1594 = vmatprep.mubr.bf16.mxu0 0
        %1595 = vmatmul.mubr.bf16.gmra.mrb[0].mxu0 %v1300
        %v1596 = vpop.f32.mrb[0].mxu0
        %v1597 = vadd.f32 %v1512, %v1596
        %v1598 = vpop.f32.mrb[0].mxu0
        %v1599 = vpop.f32.mrb[0].mxu0
        %v1600 = vadd.f32 %v1512, %v1599
        %v1601 = vpop.f32.mrb[0].mxu0
        %1602 = vmatprep.mubr.bf16.mxu0 0
        %1603 = vmatmul.mubr.bf16.gmra.mrb[0].mxu0 %v1303
        %v1604 = vpop.f32.mrb[0].mxu0
        %v1605 = vadd.f32 %v1512, %v1604
        %v1606 = vpop.f32.mrb[0].mxu0
        %v1607 = vpop.f32.mrb[0].mxu0
        %v1608 = vadd.f32 %v1512, %v1607
        %v1609 = vpop.f32.mrb[0].mxu0
        %1610 = vmatprep.mubr.bf16.mxu0 0
        %1611 = vmatmul.mubr.bf16.gmra.mrb[0].mxu0 %v1306
        %v1612 = vpop.f32.mrb[0].mxu0
        %v1613 = vadd.f32 %v1512, %v1612
        %v1614 = vpop.f32.mrb[0].mxu0
        %v1615 = vpop.f32.mrb[0].mxu0
        %v1616 = vadd.f32 %v1512, %v1615
        %v1617 = vpop.f32.mrb[0].mxu0
        %1618 = vmatprep.mubr.bf16.mxu0 0
        %1619 = vmatmul.mubr.bf16.gmra.mrb[0].mxu0 %v1309
        %v1620 = vpop.f32.mrb[0].mxu0
        %v1621 = vadd.f32 %v1512, %v1620
        %v1622 = vpop.f32.mrb[0].mxu0
        %v1623 = vpop.f32.mrb[0].mxu0
        %v1624 = vadd.f32 %v1512, %v1623
        %v1625 = vpop.f32.mrb[0].mxu0
        %1626 = vmatprep.mubr.bf16.mxu0 0
        %1627 = vmatmul.mubr.bf16.gmra.mrb[0].mxu0 %v1312
        %v1628 = vpop.f32.mrb[0].mxu0
        %v1629 = vadd.f32 %v1512, %v1628
        %v1630 = vpop.f32.mrb[0].mxu0
        %v1631 = vpop.f32.mrb[0].mxu0
        %v1632 = vadd.f32 %v1512, %v1631
        %v1633 = vpop.f32.mrb[0].mxu0
        %1634 = vmatprep.mubr.bf16.mxu0 0
        %1635 = vmatmul.mubr.bf16.gmra.mrb[0].mxu0 %v1315
        %v1636 = vpop.f32.mrb[0].mxu0
        %v1637 = vadd.f32 %v1512, %v1636
        %v1638 = vpop.f32.mrb[0].mxu0
        %v1639 = vpop.f32.mrb[0].mxu0
        %v1640 = vadd.f32 %v1512, %v1639
        %v1641 = vpop.f32.mrb[0].mxu0
        %1642 = vmatprep.mubr.bf16.mxu0 0
        %1643 = vmatmul.mubr.bf16.gmra.mrb[0].mxu0 %v1318
        %v1644 = vpop.f32.mrb[0].mxu0
        %v1645 = vadd.f32 %v1512, %v1644
        %v1646 = vpop.f32.mrb[0].mxu0
        %v1647 = vpop.f32.mrb[0].mxu0
        %v1648 = vadd.f32 %v1512, %v1647
        %v1649 = vpop.f32.mrb[0].mxu0
        %1650 = vmatprep.mubr.bf16.mxu0 0
        %1651 = vmatmul.mubr.bf16.gmra.mrb[0].mxu0 %v1321
        %v1652 = vpop.f32.mrb[0].mxu0
        %v1653 = vadd.f32 %v1512, %v1652
        %v1654 = vpop.f32.mrb[0].mxu0
        %v1655 = vpop.f32.mrb[0].mxu0
        %v1656 = vadd.f32 %v1512, %v1655
        %v1657 = vpop.f32.mrb[0].mxu0
        %1658 = vmatprep.mubr.bf16.mxu0 0
        %1659 = vmatmul.mubr.bf16.gmra.mrb[0].mxu0 %v1324
        %v1660 = vpop.f32.mrb[0].mxu0
        %v1661 = vadd.f32 %v1512, %v1660
        %v1662 = vpop.f32.mrb[0].mxu0
        %v1663 = vpop.f32.mrb[0].mxu0
        %v1664 = vadd.f32 %v1512, %v1663
        %v1665 = vpop.f32.mrb[0].mxu0
        %1666 = vmatprep.mubr.bf16.mxu0 0
        %1667 = vmatmul.mubr.bf16.gmra.mrb[0].mxu0 %v1327
        %v1668 = vpop.f32.mrb[0].mxu0
        %v1669 = vadd.f32 %v1512, %v1668
        %v1670 = vpop.f32.mrb[0].mxu0
        %v1671 = vpop.f32.mrb[0].mxu0
        %v1672 = vadd.f32 %v1512, %v1671
        %v1673 = vpop.f32.mrb[0].mxu0
        %1674 = vmatprep.mubr.bf16.mxu0 0
        %1675 = vmatmul.mubr.bf16.gmra.mrb[0].mxu0 %v1330
        %v1676 = vpop.f32.mrb[0].mxu0
        %v1677 = vadd.f32 %v1512, %v1676
        %v1678 = vpop.f32.mrb[0].mxu0
        %v1679 = vpop.f32.mrb[0].mxu0
        %v1680 = vadd.f32 %v1512, %v1679
        %v1681 = vpop.f32.mrb[0].mxu0
        %1682 = vmatprep.mubr.bf16.mxu0 0
        %1683 = vmatmul.mubr.bf16.gmra.mrb[0].mxu0 %v1333
        %v1684 = vpop.f32.mrb[0].mxu0
        %v1685 = vadd.f32 %v1512, %v1684
        %v1686 = vpop.f32.mrb[0].mxu0
        %v1687 = vpop.f32.mrb[0].mxu0
        %v1688 = vadd.f32 %v1512, %v1687
        %v1689 = vpop.f32.mrb[0].mxu0
        %1690 = vmatprep.mubr.bf16.mxu0 0
        %1691 = vmatmul.mubr.bf16.gmra.mrb[0].mxu0 %v1336
        %v1692 = vpop.f32.mrb[0].mxu0
        %v1693 = vadd.f32 %v1512, %v1692
        %v1694 = vpop.f32.mrb[0].mxu0
        %v1695 = vpop.f32.mrb[0].mxu0
        %v1696 = vadd.f32 %v1512, %v1695
        %v1697 = vpop.f32.mrb[0].mxu0
        %1698 = vdwg.mxu0
        %v1699 = vld [vmem:[%s7] sm:$0xf]
        %v1700 = vld [vmem:[%s7 + $0x4] sm:$0xf]
        %v1701 = vld [vmem:[%s7 + $0x8] sm:$0xf]
        %v1702 = vld [vmem:[%s7 + $0xc] sm:$0xf]
        %v1703 = vld [vmem:[%s7 + $0x10] sm:$0xf]
        %v1704 = vld [vmem:[%s7 + $0x14] sm:$0xf]
        %v1705 = vld [vmem:[%s7 + $0x18] sm:$0xf]
        %v1706 = vld [vmem:[%s7 + $0x1c] sm:$0xf]
        %v1707 = vld [vmem:[%s8] sm:$0x1]
        %v1709 = vlaneseq
        %v1710 = vshrl.u32 %v1709, 7
        %v1711 = vsub.s32 0, %v1710
        %v1712 = vrot.slane %v1707, %v1711
        %v1722 = vunpack.c.l.b16 %v1699
        %v1723 = vunpack.c.l.b16 %v1700
        %v1724 = vunpack.c.l.b16 %v1701
        %v1725 = vunpack.c.l.b16 %v1702
        %v1726 = vunpack.c.l.b16 %v1703
        %v1727 = vunpack.c.l.b16 %v1704
        %v1728 = vunpack.c.l.b16 %v1705
        %v1729 = vunpack.c.l.b16 %v1706
        %v1730 = vpack.c.b16 %v1723, %v1722
        %v1731 = vpack.c.b16 %v1725, %v1724
        %v1732 = vpack.c.b16 %v1727, %v1726
        %v1733 = vpack.c.b16 %v1729, %v1728
        %1738 = vmatprep.subr.bf16.mxu0 0
        %1739 = vmatpush1.bf16.msra.mxu0 %v1730
        %1740 = vmatprep.subr.bf16.mxu0 0
        %1741 = vmatpush1.bf16.msra.mxu0 %v1731
        %1742 = vmatprep.subr.bf16.mxu0 0
        %1743 = vmatpush1.bf16.msra.mxu0 %v1732
        %1744 = vmatprep.subr.bf16.mxu0 0
        %1745 = vmatpush1.bf16.msra.mxu0 %v1733
        %1746 = vmatprep.subr.bf16.mxu0 0
        %1747 = vmatpush1.bf16.msra.mxu0 0
        %1748 = vmatprep.subr.bf16.mxu0 0
        %1749 = vmatpush1.bf16.msra.mxu0 0
        %1750 = vmatprep.subr.bf16.mxu0 0
        %1751 = vmatpush1.bf16.msra.mxu0 0
        %1752 = vmatprep.subr.bf16.mxu0 0
        %1753 = vmatpush1.bf16.msra.mxu0 0
        %1754 = vmatprep.subr.bf16.mxu0 0
        %1755 = vmatpush1.bf16.msra.mxu0 0
        %1756 = vmatprep.subr.bf16.mxu0 0
        %1757 = vmatpush1.bf16.msra.mxu0 0
        %1758 = vmatprep.subr.bf16.mxu0 0
        %1759 = vmatpush1.bf16.msra.mxu0 0
        %1760 = vmatprep.subr.bf16.mxu0 0
        %1761 = vmatpush1.bf16.msra.mxu0 0
        %1762 = vmatprep.subr.bf16.mxu0 0
        %1763 = vmatpush1.bf16.msra.mxu0 0
        %1764 = vmatprep.subr.bf16.mxu0 0
        %1765 = vmatpush1.bf16.msra.mxu0 0
        %1766 = vmatprep.subr.bf16.mxu0 0
        %1767 = vmatpush1.bf16.msra.mxu0 0
        %1768 = vmatprep.subr.bf16.mxu0 0
        %1769 = vmatpush1.bf16.msra.mxu0 0
        %1770 = vmatprep.mubr.bf16.mxu0 0
        %1771 = vmatmul.mubr.bf16.gmra.mrb[0].mxu0 %v1291
        %v1772 = vpop.f32.mrb[0].mxu0
        %v1773 = vadd.f32 %v1712, %v1772
        %v1774 = vpop.f32.mrb[0].mxu0
        %v1775 = vpop.f32.mrb[0].mxu0
        %v1776 = vadd.f32 %v1712, %v1775
        %v1777 = vpop.f32.mrb[0].mxu0
        %1778 = vmatprep.mubr.bf16.mxu0 0
        %1779 = vmatmul.mubr.bf16.gmra.mrb[0].mxu0 %v1294
        %v1780 = vpop.f32.mrb[0].mxu0
        %v1781 = vadd.f32 %v1712, %v1780
        %v1782 = vpop.f32.mrb[0].mxu0
        %v1783 = vpop.f32.mrb[0].mxu0
        %v1784 = vadd.f32 %v1712, %v1783
        %v1785 = vpop.f32.mrb[0].mxu0
        %1786 = vmatprep.mubr.bf16.mxu0 0
        %1787 = vmatmul.mubr.bf16.gmra.mrb[0].mxu0 %v1297
        %v1788 = vpop.f32.mrb[0].mxu0
        %v1789 = vadd.f32 %v1712, %v1788
        %v1790 = vpop.f32.mrb[0].mxu0
        %v1791 = vpop.f32.mrb[0].mxu0
        %v1792 = vadd.f32 %v1712, %v1791
        %v1793 = vpop.f32.mrb[0].mxu0
        %1794 = vmatprep.mubr.bf16.mxu0 0
        %1795 = vmatmul.mubr.bf16.gmra.mrb[0].mxu0 %v1300
        %v1796 = vpop.f32.mrb[0].mxu0
        %v1797 = vadd.f32 %v1712, %v1796
        %v1798 = vpop.f32.mrb[0].mxu0
        %v1799 = vpop.f32.mrb[0].mxu0
        %v1800 = vadd.f32 %v1712, %v1799
        %v1801 = vpop.f32.mrb[0].mxu0
        %1802 = vmatprep.mubr.bf16.mxu0 0
        %1803 = vmatmul.mubr.bf16.gmra.mrb[0].mxu0 %v1303
        %v1804 = vpop.f32.mrb[0].mxu0
        %v1805 = vadd.f32 %v1712, %v1804
        %v1806 = vpop.f32.mrb[0].mxu0
        %v1807 = vpop.f32.mrb[0].mxu0
        %v1808 = vadd.f32 %v1712, %v1807
        %v1809 = vpop.f32.mrb[0].mxu0
        %1810 = vmatprep.mubr.bf16.mxu0 0
        %1811 = vmatmul.mubr.bf16.gmra.mrb[0].mxu0 %v1306
        %v1812 = vpop.f32.mrb[0].mxu0
        %v1813 = vadd.f32 %v1712, %v1812
        %v1814 = vpop.f32.mrb[0].mxu0
        %v1815 = vpop.f32.mrb[0].mxu0
        %v1816 = vadd.f32 %v1712, %v1815
        %v1817 = vpop.f32.mrb[0].mxu0
        %1818 = vmatprep.mubr.bf16.mxu0 0
        %1819 = vmatmul.mubr.bf16.gmra.mrb[0].mxu0 %v1309
        %v1820 = vpop.f32.mrb[0].mxu0
        %v1821 = vadd.f32 %v1712, %v1820
        %v1822 = vpop.f32.mrb[0].mxu0
        %v1823 = vpop.f32.mrb[0].mxu0
        %v1824 = vadd.f32 %v1712, %v1823
        %v1825 = vpop.f32.mrb[0].mxu0
        %1826 = vmatprep.mubr.bf16.mxu0 0
        %1827 = vmatmul.mubr.bf16.gmra.mrb[0].mxu0 %v1312
        %v1828 = vpop.f32.mrb[0].mxu0
        %v1829 = vadd.f32 %v1712, %v1828
        %v1830 = vpop.f32.mrb[0].mxu0
        %v1831 = vpop.f32.mrb[0].mxu0
        %v1832 = vadd.f32 %v1712, %v1831
        %v1833 = vpop.f32.mrb[0].mxu0
        %1834 = vmatprep.mubr.bf16.mxu0 0
        %1835 = vmatmul.mubr.bf16.gmra.mrb[0].mxu0 %v1315
        %v1836 = vpop.f32.mrb[0].mxu0
        %v1837 = vadd.f32 %v1712, %v1836
        %v1838 = vpop.f32.mrb[0].mxu0
        %v1839 = vpop.f32.mrb[0].mxu0
        %v1840 = vadd.f32 %v1712, %v1839
        %v1841 = vpop.f32.mrb[0].mxu0
        %1842 = vmatprep.mubr.bf16.mxu0 0
        %1843 = vmatmul.mubr.bf16.gmra.mrb[0].mxu0 %v1318
        %v1844 = vpop.f32.mrb[0].mxu0
        %v1845 = vadd.f32 %v1712, %v1844
        %v1846 = vpop.f32.mrb[0].mxu0
        %v1847 = vpop.f32.mrb[0].mxu0
        %v1848 = vadd.f32 %v1712, %v1847
        %v1849 = vpop.f32.mrb[0].mxu0
        %1850 = vmatprep.mubr.bf16.mxu0 0
        %1851 = vmatmul.mubr.bf16.gmra.mrb[0].mxu0 %v1321
        %v1852 = vpop.f32.mrb[0].mxu0
        %v1853 = vadd.f32 %v1712, %v1852
        %v1854 = vpop.f32.mrb[0].mxu0
        %v1855 = vpop.f32.mrb[0].mxu0
        %v1856 = vadd.f32 %v1712, %v1855
        %v1857 = vpop.f32.mrb[0].mxu0
        %1858 = vmatprep.mubr.bf16.mxu0 0
        %1859 = vmatmul.mubr.bf16.gmra.mrb[0].mxu0 %v1324
        %v1860 = vpop.f32.mrb[0].mxu0
        %v1861 = vadd.f32 %v1712, %v1860
        %v1862 = vpop.f32.mrb[0].mxu0
        %v1863 = vpop.f32.mrb[0].mxu0
        %v1864 = vadd.f32 %v1712, %v1863
        %v1865 = vpop.f32.mrb[0].mxu0
        %1866 = vmatprep.mubr.bf16.mxu0 0
        %1867 = vmatmul.mubr.bf16.gmra.mrb[0].mxu0 %v1327
        %v1868 = vpop.f32.mrb[0].mxu0
        %v1869 = vadd.f32 %v1712, %v1868
        %v1870 = vpop.f32.mrb[0].mxu0
        %v1871 = vpop.f32.mrb[0].mxu0
        %v1872 = vadd.f32 %v1712, %v1871
        %v1873 = vpop.f32.mrb[0].mxu0
        %1874 = vmatprep.mubr.bf16.mxu0 0
        %1875 = vmatmul.mubr.bf16.gmra.mrb[0].mxu0 %v1330
        %v1876 = vpop.f32.mrb[0].mxu0
        %v1877 = vadd.f32 %v1712, %v1876
        %v1878 = vpop.f32.mrb[0].mxu0
        %v1879 = vpop.f32.mrb[0].mxu0
        %v1880 = vadd.f32 %v1712, %v1879
        %v1881 = vpop.f32.mrb[0].mxu0
        %1882 = vmatprep.mubr.bf16.mxu0 0
        %1883 = vmatmul.mubr.bf16.gmra.mrb[0].mxu0 %v1333
        %v1884 = vpop.f32.mrb[0].mxu0
        %v1885 = vadd.f32 %v1712, %v1884
        %v1886 = vpop.f32.mrb[0].mxu0
        %v1887 = vpop.f32.mrb[0].mxu0
        %v1888 = vadd.f32 %v1712, %v1887
        %v1889 = vpop.f32.mrb[0].mxu0
        %1890 = vmatprep.mubr.bf16.mxu0 0
        %1891 = vmatmul.mubr.bf16.gmra.mrb[0].mxu0 %v1336
        %v1892 = vpop.f32.mrb[0].mxu0
        %v1893 = vadd.f32 %v1712, %v1892
        %v1894 = vpop.f32.mrb[0].mxu0
        %v1895 = vpop.f32.mrb[0].mxu0
        %v1896 = vadd.f32 %v1712, %v1895
        %v1897 = vpop.f32.mrb[0].mxu0
        %1898 = vdwg.mxu0
        %v1899 = vlaneseq
        %v1900 = vshrl.u32 %v1899, 7
        %v1901 = vadd.s32 %v1900, 8
        %v1902 = vadd.s32 %v1900, 16
        %v1903 = vadd.s32 %v1900, 24
        %v1904 = vadd.s32 %v1900, 32
        %v1905 = vadd.s32 %v1900, 40
        %v1906 = vadd.s32 %v1900, 48
        %v1907 = vadd.s32 %v1900, 56
        %v1908 = vadd.s32 %v1900, 64
        %v1909 = vadd.s32 %v1900, 72
        %v1910 = vadd.s32 %v1900, 80
        %v1911 = vadd.s32 %v1900, 88
        %v1912 = vadd.s32 %v1900, 96
        %v1913 = vadd.s32 %v1900, 104
        %v1914 = vadd.s32 %v1900, 112
        %v1915 = vadd.s32 %v1900, 120
        %v1916 = vadd.s32 %v1900, 128
        %v1917 = vadd.s32 %v1900, 136
        %v1918 = vadd.s32 %v1900, 144
        %v1919 = vadd.s32 %v1900, 152
        %v1920 = vadd.s32 %v1900, 160
        %v1921 = vadd.s32 %v1900, 168
        %v1922 = vadd.s32 %v1900, 176
        %v1923 = vadd.s32 %v1900, 184
        %v1924 = vadd.s32 %v1900, 192
        %v1925 = vadd.s32 %v1900, 200
        %v1926 = vadd.s32 %v1900, 208
        %v1927 = vadd.s32 %v1900, 216
        %v1928 = vadd.s32 %v1900, 224
        %v1929 = vadd.s32 %v1900, 232
        %v1930 = vadd.s32 %v1900, 240
        %v1931 = vadd.s32 %v1900, 248
        %vm1932 = vcmp.lt.s32.totalorder %v1900, 0
        %v1933 = vsub.s32 0, %v1900
        %v1934 = vsel %vm1932, %v1933, %v1900
        %v1935 = vshrl.u32 %v1934, 4
        %v1936 = vand.u32 %v1934, 15
        %v1937 = vsub.s32 0, %v1936
        %v1938 = vsel %vm1932, %v1937, %v1936
        %vm1939 = vcmp.lt.s32.totalorder %v1901, 0
        %v1940 = vsub.s32 0, %v1901
        %v1941 = vsel %vm1939, %v1940, %v1901
        %v1942 = vshrl.u32 %v1941, 4
        %v1943 = vand.u32 %v1941, 15
        %v1944 = vsub.s32 0, %v1943
        %v1945 = vsel %vm1939, %v1944, %v1943
        %vm1946 = vcmp.lt.s32.totalorder %v1902, 0
        %v1947 = vsub.s32 0, %v1902
        %v1948 = vsel %vm1946, %v1947, %v1902
        %v1949 = vshrl.u32 %v1948, 4
        %v1950 = vand.u32 %v1948, 15
        %v1951 = vsub.s32 0, %v1950
        %v1952 = vsel %vm1946, %v1951, %v1950
        %vm1953 = vcmp.lt.s32.totalorder %v1903, 0
        %v1954 = vsub.s32 0, %v1903
        %v1955 = vsel %vm1953, %v1954, %v1903
        %v1956 = vshrl.u32 %v1955, 4
        %v1957 = vand.u32 %v1955, 15
        %v1958 = vsub.s32 0, %v1957
        %v1959 = vsel %vm1953, %v1958, %v1957
        %vm1960 = vcmp.lt.s32.totalorder %v1904, 0
        %v1961 = vsub.s32 0, %v1904
        %v1962 = vsel %vm1960, %v1961, %v1904
        %v1963 = vshrl.u32 %v1962, 4
        %v1964 = vand.u32 %v1962, 15
        %v1965 = vsub.s32 0, %v1964
        %v1966 = vsel %vm1960, %v1965, %v1964
        %vm1967 = vcmp.lt.s32.totalorder %v1905, 0
        %v1968 = vsub.s32 0, %v1905
        %v1969 = vsel %vm1967, %v1968, %v1905
        %v1970 = vshrl.u32 %v1969, 4
        %v1971 = vand.u32 %v1969, 15
        %v1972 = vsub.s32 0, %v1971
        %v1973 = vsel %vm1967, %v1972, %v1971
        %vm1974 = vcmp.lt.s32.totalorder %v1906, 0
        %v1975 = vsub.s32 0, %v1906
        %v1976 = vsel %vm1974, %v1975, %v1906
        %v1977 = vshrl.u32 %v1976, 4
        %v1978 = vand.u32 %v1976, 15
        %v1979 = vsub.s32 0, %v1978
        %v1980 = vsel %vm1974, %v1979, %v1978
        %vm1981 = vcmp.lt.s32.totalorder %v1907, 0
        %v1982 = vsub.s32 0, %v1907
        %v1983 = vsel %vm1981, %v1982, %v1907
        %v1984 = vshrl.u32 %v1983, 4
        %v1985 = vand.u32 %v1983, 15
        %v1986 = vsub.s32 0, %v1985
        %v1987 = vsel %vm1981, %v1986, %v1985
        %vm1988 = vcmp.lt.s32.totalorder %v1908, 0
        %v1989 = vsub.s32 0, %v1908
        %v1990 = vsel %vm1988, %v1989, %v1908
        %v1991 = vshrl.u32 %v1990, 4
        %v1992 = vand.u32 %v1990, 15
        %v1993 = vsub.s32 0, %v1992
        %v1994 = vsel %vm1988, %v1993, %v1992
        %vm1995 = vcmp.lt.s32.totalorder %v1909, 0
        %v1996 = vsub.s32 0, %v1909
        %v1997 = vsel %vm1995, %v1996, %v1909
        %v1998 = vshrl.u32 %v1997, 4
        %v1999 = vand.u32 %v1997, 15
        %v2000 = vsub.s32 0, %v1999
        %v2001 = vsel %vm1995, %v2000, %v1999
        %vm2002 = vcmp.lt.s32.totalorder %v1910, 0
        %v2003 = vsub.s32 0, %v1910
        %v2004 = vsel %vm2002, %v2003, %v1910
        %v2005 = vshrl.u32 %v2004, 4
        %v2006 = vand.u32 %v2004, 15
        %v2007 = vsub.s32 0, %v2006
        %v2008 = vsel %vm2002, %v2007, %v2006
        %vm2009 = vcmp.lt.s32.totalorder %v1911, 0
        %v2010 = vsub.s32 0, %v1911
        %v2011 = vsel %vm2009, %v2010, %v1911
        %v2012 = vshrl.u32 %v2011, 4
        %v2013 = vand.u32 %v2011, 15
        %v2014 = vsub.s32 0, %v2013
        %v2015 = vsel %vm2009, %v2014, %v2013
        %vm2016 = vcmp.lt.s32.totalorder %v1912, 0
        %v2017 = vsub.s32 0, %v1912
        %v2018 = vsel %vm2016, %v2017, %v1912
        %v2019 = vshrl.u32 %v2018, 4
        %v2020 = vand.u32 %v2018, 15
        %v2021 = vsub.s32 0, %v2020
        %v2022 = vsel %vm2016, %v2021, %v2020
        %vm2023 = vcmp.lt.s32.totalorder %v1913, 0
        %v2024 = vsub.s32 0, %v1913
        %v2025 = vsel %vm2023, %v2024, %v1913
        %v2026 = vshrl.u32 %v2025, 4
        %v2027 = vand.u32 %v2025, 15
        %v2028 = vsub.s32 0, %v2027
        %v2029 = vsel %vm2023, %v2028, %v2027
        %vm2030 = vcmp.lt.s32.totalorder %v1914, 0
        %v2031 = vsub.s32 0, %v1914
        %v2032 = vsel %vm2030, %v2031, %v1914
        %v2033 = vshrl.u32 %v2032, 4
        %v2034 = vand.u32 %v2032, 15
        %v2035 = vsub.s32 0, %v2034
        %v2036 = vsel %vm2030, %v2035, %v2034
        %vm2037 = vcmp.lt.s32.totalorder %v1915, 0
        %v2038 = vsub.s32 0, %v1915
        %v2039 = vsel %vm2037, %v2038, %v1915
        %v2040 = vshrl.u32 %v2039, 4
        %v2041 = vand.u32 %v2039, 15
        %v2042 = vsub.s32 0, %v2041
        %v2043 = vsel %vm2037, %v2042, %v2041
        %vm2044 = vcmp.lt.s32.totalorder %v1916, 0
        %v2045 = vsub.s32 0, %v1916
        %v2046 = vsel %vm2044, %v2045, %v1916
        %v2047 = vshrl.u32 %v2046, 4
        %v2048 = vand.u32 %v2046, 15
        %v2049 = vsub.s32 0, %v2048
        %v2050 = vsel %vm2044, %v2049, %v2048
        %vm2051 = vcmp.lt.s32.totalorder %v1917, 0
        %v2052 = vsub.s32 0, %v1917
        %v2053 = vsel %vm2051, %v2052, %v1917
        %v2054 = vshrl.u32 %v2053, 4
        %v2055 = vand.u32 %v2053, 15
        %v2056 = vsub.s32 0, %v2055
        %v2057 = vsel %vm2051, %v2056, %v2055
        %vm2058 = vcmp.lt.s32.totalorder %v1918, 0
        %v2059 = vsub.s32 0, %v1918
        %v2060 = vsel %vm2058, %v2059, %v1918
        %v2061 = vshrl.u32 %v2060, 4
        %v2062 = vand.u32 %v2060, 15
        %v2063 = vsub.s32 0, %v2062
        %v2064 = vsel %vm2058, %v2063, %v2062
        %vm2065 = vcmp.lt.s32.totalorder %v1919, 0
        %v2066 = vsub.s32 0, %v1919
        %v2067 = vsel %vm2065, %v2066, %v1919
        %v2068 = vshrl.u32 %v2067, 4
        %v2069 = vand.u32 %v2067, 15
        %v2070 = vsub.s32 0, %v2069
        %v2071 = vsel %vm2065, %v2070, %v2069
        %vm2072 = vcmp.lt.s32.totalorder %v1920, 0
        %v2073 = vsub.s32 0, %v1920
        %v2074 = vsel %vm2072, %v2073, %v1920
        %v2075 = vshrl.u32 %v2074, 4
        %v2076 = vand.u32 %v2074, 15
        %v2077 = vsub.s32 0, %v2076
        %v2078 = vsel %vm2072, %v2077, %v2076
        %vm2079 = vcmp.lt.s32.totalorder %v1921, 0
        %v2080 = vsub.s32 0, %v1921
        %v2081 = vsel %vm2079, %v2080, %v1921
        %v2082 = vshrl.u32 %v2081, 4
        %v2083 = vand.u32 %v2081, 15
        %v2084 = vsub.s32 0, %v2083
        %v2085 = vsel %vm2079, %v2084, %v2083
        %vm2086 = vcmp.lt.s32.totalorder %v1922, 0
        %v2087 = vsub.s32 0, %v1922
        %v2088 = vsel %vm2086, %v2087, %v1922
        %v2089 = vshrl.u32 %v2088, 4
        %v2090 = vand.u32 %v2088, 15
        %v2091 = vsub.s32 0, %v2090
        %v2092 = vsel %vm2086, %v2091, %v2090
        %vm2093 = vcmp.lt.s32.totalorder %v1923, 0
        %v2094 = vsub.s32 0, %v1923
        %v2095 = vsel %vm2093, %v2094, %v1923
        %v2096 = vshrl.u32 %v2095, 4
        %v2097 = vand.u32 %v2095, 15
        %v2098 = vsub.s32 0, %v2097
        %v2099 = vsel %vm2093, %v2098, %v2097
        %vm2100 = vcmp.lt.s32.totalorder %v1924, 0
        %v2101 = vsub.s32 0, %v1924
        %v2102 = vsel %vm2100, %v2101, %v1924
        %v2103 = vshrl.u32 %v2102, 4
        %v2104 = vand.u32 %v2102, 15
        %v2105 = vsub.s32 0, %v2104
        %v2106 = vsel %vm2100, %v2105, %v2104
        %vm2107 = vcmp.lt.s32.totalorder %v1925, 0
        %v2108 = vsub.s32 0, %v1925
        %v2109 = vsel %vm2107, %v2108, %v1925
        %v2110 = vshrl.u32 %v2109, 4
        %v2111 = vand.u32 %v2109, 15
        %v2112 = vsub.s32 0, %v2111
        %v2113 = vsel %vm2107, %v2112, %v2111
        %vm2114 = vcmp.lt.s32.totalorder %v1926, 0
        %v2115 = vsub.s32 0, %v1926
        %v2116 = vsel %vm2114, %v2115, %v1926
        %v2117 = vshrl.u32 %v2116, 4
        %v2118 = vand.u32 %v2116, 15
        %v2119 = vsub.s32 0, %v2118
        %v2120 = vsel %vm2114, %v2119, %v2118
        %vm2121 = vcmp.lt.s32.totalorder %v1927, 0
        %v2122 = vsub.s32 0, %v1927
        %v2123 = vsel %vm2121, %v2122, %v1927
        %v2124 = vshrl.u32 %v2123, 4
        %v2125 = vand.u32 %v2123, 15
        %v2126 = vsub.s32 0, %v2125
        %v2127 = vsel %vm2121, %v2126, %v2125
        %vm2128 = vcmp.lt.s32.totalorder %v1928, 0
        %v2129 = vsub.s32 0, %v1928
        %v2130 = vsel %vm2128, %v2129, %v1928
        %v2131 = vshrl.u32 %v2130, 4
        %v2132 = vand.u32 %v2130, 15
        %v2133 = vsub.s32 0, %v2132
        %v2134 = vsel %vm2128, %v2133, %v2132
        %vm2135 = vcmp.lt.s32.totalorder %v1929, 0
        %v2136 = vsub.s32 0, %v1929
        %v2137 = vsel %vm2135, %v2136, %v1929
        %v2138 = vshrl.u32 %v2137, 4
        %v2139 = vand.u32 %v2137, 15
        %v2140 = vsub.s32 0, %v2139
        %v2141 = vsel %vm2135, %v2140, %v2139
        %vm2142 = vcmp.lt.s32.totalorder %v1930, 0
        %v2143 = vsub.s32 0, %v1930
        %v2144 = vsel %vm2142, %v2143, %v1930
        %v2145 = vshrl.u32 %v2144, 4
        %v2146 = vand.u32 %v2144, 15
        %v2147 = vsub.s32 0, %v2146
        %v2148 = vsel %vm2142, %v2147, %v2146
        %vm2149 = vcmp.lt.s32.totalorder %v1931, 0
        %v2150 = vsub.s32 0, %v1931
        %v2151 = vsel %vm2149, %v2150, %v1931
        %v2152 = vshrl.u32 %v2151, 4
        %v2153 = vand.u32 %v2151, 15
        %v2154 = vsub.s32 0, %v2153
        %v2155 = vsel %vm2149, %v2154, %v2153
        %vm2156 = vcmp.ne.s32.totalorder %v1938, 0
        %vm2157 = vcmp.ne.s32.totalorder %v1945, 0
        %vm2158 = vcmp.ne.s32.totalorder %v1952, 0
        %vm2159 = vcmp.ne.s32.totalorder %v1959, 0
        %vm2160 = vcmp.ne.s32.totalorder %v1966, 0
        %vm2161 = vcmp.ne.s32.totalorder %v1973, 0
        %vm2162 = vcmp.ne.s32.totalorder %v1980, 0
        %vm2163 = vcmp.ne.s32.totalorder %v1987, 0
        %vm2164 = vcmp.ne.s32.totalorder %v1994, 0
        %vm2165 = vcmp.ne.s32.totalorder %v2001, 0
        %vm2166 = vcmp.ne.s32.totalorder %v2008, 0
        %vm2167 = vcmp.ne.s32.totalorder %v2015, 0
        %vm2168 = vcmp.ne.s32.totalorder %v2022, 0
        %vm2169 = vcmp.ne.s32.totalorder %v2029, 0
        %vm2170 = vcmp.ne.s32.totalorder %v2036, 0
        %vm2171 = vcmp.ne.s32.totalorder %v2043, 0
        %vm2172 = vcmp.ne.s32.totalorder %v2050, 0
        %vm2173 = vcmp.ne.s32.totalorder %v2057, 0
        %vm2174 = vcmp.ne.s32.totalorder %v2064, 0
        %vm2175 = vcmp.ne.s32.totalorder %v2071, 0
        %vm2176 = vcmp.ne.s32.totalorder %v2078, 0
        %vm2177 = vcmp.ne.s32.totalorder %v2085, 0
        %vm2178 = vcmp.ne.s32.totalorder %v2092, 0
        %vm2179 = vcmp.ne.s32.totalorder %v2099, 0
        %vm2180 = vcmp.ne.s32.totalorder %v2106, 0
        %vm2181 = vcmp.ne.s32.totalorder %v2113, 0
        %vm2182 = vcmp.ne.s32.totalorder %v2120, 0
        %vm2183 = vcmp.ne.s32.totalorder %v2127, 0
        %vm2184 = vcmp.ne.s32.totalorder %v2134, 0
        %vm2185 = vcmp.ne.s32.totalorder %v2141, 0
        %vm2186 = vcmp.ne.s32.totalorder %v2148, 0
        %vm2187 = vcmp.ne.s32.totalorder %v2155, 0
        %vm2188 = vcmp.lt.s32.totalorder %v1938, 0
        %vm2189 = vcmp.lt.s32.totalorder %v1945, 0
        %vm2190 = vcmp.lt.s32.totalorder %v1952, 0
        %vm2191 = vcmp.lt.s32.totalorder %v1959, 0
        %vm2192 = vcmp.lt.s32.totalorder %v1966, 0
        %vm2193 = vcmp.lt.s32.totalorder %v1973, 0
        %vm2194 = vcmp.lt.s32.totalorder %v1980, 0
        %vm2195 = vcmp.lt.s32.totalorder %v1987, 0
        %vm2196 = vcmp.lt.s32.totalorder %v1994, 0
        %vm2197 = vcmp.lt.s32.totalorder %v2001, 0
        %vm2198 = vcmp.lt.s32.totalorder %v2008, 0
        %vm2199 = vcmp.lt.s32.totalorder %v2015, 0
        %vm2200 = vcmp.lt.s32.totalorder %v2022, 0
        %vm2201 = vcmp.lt.s32.totalorder %v2029, 0
        %vm2202 = vcmp.lt.s32.totalorder %v2036, 0
        %vm2203 = vcmp.lt.s32.totalorder %v2043, 0
        %vm2204 = vcmp.lt.s32.totalorder %v2050, 0
        %vm2205 = vcmp.lt.s32.totalorder %v2057, 0
        %vm2206 = vcmp.lt.s32.totalorder %v2064, 0
        %vm2207 = vcmp.lt.s32.totalorder %v2071, 0
        %vm2208 = vcmp.lt.s32.totalorder %v2078, 0
        %vm2209 = vcmp.lt.s32.totalorder %v2085, 0
        %vm2210 = vcmp.lt.s32.totalorder %v2092, 0
        %vm2211 = vcmp.lt.s32.totalorder %v2099, 0
        %vm2212 = vcmp.lt.s32.totalorder %v2106, 0
        %vm2213 = vcmp.lt.s32.totalorder %v2113, 0
        %vm2214 = vcmp.lt.s32.totalorder %v2120, 0
        %vm2215 = vcmp.lt.s32.totalorder %v2127, 0
        %vm2216 = vcmp.lt.s32.totalorder %v2134, 0
        %vm2217 = vcmp.lt.s32.totalorder %v2141, 0
        %vm2218 = vcmp.lt.s32.totalorder %v2148, 0
        %vm2219 = vcmp.lt.s32.totalorder %v2155, 0
        %vm2220 = vmand %vm2188, %vm2156
        %vm2221 = vmand %vm2189, %vm2157
        %vm2222 = vmand %vm2190, %vm2158
        %vm2223 = vmand %vm2191, %vm2159
        %vm2224 = vmand %vm2192, %vm2160
        %vm2225 = vmand %vm2193, %vm2161
        %vm2226 = vmand %vm2194, %vm2162
        %vm2227 = vmand %vm2195, %vm2163
        %vm2228 = vmand %vm2196, %vm2164
        %vm2229 = vmand %vm2197, %vm2165
        %vm2230 = vmand %vm2198, %vm2166
        %vm2231 = vmand %vm2199, %vm2167
        %vm2232 = vmand %vm2200, %vm2168
        %vm2233 = vmand %vm2201, %vm2169
        %vm2234 = vmand %vm2202, %vm2170
        %vm2235 = vmand %vm2203, %vm2171
        %vm2236 = vmand %vm2204, %vm2172
        %vm2237 = vmand %vm2205, %vm2173
        %vm2238 = vmand %vm2206, %vm2174
        %vm2239 = vmand %vm2207, %vm2175
        %vm2240 = vmand %vm2208, %vm2176
        %vm2241 = vmand %vm2209, %vm2177
        %vm2242 = vmand %vm2210, %vm2178
        %vm2243 = vmand %vm2211, %vm2179
        %vm2244 = vmand %vm2212, %vm2180
        %vm2245 = vmand %vm2213, %vm2181
        %vm2246 = vmand %vm2214, %vm2182
        %vm2247 = vmand %vm2215, %vm2183
        %vm2248 = vmand %vm2216, %vm2184
        %vm2249 = vmand %vm2217, %vm2185
        %vm2250 = vmand %vm2218, %vm2186
        %vm2251 = vmand %vm2219, %vm2187
        %v2252 = vadd.s32 %v1938, 16
        %v2253 = vadd.s32 %v1945, 16
        %v2254 = vadd.s32 %v1952, 16
        %v2255 = vadd.s32 %v1959, 16
        %v2256 = vadd.s32 %v1966, 16
        %v2257 = vadd.s32 %v1973, 16
        %v2258 = vadd.s32 %v1980, 16
        %v2259 = vadd.s32 %v1987, 16
        %v2260 = vadd.s32 %v1994, 16
        %v2261 = vadd.s32 %v2001, 16
        %v2262 = vadd.s32 %v2008, 16
        %v2263 = vadd.s32 %v2015, 16
        %v2264 = vadd.s32 %v2022, 16
        %v2265 = vadd.s32 %v2029, 16
        %v2266 = vadd.s32 %v2036, 16
        %v2267 = vadd.s32 %v2043, 16
        %v2268 = vadd.s32 %v2050, 16
        %v2269 = vadd.s32 %v2057, 16
        %v2270 = vadd.s32 %v2064, 16
        %v2271 = vadd.s32 %v2071, 16
        %v2272 = vadd.s32 %v2078, 16
        %v2273 = vadd.s32 %v2085, 16
        %v2274 = vadd.s32 %v2092, 16
        %v2275 = vadd.s32 %v2099, 16
        %v2276 = vadd.s32 %v2106, 16
        %v2277 = vadd.s32 %v2113, 16
        %v2278 = vadd.s32 %v2120, 16
        %v2279 = vadd.s32 %v2127, 16
        %v2280 = vadd.s32 %v2134, 16
        %v2281 = vadd.s32 %v2141, 16
        %v2282 = vadd.s32 %v2148, 16
        %v2283 = vadd.s32 %v2155, 16
        %v2284 = vsel %vm2220, %v2252, %v1938
        %v2285 = vsel %vm2221, %v2253, %v1945
        %v2286 = vsel %vm2222, %v2254, %v1952
        %v2287 = vsel %vm2223, %v2255, %v1959
        %v2288 = vsel %vm2224, %v2256, %v1966
        %v2289 = vsel %vm2225, %v2257, %v1973
        %v2290 = vsel %vm2226, %v2258, %v1980
        %v2291 = vsel %vm2227, %v2259, %v1987
        %v2292 = vsel %vm2228, %v2260, %v1994
        %v2293 = vsel %vm2229, %v2261, %v2001
        %v2294 = vsel %vm2230, %v2262, %v2008
        %v2295 = vsel %vm2231, %v2263, %v2015
        %v2296 = vsel %vm2232, %v2264, %v2022
        %v2297 = vsel %vm2233, %v2265, %v2029
        %v2298 = vsel %vm2234, %v2266, %v2036
        %v2299 = vsel %vm2235, %v2267, %v2043
        %v2300 = vsel %vm2236, %v2268, %v2050
        %v2301 = vsel %vm2237, %v2269, %v2057
        %v2302 = vsel %vm2238, %v2270, %v2064
        %v2303 = vsel %vm2239, %v2271, %v2071
        %v2304 = vsel %vm2240, %v2272, %v2078
        %v2305 = vsel %vm2241, %v2273, %v2085
        %v2306 = vsel %vm2242, %v2274, %v2092
        %v2307 = vsel %vm2243, %v2275, %v2099
        %v2308 = vsel %vm2244, %v2276, %v2106
        %v2309 = vsel %vm2245, %v2277, %v2113
        %v2310 = vsel %vm2246, %v2278, %v2120
        %v2311 = vsel %vm2247, %v2279, %v2127
        %v2312 = vsel %vm2248, %v2280, %v2134
        %v2313 = vsel %vm2249, %v2281, %v2141
        %v2314 = vsel %vm2250, %v2282, %v2148
        %v2315 = vsel %vm2251, %v2283, %v2155
        %vm2316 = vcmp.gt.s32.totalorder %v2284, 0
        %vm2317 = vcmp.gt.s32.totalorder %v2285, 0
        %vm2318 = vcmp.gt.s32.totalorder %v2286, 0
        %vm2319 = vcmp.gt.s32.totalorder %v2287, 0
        %vm2320 = vcmp.gt.s32.totalorder %v2288, 0
        %vm2321 = vcmp.gt.s32.totalorder %v2289, 0
        %vm2322 = vcmp.gt.s32.totalorder %v2290, 0
        %vm2323 = vcmp.gt.s32.totalorder %v2291, 0
        %vm2324 = vcmp.gt.s32.totalorder %v2292, 0
        %vm2325 = vcmp.gt.s32.totalorder %v2293, 0
        %vm2326 = vcmp.gt.s32.totalorder %v2294, 0
        %vm2327 = vcmp.gt.s32.totalorder %v2295, 0
        %vm2328 = vcmp.gt.s32.totalorder %v2296, 0
        %vm2329 = vcmp.gt.s32.totalorder %v2297, 0
        %vm2330 = vcmp.gt.s32.totalorder %v2298, 0
        %vm2331 = vcmp.gt.s32.totalorder %v2299, 0
        %vm2332 = vcmp.gt.s32.totalorder %v2300, 0
        %vm2333 = vcmp.gt.s32.totalorder %v2301, 0
        %vm2334 = vcmp.gt.s32.totalorder %v2302, 0
        %vm2335 = vcmp.gt.s32.totalorder %v2303, 0
        %vm2336 = vcmp.gt.s32.totalorder %v2304, 0
        %vm2337 = vcmp.gt.s32.totalorder %v2305, 0
        %vm2338 = vcmp.gt.s32.totalorder %v2306, 0
        %vm2339 = vcmp.gt.s32.totalorder %v2307, 0
        %vm2340 = vcmp.gt.s32.totalorder %v2308, 0
        %vm2341 = vcmp.gt.s32.totalorder %v2309, 0
        %vm2342 = vcmp.gt.s32.totalorder %v2310, 0
        %vm2343 = vcmp.gt.s32.totalorder %v2311, 0
        %vm2344 = vcmp.gt.s32.totalorder %v2312, 0
        %vm2345 = vcmp.gt.s32.totalorder %v2313, 0
        %vm2346 = vcmp.gt.s32.totalorder %v2314, 0
        %vm2347 = vcmp.gt.s32.totalorder %v2315, 0
        %v2348 = vsel %vm2316, 1, 0
        %v2349 = vsel %vm2317, 1, 0
        %v2350 = vsel %vm2318, 1, 0
        %v2351 = vsel %vm2319, 1, 0
        %v2352 = vsel %vm2320, 1, 0
        %v2353 = vsel %vm2321, 1, 0
        %v2354 = vsel %vm2322, 1, 0
        %v2355 = vsel %vm2323, 1, 0
        %v2356 = vsel %vm2324, 1, 0
        %v2357 = vsel %vm2325, 1, 0
        %v2358 = vsel %vm2326, 1, 0
        %v2359 = vsel %vm2327, 1, 0
        %v2360 = vsel %vm2328, 1, 0
        %v2361 = vsel %vm2329, 1, 0
        %v2362 = vsel %vm2330, 1, 0
        %v2363 = vsel %vm2331, 1, 0
        %v2364 = vsel %vm2332, 1, 0
        %v2365 = vsel %vm2333, 1, 0
        %v2366 = vsel %vm2334, 1, 0
        %v2367 = vsel %vm2335, 1, 0
        %v2368 = vsel %vm2336, 1, 0
        %v2369 = vsel %vm2337, 1, 0
        %v2370 = vsel %vm2338, 1, 0
        %v2371 = vsel %vm2339, 1, 0
        %v2372 = vsel %vm2340, 1, 0
        %v2373 = vsel %vm2341, 1, 0
        %v2374 = vsel %vm2342, 1, 0
        %v2375 = vsel %vm2343, 1, 0
        %v2376 = vsel %vm2344, 1, 0
        %v2377 = vsel %vm2345, 1, 0
        %v2378 = vsel %vm2346, 1, 0
        %v2379 = vsel %vm2347, 1, 0
        %v2380 = vcvt.s32.f32 %v2348
        %v2381 = vcvt.s32.f32 %v2349
        %v2382 = vcvt.s32.f32 %v2350
        %v2383 = vcvt.s32.f32 %v2351
        %v2384 = vcvt.s32.f32 %v2352
        %v2385 = vcvt.s32.f32 %v2353
        %v2386 = vcvt.s32.f32 %v2354
        %v2387 = vcvt.s32.f32 %v2355
        %v2388 = vcvt.s32.f32 %v2356
        %v2389 = vcvt.s32.f32 %v2357
        %v2390 = vcvt.s32.f32 %v2358
        %v2391 = vcvt.s32.f32 %v2359
        %v2392 = vcvt.s32.f32 %v2360
        %v2393 = vcvt.s32.f32 %v2361
        %v2394 = vcvt.s32.f32 %v2362
        %v2395 = vcvt.s32.f32 %v2363
        %v2396 = vcvt.s32.f32 %v2364
        %v2397 = vcvt.s32.f32 %v2365
        %v2398 = vcvt.s32.f32 %v2366
        %v2399 = vcvt.s32.f32 %v2367
        %v2400 = vcvt.s32.f32 %v2368
        %v2401 = vcvt.s32.f32 %v2369
        %v2402 = vcvt.s32.f32 %v2370
        %v2403 = vcvt.s32.f32 %v2371
        %v2404 = vcvt.s32.f32 %v2372
        %v2405 = vcvt.s32.f32 %v2373
        %v2406 = vcvt.s32.f32 %v2374
        %v2407 = vcvt.s32.f32 %v2375
        %v2408 = vcvt.s32.f32 %v2376
        %v2409 = vcvt.s32.f32 %v2377
        %v2410 = vcvt.s32.f32 %v2378
        %v2411 = vcvt.s32.f32 %v2379
        %vm2412 = vcmp.lt.s32.totalorder %v2284, 15
        %vm2413 = vcmp.lt.s32.totalorder %v2285, 15
        %vm2414 = vcmp.lt.s32.totalorder %v2286, 15
        %vm2415 = vcmp.lt.s32.totalorder %v2287, 15
        %vm2416 = vcmp.lt.s32.totalorder %v2288, 15
        %vm2417 = vcmp.lt.s32.totalorder %v2289, 15
        %vm2418 = vcmp.lt.s32.totalorder %v2290, 15
        %vm2419 = vcmp.lt.s32.totalorder %v2291, 15
        %vm2420 = vcmp.lt.s32.totalorder %v2292, 15
        %vm2421 = vcmp.lt.s32.totalorder %v2293, 15
        %vm2422 = vcmp.lt.s32.totalorder %v2294, 15
        %vm2423 = vcmp.lt.s32.totalorder %v2295, 15
        %vm2424 = vcmp.lt.s32.totalorder %v2296, 15
        %vm2425 = vcmp.lt.s32.totalorder %v2297, 15
        %vm2426 = vcmp.lt.s32.totalorder %v2298, 15
        %vm2427 = vcmp.lt.s32.totalorder %v2299, 15
        %vm2428 = vcmp.lt.s32.totalorder %v2300, 15
        %vm2429 = vcmp.lt.s32.totalorder %v2301, 15
        %vm2430 = vcmp.lt.s32.totalorder %v2302, 15
        %vm2431 = vcmp.lt.s32.totalorder %v2303, 15
        %vm2432 = vcmp.lt.s32.totalorder %v2304, 15
        %vm2433 = vcmp.lt.s32.totalorder %v2305, 15
        %vm2434 = vcmp.lt.s32.totalorder %v2306, 15
        %vm2435 = vcmp.lt.s32.totalorder %v2307, 15
        %vm2436 = vcmp.lt.s32.totalorder %v2308, 15
        %vm2437 = vcmp.lt.s32.totalorder %v2309, 15
        %vm2438 = vcmp.lt.s32.totalorder %v2310, 15
        %vm2439 = vcmp.lt.s32.totalorder %v2311, 15
        %vm2440 = vcmp.lt.s32.totalorder %v2312, 15
        %vm2441 = vcmp.lt.s32.totalorder %v2313, 15
        %vm2442 = vcmp.lt.s32.totalorder %v2314, 15
        %vm2443 = vcmp.lt.s32.totalorder %v2315, 15
        %v2444 = vsel %vm2412, 1, 0
        %v2445 = vsel %vm2413, 1, 0
        %v2446 = vsel %vm2414, 1, 0
        %v2447 = vsel %vm2415, 1, 0
        %v2448 = vsel %vm2416, 1, 0
        %v2449 = vsel %vm2417, 1, 0
        %v2450 = vsel %vm2418, 1, 0
        %v2451 = vsel %vm2419, 1, 0
        %v2452 = vsel %vm2420, 1, 0
        %v2453 = vsel %vm2421, 1, 0
        %v2454 = vsel %vm2422, 1, 0
        %v2455 = vsel %vm2423, 1, 0
        %v2456 = vsel %vm2424, 1, 0
        %v2457 = vsel %vm2425, 1, 0
        %v2458 = vsel %vm2426, 1, 0
        %v2459 = vsel %vm2427, 1, 0
        %v2460 = vsel %vm2428, 1, 0
        %v2461 = vsel %vm2429, 1, 0
        %v2462 = vsel %vm2430, 1, 0
        %v2463 = vsel %vm2431, 1, 0
        %v2464 = vsel %vm2432, 1, 0
        %v2465 = vsel %vm2433, 1, 0
        %v2466 = vsel %vm2434, 1, 0
        %v2467 = vsel %vm2435, 1, 0
        %v2468 = vsel %vm2436, 1, 0
        %v2469 = vsel %vm2437, 1, 0
        %v2470 = vsel %vm2438, 1, 0
        %v2471 = vsel %vm2439, 1, 0
        %v2472 = vsel %vm2440, 1, 0
        %v2473 = vsel %vm2441, 1, 0
        %v2474 = vsel %vm2442, 1, 0
        %v2475 = vsel %vm2443, 1, 0
        %v2476 = vcvt.s32.f32 %v2444
        %v2477 = vcvt.s32.f32 %v2445
        %v2478 = vcvt.s32.f32 %v2446
        %v2479 = vcvt.s32.f32 %v2447
        %v2480 = vcvt.s32.f32 %v2448
        %v2481 = vcvt.s32.f32 %v2449
        %v2482 = vcvt.s32.f32 %v2450
        %v2483 = vcvt.s32.f32 %v2451
        %v2484 = vcvt.s32.f32 %v2452
        %v2485 = vcvt.s32.f32 %v2453
        %v2486 = vcvt.s32.f32 %v2454
        %v2487 = vcvt.s32.f32 %v2455
        %v2488 = vcvt.s32.f32 %v2456
        %v2489 = vcvt.s32.f32 %v2457
        %v2490 = vcvt.s32.f32 %v2458
        %v2491 = vcvt.s32.f32 %v2459
        %v2492 = vcvt.s32.f32 %v2460
        %v2493 = vcvt.s32.f32 %v2461
        %v2494 = vcvt.s32.f32 %v2462
        %v2495 = vcvt.s32.f32 %v2463
        %v2496 = vcvt.s32.f32 %v2464
        %v2497 = vcvt.s32.f32 %v2465
        %v2498 = vcvt.s32.f32 %v2466
        %v2499 = vcvt.s32.f32 %v2467
        %v2500 = vcvt.s32.f32 %v2468
        %v2501 = vcvt.s32.f32 %v2469
        %v2502 = vcvt.s32.f32 %v2470
        %v2503 = vcvt.s32.f32 %v2471
        %v2504 = vcvt.s32.f32 %v2472
        %v2505 = vcvt.s32.f32 %v2473
        %v2506 = vcvt.s32.f32 %v2474
        %v2507 = vcvt.s32.f32 %v2475
        %vm2508 = vcmp.ge.s32.totalorder %v1900, 16
        %vm2509 = vcmp.ge.s32.totalorder %v1901, 16
        %vm2510 = vcmp.ge.s32.totalorder %v1902, 16
        %vm2511 = vcmp.ge.s32.totalorder %v1903, 16
        %vm2512 = vcmp.ge.s32.totalorder %v1904, 16
        %vm2513 = vcmp.ge.s32.totalorder %v1905, 16
        %vm2514 = vcmp.ge.s32.totalorder %v1906, 16
        %vm2515 = vcmp.ge.s32.totalorder %v1907, 16
        %vm2516 = vcmp.ge.s32.totalorder %v1908, 16
        %vm2517 = vcmp.ge.s32.totalorder %v1909, 16
        %vm2518 = vcmp.ge.s32.totalorder %v1910, 16
        %vm2519 = vcmp.ge.s32.totalorder %v1911, 16
        %vm2520 = vcmp.ge.s32.totalorder %v1912, 16
        %vm2521 = vcmp.ge.s32.totalorder %v1913, 16
        %vm2522 = vcmp.ge.s32.totalorder %v1914, 16
        %vm2523 = vcmp.ge.s32.totalorder %v1915, 16
        %vm2524 = vcmp.ge.s32.totalorder %v1916, 16
        %vm2525 = vcmp.ge.s32.totalorder %v1917, 16
        %vm2526 = vcmp.ge.s32.totalorder %v1918, 16
        %vm2527 = vcmp.ge.s32.totalorder %v1919, 16
        %vm2528 = vcmp.ge.s32.totalorder %v1920, 16
        %vm2529 = vcmp.ge.s32.totalorder %v1921, 16
        %vm2530 = vcmp.ge.s32.totalorder %v1922, 16
        %vm2531 = vcmp.ge.s32.totalorder %v1923, 16
        %vm2532 = vcmp.ge.s32.totalorder %v1924, 16
        %vm2533 = vcmp.ge.s32.totalorder %v1925, 16
        %vm2534 = vcmp.ge.s32.totalorder %v1926, 16
        %vm2535 = vcmp.ge.s32.totalorder %v1927, 16
        %vm2536 = vcmp.ge.s32.totalorder %v1928, 16
        %vm2537 = vcmp.ge.s32.totalorder %v1929, 16
        %vm2538 = vcmp.ge.s32.totalorder %v1930, 16
        %vm2539 = vcmp.ge.s32.totalorder %v1931, 16
        %v2540 = vsel %vm2508, 1, 0
        %v2541 = vsel %vm2509, 1, 0
        %v2542 = vsel %vm2510, 1, 0
        %v2543 = vsel %vm2511, 1, 0
        %v2544 = vsel %vm2512, 1, 0
        %v2545 = vsel %vm2513, 1, 0
        %v2546 = vsel %vm2514, 1, 0
        %v2547 = vsel %vm2515, 1, 0
        %v2548 = vsel %vm2516, 1, 0
        %v2549 = vsel %vm2517, 1, 0
        %v2550 = vsel %vm2518, 1, 0
        %v2551 = vsel %vm2519, 1, 0
        %v2552 = vsel %vm2520, 1, 0
        %v2553 = vsel %vm2521, 1, 0
        %v2554 = vsel %vm2522, 1, 0
        %v2555 = vsel %vm2523, 1, 0
        %v2556 = vsel %vm2524, 1, 0
        %v2557 = vsel %vm2525, 1, 0
        %v2558 = vsel %vm2526, 1, 0
        %v2559 = vsel %vm2527, 1, 0
        %v2560 = vsel %vm2528, 1, 0
        %v2561 = vsel %vm2529, 1, 0
        %v2562 = vsel %vm2530, 1, 0
        %v2563 = vsel %vm2531, 1, 0
        %v2564 = vsel %vm2532, 1, 0
        %v2565 = vsel %vm2533, 1, 0
        %v2566 = vsel %vm2534, 1, 0
        %v2567 = vsel %vm2535, 1, 0
        %v2568 = vsel %vm2536, 1, 0
        %v2569 = vsel %vm2537, 1, 0
        %v2570 = vsel %vm2538, 1, 0
        %v2571 = vsel %vm2539, 1, 0
        %v2572 = vcvt.s32.f32 %v2540
        %v2573 = vcvt.s32.f32 %v2541
        %v2574 = vcvt.s32.f32 %v2542
        %v2575 = vcvt.s32.f32 %v2543
        %v2576 = vcvt.s32.f32 %v2544
        %v2577 = vcvt.s32.f32 %v2545
        %v2578 = vcvt.s32.f32 %v2546
        %v2579 = vcvt.s32.f32 %v2547
        %v2580 = vcvt.s32.f32 %v2548
        %v2581 = vcvt.s32.f32 %v2549
        %v2582 = vcvt.s32.f32 %v2550
        %v2583 = vcvt.s32.f32 %v2551
        %v2584 = vcvt.s32.f32 %v2552
        %v2585 = vcvt.s32.f32 %v2553
        %v2586 = vcvt.s32.f32 %v2554
        %v2587 = vcvt.s32.f32 %v2555
        %v2588 = vcvt.s32.f32 %v2556
        %v2589 = vcvt.s32.f32 %v2557
        %v2590 = vcvt.s32.f32 %v2558
        %v2591 = vcvt.s32.f32 %v2559
        %v2592 = vcvt.s32.f32 %v2560
        %v2593 = vcvt.s32.f32 %v2561
        %v2594 = vcvt.s32.f32 %v2562
        %v2595 = vcvt.s32.f32 %v2563
        %v2596 = vcvt.s32.f32 %v2564
        %v2597 = vcvt.s32.f32 %v2565
        %v2598 = vcvt.s32.f32 %v2566
        %v2599 = vcvt.s32.f32 %v2567
        %v2600 = vcvt.s32.f32 %v2568
        %v2601 = vcvt.s32.f32 %v2569
        %v2602 = vcvt.s32.f32 %v2570
        %v2603 = vcvt.s32.f32 %v2571
        %vm2604 = vcmp.lt.s32.totalorder %v1900, 240
        %vm2605 = vcmp.lt.s32.totalorder %v1901, 240
        %vm2606 = vcmp.lt.s32.totalorder %v1902, 240
        %vm2607 = vcmp.lt.s32.totalorder %v1903, 240
        %vm2608 = vcmp.lt.s32.totalorder %v1904, 240
        %vm2609 = vcmp.lt.s32.totalorder %v1905, 240
        %vm2610 = vcmp.lt.s32.totalorder %v1906, 240
        %vm2611 = vcmp.lt.s32.totalorder %v1907, 240
        %vm2612 = vcmp.lt.s32.totalorder %v1908, 240
        %vm2613 = vcmp.lt.s32.totalorder %v1909, 240
        %vm2614 = vcmp.lt.s32.totalorder %v1910, 240
        %vm2615 = vcmp.lt.s32.totalorder %v1911, 240
        %vm2616 = vcmp.lt.s32.totalorder %v1912, 240
        %vm2617 = vcmp.lt.s32.totalorder %v1913, 240
        %vm2618 = vcmp.lt.s32.totalorder %v1914, 240
        %vm2619 = vcmp.lt.s32.totalorder %v1915, 240
        %vm2620 = vcmp.lt.s32.totalorder %v1916, 240
        %vm2621 = vcmp.lt.s32.totalorder %v1917, 240
        %vm2622 = vcmp.lt.s32.totalorder %v1918, 240
        %vm2623 = vcmp.lt.s32.totalorder %v1919, 240
        %vm2624 = vcmp.lt.s32.totalorder %v1920, 240
        %vm2625 = vcmp.lt.s32.totalorder %v1921, 240
        %vm2626 = vcmp.lt.s32.totalorder %v1922, 240
        %vm2627 = vcmp.lt.s32.totalorder %v1923, 240
        %vm2628 = vcmp.lt.s32.totalorder %v1924, 240
        %vm2629 = vcmp.lt.s32.totalorder %v1925, 240
        %vm2630 = vcmp.lt.s32.totalorder %v1926, 240
        %vm2631 = vcmp.lt.s32.totalorder %v1927, 240
        %vm2632 = vcmp.lt.s32.totalorder %v1928, 240
        %vm2633 = vcmp.lt.s32.totalorder %v1929, 240
        %vm2634 = vcmp.lt.s32.totalorder %v1930, 240
        %vm2635 = vcmp.lt.s32.totalorder %v1931, 240
        %v2636 = vsel %vm2604, 1, 0
        %v2637 = vsel %vm2605, 1, 0
        %v2638 = vsel %vm2606, 1, 0
        %v2639 = vsel %vm2607, 1, 0
        %v2640 = vsel %vm2608, 1, 0
        %v2641 = vsel %vm2609, 1, 0
        %v2642 = vsel %vm2610, 1, 0
        %v2643 = vsel %vm2611, 1, 0
        %v2644 = vsel %vm2612, 1, 0
        %v2645 = vsel %vm2613, 1, 0
        %v2646 = vsel %vm2614, 1, 0
        %v2647 = vsel %vm2615, 1, 0
        %v2648 = vsel %vm2616, 1, 0
        %v2649 = vsel %vm2617, 1, 0
        %v2650 = vsel %vm2618, 1, 0
        %v2651 = vsel %vm2619, 1, 0
        %v2652 = vsel %vm2620, 1, 0
        %v2653 = vsel %vm2621, 1, 0
        %v2654 = vsel %vm2622, 1, 0
        %v2655 = vsel %vm2623, 1, 0
        %v2656 = vsel %vm2624, 1, 0
        %v2657 = vsel %vm2625, 1, 0
        %v2658 = vsel %vm2626, 1, 0
        %v2659 = vsel %vm2627, 1, 0
        %v2660 = vsel %vm2628, 1, 0
        %v2661 = vsel %vm2629, 1, 0
        %v2662 = vsel %vm2630, 1, 0
        %v2663 = vsel %vm2631, 1, 0
        %v2664 = vsel %vm2632, 1, 0
        %v2665 = vsel %vm2633, 1, 0
        %v2666 = vsel %vm2634, 1, 0
        %v2667 = vsel %vm2635, 1, 0
        %v2668 = vcvt.s32.f32 %v2636
        %v2669 = vcvt.s32.f32 %v2637
        %v2670 = vcvt.s32.f32 %v2638
        %v2671 = vcvt.s32.f32 %v2639
        %v2672 = vcvt.s32.f32 %v2640
        %v2673 = vcvt.s32.f32 %v2641
        %v2674 = vcvt.s32.f32 %v2642
        %v2675 = vcvt.s32.f32 %v2643
        %v2676 = vcvt.s32.f32 %v2644
        %v2677 = vcvt.s32.f32 %v2645
        %v2678 = vcvt.s32.f32 %v2646
        %v2679 = vcvt.s32.f32 %v2647
        %v2680 = vcvt.s32.f32 %v2648
        %v2681 = vcvt.s32.f32 %v2649
        %v2682 = vcvt.s32.f32 %v2650
        %v2683 = vcvt.s32.f32 %v2651
        %v2684 = vcvt.s32.f32 %v2652
        %v2685 = vcvt.s32.f32 %v2653
        %v2686 = vcvt.s32.f32 %v2654
        %v2687 = vcvt.s32.f32 %v2655
        %v2688 = vcvt.s32.f32 %v2656
        %v2689 = vcvt.s32.f32 %v2657
        %v2690 = vcvt.s32.f32 %v2658
        %v2691 = vcvt.s32.f32 %v2659
        %v2692 = vcvt.s32.f32 %v2660
        %v2693 = vcvt.s32.f32 %v2661
        %v2694 = vcvt.s32.f32 %v2662
        %v2695 = vcvt.s32.f32 %v2663
        %v2696 = vcvt.s32.f32 %v2664
        %v2697 = vcvt.s32.f32 %v2665
        %v2698 = vcvt.s32.f32 %v2666
        %v2699 = vcvt.s32.f32 %v2667
        %v2700 = vld [vmem:[%s9] sm:$0xff]
        %v2701 = vld [vmem:[%s9 + $0x8] sm:$0x1]
        %v2702 = vrot.slane %v1773, 7
        %v2703 = vrot.slane %v1776, 7
        %v2704 = vrot.slane %v1781, 7
        %v2705 = vrot.slane %v1784, 7
        %v2706 = vrot.slane %v1789, 7
        %v2707 = vrot.slane %v1792, 7
        %v2708 = vrot.slane %v1797, 7
        %v2709 = vrot.slane %v1800, 7
        %v2710 = vrot.slane %v1805, 7
        %v2711 = vrot.slane %v1808, 7
        %v2712 = vrot.slane %v1813, 7
        %v2713 = vrot.slane %v1816, 7
        %v2714 = vrot.slane %v1821, 7
        %v2715 = vrot.slane %v1824, 7
        %v2716 = vrot.slane %v1829, 7
        %v2717 = vrot.slane %v1832, 7
        %v2718 = vrot.slane %v1837, 7
        %v2719 = vrot.slane %v1840, 7
        %v2720 = vrot.slane %v1845, 7
        %v2721 = vrot.slane %v1848, 7
        %v2722 = vrot.slane %v1853, 7
        %v2723 = vrot.slane %v1856, 7
        %v2724 = vrot.slane %v1861, 7
        %v2725 = vrot.slane %v1864, 7
        %v2726 = vrot.slane %v1869, 7
        %v2727 = vrot.slane %v1872, 7
        %v2728 = vrot.slane %v1877, 7
        %v2729 = vrot.slane %v1880, 7
        %v2730 = vrot.slane %v1885, 7
        %v2731 = vrot.slane %v1888, 7
        %v2732 = vrot.slane %v1893, 7
        %v2733 = vrot.slane %v1896, 7
        %vm2734 = vcmp.lt.s32.totalorder %v1900, 1
        %v2735 = vsel %vm2734, %v2732, %v2733
        %v2736 = vsel %vm2734, %v2731, %v2732
        %v2737 = vsel %vm2734, %v2730, %v2731
        %v2738 = vsel %vm2734, %v2729, %v2730
        %v2739 = vsel %vm2734, %v2728, %v2729
        %v2740 = vsel %vm2734, %v2727, %v2728
        %v2741 = vsel %vm2734, %v2726, %v2727
        %v2742 = vsel %vm2734, %v2725, %v2726
        %v2743 = vsel %vm2734, %v2724, %v2725
        %v2744 = vsel %vm2734, %v2723, %v2724
        %v2745 = vsel %vm2734, %v2722, %v2723
        %v2746 = vsel %vm2734, %v2721, %v2722
        %v2747 = vsel %vm2734, %v2720, %v2721
        %v2748 = vsel %vm2734, %v2719, %v2720
        %v2749 = vsel %vm2734, %v2718, %v2719
        %v2750 = vsel %vm2734, %v2717, %v2718
        %v2751 = vsel %vm2734, %v2716, %v2717
        %v2752 = vsel %vm2734, %v2715, %v2716
        %v2753 = vsel %vm2734, %v2714, %v2715
        %v2754 = vsel %vm2734, %v2713, %v2714
        %v2755 = vsel %vm2734, %v2712, %v2713
        %v2756 = vsel %vm2734, %v2711, %v2712
        %v2757 = vsel %vm2734, %v2710, %v2711
        %v2758 = vsel %vm2734, %v2709, %v2710
        %v2759 = vsel %vm2734, %v2708, %v2709
        %v2760 = vsel %vm2734, %v2707, %v2708
        %v2761 = vsel %vm2734, %v2706, %v2707
        %v2762 = vsel %vm2734, %v2705, %v2706
        %v2763 = vsel %vm2734, %v2704, %v2705
        %v2764 = vsel %vm2734, %v2703, %v2704
        %v2765 = vsel %vm2734, %v2702, %v2703
        %v2766 = vsel %vm2734, %v2733, %v2702
        %v2767 = vmul.f32 %v2572, %v2380
        %v2768 = vmul.f32 %v2573, %v2381
        %v2769 = vmul.f32 %v2574, %v2382
        %v2770 = vmul.f32 %v2575, %v2383
        %v2771 = vmul.f32 %v2576, %v2384
        %v2772 = vmul.f32 %v2577, %v2385
        %v2773 = vmul.f32 %v2578, %v2386
        %v2774 = vmul.f32 %v2579, %v2387
        %v2775 = vmul.f32 %v2580, %v2388
        %v2776 = vmul.f32 %v2581, %v2389
        %v2777 = vmul.f32 %v2582, %v2390
        %v2778 = vmul.f32 %v2583, %v2391
        %v2779 = vmul.f32 %v2584, %v2392
        %v2780 = vmul.f32 %v2585, %v2393
        %v2781 = vmul.f32 %v2586, %v2394
        %v2782 = vmul.f32 %v2587, %v2395
        %v2783 = vmul.f32 %v2588, %v2396
        %v2784 = vmul.f32 %v2589, %v2397
        %v2785 = vmul.f32 %v2590, %v2398
        %v2786 = vmul.f32 %v2591, %v2399
        %v2787 = vmul.f32 %v2592, %v2400
        %v2788 = vmul.f32 %v2593, %v2401
        %v2789 = vmul.f32 %v2594, %v2402
        %v2790 = vmul.f32 %v2595, %v2403
        %v2791 = vmul.f32 %v2596, %v2404
        %v2792 = vmul.f32 %v2597, %v2405
        %v2793 = vmul.f32 %v2598, %v2406
        %v2794 = vmul.f32 %v2599, %v2407
        %v2795 = vmul.f32 %v2600, %v2408
        %v2796 = vmul.f32 %v2601, %v2409
        %v2797 = vmul.f32 %v2602, %v2410
        %v2798 = vmul.f32 %v2603, %v2411
        %v2799 = vmul.f32 %v2736, %v2767
        %v2800 = vmul.f32 %v2735, %v2768
        %v2801 = vmul.f32 %v2766, %v2769
        %v2802 = vmul.f32 %v2765, %v2770
        %v2803 = vmul.f32 %v2764, %v2771
        %v2804 = vmul.f32 %v2763, %v2772
        %v2805 = vmul.f32 %v2762, %v2773
        %v2806 = vmul.f32 %v2761, %v2774
        %v2807 = vmul.f32 %v2760, %v2775
        %v2808 = vmul.f32 %v2759, %v2776
        %v2809 = vmul.f32 %v2758, %v2777
        %v2810 = vmul.f32 %v2757, %v2778
        %v2811 = vmul.f32 %v2756, %v2779
        %v2812 = vmul.f32 %v2755, %v2780
        %v2813 = vmul.f32 %v2754, %v2781
        %v2814 = vmul.f32 %v2753, %v2782
        %v2815 = vmul.f32 %v2752, %v2783
        %v2816 = vmul.f32 %v2751, %v2784
        %v2817 = vmul.f32 %v2750, %v2785
        %v2818 = vmul.f32 %v2749, %v2786
        %v2819 = vmul.f32 %v2748, %v2787
        %v2820 = vmul.f32 %v2747, %v2788
        %v2821 = vmul.f32 %v2746, %v2789
        %v2822 = vmul.f32 %v2745, %v2790
        %v2823 = vmul.f32 %v2744, %v2791
        %v2824 = vmul.f32 %v2743, %v2792
        %v2825 = vmul.f32 %v2742, %v2793
        %v2826 = vmul.f32 %v2741, %v2794
        %v2827 = vmul.f32 %v2740, %v2795
        %v2828 = vmul.f32 %v2739, %v2796
        %v2829 = vmul.f32 %v2738, %v2797
        %v2830 = vmul.f32 %v2737, %v2798
        %v2831 = vlaneseq
        %v2832 = vshrl.u32 %v2831, 7
        %v2833 = vsub.s32 0, %v2832
        %v2834 = vrot.slane %v2700, %v2833
        %v2835 = vmul.f32 %v2799, %v2834
        %v2836 = vmul.f32 %v2800, %v2834
        %v2837 = vmul.f32 %v2801, %v2834
        %v2838 = vmul.f32 %v2802, %v2834
        %v2839 = vmul.f32 %v2803, %v2834
        %v2840 = vmul.f32 %v2804, %v2834
        %v2841 = vmul.f32 %v2805, %v2834
        %v2842 = vmul.f32 %v2806, %v2834
        %v2843 = vmul.f32 %v2807, %v2834
        %v2844 = vmul.f32 %v2808, %v2834
        %v2845 = vmul.f32 %v2809, %v2834
        %v2846 = vmul.f32 %v2810, %v2834
        %v2847 = vmul.f32 %v2811, %v2834
        %v2848 = vmul.f32 %v2812, %v2834
        %v2849 = vmul.f32 %v2813, %v2834
        %v2850 = vmul.f32 %v2814, %v2834
        %v2851 = vmul.f32 %v2815, %v2834
        %v2852 = vmul.f32 %v2816, %v2834
        %v2853 = vmul.f32 %v2817, %v2834
        %v2854 = vmul.f32 %v2818, %v2834
        %v2855 = vmul.f32 %v2819, %v2834
        %v2856 = vmul.f32 %v2820, %v2834
        %v2857 = vmul.f32 %v2821, %v2834
        %v2858 = vmul.f32 %v2822, %v2834
        %v2859 = vmul.f32 %v2823, %v2834
        %v2860 = vmul.f32 %v2824, %v2834
        %v2861 = vmul.f32 %v2825, %v2834
        %v2862 = vmul.f32 %v2826, %v2834
        %v2863 = vmul.f32 %v2827, %v2834
        %v2864 = vmul.f32 %v2828, %v2834
        %v2865 = vmul.f32 %v2829, %v2834
        %v2866 = vmul.f32 %v2830, %v2834
        %v2867 = vmul.f32 %v1893, %v2572
        %v2868 = vmul.f32 %v1896, %v2573
        %v2869 = vmul.f32 %v1773, %v2574
        %v2870 = vmul.f32 %v1776, %v2575
        %v2871 = vmul.f32 %v1781, %v2576
        %v2872 = vmul.f32 %v1784, %v2577
        %v2873 = vmul.f32 %v1789, %v2578
        %v2874 = vmul.f32 %v1792, %v2579
        %v2875 = vmul.f32 %v1797, %v2580
        %v2876 = vmul.f32 %v1800, %v2581
        %v2877 = vmul.f32 %v1805, %v2582
        %v2878 = vmul.f32 %v1808, %v2583
        %v2879 = vmul.f32 %v1813, %v2584
        %v2880 = vmul.f32 %v1816, %v2585
        %v2881 = vmul.f32 %v1821, %v2586
        %v2882 = vmul.f32 %v1824, %v2587
        %v2883 = vmul.f32 %v1829, %v2588
        %v2884 = vmul.f32 %v1832, %v2589
        %v2885 = vmul.f32 %v1837, %v2590
        %v2886 = vmul.f32 %v1840, %v2591
        %v2887 = vmul.f32 %v1845, %v2592
        %v2888 = vmul.f32 %v1848, %v2593
        %v2889 = vmul.f32 %v1853, %v2594
        %v2890 = vmul.f32 %v1856, %v2595
        %v2891 = vmul.f32 %v1861, %v2596
        %v2892 = vmul.f32 %v1864, %v2597
        %v2893 = vmul.f32 %v1869, %v2598
        %v2894 = vmul.f32 %v1872, %v2599
        %v2895 = vmul.f32 %v1877, %v2600
        %v2896 = vmul.f32 %v1880, %v2601
        %v2897 = vmul.f32 %v1885, %v2602
        %v2898 = vmul.f32 %v1888, %v2603
        %v2899 = vlaneseq
        %v2900 = vshrl.u32 %v2899, 7
        %v2901 = vsub.s32 1, %v2900
        %v2902 = vrot.slane %v2700, %v2901
        %v2903 = vmul.f32 %v2867, %v2902
        %v2904 = vmul.f32 %v2868, %v2902
        %v2905 = vmul.f32 %v2869, %v2902
        %v2906 = vmul.f32 %v2870, %v2902
        %v2907 = vmul.f32 %v2871, %v2902
        %v2908 = vmul.f32 %v2872, %v2902
        %v2909 = vmul.f32 %v2873, %v2902
        %v2910 = vmul.f32 %v2874, %v2902
        %v2911 = vmul.f32 %v2875, %v2902
        %v2912 = vmul.f32 %v2876, %v2902
        %v2913 = vmul.f32 %v2877, %v2902
        %v2914 = vmul.f32 %v2878, %v2902
        %v2915 = vmul.f32 %v2879, %v2902
        %v2916 = vmul.f32 %v2880, %v2902
        %v2917 = vmul.f32 %v2881, %v2902
        %v2918 = vmul.f32 %v2882, %v2902
        %v2919 = vmul.f32 %v2883, %v2902
        %v2920 = vmul.f32 %v2884, %v2902
        %v2921 = vmul.f32 %v2885, %v2902
        %v2922 = vmul.f32 %v2886, %v2902
        %v2923 = vmul.f32 %v2887, %v2902
        %v2924 = vmul.f32 %v2888, %v2902
        %v2925 = vmul.f32 %v2889, %v2902
        %v2926 = vmul.f32 %v2890, %v2902
        %v2927 = vmul.f32 %v2891, %v2902
        %v2928 = vmul.f32 %v2892, %v2902
        %v2929 = vmul.f32 %v2893, %v2902
        %v2930 = vmul.f32 %v2894, %v2902
        %v2931 = vmul.f32 %v2895, %v2902
        %v2932 = vmul.f32 %v2896, %v2902
        %v2933 = vmul.f32 %v2897, %v2902
        %v2934 = vmul.f32 %v2898, %v2902
        %v2935 = vadd.f32 %v2835, %v2903
        %v2936 = vadd.f32 %v2836, %v2904
        %v2937 = vadd.f32 %v2837, %v2905
        %v2938 = vadd.f32 %v2838, %v2906
        %v2939 = vadd.f32 %v2839, %v2907
        %v2940 = vadd.f32 %v2840, %v2908
        %v2941 = vadd.f32 %v2841, %v2909
        %v2942 = vadd.f32 %v2842, %v2910
        %v2943 = vadd.f32 %v2843, %v2911
        %v2944 = vadd.f32 %v2844, %v2912
        %v2945 = vadd.f32 %v2845, %v2913
        %v2946 = vadd.f32 %v2846, %v2914
        %v2947 = vadd.f32 %v2847, %v2915
        %v2948 = vadd.f32 %v2848, %v2916
        %v2949 = vadd.f32 %v2849, %v2917
        %v2950 = vadd.f32 %v2850, %v2918
        %v2951 = vadd.f32 %v2851, %v2919
        %v2952 = vadd.f32 %v2852, %v2920
        %v2953 = vadd.f32 %v2853, %v2921
        %v2954 = vadd.f32 %v2854, %v2922
        %v2955 = vadd.f32 %v2855, %v2923
        %v2956 = vadd.f32 %v2856, %v2924
        %v2957 = vadd.f32 %v2857, %v2925
        %v2958 = vadd.f32 %v2858, %v2926
        %v2959 = vadd.f32 %v2859, %v2927
        %v2960 = vadd.f32 %v2860, %v2928
        %v2961 = vadd.f32 %v2861, %v2929
        %v2962 = vadd.f32 %v2862, %v2930
        %v2963 = vadd.f32 %v2863, %v2931
        %v2964 = vadd.f32 %v2864, %v2932
        %v2965 = vadd.f32 %v2865, %v2933
        %v2966 = vadd.f32 %v2866, %v2934
        %v2967 = vrot.slane %v1773, 1
        %v2968 = vrot.slane %v1776, 1
        %v2969 = vrot.slane %v1781, 1
        %v2970 = vrot.slane %v1784, 1
        %v2971 = vrot.slane %v1789, 1
        %v2972 = vrot.slane %v1792, 1
        %v2973 = vrot.slane %v1797, 1
        %v2974 = vrot.slane %v1800, 1
        %v2975 = vrot.slane %v1805, 1
        %v2976 = vrot.slane %v1808, 1
        %v2977 = vrot.slane %v1813, 1
        %v2978 = vrot.slane %v1816, 1
        %v2979 = vrot.slane %v1821, 1
        %v2980 = vrot.slane %v1824, 1
        %v2981 = vrot.slane %v1829, 1
        %v2982 = vrot.slane %v1832, 1
        %v2983 = vrot.slane %v1837, 1
        %v2984 = vrot.slane %v1840, 1
        %v2985 = vrot.slane %v1845, 1
        %v2986 = vrot.slane %v1848, 1
        %v2987 = vrot.slane %v1853, 1
        %v2988 = vrot.slane %v1856, 1
        %v2989 = vrot.slane %v1861, 1
        %v2990 = vrot.slane %v1864, 1
        %v2991 = vrot.slane %v1869, 1
        %v2992 = vrot.slane %v1872, 1
        %v2993 = vrot.slane %v1877, 1
        %v2994 = vrot.slane %v1880, 1
        %v2995 = vrot.slane %v1885, 1
        %v2996 = vrot.slane %v1888, 1
        %v2997 = vrot.slane %v1893, 1
        %v2998 = vrot.slane %v1896, 1
        %vm2999 = vcmp.lt.s32.totalorder %v1900, 7
        %v3000 = vsel %vm2999, %v2997, %v2998
        %v3001 = vsel %vm2999, %v2996, %v2997
        %v3002 = vsel %vm2999, %v2995, %v2996
        %v3003 = vsel %vm2999, %v2994, %v2995
        %v3004 = vsel %vm2999, %v2993, %v2994
        %v3005 = vsel %vm2999, %v2992, %v2993
        %v3006 = vsel %vm2999, %v2991, %v2992
        %v3007 = vsel %vm2999, %v2990, %v2991
        %v3008 = vsel %vm2999, %v2989, %v2990
        %v3009 = vsel %vm2999, %v2988, %v2989
        %v3010 = vsel %vm2999, %v2987, %v2988
        %v3011 = vsel %vm2999, %v2986, %v2987
        %v3012 = vsel %vm2999, %v2985, %v2986
        %v3013 = vsel %vm2999, %v2984, %v2985
        %v3014 = vsel %vm2999, %v2983, %v2984
        %v3015 = vsel %vm2999, %v2982, %v2983
        %v3016 = vsel %vm2999, %v2981, %v2982
        %v3017 = vsel %vm2999, %v2980, %v2981
        %v3018 = vsel %vm2999, %v2979, %v2980
        %v3019 = vsel %vm2999, %v2978, %v2979
        %v3020 = vsel %vm2999, %v2977, %v2978
        %v3021 = vsel %vm2999, %v2976, %v2977
        %v3022 = vsel %vm2999, %v2975, %v2976
        %v3023 = vsel %vm2999, %v2974, %v2975
        %v3024 = vsel %vm2999, %v2973, %v2974
        %v3025 = vsel %vm2999, %v2972, %v2973
        %v3026 = vsel %vm2999, %v2971, %v2972
        %v3027 = vsel %vm2999, %v2970, %v2971
        %v3028 = vsel %vm2999, %v2969, %v2970
        %v3029 = vsel %vm2999, %v2968, %v2969
        %v3030 = vsel %vm2999, %v2967, %v2968
        %v3031 = vsel %vm2999, %v2998, %v2967
        %v3032 = vmul.f32 %v2572, %v2476
        %v3033 = vmul.f32 %v2573, %v2477
        %v3034 = vmul.f32 %v2574, %v2478
        %v3035 = vmul.f32 %v2575, %v2479
        %v3036 = vmul.f32 %v2576, %v2480
        %v3037 = vmul.f32 %v2577, %v2481
        %v3038 = vmul.f32 %v2578, %v2482
        %v3039 = vmul.f32 %v2579, %v2483
        %v3040 = vmul.f32 %v2580, %v2484
        %v3041 = vmul.f32 %v2581, %v2485
        %v3042 = vmul.f32 %v2582, %v2486
        %v3043 = vmul.f32 %v2583, %v2487
        %v3044 = vmul.f32 %v2584, %v2488
        %v3045 = vmul.f32 %v2585, %v2489
        %v3046 = vmul.f32 %v2586, %v2490
        %v3047 = vmul.f32 %v2587, %v2491
        %v3048 = vmul.f32 %v2588, %v2492
        %v3049 = vmul.f32 %v2589, %v2493
        %v3050 = vmul.f32 %v2590, %v2494
        %v3051 = vmul.f32 %v2591, %v2495
        %v3052 = vmul.f32 %v2592, %v2496
        %v3053 = vmul.f32 %v2593, %v2497
        %v3054 = vmul.f32 %v2594, %v2498
        %v3055 = vmul.f32 %v2595, %v2499
        %v3056 = vmul.f32 %v2596, %v2500
        %v3057 = vmul.f32 %v2597, %v2501
        %v3058 = vmul.f32 %v2598, %v2502
        %v3059 = vmul.f32 %v2599, %v2503
        %v3060 = vmul.f32 %v2600, %v2504
        %v3061 = vmul.f32 %v2601, %v2505
        %v3062 = vmul.f32 %v2602, %v2506
        %v3063 = vmul.f32 %v2603, %v2507
        %v3064 = vmul.f32 %v3000, %v3032
        %v3065 = vmul.f32 %v3031, %v3033
        %v3066 = vmul.f32 %v3030, %v3034
        %v3067 = vmul.f32 %v3029, %v3035
        %v3068 = vmul.f32 %v3028, %v3036
        %v3069 = vmul.f32 %v3027, %v3037
        %v3070 = vmul.f32 %v3026, %v3038
        %v3071 = vmul.f32 %v3025, %v3039
        %v3072 = vmul.f32 %v3024, %v3040
        %v3073 = vmul.f32 %v3023, %v3041
        %v3074 = vmul.f32 %v3022, %v3042
        %v3075 = vmul.f32 %v3021, %v3043
        %v3076 = vmul.f32 %v3020, %v3044
        %v3077 = vmul.f32 %v3019, %v3045
        %v3078 = vmul.f32 %v3018, %v3046
        %v3079 = vmul.f32 %v3017, %v3047
        %v3080 = vmul.f32 %v3016, %v3048
        %v3081 = vmul.f32 %v3015, %v3049
        %v3082 = vmul.f32 %v3014, %v3050
        %v3083 = vmul.f32 %v3013, %v3051
        %v3084 = vmul.f32 %v3012, %v3052
        %v3085 = vmul.f32 %v3011, %v3053
        %v3086 = vmul.f32 %v3010, %v3054
        %v3087 = vmul.f32 %v3009, %v3055
        %v3088 = vmul.f32 %v3008, %v3056
        %v3089 = vmul.f32 %v3007, %v3057
        %v3090 = vmul.f32 %v3006, %v3058
        %v3091 = vmul.f32 %v3005, %v3059
        %v3092 = vmul.f32 %v3004, %v3060
        %v3093 = vmul.f32 %v3003, %v3061
        %v3094 = vmul.f32 %v3002, %v3062
        %v3095 = vmul.f32 %v3001, %v3063
        %v3096 = vlaneseq
        %v3097 = vshrl.u32 %v3096, 7
        %v3098 = vsub.s32 2, %v3097
        %v3099 = vrot.slane %v2700, %v3098
        %v3100 = vmul.f32 %v3064, %v3099
        %v3101 = vmul.f32 %v3065, %v3099
        %v3102 = vmul.f32 %v3066, %v3099
        %v3103 = vmul.f32 %v3067, %v3099
        %v3104 = vmul.f32 %v3068, %v3099
        %v3105 = vmul.f32 %v3069, %v3099
        %v3106 = vmul.f32 %v3070, %v3099
        %v3107 = vmul.f32 %v3071, %v3099
        %v3108 = vmul.f32 %v3072, %v3099
        %v3109 = vmul.f32 %v3073, %v3099
        %v3110 = vmul.f32 %v3074, %v3099
        %v3111 = vmul.f32 %v3075, %v3099
        %v3112 = vmul.f32 %v3076, %v3099
        %v3113 = vmul.f32 %v3077, %v3099
        %v3114 = vmul.f32 %v3078, %v3099
        %v3115 = vmul.f32 %v3079, %v3099
        %v3116 = vmul.f32 %v3080, %v3099
        %v3117 = vmul.f32 %v3081, %v3099
        %v3118 = vmul.f32 %v3082, %v3099
        %v3119 = vmul.f32 %v3083, %v3099
        %v3120 = vmul.f32 %v3084, %v3099
        %v3121 = vmul.f32 %v3085, %v3099
        %v3122 = vmul.f32 %v3086, %v3099
        %v3123 = vmul.f32 %v3087, %v3099
        %v3124 = vmul.f32 %v3088, %v3099
        %v3125 = vmul.f32 %v3089, %v3099
        %v3126 = vmul.f32 %v3090, %v3099
        %v3127 = vmul.f32 %v3091, %v3099
        %v3128 = vmul.f32 %v3092, %v3099
        %v3129 = vmul.f32 %v3093, %v3099
        %v3130 = vmul.f32 %v3094, %v3099
        %v3131 = vmul.f32 %v3095, %v3099
        %v3132 = vadd.f32 %v2935, %v3100
        %v3133 = vadd.f32 %v2936, %v3101
        %v3134 = vadd.f32 %v2937, %v3102
        %v3135 = vadd.f32 %v2938, %v3103
        %v3136 = vadd.f32 %v2939, %v3104
        %v3137 = vadd.f32 %v2940, %v3105
        %v3138 = vadd.f32 %v2941, %v3106
        %v3139 = vadd.f32 %v2942, %v3107
        %v3140 = vadd.f32 %v2943, %v3108
        %v3141 = vadd.f32 %v2944, %v3109
        %v3142 = vadd.f32 %v2945, %v3110
        %v3143 = vadd.f32 %v2946, %v3111
        %v3144 = vadd.f32 %v2947, %v3112
        %v3145 = vadd.f32 %v2948, %v3113
        %v3146 = vadd.f32 %v2949, %v3114
        %v3147 = vadd.f32 %v2950, %v3115
        %v3148 = vadd.f32 %v2951, %v3116
        %v3149 = vadd.f32 %v2952, %v3117
        %v3150 = vadd.f32 %v2953, %v3118
        %v3151 = vadd.f32 %v2954, %v3119
        %v3152 = vadd.f32 %v2955, %v3120
        %v3153 = vadd.f32 %v2956, %v3121
        %v3154 = vadd.f32 %v2957, %v3122
        %v3155 = vadd.f32 %v2958, %v3123
        %v3156 = vadd.f32 %v2959, %v3124
        %v3157 = vadd.f32 %v2960, %v3125
        %v3158 = vadd.f32 %v2961, %v3126
        %v3159 = vadd.f32 %v2962, %v3127
        %v3160 = vadd.f32 %v2963, %v3128
        %v3161 = vadd.f32 %v2964, %v3129
        %v3162 = vadd.f32 %v2965, %v3130
        %v3163 = vadd.f32 %v2966, %v3131
        %v3164 = vmul.f32 %v2766, %v2380
        %v3165 = vmul.f32 %v2765, %v2381
        %v3166 = vmul.f32 %v2764, %v2382
        %v3167 = vmul.f32 %v2763, %v2383
        %v3168 = vmul.f32 %v2762, %v2384
        %v3169 = vmul.f32 %v2761, %v2385
        %v3170 = vmul.f32 %v2760, %v2386
        %v3171 = vmul.f32 %v2759, %v2387
        %v3172 = vmul.f32 %v2758, %v2388
        %v3173 = vmul.f32 %v2757, %v2389
        %v3174 = vmul.f32 %v2756, %v2390
        %v3175 = vmul.f32 %v2755, %v2391
        %v3176 = vmul.f32 %v2754, %v2392
        %v3177 = vmul.f32 %v2753, %v2393
        %v3178 = vmul.f32 %v2752, %v2394
        %v3179 = vmul.f32 %v2751, %v2395
        %v3180 = vmul.f32 %v2750, %v2396
        %v3181 = vmul.f32 %v2749, %v2397
        %v3182 = vmul.f32 %v2748, %v2398
        %v3183 = vmul.f32 %v2747, %v2399
        %v3184 = vmul.f32 %v2746, %v2400
        %v3185 = vmul.f32 %v2745, %v2401
        %v3186 = vmul.f32 %v2744, %v2402
        %v3187 = vmul.f32 %v2743, %v2403
        %v3188 = vmul.f32 %v2742, %v2404
        %v3189 = vmul.f32 %v2741, %v2405
        %v3190 = vmul.f32 %v2740, %v2406
        %v3191 = vmul.f32 %v2739, %v2407
        %v3192 = vmul.f32 %v2738, %v2408
        %v3193 = vmul.f32 %v2737, %v2409
        %v3194 = vmul.f32 %v2736, %v2410
        %v3195 = vmul.f32 %v2735, %v2411
        %v3196 = vlaneseq
        %v3197 = vshrl.u32 %v3196, 7
        %v3198 = vsub.s32 3, %v3197
        %v3199 = vrot.slane %v2700, %v3198
        %v3200 = vmul.f32 %v3164, %v3199
        %v3201 = vmul.f32 %v3165, %v3199
        %v3202 = vmul.f32 %v3166, %v3199
        %v3203 = vmul.f32 %v3167, %v3199
        %v3204 = vmul.f32 %v3168, %v3199
        %v3205 = vmul.f32 %v3169, %v3199
        %v3206 = vmul.f32 %v3170, %v3199
        %v3207 = vmul.f32 %v3171, %v3199
        %v3208 = vmul.f32 %v3172, %v3199
        %v3209 = vmul.f32 %v3173, %v3199
        %v3210 = vmul.f32 %v3174, %v3199
        %v3211 = vmul.f32 %v3175, %v3199
        %v3212 = vmul.f32 %v3176, %v3199
        %v3213 = vmul.f32 %v3177, %v3199
        %v3214 = vmul.f32 %v3178, %v3199
        %v3215 = vmul.f32 %v3179, %v3199
        %v3216 = vmul.f32 %v3180, %v3199
        %v3217 = vmul.f32 %v3181, %v3199
        %v3218 = vmul.f32 %v3182, %v3199
        %v3219 = vmul.f32 %v3183, %v3199
        %v3220 = vmul.f32 %v3184, %v3199
        %v3221 = vmul.f32 %v3185, %v3199
        %v3222 = vmul.f32 %v3186, %v3199
        %v3223 = vmul.f32 %v3187, %v3199
        %v3224 = vmul.f32 %v3188, %v3199
        %v3225 = vmul.f32 %v3189, %v3199
        %v3226 = vmul.f32 %v3190, %v3199
        %v3227 = vmul.f32 %v3191, %v3199
        %v3228 = vmul.f32 %v3192, %v3199
        %v3229 = vmul.f32 %v3193, %v3199
        %v3230 = vmul.f32 %v3194, %v3199
        %v3231 = vmul.f32 %v3195, %v3199
        %v3232 = vadd.f32 %v3132, %v3200
        %v3233 = vadd.f32 %v3133, %v3201
        %v3234 = vadd.f32 %v3134, %v3202
        %v3235 = vadd.f32 %v3135, %v3203
        %v3236 = vadd.f32 %v3136, %v3204
        %v3237 = vadd.f32 %v3137, %v3205
        %v3238 = vadd.f32 %v3138, %v3206
        %v3239 = vadd.f32 %v3139, %v3207
        %v3240 = vadd.f32 %v3140, %v3208
        %v3241 = vadd.f32 %v3141, %v3209
        %v3242 = vadd.f32 %v3142, %v3210
        %v3243 = vadd.f32 %v3143, %v3211
        %v3244 = vadd.f32 %v3144, %v3212
        %v3245 = vadd.f32 %v3145, %v3213
        %v3246 = vadd.f32 %v3146, %v3214
        %v3247 = vadd.f32 %v3147, %v3215
        %v3248 = vadd.f32 %v3148, %v3216
        %v3249 = vadd.f32 %v3149, %v3217
        %v3250 = vadd.f32 %v3150, %v3218
        %v3251 = vadd.f32 %v3151, %v3219
        %v3252 = vadd.f32 %v3152, %v3220
        %v3253 = vadd.f32 %v3153, %v3221
        %v3254 = vadd.f32 %v3154, %v3222
        %v3255 = vadd.f32 %v3155, %v3223
        %v3256 = vadd.f32 %v3156, %v3224
        %v3257 = vadd.f32 %v3157, %v3225
        %v3258 = vadd.f32 %v3158, %v3226
        %v3259 = vadd.f32 %v3159, %v3227
        %v3260 = vadd.f32 %v3160, %v3228
        %v3261 = vadd.f32 %v3161, %v3229
        %v3262 = vadd.f32 %v3162, %v3230
        %v3263 = vadd.f32 %v3163, %v3231
        %v3264 = vlaneseq
        %v3265 = vshrl.u32 %v3264, 7
        %v3266 = vsub.s32 4, %v3265
        %v3267 = vrot.slane %v2700, %v3266
        %v3268 = vmul.f32 %v1773, %v3267
        %v3269 = vmul.f32 %v1776, %v3267
        %v3270 = vmul.f32 %v1781, %v3267
        %v3271 = vmul.f32 %v1784, %v3267
        %v3272 = vmul.f32 %v1789, %v3267
        %v3273 = vmul.f32 %v1792, %v3267
        %v3274 = vmul.f32 %v1797, %v3267
        %v3275 = vmul.f32 %v1800, %v3267
        %v3276 = vmul.f32 %v1805, %v3267
        %v3277 = vmul.f32 %v1808, %v3267
        %v3278 = vmul.f32 %v1813, %v3267
        %v3279 = vmul.f32 %v1816, %v3267
        %v3280 = vmul.f32 %v1821, %v3267
        %v3281 = vmul.f32 %v1824, %v3267
        %v3282 = vmul.f32 %v1829, %v3267
        %v3283 = vmul.f32 %v1832, %v3267
        %v3284 = vmul.f32 %v1837, %v3267
        %v3285 = vmul.f32 %v1840, %v3267
        %v3286 = vmul.f32 %v1845, %v3267
        %v3287 = vmul.f32 %v1848, %v3267
        %v3288 = vmul.f32 %v1853, %v3267
        %v3289 = vmul.f32 %v1856, %v3267
        %v3290 = vmul.f32 %v1861, %v3267
        %v3291 = vmul.f32 %v1864, %v3267
        %v3292 = vmul.f32 %v1869, %v3267
        %v3293 = vmul.f32 %v1872, %v3267
        %v3294 = vmul.f32 %v1877, %v3267
        %v3295 = vmul.f32 %v1880, %v3267
        %v3296 = vmul.f32 %v1885, %v3267
        %v3297 = vmul.f32 %v1888, %v3267
        %v3298 = vmul.f32 %v1893, %v3267
        %v3299 = vmul.f32 %v1896, %v3267
        %v3300 = vadd.f32 %v3232, %v3268
        %v3301 = vadd.f32 %v3233, %v3269
        %v3302 = vadd.f32 %v3234, %v3270
        %v3303 = vadd.f32 %v3235, %v3271
        %v3304 = vadd.f32 %v3236, %v3272
        %v3305 = vadd.f32 %v3237, %v3273
        %v3306 = vadd.f32 %v3238, %v3274
        %v3307 = vadd.f32 %v3239, %v3275
        %v3308 = vadd.f32 %v3240, %v3276
        %v3309 = vadd.f32 %v3241, %v3277
        %v3310 = vadd.f32 %v3242, %v3278
        %v3311 = vadd.f32 %v3243, %v3279
        %v3312 = vadd.f32 %v3244, %v3280
        %v3313 = vadd.f32 %v3245, %v3281
        %v3314 = vadd.f32 %v3246, %v3282
        %v3315 = vadd.f32 %v3247, %v3283
        %v3316 = vadd.f32 %v3248, %v3284
        %v3317 = vadd.f32 %v3249, %v3285
        %v3318 = vadd.f32 %v3250, %v3286
        %v3319 = vadd.f32 %v3251, %v3287
        %v3320 = vadd.f32 %v3252, %v3288
        %v3321 = vadd.f32 %v3253, %v3289
        %v3322 = vadd.f32 %v3254, %v3290
        %v3323 = vadd.f32 %v3255, %v3291
        %v3324 = vadd.f32 %v3256, %v3292
        %v3325 = vadd.f32 %v3257, %v3293
        %v3326 = vadd.f32 %v3258, %v3294
        %v3327 = vadd.f32 %v3259, %v3295
        %v3328 = vadd.f32 %v3260, %v3296
        %v3329 = vadd.f32 %v3261, %v3297
        %v3330 = vadd.f32 %v3262, %v3298
        %v3331 = vadd.f32 %v3263, %v3299
        %v3332 = vmul.f32 %v3030, %v2476
        %v3333 = vmul.f32 %v3029, %v2477
        %v3334 = vmul.f32 %v3028, %v2478
        %v3335 = vmul.f32 %v3027, %v2479
        %v3336 = vmul.f32 %v3026, %v2480
        %v3337 = vmul.f32 %v3025, %v2481
        %v3338 = vmul.f32 %v3024, %v2482
        %v3339 = vmul.f32 %v3023, %v2483
        %v3340 = vmul.f32 %v3022, %v2484
        %v3341 = vmul.f32 %v3021, %v2485
        %v3342 = vmul.f32 %v3020, %v2486
        %v3343 = vmul.f32 %v3019, %v2487
        %v3344 = vmul.f32 %v3018, %v2488
        %v3345 = vmul.f32 %v3017, %v2489
        %v3346 = vmul.f32 %v3016, %v2490
        %v3347 = vmul.f32 %v3015, %v2491
        %v3348 = vmul.f32 %v3014, %v2492
        %v3349 = vmul.f32 %v3013, %v2493
        %v3350 = vmul.f32 %v3012, %v2494
        %v3351 = vmul.f32 %v3011, %v2495
        %v3352 = vmul.f32 %v3010, %v2496
        %v3353 = vmul.f32 %v3009, %v2497
        %v3354 = vmul.f32 %v3008, %v2498
        %v3355 = vmul.f32 %v3007, %v2499
        %v3356 = vmul.f32 %v3006, %v2500
        %v3357 = vmul.f32 %v3005, %v2501
        %v3358 = vmul.f32 %v3004, %v2502
        %v3359 = vmul.f32 %v3003, %v2503
        %v3360 = vmul.f32 %v3002, %v2504
        %v3361 = vmul.f32 %v3001, %v2505
        %v3362 = vmul.f32 %v3000, %v2506
        %v3363 = vmul.f32 %v3031, %v2507
        %v3364 = vlaneseq
        %v3365 = vshrl.u32 %v3364, 7
        %v3366 = vsub.s32 5, %v3365
        %v3367 = vrot.slane %v2700, %v3366
        %v3368 = vmul.f32 %v3332, %v3367
        %v3369 = vmul.f32 %v3333, %v3367
        %v3370 = vmul.f32 %v3334, %v3367
        %v3371 = vmul.f32 %v3335, %v3367
        %v3372 = vmul.f32 %v3336, %v3367
        %v3373 = vmul.f32 %v3337, %v3367
        %v3374 = vmul.f32 %v3338, %v3367
        %v3375 = vmul.f32 %v3339, %v3367
        %v3376 = vmul.f32 %v3340, %v3367
        %v3377 = vmul.f32 %v3341, %v3367
        %v3378 = vmul.f32 %v3342, %v3367
        %v3379 = vmul.f32 %v3343, %v3367
        %v3380 = vmul.f32 %v3344, %v3367
        %v3381 = vmul.f32 %v3345, %v3367
        %v3382 = vmul.f32 %v3346, %v3367
        %v3383 = vmul.f32 %v3347, %v3367
        %v3384 = vmul.f32 %v3348, %v3367
        %v3385 = vmul.f32 %v3349, %v3367
        %v3386 = vmul.f32 %v3350, %v3367
        %v3387 = vmul.f32 %v3351, %v3367
        %v3388 = vmul.f32 %v3352, %v3367
        %v3389 = vmul.f32 %v3353, %v3367
        %v3390 = vmul.f32 %v3354, %v3367
        %v3391 = vmul.f32 %v3355, %v3367
        %v3392 = vmul.f32 %v3356, %v3367
        %v3393 = vmul.f32 %v3357, %v3367
        %v3394 = vmul.f32 %v3358, %v3367
        %v3395 = vmul.f32 %v3359, %v3367
        %v3396 = vmul.f32 %v3360, %v3367
        %v3397 = vmul.f32 %v3361, %v3367
        %v3398 = vmul.f32 %v3362, %v3367
        %v3399 = vmul.f32 %v3363, %v3367
        %v3400 = vadd.f32 %v3300, %v3368
        %v3401 = vadd.f32 %v3301, %v3369
        %v3402 = vadd.f32 %v3302, %v3370
        %v3403 = vadd.f32 %v3303, %v3371
        %v3404 = vadd.f32 %v3304, %v3372
        %v3405 = vadd.f32 %v3305, %v3373
        %v3406 = vadd.f32 %v3306, %v3374
        %v3407 = vadd.f32 %v3307, %v3375
        %v3408 = vadd.f32 %v3308, %v3376
        %v3409 = vadd.f32 %v3309, %v3377
        %v3410 = vadd.f32 %v3310, %v3378
        %v3411 = vadd.f32 %v3311, %v3379
        %v3412 = vadd.f32 %v3312, %v3380
        %v3413 = vadd.f32 %v3313, %v3381
        %v3414 = vadd.f32 %v3314, %v3382
        %v3415 = vadd.f32 %v3315, %v3383
        %v3416 = vadd.f32 %v3316, %v3384
        %v3417 = vadd.f32 %v3317, %v3385
        %v3418 = vadd.f32 %v3318, %v3386
        %v3419 = vadd.f32 %v3319, %v3387
        %v3420 = vadd.f32 %v3320, %v3388
        %v3421 = vadd.f32 %v3321, %v3389
        %v3422 = vadd.f32 %v3322, %v3390
        %v3423 = vadd.f32 %v3323, %v3391
        %v3424 = vadd.f32 %v3324, %v3392
        %v3425 = vadd.f32 %v3325, %v3393
        %v3426 = vadd.f32 %v3326, %v3394
        %v3427 = vadd.f32 %v3327, %v3395
        %v3428 = vadd.f32 %v3328, %v3396
        %v3429 = vadd.f32 %v3329, %v3397
        %v3430 = vadd.f32 %v3330, %v3398
        %v3431 = vadd.f32 %v3331, %v3399
        %v3432 = vmul.f32 %v2668, %v2380
        %v3433 = vmul.f32 %v2669, %v2381
        %v3434 = vmul.f32 %v2670, %v2382
        %v3435 = vmul.f32 %v2671, %v2383
        %v3436 = vmul.f32 %v2672, %v2384
        %v3437 = vmul.f32 %v2673, %v2385
        %v3438 = vmul.f32 %v2674, %v2386
        %v3439 = vmul.f32 %v2675, %v2387
        %v3440 = vmul.f32 %v2676, %v2388
        %v3441 = vmul.f32 %v2677, %v2389
        %v3442 = vmul.f32 %v2678, %v2390
        %v3443 = vmul.f32 %v2679, %v2391
        %v3444 = vmul.f32 %v2680, %v2392
        %v3445 = vmul.f32 %v2681, %v2393
        %v3446 = vmul.f32 %v2682, %v2394
        %v3447 = vmul.f32 %v2683, %v2395
        %v3448 = vmul.f32 %v2684, %v2396
        %v3449 = vmul.f32 %v2685, %v2397
        %v3450 = vmul.f32 %v2686, %v2398
        %v3451 = vmul.f32 %v2687, %v2399
        %v3452 = vmul.f32 %v2688, %v2400
        %v3453 = vmul.f32 %v2689, %v2401
        %v3454 = vmul.f32 %v2690, %v2402
        %v3455 = vmul.f32 %v2691, %v2403
        %v3456 = vmul.f32 %v2692, %v2404
        %v3457 = vmul.f32 %v2693, %v2405
        %v3458 = vmul.f32 %v2694, %v2406
        %v3459 = vmul.f32 %v2695, %v2407
        %v3460 = vmul.f32 %v2696, %v2408
        %v3461 = vmul.f32 %v2697, %v2409
        %v3462 = vmul.f32 %v2698, %v2410
        %v3463 = vmul.f32 %v2699, %v2411
        %v3464 = vmul.f32 %v2764, %v3432
        %v3465 = vmul.f32 %v2763, %v3433
        %v3466 = vmul.f32 %v2762, %v3434
        %v3467 = vmul.f32 %v2761, %v3435
        %v3468 = vmul.f32 %v2760, %v3436
        %v3469 = vmul.f32 %v2759, %v3437
        %v3470 = vmul.f32 %v2758, %v3438
        %v3471 = vmul.f32 %v2757, %v3439
        %v3472 = vmul.f32 %v2756, %v3440
        %v3473 = vmul.f32 %v2755, %v3441
        %v3474 = vmul.f32 %v2754, %v3442
        %v3475 = vmul.f32 %v2753, %v3443
        %v3476 = vmul.f32 %v2752, %v3444
        %v3477 = vmul.f32 %v2751, %v3445
        %v3478 = vmul.f32 %v2750, %v3446
        %v3479 = vmul.f32 %v2749, %v3447
        %v3480 = vmul.f32 %v2748, %v3448
        %v3481 = vmul.f32 %v2747, %v3449
        %v3482 = vmul.f32 %v2746, %v3450
        %v3483 = vmul.f32 %v2745, %v3451
        %v3484 = vmul.f32 %v2744, %v3452
        %v3485 = vmul.f32 %v2743, %v3453
        %v3486 = vmul.f32 %v2742, %v3454
        %v3487 = vmul.f32 %v2741, %v3455
        %v3488 = vmul.f32 %v2740, %v3456
        %v3489 = vmul.f32 %v2739, %v3457
        %v3490 = vmul.f32 %v2738, %v3458
        %v3491 = vmul.f32 %v2737, %v3459
        %v3492 = vmul.f32 %v2736, %v3460
        %v3493 = vmul.f32 %v2735, %v3461
        %v3494 = vmul.f32 %v2766, %v3462
        %v3495 = vmul.f32 %v2765, %v3463
        %v3496 = vlaneseq
        %v3497 = vshrl.u32 %v3496, 7
        %v3498 = vsub.s32 6, %v3497
        %v3499 = vrot.slane %v2700, %v3498
        %v3500 = vmul.f32 %v3464, %v3499
        %v3501 = vmul.f32 %v3465, %v3499
        %v3502 = vmul.f32 %v3466, %v3499
        %v3503 = vmul.f32 %v3467, %v3499
        %v3504 = vmul.f32 %v3468, %v3499
        %v3505 = vmul.f32 %v3469, %v3499
        %v3506 = vmul.f32 %v3470, %v3499
        %v3507 = vmul.f32 %v3471, %v3499
        %v3508 = vmul.f32 %v3472, %v3499
        %v3509 = vmul.f32 %v3473, %v3499
        %v3510 = vmul.f32 %v3474, %v3499
        %v3511 = vmul.f32 %v3475, %v3499
        %v3512 = vmul.f32 %v3476, %v3499
        %v3513 = vmul.f32 %v3477, %v3499
        %v3514 = vmul.f32 %v3478, %v3499
        %v3515 = vmul.f32 %v3479, %v3499
        %v3516 = vmul.f32 %v3480, %v3499
        %v3517 = vmul.f32 %v3481, %v3499
        %v3518 = vmul.f32 %v3482, %v3499
        %v3519 = vmul.f32 %v3483, %v3499
        %v3520 = vmul.f32 %v3484, %v3499
        %v3521 = vmul.f32 %v3485, %v3499
        %v3522 = vmul.f32 %v3486, %v3499
        %v3523 = vmul.f32 %v3487, %v3499
        %v3524 = vmul.f32 %v3488, %v3499
        %v3525 = vmul.f32 %v3489, %v3499
        %v3526 = vmul.f32 %v3490, %v3499
        %v3527 = vmul.f32 %v3491, %v3499
        %v3528 = vmul.f32 %v3492, %v3499
        %v3529 = vmul.f32 %v3493, %v3499
        %v3530 = vmul.f32 %v3494, %v3499
        %v3531 = vmul.f32 %v3495, %v3499
        %v3532 = vadd.f32 %v3400, %v3500
        %v3533 = vadd.f32 %v3401, %v3501
        %v3534 = vadd.f32 %v3402, %v3502
        %v3535 = vadd.f32 %v3403, %v3503
        %v3536 = vadd.f32 %v3404, %v3504
        %v3537 = vadd.f32 %v3405, %v3505
        %v3538 = vadd.f32 %v3406, %v3506
        %v3539 = vadd.f32 %v3407, %v3507
        %v3540 = vadd.f32 %v3408, %v3508
        %v3541 = vadd.f32 %v3409, %v3509
        %v3542 = vadd.f32 %v3410, %v3510
        %v3543 = vadd.f32 %v3411, %v3511
        %v3544 = vadd.f32 %v3412, %v3512
        %v3545 = vadd.f32 %v3413, %v3513
        %v3546 = vadd.f32 %v3414, %v3514
        %v3547 = vadd.f32 %v3415, %v3515
        %v3548 = vadd.f32 %v3416, %v3516
        %v3549 = vadd.f32 %v3417, %v3517
        %v3550 = vadd.f32 %v3418, %v3518
        %v3551 = vadd.f32 %v3419, %v3519
        %v3552 = vadd.f32 %v3420, %v3520
        %v3553 = vadd.f32 %v3421, %v3521
        %v3554 = vadd.f32 %v3422, %v3522
        %v3555 = vadd.f32 %v3423, %v3523
        %v3556 = vadd.f32 %v3424, %v3524
        %v3557 = vadd.f32 %v3425, %v3525
        %v3558 = vadd.f32 %v3426, %v3526
        %v3559 = vadd.f32 %v3427, %v3527
        %v3560 = vadd.f32 %v3428, %v3528
        %v3561 = vadd.f32 %v3429, %v3529
        %v3562 = vadd.f32 %v3430, %v3530
        %v3563 = vadd.f32 %v3431, %v3531
        %v3564 = vmul.f32 %v1781, %v2668
        %v3565 = vmul.f32 %v1784, %v2669
        %v3566 = vmul.f32 %v1789, %v2670
        %v3567 = vmul.f32 %v1792, %v2671
        %v3568 = vmul.f32 %v1797, %v2672
        %v3569 = vmul.f32 %v1800, %v2673
        %v3570 = vmul.f32 %v1805, %v2674
        %v3571 = vmul.f32 %v1808, %v2675
        %v3572 = vmul.f32 %v1813, %v2676
        %v3573 = vmul.f32 %v1816, %v2677
        %v3574 = vmul.f32 %v1821, %v2678
        %v3575 = vmul.f32 %v1824, %v2679
        %v3576 = vmul.f32 %v1829, %v2680
        %v3577 = vmul.f32 %v1832, %v2681
        %v3578 = vmul.f32 %v1837, %v2682
        %v3579 = vmul.f32 %v1840, %v2683
        %v3580 = vmul.f32 %v1845, %v2684
        %v3581 = vmul.f32 %v1848, %v2685
        %v3582 = vmul.f32 %v1853, %v2686
        %v3583 = vmul.f32 %v1856, %v2687
        %v3584 = vmul.f32 %v1861, %v2688
        %v3585 = vmul.f32 %v1864, %v2689
        %v3586 = vmul.f32 %v1869, %v2690
        %v3587 = vmul.f32 %v1872, %v2691
        %v3588 = vmul.f32 %v1877, %v2692
        %v3589 = vmul.f32 %v1880, %v2693
        %v3590 = vmul.f32 %v1885, %v2694
        %v3591 = vmul.f32 %v1888, %v2695
        %v3592 = vmul.f32 %v1893, %v2696
        %v3593 = vmul.f32 %v1896, %v2697
        %v3594 = vmul.f32 %v1773, %v2698
        %v3595 = vmul.f32 %v1776, %v2699
        %v3596 = vlaneseq
        %v3597 = vshrl.u32 %v3596, 7
        %v3598 = vsub.s32 7, %v3597
        %v3599 = vrot.slane %v2700, %v3598
        %v3600 = vmul.f32 %v3564, %v3599
        %v3601 = vmul.f32 %v3565, %v3599
        %v3602 = vmul.f32 %v3566, %v3599
        %v3603 = vmul.f32 %v3567, %v3599
        %v3604 = vmul.f32 %v3568, %v3599
        %v3605 = vmul.f32 %v3569, %v3599
        %v3606 = vmul.f32 %v3570, %v3599
        %v3607 = vmul.f32 %v3571, %v3599
        %v3608 = vmul.f32 %v3572, %v3599
        %v3609 = vmul.f32 %v3573, %v3599
        %v3610 = vmul.f32 %v3574, %v3599
        %v3611 = vmul.f32 %v3575, %v3599
        %v3612 = vmul.f32 %v3576, %v3599
        %v3613 = vmul.f32 %v3577, %v3599
        %v3614 = vmul.f32 %v3578, %v3599
        %v3615 = vmul.f32 %v3579, %v3599
        %v3616 = vmul.f32 %v3580, %v3599
        %v3617 = vmul.f32 %v3581, %v3599
        %v3618 = vmul.f32 %v3582, %v3599
        %v3619 = vmul.f32 %v3583, %v3599
        %v3620 = vmul.f32 %v3584, %v3599
        %v3621 = vmul.f32 %v3585, %v3599
        %v3622 = vmul.f32 %v3586, %v3599
        %v3623 = vmul.f32 %v3587, %v3599
        %v3624 = vmul.f32 %v3588, %v3599
        %v3625 = vmul.f32 %v3589, %v3599
        %v3626 = vmul.f32 %v3590, %v3599
        %v3627 = vmul.f32 %v3591, %v3599
        %v3628 = vmul.f32 %v3592, %v3599
        %v3629 = vmul.f32 %v3593, %v3599
        %v3630 = vmul.f32 %v3594, %v3599
        %v3631 = vmul.f32 %v3595, %v3599
        %v3632 = vadd.f32 %v3532, %v3600
        %v3633 = vadd.f32 %v3533, %v3601
        %v3634 = vadd.f32 %v3534, %v3602
        %v3635 = vadd.f32 %v3535, %v3603
        %v3636 = vadd.f32 %v3536, %v3604
        %v3637 = vadd.f32 %v3537, %v3605
        %v3638 = vadd.f32 %v3538, %v3606
        %v3639 = vadd.f32 %v3539, %v3607
        %v3640 = vadd.f32 %v3540, %v3608
        %v3641 = vadd.f32 %v3541, %v3609
        %v3642 = vadd.f32 %v3542, %v3610
        %v3643 = vadd.f32 %v3543, %v3611
        %v3644 = vadd.f32 %v3544, %v3612
        %v3645 = vadd.f32 %v3545, %v3613
        %v3646 = vadd.f32 %v3546, %v3614
        %v3647 = vadd.f32 %v3547, %v3615
        %v3648 = vadd.f32 %v3548, %v3616
        %v3649 = vadd.f32 %v3549, %v3617
        %v3650 = vadd.f32 %v3550, %v3618
        %v3651 = vadd.f32 %v3551, %v3619
        %v3652 = vadd.f32 %v3552, %v3620
        %v3653 = vadd.f32 %v3553, %v3621
        %v3654 = vadd.f32 %v3554, %v3622
        %v3655 = vadd.f32 %v3555, %v3623
        %v3656 = vadd.f32 %v3556, %v3624
        %v3657 = vadd.f32 %v3557, %v3625
        %v3658 = vadd.f32 %v3558, %v3626
        %v3659 = vadd.f32 %v3559, %v3627
        %v3660 = vadd.f32 %v3560, %v3628
        %v3661 = vadd.f32 %v3561, %v3629
        %v3662 = vadd.f32 %v3562, %v3630
        %v3663 = vadd.f32 %v3563, %v3631
        %v3664 = vmul.f32 %v2668, %v2476
        %v3665 = vmul.f32 %v2669, %v2477
        %v3666 = vmul.f32 %v2670, %v2478
        %v3667 = vmul.f32 %v2671, %v2479
        %v3668 = vmul.f32 %v2672, %v2480
        %v3669 = vmul.f32 %v2673, %v2481
        %v3670 = vmul.f32 %v2674, %v2482
        %v3671 = vmul.f32 %v2675, %v2483
        %v3672 = vmul.f32 %v2676, %v2484
        %v3673 = vmul.f32 %v2677, %v2485
        %v3674 = vmul.f32 %v2678, %v2486
        %v3675 = vmul.f32 %v2679, %v2487
        %v3676 = vmul.f32 %v2680, %v2488
        %v3677 = vmul.f32 %v2681, %v2489
        %v3678 = vmul.f32 %v2682, %v2490
        %v3679 = vmul.f32 %v2683, %v2491
        %v3680 = vmul.f32 %v2684, %v2492
        %v3681 = vmul.f32 %v2685, %v2493
        %v3682 = vmul.f32 %v2686, %v2494
        %v3683 = vmul.f32 %v2687, %v2495
        %v3684 = vmul.f32 %v2688, %v2496
        %v3685 = vmul.f32 %v2689, %v2497
        %v3686 = vmul.f32 %v2690, %v2498
        %v3687 = vmul.f32 %v2691, %v2499
        %v3688 = vmul.f32 %v2692, %v2500
        %v3689 = vmul.f32 %v2693, %v2501
        %v3690 = vmul.f32 %v2694, %v2502
        %v3691 = vmul.f32 %v2695, %v2503
        %v3692 = vmul.f32 %v2696, %v2504
        %v3693 = vmul.f32 %v2697, %v2505
        %v3694 = vmul.f32 %v2698, %v2506
        %v3695 = vmul.f32 %v2699, %v2507
        %v3696 = vmul.f32 %v3028, %v3664
        %v3697 = vmul.f32 %v3027, %v3665
        %v3698 = vmul.f32 %v3026, %v3666
        %v3699 = vmul.f32 %v3025, %v3667
        %v3700 = vmul.f32 %v3024, %v3668
        %v3701 = vmul.f32 %v3023, %v3669
        %v3702 = vmul.f32 %v3022, %v3670
        %v3703 = vmul.f32 %v3021, %v3671
        %v3704 = vmul.f32 %v3020, %v3672
        %v3705 = vmul.f32 %v3019, %v3673
        %v3706 = vmul.f32 %v3018, %v3674
        %v3707 = vmul.f32 %v3017, %v3675
        %v3708 = vmul.f32 %v3016, %v3676
        %v3709 = vmul.f32 %v3015, %v3677
        %v3710 = vmul.f32 %v3014, %v3678
        %v3711 = vmul.f32 %v3013, %v3679
        %v3712 = vmul.f32 %v3012, %v3680
        %v3713 = vmul.f32 %v3011, %v3681
        %v3714 = vmul.f32 %v3010, %v3682
        %v3715 = vmul.f32 %v3009, %v3683
        %v3716 = vmul.f32 %v3008, %v3684
        %v3717 = vmul.f32 %v3007, %v3685
        %v3718 = vmul.f32 %v3006, %v3686
        %v3719 = vmul.f32 %v3005, %v3687
        %v3720 = vmul.f32 %v3004, %v3688
        %v3721 = vmul.f32 %v3003, %v3689
        %v3722 = vmul.f32 %v3002, %v3690
        %v3723 = vmul.f32 %v3001, %v3691
        %v3724 = vmul.f32 %v3000, %v3692
        %v3725 = vmul.f32 %v3031, %v3693
        %v3726 = vmul.f32 %v3030, %v3694
        %v3727 = vmul.f32 %v3029, %v3695
        %v3728 = vlaneseq
        %v3729 = vshrl.u32 %v3728, 7
        %v3730 = vsub.s32 0, %v3729
        %v3731 = vrot.slane %v2701, %v3730
        %v3732 = vmul.f32 %v3696, %v3731
        %v3733 = vmul.f32 %v3697, %v3731
        %v3734 = vmul.f32 %v3698, %v3731
        %v3735 = vmul.f32 %v3699, %v3731
        %v3736 = vmul.f32 %v3700, %v3731
        %v3737 = vmul.f32 %v3701, %v3731
        %v3738 = vmul.f32 %v3702, %v3731
        %v3739 = vmul.f32 %v3703, %v3731
        %v3740 = vmul.f32 %v3704, %v3731
        %v3741 = vmul.f32 %v3705, %v3731
        %v3742 = vmul.f32 %v3706, %v3731
        %v3743 = vmul.f32 %v3707, %v3731
        %v3744 = vmul.f32 %v3708, %v3731
        %v3745 = vmul.f32 %v3709, %v3731
        %v3746 = vmul.f32 %v3710, %v3731
        %v3747 = vmul.f32 %v3711, %v3731
        %v3748 = vmul.f32 %v3712, %v3731
        %v3749 = vmul.f32 %v3713, %v3731
        %v3750 = vmul.f32 %v3714, %v3731
        %v3751 = vmul.f32 %v3715, %v3731
        %v3752 = vmul.f32 %v3716, %v3731
        %v3753 = vmul.f32 %v3717, %v3731
        %v3754 = vmul.f32 %v3718, %v3731
        %v3755 = vmul.f32 %v3719, %v3731
        %v3756 = vmul.f32 %v3720, %v3731
        %v3757 = vmul.f32 %v3721, %v3731
        %v3758 = vmul.f32 %v3722, %v3731
        %v3759 = vmul.f32 %v3723, %v3731
        %v3760 = vmul.f32 %v3724, %v3731
        %v3761 = vmul.f32 %v3725, %v3731
        %v3762 = vmul.f32 %v3726, %v3731
        %v3763 = vmul.f32 %v3727, %v3731
        %v3764 = vadd.f32 %v3632, %v3732
        %v3765 = vadd.f32 %v3633, %v3733
        %v3766 = vadd.f32 %v3634, %v3734
        %v3767 = vadd.f32 %v3635, %v3735
        %v3768 = vadd.f32 %v3636, %v3736
        %v3769 = vadd.f32 %v3637, %v3737
        %v3770 = vadd.f32 %v3638, %v3738
        %v3771 = vadd.f32 %v3639, %v3739
        %v3772 = vadd.f32 %v3640, %v3740
        %v3773 = vadd.f32 %v3641, %v3741
        %v3774 = vadd.f32 %v3642, %v3742
        %v3775 = vadd.f32 %v3643, %v3743
        %v3776 = vadd.f32 %v3644, %v3744
        %v3777 = vadd.f32 %v3645, %v3745
        %v3778 = vadd.f32 %v3646, %v3746
        %v3779 = vadd.f32 %v3647, %v3747
        %v3780 = vadd.f32 %v3648, %v3748
        %v3781 = vadd.f32 %v3649, %v3749
        %v3782 = vadd.f32 %v3650, %v3750
        %v3783 = vadd.f32 %v3651, %v3751
        %v3784 = vadd.f32 %v3652, %v3752
        %v3785 = vadd.f32 %v3653, %v3753
        %v3786 = vadd.f32 %v3654, %v3754
        %v3787 = vadd.f32 %v3655, %v3755
        %v3788 = vadd.f32 %v3656, %v3756
        %v3789 = vadd.f32 %v3657, %v3757
        %v3790 = vadd.f32 %v3658, %v3758
        %v3791 = vadd.f32 %v3659, %v3759
        %v3792 = vadd.f32 %v3660, %v3760
        %v3793 = vadd.f32 %v3661, %v3761
        %v3794 = vadd.f32 %v3662, %v3762
        %v3795 = vadd.f32 %v3663, %v3763
        %v3796 = vld [vmem:[%s10] sm:$0x1]
        %v3798 = vlaneseq
        %v3799 = vshrl.u32 %v3798, 7
        %v3800 = vsub.s32 0, %v3799
        %v3801 = vrot.slane %v3796, %v3800
        %v3803 = vadd.f32 %v3764, %v3801
        %v3804 = vadd.f32 %v3765, %v3801
        %v3805 = vadd.f32 %v3766, %v3801
        %v3806 = vadd.f32 %v3767, %v3801
        %v3807 = vadd.f32 %v3768, %v3801
        %v3808 = vadd.f32 %v3769, %v3801
        %v3809 = vadd.f32 %v3770, %v3801
        %v3810 = vadd.f32 %v3771, %v3801
        %v3811 = vadd.f32 %v3772, %v3801
        %v3812 = vadd.f32 %v3773, %v3801
        %v3813 = vadd.f32 %v3774, %v3801
        %v3814 = vadd.f32 %v3775, %v3801
        %v3815 = vadd.f32 %v3776, %v3801
        %v3816 = vadd.f32 %v3777, %v3801
        %v3817 = vadd.f32 %v3778, %v3801
        %v3818 = vadd.f32 %v3779, %v3801
        %v3819 = vadd.f32 %v3780, %v3801
        %v3820 = vadd.f32 %v3781, %v3801
        %v3821 = vadd.f32 %v3782, %v3801
        %v3822 = vadd.f32 %v3783, %v3801
        %v3823 = vadd.f32 %v3784, %v3801
        %v3824 = vadd.f32 %v3785, %v3801
        %v3825 = vadd.f32 %v3786, %v3801
        %v3826 = vadd.f32 %v3787, %v3801
        %v3827 = vadd.f32 %v3788, %v3801
        %v3828 = vadd.f32 %v3789, %v3801
        %v3829 = vadd.f32 %v3790, %v3801
        %v3830 = vadd.f32 %v3791, %v3801
        %v3831 = vadd.f32 %v3792, %v3801
        %v3832 = vadd.f32 %v3793, %v3801
        %v3833 = vadd.f32 %v3794, %v3801
        %v3834 = vadd.f32 %v3795, %v3801
        %v3835 = vld [vmem:[%s11] sm:$0xf]
        %v3836 = vld [vmem:[%s11 + $0x4] sm:$0xf]
        %v3837 = vld [vmem:[%s11 + $0x8] sm:$0xf]
        %v3838 = vld [vmem:[%s11 + $0xc] sm:$0xf]
        %v3839 = vld [vmem:[%s11 + $0x10] sm:$0xf]
        %v3840 = vld [vmem:[%s11 + $0x14] sm:$0xf]
        %v3841 = vld [vmem:[%s11 + $0x18] sm:$0xf]
        %v3842 = vld [vmem:[%s11 + $0x1c] sm:$0xf]
        %v3843 = vpack.c.bf16 %v3804, %v3803
        %v3844 = vpack.c.bf16 %v3806, %v3805
        %v3845 = vpack.c.bf16 %v3808, %v3807
        %v3846 = vpack.c.bf16 %v3810, %v3809
        %v3847 = vpack.c.bf16 %v3812, %v3811
        %v3848 = vpack.c.bf16 %v3814, %v3813
        %v3849 = vpack.c.bf16 %v3816, %v3815
        %v3850 = vpack.c.bf16 %v3818, %v3817
        %v3851 = vpack.c.bf16 %v3820, %v3819
        %v3852 = vpack.c.bf16 %v3822, %v3821
        %v3853 = vpack.c.bf16 %v3824, %v3823
        %v3854 = vpack.c.bf16 %v3826, %v3825
        %v3855 = vpack.c.bf16 %v3828, %v3827
        %v3856 = vpack.c.bf16 %v3830, %v3829
        %v3857 = vpack.c.bf16 %v3832, %v3831
        %v3858 = vpack.c.bf16 %v3834, %v3833
        %v3859 = vpack.c.bf16 %v1376, %v1373
        %v3860 = vpack.c.bf16 %v1384, %v1381
        %v3861 = vpack.c.bf16 %v1392, %v1389
        %v3862 = vpack.c.bf16 %v1400, %v1397
        %v3863 = vpack.c.bf16 %v1408, %v1405
        %v3864 = vpack.c.bf16 %v1416, %v1413
        %v3865 = vpack.c.bf16 %v1424, %v1421
        %v3866 = vpack.c.bf16 %v1432, %v1429
        %v3867 = vpack.c.bf16 %v1440, %v1437
        %v3868 = vpack.c.bf16 %v1448, %v1445
        %v3869 = vpack.c.bf16 %v1456, %v1453
        %v3870 = vpack.c.bf16 %v1464, %v1461
        %v3871 = vpack.c.bf16 %v1472, %v1469
        %v3872 = vpack.c.bf16 %v1480, %v1477
        %v3873 = vpack.c.bf16 %v1488, %v1485
        %v3874 = vpack.c.bf16 %v1496, %v1493
        %v3875 = vpack.c.bf16 %v1576, %v1573
        %v3876 = vpack.c.bf16 %v1584, %v1581
        %v3877 = vpack.c.bf16 %v1592, %v1589
        %v3878 = vpack.c.bf16 %v1600, %v1597
        %v3879 = vpack.c.bf16 %v1608, %v1605
        %v3880 = vpack.c.bf16 %v1616, %v1613
        %v3881 = vpack.c.bf16 %v1624, %v1621
        %v3882 = vpack.c.bf16 %v1632, %v1629
        %v3883 = vpack.c.bf16 %v1640, %v1637
        %v3884 = vpack.c.bf16 %v1648, %v1645
        %v3885 = vpack.c.bf16 %v1656, %v1653
        %v3886 = vpack.c.bf16 %v1664, %v1661
        %v3887 = vpack.c.bf16 %v1672, %v1669
        %v3888 = vpack.c.bf16 %v1680, %v1677
        %v3889 = vpack.c.bf16 %v1688, %v1685
        %v3890 = vpack.c.bf16 %v1696, %v1693
        %vm3891 = vcmask 261120
        %v3893 = vsel %vm3891, %v3859, 0
        %v3896 = vsel %vm3891, %v3860, 0
        %v3899 = vsel %vm3891, %v3861, 0
        %v3902 = vsel %vm3891, %v3862, 0
        %v3905 = vsel %vm3891, %v3863, 0
        %v3908 = vsel %vm3891, %v3864, 0
        %v3911 = vsel %vm3891, %v3865, 0
        %v3914 = vsel %vm3891, %v3866, 0
        %v3917 = vsel %vm3891, %v3867, 0
        %v3920 = vsel %vm3891, %v3868, 0
        %v3923 = vsel %vm3891, %v3869, 0
        %v3926 = vsel %vm3891, %v3870, 0
        %v3929 = vsel %vm3891, %v3871, 0
        %v3932 = vsel %vm3891, %v3872, 0
        %v3935 = vsel %vm3891, %v3873, 0
        %v3938 = vsel %vm3891, %v3874, 0
        %v3941 = vsel %vm3891, %v3875, 0
        %v3944 = vsel %vm3891, %v3876, 0
        %v3947 = vsel %vm3891, %v3877, 0
        %v3950 = vsel %vm3891, %v3878, 0
        %v3953 = vsel %vm3891, %v3879, 0
        %v3956 = vsel %vm3891, %v3880, 0
        %v3959 = vsel %vm3891, %v3881, 0
        %v3962 = vsel %vm3891, %v3882, 0
        %v3965 = vsel %vm3891, %v3883, 0
        %v3968 = vsel %vm3891, %v3884, 0
        %v3971 = vsel %vm3891, %v3885, 0
        %v3974 = vsel %vm3891, %v3886, 0
        %v3977 = vsel %vm3891, %v3887, 0
        %v3980 = vsel %vm3891, %v3888, 0
        %v3983 = vsel %vm3891, %v3889, 0
        %v3986 = vsel %vm3891, %v3890, 0
        %3988 = vmatprep.subr.bf16.mxu0 0
        %3989 = vmatpush1.bf16.xpose.msra.mxu0 %v3941
        %3990 = vmatprep.subr.bf16.mxu0 0
        %3991 = vmatpush1.bf16.xpose.msra.mxu0 %v3944
        %3992 = vmatprep.subr.bf16.mxu0 0
        %3993 = vmatpush1.bf16.xpose.msra.mxu0 %v3947
        %3994 = vmatprep.subr.bf16.mxu0 0
        %3995 = vmatpush1.bf16.xpose.msra.mxu0 %v3950
        %3996 = vmatprep.subr.bf16.mxu0 0
        %3997 = vmatpush1.bf16.xpose.msra.mxu0 %v3953
        %3998 = vmatprep.subr.bf16.mxu0 0
        %3999 = vmatpush1.bf16.xpose.msra.mxu0 %v3956
        %4000 = vmatprep.subr.bf16.mxu0 0
        %4001 = vmatpush1.bf16.xpose.msra.mxu0 %v3959
        %4002 = vmatprep.subr.bf16.mxu0 0
        %4003 = vmatpush1.bf16.xpose.msra.mxu0 %v3962
        %4004 = vmatprep.subr.bf16.mxu0 0
        %4005 = vmatpush1.bf16.xpose.msra.mxu0 %v3965
        %4006 = vmatprep.subr.bf16.mxu0 0
        %4007 = vmatpush1.bf16.xpose.msra.mxu0 %v3968
        %4008 = vmatprep.subr.bf16.mxu0 0
        %4009 = vmatpush1.bf16.xpose.msra.mxu0 %v3971
        %4010 = vmatprep.subr.bf16.mxu0 0
        %4011 = vmatpush1.bf16.xpose.msra.mxu0 %v3974
        %4012 = vmatprep.subr.bf16.mxu0 0
        %4013 = vmatpush1.bf16.xpose.msra.mxu0 %v3977
        %4014 = vmatprep.subr.bf16.mxu0 0
        %4015 = vmatpush1.bf16.xpose.msra.mxu0 %v3980
        %4016 = vmatprep.subr.bf16.mxu0 0
        %4017 = vmatpush1.bf16.xpose.msra.mxu0 %v3983
        %4018 = vmatprep.subr.bf16.mxu0 0
        %4019 = vmatpush1.bf16.xpose.msra.mxu0 %v3986
        %4020 = vmatprep.mubr.bf16.mxu0 0
        %4021 = vmatmul.mubr.bf16.gmra.mrb[0].mxu0 %v3893
        %v4022 = vpop.f32.mrb[0].mxu0
        %v4023 = vadd.f32 0.0, %v4022
        %v4024 = vpop.f32.mrb[0].mxu0
        %v4025 = vadd.f32 0.0, %v4024
        %v4026 = vpop.f32.mrb[0].mxu0
        %v4027 = vadd.f32 0.0, %v4026
        %v4028 = vpop.f32.mrb[0].mxu0
        %v4029 = vadd.f32 0.0, %v4028
        %4030 = vmatprep.mubr.bf16.mxu0 0
        %4031 = vmatmul.mubr.bf16.gmra.mrb[0].mxu0 %v3896
        %v4032 = vpop.f32.mrb[0].mxu0
        %v4033 = vadd.f32 0.0, %v4032
        %v4034 = vpop.f32.mrb[0].mxu0
        %v4035 = vadd.f32 0.0, %v4034
        %v4036 = vpop.f32.mrb[0].mxu0
        %v4037 = vadd.f32 0.0, %v4036
        %v4038 = vpop.f32.mrb[0].mxu0
        %v4039 = vadd.f32 0.0, %v4038
        %4040 = vmatprep.mubr.bf16.mxu0 0
        %4041 = vmatmul.mubr.bf16.gmra.mrb[0].mxu0 %v3899
        %v4042 = vpop.f32.mrb[0].mxu0
        %v4043 = vadd.f32 0.0, %v4042
        %v4044 = vpop.f32.mrb[0].mxu0
        %v4045 = vadd.f32 0.0, %v4044
        %v4046 = vpop.f32.mrb[0].mxu0
        %v4047 = vadd.f32 0.0, %v4046
        %v4048 = vpop.f32.mrb[0].mxu0
        %v4049 = vadd.f32 0.0, %v4048
        %4050 = vmatprep.mubr.bf16.mxu0 0
        %4051 = vmatmul.mubr.bf16.gmra.mrb[0].mxu0 %v3902
        %v4052 = vpop.f32.mrb[0].mxu0
        %v4053 = vadd.f32 0.0, %v4052
        %v4054 = vpop.f32.mrb[0].mxu0
        %v4055 = vadd.f32 0.0, %v4054
        %v4056 = vpop.f32.mrb[0].mxu0
        %v4057 = vadd.f32 0.0, %v4056
        %v4058 = vpop.f32.mrb[0].mxu0
        %v4059 = vadd.f32 0.0, %v4058
        %4060 = vmatprep.mubr.bf16.mxu0 0
        %4061 = vmatmul.mubr.bf16.gmra.mrb[0].mxu0 %v3905
        %v4062 = vpop.f32.mrb[0].mxu0
        %v4063 = vadd.f32 0.0, %v4062
        %v4064 = vpop.f32.mrb[0].mxu0
        %v4065 = vadd.f32 0.0, %v4064
        %v4066 = vpop.f32.mrb[0].mxu0
        %v4067 = vadd.f32 0.0, %v4066
        %v4068 = vpop.f32.mrb[0].mxu0
        %v4069 = vadd.f32 0.0, %v4068
        %4070 = vmatprep.mubr.bf16.mxu0 0
        %4071 = vmatmul.mubr.bf16.gmra.mrb[0].mxu0 %v3908
        %v4072 = vpop.f32.mrb[0].mxu0
        %v4073 = vadd.f32 0.0, %v4072
        %v4074 = vpop.f32.mrb[0].mxu0
        %v4075 = vadd.f32 0.0, %v4074
        %v4076 = vpop.f32.mrb[0].mxu0
        %v4077 = vadd.f32 0.0, %v4076
        %v4078 = vpop.f32.mrb[0].mxu0
        %v4079 = vadd.f32 0.0, %v4078
        %4080 = vmatprep.mubr.bf16.mxu0 0
        %4081 = vmatmul.mubr.bf16.gmra.mrb[0].mxu0 %v3911
        %v4082 = vpop.f32.mrb[0].mxu0
        %v4083 = vadd.f32 0.0, %v4082
        %v4084 = vpop.f32.mrb[0].mxu0
        %v4085 = vadd.f32 0.0, %v4084
        %v4086 = vpop.f32.mrb[0].mxu0
        %v4087 = vadd.f32 0.0, %v4086
        %v4088 = vpop.f32.mrb[0].mxu0
        %v4089 = vadd.f32 0.0, %v4088
        %4090 = vmatprep.mubr.bf16.mxu0 0
        %4091 = vmatmul.mubr.bf16.gmra.mrb[0].mxu0 %v3914
        %v4092 = vpop.f32.mrb[0].mxu0
        %v4093 = vadd.f32 0.0, %v4092
        %v4094 = vpop.f32.mrb[0].mxu0
        %v4095 = vadd.f32 0.0, %v4094
        %v4096 = vpop.f32.mrb[0].mxu0
        %v4097 = vadd.f32 0.0, %v4096
        %v4098 = vpop.f32.mrb[0].mxu0
        %v4099 = vadd.f32 0.0, %v4098
        %4100 = vmatprep.mubr.bf16.mxu0 0
        %4101 = vmatmul.mubr.bf16.gmra.mrb[0].mxu0 %v3917
        %v4102 = vpop.f32.mrb[0].mxu0
        %v4103 = vadd.f32 0.0, %v4102
        %v4104 = vpop.f32.mrb[0].mxu0
        %v4105 = vadd.f32 0.0, %v4104
        %v4106 = vpop.f32.mrb[0].mxu0
        %v4107 = vadd.f32 0.0, %v4106
        %v4108 = vpop.f32.mrb[0].mxu0
        %v4109 = vadd.f32 0.0, %v4108
        %4110 = vmatprep.mubr.bf16.mxu0 0
        %4111 = vmatmul.mubr.bf16.gmra.mrb[0].mxu0 %v3920
        %v4112 = vpop.f32.mrb[0].mxu0
        %v4113 = vadd.f32 0.0, %v4112
        %v4114 = vpop.f32.mrb[0].mxu0
        %v4115 = vadd.f32 0.0, %v4114
        %v4116 = vpop.f32.mrb[0].mxu0
        %v4117 = vadd.f32 0.0, %v4116
        %v4118 = vpop.f32.mrb[0].mxu0
        %v4119 = vadd.f32 0.0, %v4118
        %4120 = vmatprep.mubr.bf16.mxu0 0
        %4121 = vmatmul.mubr.bf16.gmra.mrb[0].mxu0 %v3923
        %v4122 = vpop.f32.mrb[0].mxu0
        %v4123 = vadd.f32 0.0, %v4122
        %v4124 = vpop.f32.mrb[0].mxu0
        %v4125 = vadd.f32 0.0, %v4124
        %v4126 = vpop.f32.mrb[0].mxu0
        %v4127 = vadd.f32 0.0, %v4126
        %v4128 = vpop.f32.mrb[0].mxu0
        %v4129 = vadd.f32 0.0, %v4128
        %4130 = vmatprep.mubr.bf16.mxu0 0
        %4131 = vmatmul.mubr.bf16.gmra.mrb[0].mxu0 %v3926
        %v4132 = vpop.f32.mrb[0].mxu0
        %v4133 = vadd.f32 0.0, %v4132
        %v4134 = vpop.f32.mrb[0].mxu0
        %v4135 = vadd.f32 0.0, %v4134
        %v4136 = vpop.f32.mrb[0].mxu0
        %v4137 = vadd.f32 0.0, %v4136
        %v4138 = vpop.f32.mrb[0].mxu0
        %v4139 = vadd.f32 0.0, %v4138
        %4140 = vmatprep.mubr.bf16.mxu0 0
        %4141 = vmatmul.mubr.bf16.gmra.mrb[0].mxu0 %v3929
        %v4142 = vpop.f32.mrb[0].mxu0
        %v4143 = vadd.f32 0.0, %v4142
        %v4144 = vpop.f32.mrb[0].mxu0
        %v4145 = vadd.f32 0.0, %v4144
        %v4146 = vpop.f32.mrb[0].mxu0
        %v4147 = vadd.f32 0.0, %v4146
        %v4148 = vpop.f32.mrb[0].mxu0
        %v4149 = vadd.f32 0.0, %v4148
        %4150 = vmatprep.mubr.bf16.mxu0 0
        %4151 = vmatmul.mubr.bf16.gmra.mrb[0].mxu0 %v3932
        %v4152 = vpop.f32.mrb[0].mxu0
        %v4153 = vadd.f32 0.0, %v4152
        %v4154 = vpop.f32.mrb[0].mxu0
        %v4155 = vadd.f32 0.0, %v4154
        %v4156 = vpop.f32.mrb[0].mxu0
        %v4157 = vadd.f32 0.0, %v4156
        %v4158 = vpop.f32.mrb[0].mxu0
        %v4159 = vadd.f32 0.0, %v4158
        %4160 = vmatprep.mubr.bf16.mxu0 0
        %4161 = vmatmul.mubr.bf16.gmra.mrb[0].mxu0 %v3935
        %v4162 = vpop.f32.mrb[0].mxu0
        %v4163 = vadd.f32 0.0, %v4162
        %v4164 = vpop.f32.mrb[0].mxu0
        %v4165 = vadd.f32 0.0, %v4164
        %v4166 = vpop.f32.mrb[0].mxu0
        %v4167 = vadd.f32 0.0, %v4166
        %v4168 = vpop.f32.mrb[0].mxu0
        %v4169 = vadd.f32 0.0, %v4168
        %4170 = vmatprep.mubr.bf16.mxu0 0
        %4171 = vmatmul.mubr.bf16.gmra.mrb[0].mxu0 %v3938
        %v4172 = vpop.f32.mrb[0].mxu0
        %v4173 = vadd.f32 0.0, %v4172
        %v4174 = vpop.f32.mrb[0].mxu0
        %v4175 = vadd.f32 0.0, %v4174
        %v4176 = vpop.f32.mrb[0].mxu0
        %v4177 = vadd.f32 0.0, %v4176
        %v4178 = vpop.f32.mrb[0].mxu0
        %v4179 = vadd.f32 0.0, %v4178
        %4180 = vdwg.mxu0
        %v4181 = vmax.f32 %v4023, %v4025
        %4182 = vmax.xlane.f32.xlu0 %v4181
        %v4183 = vpop.xlane.xlu0 %4182
        %v4184 = vmax.f32 %v4027, %v4029
        %4185 = vmax.xlane.f32.xlu0 %v4184
        %v4186 = vpop.xlane.xlu0 %4185
        %v4187 = vmax.f32 %v4033, %v4035
        %4188 = vmax.xlane.f32.xlu0 %v4187
        %v4189 = vpop.xlane.xlu0 %4188
        %v4190 = vmax.f32 %v4037, %v4039
        %4191 = vmax.xlane.f32.xlu0 %v4190
        %v4192 = vpop.xlane.xlu0 %4191
        %v4193 = vmax.f32 %v4043, %v4045
        %4194 = vmax.xlane.f32.xlu0 %v4193
        %v4195 = vpop.xlane.xlu0 %4194
        %v4196 = vmax.f32 %v4047, %v4049
        %4197 = vmax.xlane.f32.xlu0 %v4196
        %v4198 = vpop.xlane.xlu0 %4197
        %v4199 = vmax.f32 %v4053, %v4055
        %4200 = vmax.xlane.f32.xlu0 %v4199
        %v4201 = vpop.xlane.xlu0 %4200
        %v4202 = vmax.f32 %v4057, %v4059
        %4203 = vmax.xlane.f32.xlu0 %v4202
        %v4204 = vpop.xlane.xlu0 %4203
        %v4205 = vmax.f32 %v4063, %v4065
        %4206 = vmax.xlane.f32.xlu0 %v4205
        %v4207 = vpop.xlane.xlu0 %4206
        %v4208 = vmax.f32 %v4067, %v4069
        %4209 = vmax.xlane.f32.xlu0 %v4208
        %v4210 = vpop.xlane.xlu0 %4209
        %v4211 = vmax.f32 %v4073, %v4075
        %4212 = vmax.xlane.f32.xlu0 %v4211
        %v4213 = vpop.xlane.xlu0 %4212
        %v4214 = vmax.f32 %v4077, %v4079
        %4215 = vmax.xlane.f32.xlu0 %v4214
        %v4216 = vpop.xlane.xlu0 %4215
        %v4217 = vmax.f32 %v4083, %v4085
        %4218 = vmax.xlane.f32.xlu0 %v4217
        %v4219 = vpop.xlane.xlu0 %4218
        %v4220 = vmax.f32 %v4087, %v4089
        %4221 = vmax.xlane.f32.xlu0 %v4220
        %v4222 = vpop.xlane.xlu0 %4221
        %v4223 = vmax.f32 %v4093, %v4095
        %4224 = vmax.xlane.f32.xlu0 %v4223
        %v4225 = vpop.xlane.xlu0 %4224
        %v4226 = vmax.f32 %v4097, %v4099
        %4227 = vmax.xlane.f32.xlu0 %v4226
        %v4228 = vpop.xlane.xlu0 %4227
        %v4229 = vmax.f32 %v4103, %v4105
        %4230 = vmax.xlane.f32.xlu0 %v4229
        %v4231 = vpop.xlane.xlu0 %4230
        %v4232 = vmax.f32 %v4107, %v4109
        %4233 = vmax.xlane.f32.xlu0 %v4232
        %v4234 = vpop.xlane.xlu0 %4233
        %v4235 = vmax.f32 %v4113, %v4115
        %4236 = vmax.xlane.f32.xlu0 %v4235
        %v4237 = vpop.xlane.xlu0 %4236
        %v4238 = vmax.f32 %v4117, %v4119
        %4239 = vmax.xlane.f32.xlu0 %v4238
        %v4240 = vpop.xlane.xlu0 %4239
        %v4241 = vmax.f32 %v4123, %v4125
        %4242 = vmax.xlane.f32.xlu0 %v4241
        %v4243 = vpop.xlane.xlu0 %4242
        %v4244 = vmax.f32 %v4127, %v4129
        %4245 = vmax.xlane.f32.xlu0 %v4244
        %v4246 = vpop.xlane.xlu0 %4245
        %v4247 = vmax.f32 %v4133, %v4135
        %4248 = vmax.xlane.f32.xlu0 %v4247
        %v4249 = vpop.xlane.xlu0 %4248
        %v4250 = vmax.f32 %v4137, %v4139
        %4251 = vmax.xlane.f32.xlu0 %v4250
        %v4252 = vpop.xlane.xlu0 %4251
        %v4253 = vmax.f32 %v4143, %v4145
        %4254 = vmax.xlane.f32.xlu0 %v4253
        %v4255 = vpop.xlane.xlu0 %4254
        %v4256 = vmax.f32 %v4147, %v4149
        %4257 = vmax.xlane.f32.xlu0 %v4256
        %v4258 = vpop.xlane.xlu0 %4257
        %v4259 = vmax.f32 %v4153, %v4155
        %4260 = vmax.xlane.f32.xlu0 %v4259
        %v4261 = vpop.xlane.xlu0 %4260
        %v4262 = vmax.f32 %v4157, %v4159
        %4263 = vmax.xlane.f32.xlu0 %v4262
        %v4264 = vpop.xlane.xlu0 %4263
        %v4265 = vmax.f32 %v4163, %v4165
        %4266 = vmax.xlane.f32.xlu0 %v4265
        %v4267 = vpop.xlane.xlu0 %4266
        %v4268 = vmax.f32 %v4167, %v4169
        %4269 = vmax.xlane.f32.xlu0 %v4268
        %v4270 = vpop.xlane.xlu0 %4269
        %v4271 = vmax.f32 %v4173, %v4175
        %4272 = vmax.xlane.f32.xlu0 %v4271
        %v4273 = vpop.xlane.xlu0 %4272
        %v4274 = vmax.f32 %v4177, %v4179
        %4275 = vmax.xlane.f32.xlu0 %v4274
        %v4276 = vpop.xlane.xlu0 %4275
        %v4277 = vsub.f32 %v4023, %v4183
        %v4278 = vsub.f32 %v4025, %v4183
        %v4279 = vsub.f32 %v4027, %v4186
        %v4280 = vsub.f32 %v4029, %v4186
        %v4281 = vsub.f32 %v4033, %v4189
        %v4282 = vsub.f32 %v4035, %v4189
        %v4283 = vsub.f32 %v4037, %v4192
        %v4284 = vsub.f32 %v4039, %v4192
        %v4285 = vsub.f32 %v4043, %v4195
        %v4286 = vsub.f32 %v4045, %v4195
        %v4287 = vsub.f32 %v4047, %v4198
        %v4288 = vsub.f32 %v4049, %v4198
        %v4289 = vsub.f32 %v4053, %v4201
        %v4290 = vsub.f32 %v4055, %v4201
        %v4291 = vsub.f32 %v4057, %v4204
        %v4292 = vsub.f32 %v4059, %v4204
        %v4293 = vsub.f32 %v4063, %v4207
        %v4294 = vsub.f32 %v4065, %v4207
        %v4295 = vsub.f32 %v4067, %v4210
        %v4296 = vsub.f32 %v4069, %v4210
        %v4297 = vsub.f32 %v4073, %v4213
        %v4298 = vsub.f32 %v4075, %v4213
        %v4299 = vsub.f32 %v4077, %v4216
        %v4300 = vsub.f32 %v4079, %v4216
        %v4301 = vsub.f32 %v4083, %v4219
        %v4302 = vsub.f32 %v4085, %v4219
        %v4303 = vsub.f32 %v4087, %v4222
        %v4304 = vsub.f32 %v4089, %v4222
        %v4305 = vsub.f32 %v4093, %v4225
        %v4306 = vsub.f32 %v4095, %v4225
        %v4307 = vsub.f32 %v4097, %v4228
        %v4308 = vsub.f32 %v4099, %v4228
        %v4309 = vsub.f32 %v4103, %v4231
        %v4310 = vsub.f32 %v4105, %v4231
        %v4311 = vsub.f32 %v4107, %v4234
        %v4312 = vsub.f32 %v4109, %v4234
        %v4313 = vsub.f32 %v4113, %v4237
        %v4314 = vsub.f32 %v4115, %v4237
        %v4315 = vsub.f32 %v4117, %v4240
        %v4316 = vsub.f32 %v4119, %v4240
        %v4317 = vsub.f32 %v4123, %v4243
        %v4318 = vsub.f32 %v4125, %v4243
        %v4319 = vsub.f32 %v4127, %v4246
        %v4320 = vsub.f32 %v4129, %v4246
        %v4321 = vsub.f32 %v4133, %v4249
        %v4322 = vsub.f32 %v4135, %v4249
        %v4323 = vsub.f32 %v4137, %v4252
        %v4324 = vsub.f32 %v4139, %v4252
        %v4325 = vsub.f32 %v4143, %v4255
        %v4326 = vsub.f32 %v4145, %v4255
        %v4327 = vsub.f32 %v4147, %v4258
        %v4328 = vsub.f32 %v4149, %v4258
        %v4329 = vsub.f32 %v4153, %v4261
        %v4330 = vsub.f32 %v4155, %v4261
        %v4331 = vsub.f32 %v4157, %v4264
        %v4332 = vsub.f32 %v4159, %v4264
        %v4333 = vsub.f32 %v4163, %v4267
        %v4334 = vsub.f32 %v4165, %v4267
        %v4335 = vsub.f32 %v4167, %v4270
        %v4336 = vsub.f32 %v4169, %v4270
        %v4337 = vsub.f32 %v4173, %v4273
        %v4338 = vsub.f32 %v4175, %v4273
        %v4339 = vsub.f32 %v4177, %v4276
        %v4340 = vsub.f32 %v4179, %v4276
        %v4341 = vmul.f32 %v4277, 1.442695
        %v4342 = vpow.pop %v4341
        %v4343 = vmul.f32 %v4278, 1.442695
        %v4344 = vpow.pop %v4343
        %v4345 = vmul.f32 %v4279, 1.442695
        %v4346 = vpow.pop %v4345
        %v4347 = vmul.f32 %v4280, 1.442695
        %v4348 = vpow.pop %v4347
        %v4349 = vmul.f32 %v4281, 1.442695
        %v4350 = vpow.pop %v4349
        %v4351 = vmul.f32 %v4282, 1.442695
        %v4352 = vpow.pop %v4351
        %v4353 = vmul.f32 %v4283, 1.442695
        %v4354 = vpow.pop %v4353
        %v4355 = vmul.f32 %v4284, 1.442695
        %v4356 = vpow.pop %v4355
        %v4357 = vmul.f32 %v4285, 1.442695
        %v4358 = vpow.pop %v4357
        %v4359 = vmul.f32 %v4286, 1.442695
        %v4360 = vpow.pop %v4359
        %v4361 = vmul.f32 %v4287, 1.442695
        %v4362 = vpow.pop %v4361
        %v4363 = vmul.f32 %v4288, 1.442695
        %v4364 = vpow.pop %v4363
        %v4365 = vmul.f32 %v4289, 1.442695
        %v4366 = vpow.pop %v4365
        %v4367 = vmul.f32 %v4290, 1.442695
        %v4368 = vpow.pop %v4367
        %v4369 = vmul.f32 %v4291, 1.442695
        %v4370 = vpow.pop %v4369
        %v4371 = vmul.f32 %v4292, 1.442695
        %v4372 = vpow.pop %v4371
        %v4373 = vmul.f32 %v4293, 1.442695
        %v4374 = vpow.pop %v4373
        %v4375 = vmul.f32 %v4294, 1.442695
        %v4376 = vpow.pop %v4375
        %v4377 = vmul.f32 %v4295, 1.442695
        %v4378 = vpow.pop %v4377
        %v4379 = vmul.f32 %v4296, 1.442695
        %v4380 = vpow.pop %v4379
        %v4381 = vmul.f32 %v4297, 1.442695
        %v4382 = vpow.pop %v4381
        %v4383 = vmul.f32 %v4298, 1.442695
        %v4384 = vpow.pop %v4383
        %v4385 = vmul.f32 %v4299, 1.442695
        %v4386 = vpow.pop %v4385
        %v4387 = vmul.f32 %v4300, 1.442695
        %v4388 = vpow.pop %v4387
        %v4389 = vmul.f32 %v4301, 1.442695
        %v4390 = vpow.pop %v4389
        %v4391 = vmul.f32 %v4302, 1.442695
        %v4392 = vpow.pop %v4391
        %v4393 = vmul.f32 %v4303, 1.442695
        %v4394 = vpow.pop %v4393
        %v4395 = vmul.f32 %v4304, 1.442695
        %v4396 = vpow.pop %v4395
        %v4397 = vmul.f32 %v4305, 1.442695
        %v4398 = vpow.pop %v4397
        %v4399 = vmul.f32 %v4306, 1.442695
        %v4400 = vpow.pop %v4399
        %v4401 = vmul.f32 %v4307, 1.442695
        %v4402 = vpow.pop %v4401
        %v4403 = vmul.f32 %v4308, 1.442695
        %v4404 = vpow.pop %v4403
        %v4405 = vmul.f32 %v4309, 1.442695
        %v4406 = vpow.pop %v4405
        %v4407 = vmul.f32 %v4310, 1.442695
        %v4408 = vpow.pop %v4407
        %v4409 = vmul.f32 %v4311, 1.442695
        %v4410 = vpow.pop %v4409
        %v4411 = vmul.f32 %v4312, 1.442695
        %v4412 = vpow.pop %v4411
        %v4413 = vmul.f32 %v4313, 1.442695
        %v4414 = vpow.pop %v4413
        %v4415 = vmul.f32 %v4314, 1.442695
        %v4416 = vpow.pop %v4415
        %v4417 = vmul.f32 %v4315, 1.442695
        %v4418 = vpow.pop %v4417
        %v4419 = vmul.f32 %v4316, 1.442695
        %v4420 = vpow.pop %v4419
        %v4421 = vmul.f32 %v4317, 1.442695
        %v4422 = vpow.pop %v4421
        %v4423 = vmul.f32 %v4318, 1.442695
        %v4424 = vpow.pop %v4423
        %v4425 = vmul.f32 %v4319, 1.442695
        %v4426 = vpow.pop %v4425
        %v4427 = vmul.f32 %v4320, 1.442695
        %v4428 = vpow.pop %v4427
        %v4429 = vmul.f32 %v4321, 1.442695
        %v4430 = vpow.pop %v4429
        %v4431 = vmul.f32 %v4322, 1.442695
        %v4432 = vpow.pop %v4431
        %v4433 = vmul.f32 %v4323, 1.442695
        %v4434 = vpow.pop %v4433
        %v4435 = vmul.f32 %v4324, 1.442695
        %v4436 = vpow.pop %v4435
        %v4437 = vmul.f32 %v4325, 1.442695
        %v4438 = vpow.pop %v4437
        %v4439 = vmul.f32 %v4326, 1.442695
        %v4440 = vpow.pop %v4439
        %v4441 = vmul.f32 %v4327, 1.442695
        %v4442 = vpow.pop %v4441
        %v4443 = vmul.f32 %v4328, 1.442695
        %v4444 = vpow.pop %v4443
        %v4445 = vmul.f32 %v4329, 1.442695
        %v4446 = vpow.pop %v4445
        %v4447 = vmul.f32 %v4330, 1.442695
        %v4448 = vpow.pop %v4447
        %v4449 = vmul.f32 %v4331, 1.442695
        %v4450 = vpow.pop %v4449
        %v4451 = vmul.f32 %v4332, 1.442695
        %v4452 = vpow.pop %v4451
        %v4453 = vmul.f32 %v4333, 1.442695
        %v4454 = vpow.pop %v4453
        %v4455 = vmul.f32 %v4334, 1.442695
        %v4456 = vpow.pop %v4455
        %v4457 = vmul.f32 %v4335, 1.442695
        %v4458 = vpow.pop %v4457
        %v4459 = vmul.f32 %v4336, 1.442695
        %v4460 = vpow.pop %v4459
        %v4461 = vmul.f32 %v4337, 1.442695
        %v4462 = vpow.pop %v4461
        %v4463 = vmul.f32 %v4338, 1.442695
        %v4464 = vpow.pop %v4463
        %v4465 = vmul.f32 %v4339, 1.442695
        %v4466 = vpow.pop %v4465
        %v4467 = vmul.f32 %v4340, 1.442695
        %v4468 = vpow.pop %v4467
        %v4469 = vadd.f32 %v4342, %v4344
        %4470 = vadd.xlane.f32.xlu0 %v4469
        %v4471 = vpop.xlane.xlu0 %4470
        %v4472 = vadd.f32 %v4346, %v4348
        %4473 = vadd.xlane.f32.xlu0 %v4472
        %v4474 = vpop.xlane.xlu0 %4473
        %v4475 = vadd.f32 %v4350, %v4352
        %4476 = vadd.xlane.f32.xlu0 %v4475
        %v4477 = vpop.xlane.xlu0 %4476
        %v4478 = vadd.f32 %v4354, %v4356
        %4479 = vadd.xlane.f32.xlu0 %v4478
        %v4480 = vpop.xlane.xlu0 %4479
        %v4481 = vadd.f32 %v4358, %v4360
        %4482 = vadd.xlane.f32.xlu0 %v4481
        %v4483 = vpop.xlane.xlu0 %4482
        %v4484 = vadd.f32 %v4362, %v4364
        %4485 = vadd.xlane.f32.xlu0 %v4484
        %v4486 = vpop.xlane.xlu0 %4485
        %v4487 = vadd.f32 %v4366, %v4368
        %4488 = vadd.xlane.f32.xlu0 %v4487
        %v4489 = vpop.xlane.xlu0 %4488
        %v4490 = vadd.f32 %v4370, %v4372
        %4491 = vadd.xlane.f32.xlu0 %v4490
        %v4492 = vpop.xlane.xlu0 %4491
        %v4493 = vadd.f32 %v4374, %v4376
        %4494 = vadd.xlane.f32.xlu0 %v4493
        %v4495 = vpop.xlane.xlu0 %4494
        %v4496 = vadd.f32 %v4378, %v4380
        %4497 = vadd.xlane.f32.xlu0 %v4496
        %v4498 = vpop.xlane.xlu0 %4497
        %v4499 = vadd.f32 %v4382, %v4384
        %4500 = vadd.xlane.f32.xlu0 %v4499
        %v4501 = vpop.xlane.xlu0 %4500
        %v4502 = vadd.f32 %v4386, %v4388
        %4503 = vadd.xlane.f32.xlu0 %v4502
        %v4504 = vpop.xlane.xlu0 %4503
        %v4505 = vadd.f32 %v4390, %v4392
        %4506 = vadd.xlane.f32.xlu0 %v4505
        %v4507 = vpop.xlane.xlu0 %4506
        %v4508 = vadd.f32 %v4394, %v4396
        %4509 = vadd.xlane.f32.xlu0 %v4508
        %v4510 = vpop.xlane.xlu0 %4509
        %v4511 = vadd.f32 %v4398, %v4400
        %4512 = vadd.xlane.f32.xlu0 %v4511
        %v4513 = vpop.xlane.xlu0 %4512
        %v4514 = vadd.f32 %v4402, %v4404
        %4515 = vadd.xlane.f32.xlu0 %v4514
        %v4516 = vpop.xlane.xlu0 %4515
        %v4517 = vadd.f32 %v4406, %v4408
        %4518 = vadd.xlane.f32.xlu0 %v4517
        %v4519 = vpop.xlane.xlu0 %4518
        %v4520 = vadd.f32 %v4410, %v4412
        %4521 = vadd.xlane.f32.xlu0 %v4520
        %v4522 = vpop.xlane.xlu0 %4521
        %v4523 = vadd.f32 %v4414, %v4416
        %4524 = vadd.xlane.f32.xlu0 %v4523
        %v4525 = vpop.xlane.xlu0 %4524
        %v4526 = vadd.f32 %v4418, %v4420
        %4527 = vadd.xlane.f32.xlu0 %v4526
        %v4528 = vpop.xlane.xlu0 %4527
        %v4529 = vadd.f32 %v4422, %v4424
        %4530 = vadd.xlane.f32.xlu0 %v4529
        %v4531 = vpop.xlane.xlu0 %4530
        %v4532 = vadd.f32 %v4426, %v4428
        %4533 = vadd.xlane.f32.xlu0 %v4532
        %v4534 = vpop.xlane.xlu0 %4533
        %v4535 = vadd.f32 %v4430, %v4432
        %4536 = vadd.xlane.f32.xlu0 %v4535
        %v4537 = vpop.xlane.xlu0 %4536
        %v4538 = vadd.f32 %v4434, %v4436
        %4539 = vadd.xlane.f32.xlu0 %v4538
        %v4540 = vpop.xlane.xlu0 %4539
        %v4541 = vadd.f32 %v4438, %v4440
        %4542 = vadd.xlane.f32.xlu0 %v4541
        %v4543 = vpop.xlane.xlu0 %4542
        %v4544 = vadd.f32 %v4442, %v4444
        %4545 = vadd.xlane.f32.xlu0 %v4544
        %v4546 = vpop.xlane.xlu0 %4545
        %v4547 = vadd.f32 %v4446, %v4448
        %4548 = vadd.xlane.f32.xlu0 %v4547
        %v4549 = vpop.xlane.xlu0 %4548
        %v4550 = vadd.f32 %v4450, %v4452
        %4551 = vadd.xlane.f32.xlu0 %v4550
        %v4552 = vpop.xlane.xlu0 %4551
        %v4553 = vadd.f32 %v4454, %v4456
        %4554 = vadd.xlane.f32.xlu0 %v4553
        %v4555 = vpop.xlane.xlu0 %4554
        %v4556 = vadd.f32 %v4458, %v4460
        %4557 = vadd.xlane.f32.xlu0 %v4556
        %v4558 = vpop.xlane.xlu0 %4557
        %v4559 = vadd.f32 %v4462, %v4464
        %4560 = vadd.xlane.f32.xlu0 %v4559
        %v4561 = vpop.xlane.xlu0 %4560
        %v4562 = vadd.f32 %v4466, %v4468
        %4563 = vadd.xlane.f32.xlu0 %v4562
        %v4564 = vpop.xlane.xlu0 %4563
        %v4565 = vpack.c.bf16 %v4346, %v4342
        %v4566 = vpack.c.bf16 %v4348, %v4344
        %v4567 = vpack.c.bf16 %v4354, %v4350
        %v4568 = vpack.c.bf16 %v4356, %v4352
        %v4569 = vpack.c.bf16 %v4362, %v4358
        %v4570 = vpack.c.bf16 %v4364, %v4360
        %v4571 = vpack.c.bf16 %v4370, %v4366
        %v4572 = vpack.c.bf16 %v4372, %v4368
        %v4573 = vpack.c.bf16 %v4378, %v4374
        %v4574 = vpack.c.bf16 %v4380, %v4376
        %v4575 = vpack.c.bf16 %v4386, %v4382
        %v4576 = vpack.c.bf16 %v4388, %v4384
        %v4577 = vpack.c.bf16 %v4394, %v4390
        %v4578 = vpack.c.bf16 %v4396, %v4392
        %v4579 = vpack.c.bf16 %v4402, %v4398
        %v4580 = vpack.c.bf16 %v4404, %v4400
        %v4581 = vpack.c.bf16 %v4410, %v4406
        %v4582 = vpack.c.bf16 %v4412, %v4408
        %v4583 = vpack.c.bf16 %v4418, %v4414
        %v4584 = vpack.c.bf16 %v4420, %v4416
        %v4585 = vpack.c.bf16 %v4426, %v4422
        %v4586 = vpack.c.bf16 %v4428, %v4424
        %v4587 = vpack.c.bf16 %v4434, %v4430
        %v4588 = vpack.c.bf16 %v4436, %v4432
        %v4589 = vpack.c.bf16 %v4442, %v4438
        %v4590 = vpack.c.bf16 %v4444, %v4440
        %v4591 = vpack.c.bf16 %v4450, %v4446
        %v4592 = vpack.c.bf16 %v4452, %v4448
        %v4593 = vpack.c.bf16 %v4458, %v4454
        %v4594 = vpack.c.bf16 %v4460, %v4456
        %v4595 = vpack.c.bf16 %v4466, %v4462
        %v4596 = vpack.c.bf16 %v4468, %v4464
        %v4597 = vpack.c.bf16 %v1776, %v1773
        %v4598 = vpack.c.bf16 %v1784, %v1781
        %v4599 = vpack.c.bf16 %v1792, %v1789
        %v4600 = vpack.c.bf16 %v1800, %v1797
        %v4601 = vpack.c.bf16 %v1808, %v1805
        %v4602 = vpack.c.bf16 %v1816, %v1813
        %v4603 = vpack.c.bf16 %v1824, %v1821
        %v4604 = vpack.c.bf16 %v1832, %v1829
        %v4605 = vpack.c.bf16 %v1840, %v1837
        %v4606 = vpack.c.bf16 %v1848, %v1845
        %v4607 = vpack.c.bf16 %v1856, %v1853
        %v4608 = vpack.c.bf16 %v1864, %v1861
        %v4609 = vpack.c.bf16 %v1872, %v1869
        %v4610 = vpack.c.bf16 %v1880, %v1877
        %v4611 = vpack.c.bf16 %v1888, %v1885
        %v4612 = vpack.c.bf16 %v1896, %v1893
        %4613 = vmatprep.subr.bf16.mxu0 0
        %4614 = vmatpush1.bf16.msra.mxu0 %v4597
        %4615 = vmatprep.subr.bf16.mxu0 0
        %4616 = vmatpush1.bf16.msra.mxu0 %v4598
        %4617 = vmatprep.subr.bf16.mxu0 0
        %4618 = vmatpush1.bf16.msra.mxu0 %v4599
        %4619 = vmatprep.subr.bf16.mxu0 0
        %4620 = vmatpush1.bf16.msra.mxu0 %v4600
        %4621 = vmatprep.subr.bf16.mxu0 0
        %4622 = vmatpush1.bf16.msra.mxu0 %v4601
        %4623 = vmatprep.subr.bf16.mxu0 0
        %4624 = vmatpush1.bf16.msra.mxu0 %v4602
        %4625 = vmatprep.subr.bf16.mxu0 0
        %4626 = vmatpush1.bf16.msra.mxu0 %v4603
        %4627 = vmatprep.subr.bf16.mxu0 0
        %4628 = vmatpush1.bf16.msra.mxu0 %v4604
        %4629 = vmatprep.subr.bf16.mxu0 0
        %4630 = vmatpush1.bf16.msra.mxu0 %v4605
        %4631 = vmatprep.subr.bf16.mxu0 0
        %4632 = vmatpush1.bf16.msra.mxu0 %v4606
        %4633 = vmatprep.subr.bf16.mxu0 0
        %4634 = vmatpush1.bf16.msra.mxu0 %v4607
        %4635 = vmatprep.subr.bf16.mxu0 0
        %4636 = vmatpush1.bf16.msra.mxu0 %v4608
        %4637 = vmatprep.subr.bf16.mxu0 0
        %4638 = vmatpush1.bf16.msra.mxu0 %v4609
        %4639 = vmatprep.subr.bf16.mxu0 0
        %4640 = vmatpush1.bf16.msra.mxu0 %v4610
        %4641 = vmatprep.subr.bf16.mxu0 0
        %4642 = vmatpush1.bf16.msra.mxu0 %v4611
        %4643 = vmatprep.subr.bf16.mxu0 0
        %4644 = vmatpush1.bf16.msra.mxu0 %v4612
        %4645 = vmatprep.mubr.bf16.mxu0 %v4566
        %4646 = vmatmul.mubr.bf16.gmra.mrb[0].mxu0 %v4565
        %v4647 = vpop.f32.mrb[0].mxu0
        %v4648 = vadd.f32 0.0, %v4647
        %v4649 = vpop.f32.mrb[0].mxu0
        %v4650 = vpop.f32.mrb[0].mxu0
        %v4651 = vadd.f32 0.0, %v4650
        %v4652 = vpop.f32.mrb[0].mxu0
        %4653 = vmatprep.mubr.bf16.mxu0 %v4568
        %4654 = vmatmul.mubr.bf16.gmra.mrb[0].mxu0 %v4567
        %v4655 = vpop.f32.mrb[0].mxu0
        %v4656 = vadd.f32 0.0, %v4655
        %v4657 = vpop.f32.mrb[0].mxu0
        %v4658 = vpop.f32.mrb[0].mxu0
        %v4659 = vadd.f32 0.0, %v4658
        %v4660 = vpop.f32.mrb[0].mxu0
        %4661 = vmatprep.mubr.bf16.mxu0 %v4570
        %4662 = vmatmul.mubr.bf16.gmra.mrb[0].mxu0 %v4569
        %v4663 = vpop.f32.mrb[0].mxu0
        %v4664 = vadd.f32 0.0, %v4663
        %v4665 = vpop.f32.mrb[0].mxu0
        %v4666 = vpop.f32.mrb[0].mxu0
        %v4667 = vadd.f32 0.0, %v4666
        %v4668 = vpop.f32.mrb[0].mxu0
        %4669 = vmatprep.mubr.bf16.mxu0 %v4572
        %4670 = vmatmul.mubr.bf16.gmra.mrb[0].mxu0 %v4571
        %v4671 = vpop.f32.mrb[0].mxu0
        %v4672 = vadd.f32 0.0, %v4671
        %v4673 = vpop.f32.mrb[0].mxu0
        %v4674 = vpop.f32.mrb[0].mxu0
        %v4675 = vadd.f32 0.0, %v4674
        %v4676 = vpop.f32.mrb[0].mxu0
        %4677 = vmatprep.mubr.bf16.mxu0 %v4574
        %4678 = vmatmul.mubr.bf16.gmra.mrb[0].mxu0 %v4573
        %v4679 = vpop.f32.mrb[0].mxu0
        %v4680 = vadd.f32 0.0, %v4679
        %v4681 = vpop.f32.mrb[0].mxu0
        %v4682 = vpop.f32.mrb[0].mxu0
        %v4683 = vadd.f32 0.0, %v4682
        %v4684 = vpop.f32.mrb[0].mxu0
        %4685 = vmatprep.mubr.bf16.mxu0 %v4576
        %4686 = vmatmul.mubr.bf16.gmra.mrb[0].mxu0 %v4575
        %v4687 = vpop.f32.mrb[0].mxu0
        %v4688 = vadd.f32 0.0, %v4687
        %v4689 = vpop.f32.mrb[0].mxu0
        %v4690 = vpop.f32.mrb[0].mxu0
        %v4691 = vadd.f32 0.0, %v4690
        %v4692 = vpop.f32.mrb[0].mxu0
        %4693 = vmatprep.mubr.bf16.mxu0 %v4578
        %4694 = vmatmul.mubr.bf16.gmra.mrb[0].mxu0 %v4577
        %v4695 = vpop.f32.mrb[0].mxu0
        %v4696 = vadd.f32 0.0, %v4695
        %v4697 = vpop.f32.mrb[0].mxu0
        %v4698 = vpop.f32.mrb[0].mxu0
        %v4699 = vadd.f32 0.0, %v4698
        %v4700 = vpop.f32.mrb[0].mxu0
        %4701 = vmatprep.mubr.bf16.mxu0 %v4580
        %4702 = vmatmul.mubr.bf16.gmra.mrb[0].mxu0 %v4579
        %v4703 = vpop.f32.mrb[0].mxu0
        %v4704 = vadd.f32 0.0, %v4703
        %v4705 = vpop.f32.mrb[0].mxu0
        %v4706 = vpop.f32.mrb[0].mxu0
        %v4707 = vadd.f32 0.0, %v4706
        %v4708 = vpop.f32.mrb[0].mxu0
        %4709 = vmatprep.mubr.bf16.mxu0 %v4582
        %4710 = vmatmul.mubr.bf16.gmra.mrb[0].mxu0 %v4581
        %v4711 = vpop.f32.mrb[0].mxu0
        %v4712 = vadd.f32 0.0, %v4711
        %v4713 = vpop.f32.mrb[0].mxu0
        %v4714 = vpop.f32.mrb[0].mxu0
        %v4715 = vadd.f32 0.0, %v4714
        %v4716 = vpop.f32.mrb[0].mxu0
        %4717 = vmatprep.mubr.bf16.mxu0 %v4584
        %4718 = vmatmul.mubr.bf16.gmra.mrb[0].mxu0 %v4583
        %v4719 = vpop.f32.mrb[0].mxu0
        %v4720 = vadd.f32 0.0, %v4719
        %v4721 = vpop.f32.mrb[0].mxu0
        %v4722 = vpop.f32.mrb[0].mxu0
        %v4723 = vadd.f32 0.0, %v4722
        %v4724 = vpop.f32.mrb[0].mxu0
        %4725 = vmatprep.mubr.bf16.mxu0 %v4586
        %4726 = vmatmul.mubr.bf16.gmra.mrb[0].mxu0 %v4585
        %v4727 = vpop.f32.mrb[0].mxu0
        %v4728 = vadd.f32 0.0, %v4727
        %v4729 = vpop.f32.mrb[0].mxu0
        %v4730 = vpop.f32.mrb[0].mxu0
        %v4731 = vadd.f32 0.0, %v4730
        %v4732 = vpop.f32.mrb[0].mxu0
        %4733 = vmatprep.mubr.bf16.mxu0 %v4588
        %4734 = vmatmul.mubr.bf16.gmra.mrb[0].mxu0 %v4587
        %v4735 = vpop.f32.mrb[0].mxu0
        %v4736 = vadd.f32 0.0, %v4735
        %v4737 = vpop.f32.mrb[0].mxu0
        %v4738 = vpop.f32.mrb[0].mxu0
        %v4739 = vadd.f32 0.0, %v4738
        %v4740 = vpop.f32.mrb[0].mxu0
        %4741 = vmatprep.mubr.bf16.mxu0 %v4590
        %4742 = vmatmul.mubr.bf16.gmra.mrb[0].mxu0 %v4589
        %v4743 = vpop.f32.mrb[0].mxu0
        %v4744 = vadd.f32 0.0, %v4743
        %v4745 = vpop.f32.mrb[0].mxu0
        %v4746 = vpop.f32.mrb[0].mxu0
        %v4747 = vadd.f32 0.0, %v4746
        %v4748 = vpop.f32.mrb[0].mxu0
        %4749 = vmatprep.mubr.bf16.mxu0 %v4592
        %4750 = vmatmul.mubr.bf16.gmra.mrb[0].mxu0 %v4591
        %v4751 = vpop.f32.mrb[0].mxu0
        %v4752 = vadd.f32 0.0, %v4751
        %v4753 = vpop.f32.mrb[0].mxu0
        %v4754 = vpop.f32.mrb[0].mxu0
        %v4755 = vadd.f32 0.0, %v4754
        %v4756 = vpop.f32.mrb[0].mxu0
        %4757 = vmatprep.mubr.bf16.mxu0 %v4594
        %4758 = vmatmul.mubr.bf16.gmra.mrb[0].mxu0 %v4593
        %v4759 = vpop.f32.mrb[0].mxu0
        %v4760 = vadd.f32 0.0, %v4759
        %v4761 = vpop.f32.mrb[0].mxu0
        %v4762 = vpop.f32.mrb[0].mxu0
        %v4763 = vadd.f32 0.0, %v4762
        %v4764 = vpop.f32.mrb[0].mxu0
        %4765 = vmatprep.mubr.bf16.mxu0 %v4596
        %4766 = vmatmul.mubr.bf16.gmra.mrb[0].mxu0 %v4595
        %v4767 = vpop.f32.mrb[0].mxu0
        %v4768 = vadd.f32 0.0, %v4767
        %v4769 = vpop.f32.mrb[0].mxu0
        %v4770 = vpop.f32.mrb[0].mxu0
        %v4771 = vadd.f32 0.0, %v4770
        %v4772 = vpop.f32.mrb[0].mxu0
        %4773 = vdwg.mxu0
        %v4774 = vrcp.pop %v4471
        %v4775 = vrcp.pop %v4474
        %v4776 = vrcp.pop %v4477
        %v4777 = vrcp.pop %v4480
        %v4778 = vrcp.pop %v4483
        %v4779 = vrcp.pop %v4486
        %v4780 = vrcp.pop %v4489
        %v4781 = vrcp.pop %v4492
        %v4782 = vrcp.pop %v4495
        %v4783 = vrcp.pop %v4498
        %v4784 = vrcp.pop %v4501
        %v4785 = vrcp.pop %v4504
        %v4786 = vrcp.pop %v4507
        %v4787 = vrcp.pop %v4510
        %v4788 = vrcp.pop %v4513
        %v4789 = vrcp.pop %v4516
        %v4790 = vrcp.pop %v4519
        %v4791 = vrcp.pop %v4522
        %v4792 = vrcp.pop %v4525
        %v4793 = vrcp.pop %v4528
        %v4794 = vrcp.pop %v4531
        %v4795 = vrcp.pop %v4534
        %v4796 = vrcp.pop %v4537
        %v4797 = vrcp.pop %v4540
        %v4798 = vrcp.pop %v4543
        %v4799 = vrcp.pop %v4546
        %v4800 = vrcp.pop %v4549
        %v4801 = vrcp.pop %v4552
        %v4802 = vrcp.pop %v4555
        %v4803 = vrcp.pop %v4558
        %v4804 = vrcp.pop %v4561
        %v4805 = vrcp.pop %v4564
        %v4806 = vmul.f32 %v4648, %v4774
        %v4807 = vmul.f32 %v4651, %v4775
        %v4808 = vmul.f32 %v4656, %v4776
        %v4809 = vmul.f32 %v4659, %v4777
        %v4810 = vmul.f32 %v4664, %v4778
        %v4811 = vmul.f32 %v4667, %v4779
        %v4812 = vmul.f32 %v4672, %v4780
        %v4813 = vmul.f32 %v4675, %v4781
        %v4814 = vmul.f32 %v4680, %v4782
        %v4815 = vmul.f32 %v4683, %v4783
        %v4816 = vmul.f32 %v4688, %v4784
        %v4817 = vmul.f32 %v4691, %v4785
        %v4818 = vmul.f32 %v4696, %v4786
        %v4819 = vmul.f32 %v4699, %v4787
        %v4820 = vmul.f32 %v4704, %v4788
        %v4821 = vmul.f32 %v4707, %v4789
        %v4822 = vmul.f32 %v4712, %v4790
        %v4823 = vmul.f32 %v4715, %v4791
        %v4824 = vmul.f32 %v4720, %v4792
        %v4825 = vmul.f32 %v4723, %v4793
        %v4826 = vmul.f32 %v4728, %v4794
        %v4827 = vmul.f32 %v4731, %v4795
        %v4828 = vmul.f32 %v4736, %v4796
        %v4829 = vmul.f32 %v4739, %v4797
        %v4830 = vmul.f32 %v4744, %v4798
        %v4831 = vmul.f32 %v4747, %v4799
        %v4832 = vmul.f32 %v4752, %v4800
        %v4833 = vmul.f32 %v4755, %v4801
        %v4834 = vmul.f32 %v4760, %v4802
        %v4835 = vmul.f32 %v4763, %v4803
        %v4836 = vmul.f32 %v4768, %v4804
        %v4837 = vmul.f32 %v4771, %v4805
        %v4838 = vpack.c.bf16 %v4807, %v4806
        %v4839 = vpack.c.bf16 %v4809, %v4808
        %v4840 = vpack.c.bf16 %v4811, %v4810
        %v4841 = vpack.c.bf16 %v4813, %v4812
        %v4842 = vpack.c.bf16 %v4815, %v4814
        %v4843 = vpack.c.bf16 %v4817, %v4816
        %v4844 = vpack.c.bf16 %v4819, %v4818
        %v4845 = vpack.c.bf16 %v4821, %v4820
        %v4846 = vpack.c.bf16 %v4823, %v4822
        %v4847 = vpack.c.bf16 %v4825, %v4824
        %v4848 = vpack.c.bf16 %v4827, %v4826
        %v4849 = vpack.c.bf16 %v4829, %v4828
        %v4850 = vpack.c.bf16 %v4831, %v4830
        %v4851 = vpack.c.bf16 %v4833, %v4832
        %v4852 = vpack.c.bf16 %v4835, %v4834
        %v4853 = vpack.c.bf16 %v4837, %v4836
        %v4862 = vunpack.c.l.b16 %v3835
        %v4863 = vunpack.c.l.b16 %v3836
        %v4864 = vunpack.c.l.b16 %v3837
        %v4865 = vunpack.c.l.b16 %v3838
        %v4866 = vunpack.c.l.b16 %v3839
        %v4867 = vunpack.c.l.b16 %v3840
        %v4868 = vunpack.c.l.b16 %v3841
        %v4869 = vunpack.c.l.b16 %v3842
        %v4870 = vpack.c.b16 %v4863, %v4862
        %v4871 = vpack.c.b16 %v4865, %v4864
        %v4872 = vpack.c.b16 %v4867, %v4866
        %v4873 = vpack.c.b16 %v4869, %v4868
        %v4879 = vsel %vm1289, %v4838, 0
        %v4882 = vsel %vm1289, %v4839, 0
        %v4885 = vsel %vm1289, %v4840, 0
        %v4888 = vsel %vm1289, %v4841, 0
        %v4891 = vsel %vm1289, %v4842, 0
        %v4894 = vsel %vm1289, %v4843, 0
        %v4897 = vsel %vm1289, %v4844, 0
        %v4900 = vsel %vm1289, %v4845, 0
        %v4903 = vsel %vm1289, %v4846, 0
        %v4906 = vsel %vm1289, %v4847, 0
        %v4909 = vsel %vm1289, %v4848, 0
        %v4912 = vsel %vm1289, %v4849, 0
        %v4915 = vsel %vm1289, %v4850, 0
        %v4918 = vsel %vm1289, %v4851, 0
        %v4921 = vsel %vm1289, %v4852, 0
        %v4924 = vsel %vm1289, %v4853, 0
        %4926 = vmatprep.subr.bf16.mxu0 0
        %4927 = vmatpush1.bf16.msra.mxu0 %v4870
        %4928 = vmatprep.subr.bf16.mxu0 0
        %4929 = vmatpush1.bf16.msra.mxu0 %v4871
        %4930 = vmatprep.subr.bf16.mxu0 0
        %4931 = vmatpush1.bf16.msra.mxu0 %v4872
        %4932 = vmatprep.subr.bf16.mxu0 0
        %4933 = vmatpush1.bf16.msra.mxu0 %v4873
        %4934 = vmatprep.subr.bf16.mxu0 0
        %4935 = vmatpush1.bf16.msra.mxu0 0
        %4936 = vmatprep.subr.bf16.mxu0 0
        %4937 = vmatpush1.bf16.msra.mxu0 0
        %4938 = vmatprep.subr.bf16.mxu0 0
        %4939 = vmatpush1.bf16.msra.mxu0 0
        %4940 = vmatprep.subr.bf16.mxu0 0
        %4941 = vmatpush1.bf16.msra.mxu0 0
        %4942 = vmatprep.subr.bf16.mxu0 0
        %4943 = vmatpush1.bf16.msra.mxu0 0
        %4944 = vmatprep.subr.bf16.mxu0 0
        %4945 = vmatpush1.bf16.msra.mxu0 0
        %4946 = vmatprep.subr.bf16.mxu0 0
        %4947 = vmatpush1.bf16.msra.mxu0 0
        %4948 = vmatprep.subr.bf16.mxu0 0
        %4949 = vmatpush1.bf16.msra.mxu0 0
        %4950 = vmatprep.subr.bf16.mxu0 0
        %4951 = vmatpush1.bf16.msra.mxu0 0
        %4952 = vmatprep.subr.bf16.mxu0 0
        %4953 = vmatpush1.bf16.msra.mxu0 0
        %4954 = vmatprep.subr.bf16.mxu0 0
        %4955 = vmatpush1.bf16.msra.mxu0 0
        %4956 = vmatprep.subr.bf16.mxu0 0
        %4957 = vmatpush1.bf16.msra.mxu0 0
        %4958 = vmatprep.mubr.bf16.mxu0 0
        %4959 = vmatmul.mubr.bf16.gmra.mrb[0].mxu0 %v4879
        %v4960 = vpop.f32.mrb[0].mxu0
        %v4961 = vadd.f32 0.0, %v4960
        %v4962 = vpop.f32.mrb[0].mxu0
        %v4963 = vpop.f32.mrb[0].mxu0
        %v4964 = vadd.f32 0.0, %v4963
        %v4965 = vpop.f32.mrb[0].mxu0
        %4966 = vmatprep.mubr.bf16.mxu0 0
        %4967 = vmatmul.mubr.bf16.gmra.mrb[0].mxu0 %v4882
        %v4968 = vpop.f32.mrb[0].mxu0
        %v4969 = vadd.f32 0.0, %v4968
        %v4970 = vpop.f32.mrb[0].mxu0
        %v4971 = vpop.f32.mrb[0].mxu0
        %v4972 = vadd.f32 0.0, %v4971
        %v4973 = vpop.f32.mrb[0].mxu0
        %4974 = vmatprep.mubr.bf16.mxu0 0
        %4975 = vmatmul.mubr.bf16.gmra.mrb[0].mxu0 %v4885
        %v4976 = vpop.f32.mrb[0].mxu0
        %v4977 = vadd.f32 0.0, %v4976
        %v4978 = vpop.f32.mrb[0].mxu0
        %v4979 = vpop.f32.mrb[0].mxu0
        %v4980 = vadd.f32 0.0, %v4979
        %v4981 = vpop.f32.mrb[0].mxu0
        %4982 = vmatprep.mubr.bf16.mxu0 0
        %4983 = vmatmul.mubr.bf16.gmra.mrb[0].mxu0 %v4888
        %v4984 = vpop.f32.mrb[0].mxu0
        %v4985 = vadd.f32 0.0, %v4984
        %v4986 = vpop.f32.mrb[0].mxu0
        %v4987 = vpop.f32.mrb[0].mxu0
        %v4988 = vadd.f32 0.0, %v4987
        %v4989 = vpop.f32.mrb[0].mxu0
        %4990 = vmatprep.mubr.bf16.mxu0 0
        %4991 = vmatmul.mubr.bf16.gmra.mrb[0].mxu0 %v4891
        %v4992 = vpop.f32.mrb[0].mxu0
        %v4993 = vadd.f32 0.0, %v4992
        %v4994 = vpop.f32.mrb[0].mxu0
        %v4995 = vpop.f32.mrb[0].mxu0
        %v4996 = vadd.f32 0.0, %v4995
        %v4997 = vpop.f32.mrb[0].mxu0
        %4998 = vmatprep.mubr.bf16.mxu0 0
        %4999 = vmatmul.mubr.bf16.gmra.mrb[0].mxu0 %v4894
        %v5000 = vpop.f32.mrb[0].mxu0
        %v5001 = vadd.f32 0.0, %v5000
        %v5002 = vpop.f32.mrb[0].mxu0
        %v5003 = vpop.f32.mrb[0].mxu0
        %v5004 = vadd.f32 0.0, %v5003
        %v5005 = vpop.f32.mrb[0].mxu0
        %5006 = vmatprep.mubr.bf16.mxu0 0
        %5007 = vmatmul.mubr.bf16.gmra.mrb[0].mxu0 %v4897
        %v5008 = vpop.f32.mrb[0].mxu0
        %v5009 = vadd.f32 0.0, %v5008
        %v5010 = vpop.f32.mrb[0].mxu0
        %v5011 = vpop.f32.mrb[0].mxu0
        %v5012 = vadd.f32 0.0, %v5011
        %v5013 = vpop.f32.mrb[0].mxu0
        %5014 = vmatprep.mubr.bf16.mxu0 0
        %5015 = vmatmul.mubr.bf16.gmra.mrb[0].mxu0 %v4900
        %v5016 = vpop.f32.mrb[0].mxu0
        %v5017 = vadd.f32 0.0, %v5016
        %v5018 = vpop.f32.mrb[0].mxu0
        %v5019 = vpop.f32.mrb[0].mxu0
        %v5020 = vadd.f32 0.0, %v5019
        %v5021 = vpop.f32.mrb[0].mxu0
        %5022 = vmatprep.mubr.bf16.mxu0 0
        %5023 = vmatmul.mubr.bf16.gmra.mrb[0].mxu0 %v4903
        %v5024 = vpop.f32.mrb[0].mxu0
        %v5025 = vadd.f32 0.0, %v5024
        %v5026 = vpop.f32.mrb[0].mxu0
        %v5027 = vpop.f32.mrb[0].mxu0
        %v5028 = vadd.f32 0.0, %v5027
        %v5029 = vpop.f32.mrb[0].mxu0
        %5030 = vmatprep.mubr.bf16.mxu0 0
        %5031 = vmatmul.mubr.bf16.gmra.mrb[0].mxu0 %v4906
        %v5032 = vpop.f32.mrb[0].mxu0
        %v5033 = vadd.f32 0.0, %v5032
        %v5034 = vpop.f32.mrb[0].mxu0
        %v5035 = vpop.f32.mrb[0].mxu0
        %v5036 = vadd.f32 0.0, %v5035
        %v5037 = vpop.f32.mrb[0].mxu0
        %5038 = vmatprep.mubr.bf16.mxu0 0
        %5039 = vmatmul.mubr.bf16.gmra.mrb[0].mxu0 %v4909
        %v5040 = vpop.f32.mrb[0].mxu0
        %v5041 = vadd.f32 0.0, %v5040
        %v5042 = vpop.f32.mrb[0].mxu0
        %v5043 = vpop.f32.mrb[0].mxu0
        %v5044 = vadd.f32 0.0, %v5043
        %v5045 = vpop.f32.mrb[0].mxu0
        %5046 = vmatprep.mubr.bf16.mxu0 0
        %5047 = vmatmul.mubr.bf16.gmra.mrb[0].mxu0 %v4912
        %v5048 = vpop.f32.mrb[0].mxu0
        %v5049 = vadd.f32 0.0, %v5048
        %v5050 = vpop.f32.mrb[0].mxu0
        %v5051 = vpop.f32.mrb[0].mxu0
        %v5052 = vadd.f32 0.0, %v5051
        %v5053 = vpop.f32.mrb[0].mxu0
        %5054 = vmatprep.mubr.bf16.mxu0 0
        %5055 = vmatmul.mubr.bf16.gmra.mrb[0].mxu0 %v4915
        %v5056 = vpop.f32.mrb[0].mxu0
        %v5057 = vadd.f32 0.0, %v5056
        %v5058 = vpop.f32.mrb[0].mxu0
        %v5059 = vpop.f32.mrb[0].mxu0
        %v5060 = vadd.f32 0.0, %v5059
        %v5061 = vpop.f32.mrb[0].mxu0
        %5062 = vmatprep.mubr.bf16.mxu0 0
        %5063 = vmatmul.mubr.bf16.gmra.mrb[0].mxu0 %v4918
        %v5064 = vpop.f32.mrb[0].mxu0
        %v5065 = vadd.f32 0.0, %v5064
        %v5066 = vpop.f32.mrb[0].mxu0
        %v5067 = vpop.f32.mrb[0].mxu0
        %v5068 = vadd.f32 0.0, %v5067
        %v5069 = vpop.f32.mrb[0].mxu0
        %5070 = vmatprep.mubr.bf16.mxu0 0
        %5071 = vmatmul.mubr.bf16.gmra.mrb[0].mxu0 %v4921
        %v5072 = vpop.f32.mrb[0].mxu0
        %v5073 = vadd.f32 0.0, %v5072
        %v5074 = vpop.f32.mrb[0].mxu0
        %v5075 = vpop.f32.mrb[0].mxu0
        %v5076 = vadd.f32 0.0, %v5075
        %v5077 = vpop.f32.mrb[0].mxu0
        %5078 = vmatprep.mubr.bf16.mxu0 0
        %5079 = vmatmul.mubr.bf16.gmra.mrb[0].mxu0 %v4924
        %v5080 = vpop.f32.mrb[0].mxu0
        %v5081 = vadd.f32 0.0, %v5080
        %v5082 = vpop.f32.mrb[0].mxu0
        %v5083 = vpop.f32.mrb[0].mxu0
        %v5084 = vadd.f32 0.0, %v5083
        %v5085 = vpop.f32.mrb[0].mxu0
        %5086 = vdwg.mxu0
        %v5088 = vsel %vm1289, %v3843, 0
        %v5091 = vsel %vm1289, %v3844, 0
        %v5094 = vsel %vm1289, %v3845, 0
        %v5097 = vsel %vm1289, %v3846, 0
        %v5100 = vsel %vm1289, %v3847, 0
        %v5103 = vsel %vm1289, %v3848, 0
        %v5106 = vsel %vm1289, %v3849, 0
        %v5109 = vsel %vm1289, %v3850, 0
        %v5112 = vsel %vm1289, %v3851, 0
        %v5115 = vsel %vm1289, %v3852, 0
        %v5118 = vsel %vm1289, %v3853, 0
        %v5121 = vsel %vm1289, %v3854, 0
        %v5124 = vsel %vm1289, %v3855, 0
        %v5127 = vsel %vm1289, %v3856, 0
        %v5130 = vsel %vm1289, %v3857, 0
        %v5133 = vsel %vm1289, %v3858, 0
        %5135 = vmatprep.subr.bf16.mxu0 0
        %5136 = vmatpush1.bf16.msra.mxu0 %v4870
        %5137 = vmatprep.subr.bf16.mxu0 0
        %5138 = vmatpush1.bf16.msra.mxu0 %v4871
        %5139 = vmatprep.subr.bf16.mxu0 0
        %5140 = vmatpush1.bf16.msra.mxu0 %v4872
        %5141 = vmatprep.subr.bf16.mxu0 0
        %5142 = vmatpush1.bf16.msra.mxu0 %v4873
        %5143 = vmatprep.subr.bf16.mxu0 0
        %5144 = vmatpush1.bf16.msra.mxu0 0
        %5145 = vmatprep.subr.bf16.mxu0 0
        %5146 = vmatpush1.bf16.msra.mxu0 0
        %5147 = vmatprep.subr.bf16.mxu0 0
        %5148 = vmatpush1.bf16.msra.mxu0 0
        %5149 = vmatprep.subr.bf16.mxu0 0
        %5150 = vmatpush1.bf16.msra.mxu0 0
        %5151 = vmatprep.subr.bf16.mxu0 0
        %5152 = vmatpush1.bf16.msra.mxu0 0
        %5153 = vmatprep.subr.bf16.mxu0 0
        %5154 = vmatpush1.bf16.msra.mxu0 0
        %5155 = vmatprep.subr.bf16.mxu0 0
        %5156 = vmatpush1.bf16.msra.mxu0 0
        %5157 = vmatprep.subr.bf16.mxu0 0
        %5158 = vmatpush1.bf16.msra.mxu0 0
        %5159 = vmatprep.subr.bf16.mxu0 0
        %5160 = vmatpush1.bf16.msra.mxu0 0
        %5161 = vmatprep.subr.bf16.mxu0 0
        %5162 = vmatpush1.bf16.msra.mxu0 0
        %5163 = vmatprep.subr.bf16.mxu0 0
        %5164 = vmatpush1.bf16.msra.mxu0 0
        %5165 = vmatprep.subr.bf16.mxu0 0
        %5166 = vmatpush1.bf16.msra.mxu0 0
        %5167 = vmatprep.mubr.bf16.mxu0 0
        %5168 = vmatmul.mubr.bf16.gmra.mrb[0].mxu0 %v5088
        %v5169 = vpop.f32.mrb[0].mxu0
        %v5170 = vadd.f32 %v4961, %v5169
        %v5171 = vpop.f32.mrb[0].mxu0
        %v5172 = vpop.f32.mrb[0].mxu0
        %v5173 = vadd.f32 %v4964, %v5172
        %v5174 = vpop.f32.mrb[0].mxu0
        %5175 = vmatprep.mubr.bf16.mxu0 0
        %5176 = vmatmul.mubr.bf16.gmra.mrb[0].mxu0 %v5091
        %v5177 = vpop.f32.mrb[0].mxu0
        %v5178 = vadd.f32 %v4969, %v5177
        %v5179 = vpop.f32.mrb[0].mxu0
        %v5180 = vpop.f32.mrb[0].mxu0
        %v5181 = vadd.f32 %v4972, %v5180
        %v5182 = vpop.f32.mrb[0].mxu0
        %5183 = vmatprep.mubr.bf16.mxu0 0
        %5184 = vmatmul.mubr.bf16.gmra.mrb[0].mxu0 %v5094
        %v5185 = vpop.f32.mrb[0].mxu0
        %v5186 = vadd.f32 %v4977, %v5185
        %v5187 = vpop.f32.mrb[0].mxu0
        %v5188 = vpop.f32.mrb[0].mxu0
        %v5189 = vadd.f32 %v4980, %v5188
        %v5190 = vpop.f32.mrb[0].mxu0
        %5191 = vmatprep.mubr.bf16.mxu0 0
        %5192 = vmatmul.mubr.bf16.gmra.mrb[0].mxu0 %v5097
        %v5193 = vpop.f32.mrb[0].mxu0
        %v5194 = vadd.f32 %v4985, %v5193
        %v5195 = vpop.f32.mrb[0].mxu0
        %v5196 = vpop.f32.mrb[0].mxu0
        %v5197 = vadd.f32 %v4988, %v5196
        %v5198 = vpop.f32.mrb[0].mxu0
        %5199 = vmatprep.mubr.bf16.mxu0 0
        %5200 = vmatmul.mubr.bf16.gmra.mrb[0].mxu0 %v5100
        %v5201 = vpop.f32.mrb[0].mxu0
        %v5202 = vadd.f32 %v4993, %v5201
        %v5203 = vpop.f32.mrb[0].mxu0
        %v5204 = vpop.f32.mrb[0].mxu0
        %v5205 = vadd.f32 %v4996, %v5204
        %v5206 = vpop.f32.mrb[0].mxu0
        %5207 = vmatprep.mubr.bf16.mxu0 0
        %5208 = vmatmul.mubr.bf16.gmra.mrb[0].mxu0 %v5103
        %v5209 = vpop.f32.mrb[0].mxu0
        %v5210 = vadd.f32 %v5001, %v5209
        %v5211 = vpop.f32.mrb[0].mxu0
        %v5212 = vpop.f32.mrb[0].mxu0
        %v5213 = vadd.f32 %v5004, %v5212
        %v5214 = vpop.f32.mrb[0].mxu0
        %5215 = vmatprep.mubr.bf16.mxu0 0
        %5216 = vmatmul.mubr.bf16.gmra.mrb[0].mxu0 %v5106
        %v5217 = vpop.f32.mrb[0].mxu0
        %v5218 = vadd.f32 %v5009, %v5217
        %v5219 = vpop.f32.mrb[0].mxu0
        %v5220 = vpop.f32.mrb[0].mxu0
        %v5221 = vadd.f32 %v5012, %v5220
        %v5222 = vpop.f32.mrb[0].mxu0
        %5223 = vmatprep.mubr.bf16.mxu0 0
        %5224 = vmatmul.mubr.bf16.gmra.mrb[0].mxu0 %v5109
        %v5225 = vpop.f32.mrb[0].mxu0
        %v5226 = vadd.f32 %v5017, %v5225
        %v5227 = vpop.f32.mrb[0].mxu0
        %v5228 = vpop.f32.mrb[0].mxu0
        %v5229 = vadd.f32 %v5020, %v5228
        %v5230 = vpop.f32.mrb[0].mxu0
        %5231 = vmatprep.mubr.bf16.mxu0 0
        %5232 = vmatmul.mubr.bf16.gmra.mrb[0].mxu0 %v5112
        %v5233 = vpop.f32.mrb[0].mxu0
        %v5234 = vadd.f32 %v5025, %v5233
        %v5235 = vpop.f32.mrb[0].mxu0
        %v5236 = vpop.f32.mrb[0].mxu0
        %v5237 = vadd.f32 %v5028, %v5236
        %v5238 = vpop.f32.mrb[0].mxu0
        %5239 = vmatprep.mubr.bf16.mxu0 0
        %5240 = vmatmul.mubr.bf16.gmra.mrb[0].mxu0 %v5115
        %v5241 = vpop.f32.mrb[0].mxu0
        %v5242 = vadd.f32 %v5033, %v5241
        %v5243 = vpop.f32.mrb[0].mxu0
        %v5244 = vpop.f32.mrb[0].mxu0
        %v5245 = vadd.f32 %v5036, %v5244
        %v5246 = vpop.f32.mrb[0].mxu0
        %5247 = vmatprep.mubr.bf16.mxu0 0
        %5248 = vmatmul.mubr.bf16.gmra.mrb[0].mxu0 %v5118
        %v5249 = vpop.f32.mrb[0].mxu0
        %v5250 = vadd.f32 %v5041, %v5249
        %v5251 = vpop.f32.mrb[0].mxu0
        %v5252 = vpop.f32.mrb[0].mxu0
        %v5253 = vadd.f32 %v5044, %v5252
        %v5254 = vpop.f32.mrb[0].mxu0
        %5255 = vmatprep.mubr.bf16.mxu0 0
        %5256 = vmatmul.mubr.bf16.gmra.mrb[0].mxu0 %v5121
        %v5257 = vpop.f32.mrb[0].mxu0
        %v5258 = vadd.f32 %v5049, %v5257
        %v5259 = vpop.f32.mrb[0].mxu0
        %v5260 = vpop.f32.mrb[0].mxu0
        %v5261 = vadd.f32 %v5052, %v5260
        %v5262 = vpop.f32.mrb[0].mxu0
        %5263 = vmatprep.mubr.bf16.mxu0 0
        %5264 = vmatmul.mubr.bf16.gmra.mrb[0].mxu0 %v5124
        %v5265 = vpop.f32.mrb[0].mxu0
        %v5266 = vadd.f32 %v5057, %v5265
        %v5267 = vpop.f32.mrb[0].mxu0
        %v5268 = vpop.f32.mrb[0].mxu0
        %v5269 = vadd.f32 %v5060, %v5268
        %v5270 = vpop.f32.mrb[0].mxu0
        %5271 = vmatprep.mubr.bf16.mxu0 0
        %5272 = vmatmul.mubr.bf16.gmra.mrb[0].mxu0 %v5127
        %v5273 = vpop.f32.mrb[0].mxu0
        %v5274 = vadd.f32 %v5065, %v5273
        %v5275 = vpop.f32.mrb[0].mxu0
        %v5276 = vpop.f32.mrb[0].mxu0
        %v5277 = vadd.f32 %v5068, %v5276
        %v5278 = vpop.f32.mrb[0].mxu0
        %5279 = vmatprep.mubr.bf16.mxu0 0
        %5280 = vmatmul.mubr.bf16.gmra.mrb[0].mxu0 %v5130
        %v5281 = vpop.f32.mrb[0].mxu0
        %v5282 = vadd.f32 %v5073, %v5281
        %v5283 = vpop.f32.mrb[0].mxu0
        %v5284 = vpop.f32.mrb[0].mxu0
        %v5285 = vadd.f32 %v5076, %v5284
        %v5286 = vpop.f32.mrb[0].mxu0
        %5287 = vmatprep.mubr.bf16.mxu0 0
        %5288 = vmatmul.mubr.bf16.gmra.mrb[0].mxu0 %v5133
        %v5289 = vpop.f32.mrb[0].mxu0
        %v5290 = vadd.f32 %v5081, %v5289
        %v5291 = vpop.f32.mrb[0].mxu0
        %v5292 = vpop.f32.mrb[0].mxu0
        %v5293 = vadd.f32 %v5084, %v5292
        %v5294 = vpop.f32.mrb[0].mxu0
        %5295 = vdwg.mxu0
        %5328 = vrot.lane.b32.xlu0 %v5170, 64
        %v5329 = vpop.permute.xlu0 %5328
        %5330 = vrot.lane.b32.xlu0 %v5173, 64
        %v5331 = vpop.permute.xlu0 %5330
        %5332 = vrot.lane.b32.xlu0 %v5178, 64
        %v5333 = vpop.permute.xlu0 %5332
        %5334 = vrot.lane.b32.xlu0 %v5181, 64
        %v5335 = vpop.permute.xlu0 %5334
        %5336 = vrot.lane.b32.xlu0 %v5186, 64
        %v5337 = vpop.permute.xlu0 %5336
        %5338 = vrot.lane.b32.xlu0 %v5189, 64
        %v5339 = vpop.permute.xlu0 %5338
        %5340 = vrot.lane.b32.xlu0 %v5194, 64
        %v5341 = vpop.permute.xlu0 %5340
        %5342 = vrot.lane.b32.xlu0 %v5197, 64
        %v5343 = vpop.permute.xlu0 %5342
        %5344 = vrot.lane.b32.xlu0 %v5202, 64
        %v5345 = vpop.permute.xlu0 %5344
        %5346 = vrot.lane.b32.xlu0 %v5205, 64
        %v5347 = vpop.permute.xlu0 %5346
        %5348 = vrot.lane.b32.xlu0 %v5210, 64
        %v5349 = vpop.permute.xlu0 %5348
        %5350 = vrot.lane.b32.xlu0 %v5213, 64
        %v5351 = vpop.permute.xlu0 %5350
        %5352 = vrot.lane.b32.xlu0 %v5218, 64
        %v5353 = vpop.permute.xlu0 %5352
        %5354 = vrot.lane.b32.xlu0 %v5221, 64
        %v5355 = vpop.permute.xlu0 %5354
        %5356 = vrot.lane.b32.xlu0 %v5226, 64
        %v5357 = vpop.permute.xlu0 %5356
        %5358 = vrot.lane.b32.xlu0 %v5229, 64
        %v5359 = vpop.permute.xlu0 %5358
        %5360 = vrot.lane.b32.xlu0 %v5234, 64
        %v5361 = vpop.permute.xlu0 %5360
        %5362 = vrot.lane.b32.xlu0 %v5237, 64
        %v5363 = vpop.permute.xlu0 %5362
        %5364 = vrot.lane.b32.xlu0 %v5242, 64
        %v5365 = vpop.permute.xlu0 %5364
        %5366 = vrot.lane.b32.xlu0 %v5245, 64
        %v5367 = vpop.permute.xlu0 %5366
        %5368 = vrot.lane.b32.xlu0 %v5250, 64
        %v5369 = vpop.permute.xlu0 %5368
        %5370 = vrot.lane.b32.xlu0 %v5253, 64
        %v5371 = vpop.permute.xlu0 %5370
        %5372 = vrot.lane.b32.xlu0 %v5258, 64
        %v5373 = vpop.permute.xlu0 %5372
        %5374 = vrot.lane.b32.xlu0 %v5261, 64
        %v5375 = vpop.permute.xlu0 %5374
        %5376 = vrot.lane.b32.xlu0 %v5266, 64
        %v5377 = vpop.permute.xlu0 %5376
        %5378 = vrot.lane.b32.xlu0 %v5269, 64
        %v5379 = vpop.permute.xlu0 %5378
        %5380 = vrot.lane.b32.xlu0 %v5274, 64
        %v5381 = vpop.permute.xlu0 %5380
        %5382 = vrot.lane.b32.xlu0 %v5277, 64
        %v5383 = vpop.permute.xlu0 %5382
        %5384 = vrot.lane.b32.xlu0 %v5282, 64
        %v5385 = vpop.permute.xlu0 %5384
        %5386 = vrot.lane.b32.xlu0 %v5285, 64
        %v5387 = vpop.permute.xlu0 %5386
        %5388 = vrot.lane.b32.xlu0 %v5290, 64
        %v5389 = vpop.permute.xlu0 %5388
        %5390 = vrot.lane.b32.xlu0 %v5293, 64
        %v5391 = vpop.permute.xlu0 %5390
        %v5424 = vadd.f32 %v1154, %v5329
        %v5425 = vadd.f32 %v1155, %v5331
        %v5426 = vadd.f32 %v1156, %v5333
        %v5427 = vadd.f32 %v1157, %v5335
        %v5428 = vadd.f32 %v1158, %v5337
        %v5429 = vadd.f32 %v1159, %v5339
        %v5430 = vadd.f32 %v1160, %v5341
        %v5431 = vadd.f32 %v1161, %v5343
        %v5432 = vadd.f32 %v1162, %v5345
        %v5433 = vadd.f32 %v1163, %v5347
        %v5434 = vadd.f32 %v1164, %v5349
        %v5435 = vadd.f32 %v1165, %v5351
        %v5436 = vadd.f32 %v1166, %v5353
        %v5437 = vadd.f32 %v1167, %v5355
        %v5438 = vadd.f32 %v1168, %v5357
        %v5439 = vadd.f32 %v1169, %v5359
        %v5440 = vadd.f32 %v1170, %v5361
        %v5441 = vadd.f32 %v1171, %v5363
        %v5442 = vadd.f32 %v1172, %v5365
        %v5443 = vadd.f32 %v1173, %v5367
        %v5444 = vadd.f32 %v1174, %v5369
        %v5445 = vadd.f32 %v1175, %v5371
        %v5446 = vadd.f32 %v1176, %v5373
        %v5447 = vadd.f32 %v1177, %v5375
        %v5448 = vadd.f32 %v1178, %v5377
        %v5449 = vadd.f32 %v1179, %v5379
        %v5450 = vadd.f32 %v1180, %v5381
        %v5451 = vadd.f32 %v1181, %v5383
        %v5452 = vadd.f32 %v1182, %v5385
        %v5453 = vadd.f32 %v1183, %v5387
        %v5454 = vadd.f32 %v1184, %v5389
        %v5455 = vadd.f32 %v1185, %v5391
        %v5456 = vld [vmem:[%s12] sm:$0x1]
        %v5458 = vlaneseq
        %v5459 = vshrl.u32 %v5458, 7
        %v5460 = vsub.s32 0, %v5459
        %v5461 = vrot.slane %v5456, %v5460
        %5462 = vrot.lane.b32.xlu0 %v5461, 64
        %v5463 = vpop.permute.xlu0 %5462
        %v5465 = vadd.f32 %v5424, %v5463
        %v5466 = vadd.f32 %v5425, %v5463
        %v5467 = vadd.f32 %v5426, %v5463
        %v5468 = vadd.f32 %v5427, %v5463
        %v5469 = vadd.f32 %v5428, %v5463
        %v5470 = vadd.f32 %v5429, %v5463
        %v5471 = vadd.f32 %v5430, %v5463
        %v5472 = vadd.f32 %v5431, %v5463
        %v5473 = vadd.f32 %v5432, %v5463
        %v5474 = vadd.f32 %v5433, %v5463
        %v5475 = vadd.f32 %v5434, %v5463
        %v5476 = vadd.f32 %v5435, %v5463
        %v5477 = vadd.f32 %v5436, %v5463
        %v5478 = vadd.f32 %v5437, %v5463
        %v5479 = vadd.f32 %v5438, %v5463
        %v5480 = vadd.f32 %v5439, %v5463
        %v5481 = vadd.f32 %v5440, %v5463
        %v5482 = vadd.f32 %v5441, %v5463
        %v5483 = vadd.f32 %v5442, %v5463
        %v5484 = vadd.f32 %v5443, %v5463
        %v5485 = vadd.f32 %v5444, %v5463
        %v5486 = vadd.f32 %v5445, %v5463
        %v5487 = vadd.f32 %v5446, %v5463
        %v5488 = vadd.f32 %v5447, %v5463
        %v5489 = vadd.f32 %v5448, %v5463
        %v5490 = vadd.f32 %v5449, %v5463
        %v5491 = vadd.f32 %v5450, %v5463
        %v5492 = vadd.f32 %v5451, %v5463
        %v5493 = vadd.f32 %v5452, %v5463
        %v5494 = vadd.f32 %v5453, %v5463
        %v5495 = vadd.f32 %v5454, %v5463
        %v5496 = vadd.f32 %v5455, %v5463
        %v5497 = vpack.c.bf16 %v5466, %v5465
        %v5498 = vpack.c.bf16 %v5468, %v5467
        %v5499 = vpack.c.bf16 %v5470, %v5469
        %v5500 = vpack.c.bf16 %v5472, %v5471
        %v5501 = vpack.c.bf16 %v5474, %v5473
        %v5502 = vpack.c.bf16 %v5476, %v5475
        %v5503 = vpack.c.bf16 %v5478, %v5477
        %v5504 = vpack.c.bf16 %v5480, %v5479
        %v5505 = vpack.c.bf16 %v5482, %v5481
        %v5506 = vpack.c.bf16 %v5484, %v5483
        %v5507 = vpack.c.bf16 %v5486, %v5485
        %v5508 = vpack.c.bf16 %v5488, %v5487
        %v5509 = vpack.c.bf16 %v5490, %v5489
        %v5510 = vpack.c.bf16 %v5492, %v5491
        %v5511 = vpack.c.bf16 %v5494, %v5493
        %v5512 = vpack.c.bf16 %v5496, %v5495
        %v5513 = vld [vmem:[%s13] sm:$0xf]
        %v5514 = vld [vmem:[%s13 + $0x4] sm:$0xf]
        %v5515 = vld [vmem:[%s13 + $0x8] sm:$0xf]
        %v5516 = vld [vmem:[%s13 + $0xc] sm:$0xf]
        %v5517 = vld [vmem:[%s13 + $0x10] sm:$0xf]
        %v5518 = vld [vmem:[%s13 + $0x14] sm:$0xf]
        %v5519 = vld [vmem:[%s13 + $0x18] sm:$0xf]
        %v5520 = vld [vmem:[%s13 + $0x1c] sm:$0xf]
        %v5521 = vld [vmem:[%s14] sm:$0x1]
        %v5523 = vlaneseq
        %v5524 = vshrl.u32 %v5523, 7
        %v5525 = vsub.s32 0, %v5524
        %v5526 = vrot.slane %v5521, %v5525
        %5544 = vrot.lane.b32.xlu0 %v5497, 64
        %v5545 = vpop.permute.xlu0 %5544
        %5546 = vrot.lane.b32.xlu0 %v5498, 64
        %v5547 = vpop.permute.xlu0 %5546
        %5548 = vrot.lane.b32.xlu0 %v5499, 64
        %v5549 = vpop.permute.xlu0 %5548
        %5550 = vrot.lane.b32.xlu0 %v5500, 64
        %v5551 = vpop.permute.xlu0 %5550
        %5552 = vrot.lane.b32.xlu0 %v5501, 64
        %v5553 = vpop.permute.xlu0 %5552
        %5554 = vrot.lane.b32.xlu0 %v5502, 64
        %v5555 = vpop.permute.xlu0 %5554
        %5556 = vrot.lane.b32.xlu0 %v5503, 64
        %v5557 = vpop.permute.xlu0 %5556
        %5558 = vrot.lane.b32.xlu0 %v5504, 64
        %v5559 = vpop.permute.xlu0 %5558
        %5560 = vrot.lane.b32.xlu0 %v5505, 64
        %v5561 = vpop.permute.xlu0 %5560
        %5562 = vrot.lane.b32.xlu0 %v5506, 64
        %v5563 = vpop.permute.xlu0 %5562
        %5564 = vrot.lane.b32.xlu0 %v5507, 64
        %v5565 = vpop.permute.xlu0 %5564
        %5566 = vrot.lane.b32.xlu0 %v5508, 64
        %v5567 = vpop.permute.xlu0 %5566
        %5568 = vrot.lane.b32.xlu0 %v5509, 64
        %v5569 = vpop.permute.xlu0 %5568
        %5570 = vrot.lane.b32.xlu0 %v5510, 64
        %v5571 = vpop.permute.xlu0 %5570
        %5572 = vrot.lane.b32.xlu0 %v5511, 64
        %v5573 = vpop.permute.xlu0 %5572
        %5574 = vrot.lane.b32.xlu0 %v5512, 64
        %v5575 = vpop.permute.xlu0 %5574
        %v5584 = vunpack.c.l.b16 %v5513
        %v5585 = vunpack.c.l.b16 %v5514
        %v5586 = vunpack.c.l.b16 %v5515
        %v5587 = vunpack.c.l.b16 %v5516
        %v5588 = vunpack.c.l.b16 %v5517
        %v5589 = vunpack.c.l.b16 %v5518
        %v5590 = vunpack.c.l.b16 %v5519
        %v5591 = vunpack.c.l.b16 %v5520
        %v5592 = vpack.c.b16 %v5585, %v5584
        %v5593 = vpack.c.b16 %v5587, %v5586
        %v5594 = vpack.c.b16 %v5589, %v5588
        %v5595 = vpack.c.b16 %v5591, %v5590
        %v5601 = vsel %vm1289, %v5545, 0
        %v5604 = vsel %vm1289, %v5547, 0
        %v5607 = vsel %vm1289, %v5549, 0
        %v5610 = vsel %vm1289, %v5551, 0
        %v5613 = vsel %vm1289, %v5553, 0
        %v5616 = vsel %vm1289, %v5555, 0
        %v5619 = vsel %vm1289, %v5557, 0
        %v5622 = vsel %vm1289, %v5559, 0
        %v5625 = vsel %vm1289, %v5561, 0
        %v5628 = vsel %vm1289, %v5563, 0
        %v5631 = vsel %vm1289, %v5565, 0
        %v5634 = vsel %vm1289, %v5567, 0
        %v5637 = vsel %vm1289, %v5569, 0
        %v5640 = vsel %vm1289, %v5571, 0
        %v5643 = vsel %vm1289, %v5573, 0
        %v5646 = vsel %vm1289, %v5575, 0
        %5648 = vmatprep.subr.bf16.mxu0 0
        %5649 = vmatpush1.bf16.msra.mxu0 %v5592
        %5650 = vmatprep.subr.bf16.mxu0 0
        %5651 = vmatpush1.bf16.msra.mxu0 %v5593
        %5652 = vmatprep.subr.bf16.mxu0 0
        %5653 = vmatpush1.bf16.msra.mxu0 %v5594
        %5654 = vmatprep.subr.bf16.mxu0 0
        %5655 = vmatpush1.bf16.msra.mxu0 %v5595
        %5656 = vmatprep.subr.bf16.mxu0 0
        %5657 = vmatpush1.bf16.msra.mxu0 0
        %5658 = vmatprep.subr.bf16.mxu0 0
        %5659 = vmatpush1.bf16.msra.mxu0 0
        %5660 = vmatprep.subr.bf16.mxu0 0
        %5661 = vmatpush1.bf16.msra.mxu0 0
        %5662 = vmatprep.subr.bf16.mxu0 0
        %5663 = vmatpush1.bf16.msra.mxu0 0
        %5664 = vmatprep.subr.bf16.mxu0 0
        %5665 = vmatpush1.bf16.msra.mxu0 0
        %5666 = vmatprep.subr.bf16.mxu0 0
        %5667 = vmatpush1.bf16.msra.mxu0 0
        %5668 = vmatprep.subr.bf16.mxu0 0
        %5669 = vmatpush1.bf16.msra.mxu0 0
        %5670 = vmatprep.subr.bf16.mxu0 0
        %5671 = vmatpush1.bf16.msra.mxu0 0
        %5672 = vmatprep.subr.bf16.mxu0 0
        %5673 = vmatpush1.bf16.msra.mxu0 0
        %5674 = vmatprep.subr.bf16.mxu0 0
        %5675 = vmatpush1.bf16.msra.mxu0 0
        %5676 = vmatprep.subr.bf16.mxu0 0
        %5677 = vmatpush1.bf16.msra.mxu0 0
        %5678 = vmatprep.subr.bf16.mxu0 0
        %5679 = vmatpush1.bf16.msra.mxu0 0
        %5680 = vmatprep.mubr.bf16.mxu0 0
        %5681 = vmatmul.mubr.bf16.gmra.mrb[0].mxu0 %v5601
        %v5682 = vpop.f32.mrb[0].mxu0
        %v5683 = vadd.f32 %v5526, %v5682
        %v5684 = vpop.f32.mrb[0].mxu0
        %v5685 = vpop.f32.mrb[0].mxu0
        %v5686 = vadd.f32 %v5526, %v5685
        %v5687 = vpop.f32.mrb[0].mxu0
        %5688 = vmatprep.mubr.bf16.mxu0 0
        %5689 = vmatmul.mubr.bf16.gmra.mrb[0].mxu0 %v5604
        %v5690 = vpop.f32.mrb[0].mxu0
        %v5691 = vadd.f32 %v5526, %v5690
        %v5692 = vpop.f32.mrb[0].mxu0
        %v5693 = vpop.f32.mrb[0].mxu0
        %v5694 = vadd.f32 %v5526, %v5693
        %v5695 = vpop.f32.mrb[0].mxu0
        %5696 = vmatprep.mubr.bf16.mxu0 0
        %5697 = vmatmul.mubr.bf16.gmra.mrb[0].mxu0 %v5607
        %v5698 = vpop.f32.mrb[0].mxu0
        %v5699 = vadd.f32 %v5526, %v5698
        %v5700 = vpop.f32.mrb[0].mxu0
        %v5701 = vpop.f32.mrb[0].mxu0
        %v5702 = vadd.f32 %v5526, %v5701
        %v5703 = vpop.f32.mrb[0].mxu0
        %5704 = vmatprep.mubr.bf16.mxu0 0
        %5705 = vmatmul.mubr.bf16.gmra.mrb[0].mxu0 %v5610
        %v5706 = vpop.f32.mrb[0].mxu0
        %v5707 = vadd.f32 %v5526, %v5706
        %v5708 = vpop.f32.mrb[0].mxu0
        %v5709 = vpop.f32.mrb[0].mxu0
        %v5710 = vadd.f32 %v5526, %v5709
        %v5711 = vpop.f32.mrb[0].mxu0
        %5712 = vmatprep.mubr.bf16.mxu0 0
        %5713 = vmatmul.mubr.bf16.gmra.mrb[0].mxu0 %v5613
        %v5714 = vpop.f32.mrb[0].mxu0
        %v5715 = vadd.f32 %v5526, %v5714
        %v5716 = vpop.f32.mrb[0].mxu0
        %v5717 = vpop.f32.mrb[0].mxu0
        %v5718 = vadd.f32 %v5526, %v5717
        %v5719 = vpop.f32.mrb[0].mxu0
        %5720 = vmatprep.mubr.bf16.mxu0 0
        %5721 = vmatmul.mubr.bf16.gmra.mrb[0].mxu0 %v5616
        %v5722 = vpop.f32.mrb[0].mxu0
        %v5723 = vadd.f32 %v5526, %v5722
        %v5724 = vpop.f32.mrb[0].mxu0
        %v5725 = vpop.f32.mrb[0].mxu0
        %v5726 = vadd.f32 %v5526, %v5725
        %v5727 = vpop.f32.mrb[0].mxu0
        %5728 = vmatprep.mubr.bf16.mxu0 0
        %5729 = vmatmul.mubr.bf16.gmra.mrb[0].mxu0 %v5619
        %v5730 = vpop.f32.mrb[0].mxu0
        %v5731 = vadd.f32 %v5526, %v5730
        %v5732 = vpop.f32.mrb[0].mxu0
        %v5733 = vpop.f32.mrb[0].mxu0
        %v5734 = vadd.f32 %v5526, %v5733
        %v5735 = vpop.f32.mrb[0].mxu0
        %5736 = vmatprep.mubr.bf16.mxu0 0
        %5737 = vmatmul.mubr.bf16.gmra.mrb[0].mxu0 %v5622
        %v5738 = vpop.f32.mrb[0].mxu0
        %v5739 = vadd.f32 %v5526, %v5738
        %v5740 = vpop.f32.mrb[0].mxu0
        %v5741 = vpop.f32.mrb[0].mxu0
        %v5742 = vadd.f32 %v5526, %v5741
        %v5743 = vpop.f32.mrb[0].mxu0
        %5744 = vmatprep.mubr.bf16.mxu0 0
        %5745 = vmatmul.mubr.bf16.gmra.mrb[0].mxu0 %v5625
        %v5746 = vpop.f32.mrb[0].mxu0
        %v5747 = vadd.f32 %v5526, %v5746
        %v5748 = vpop.f32.mrb[0].mxu0
        %v5749 = vpop.f32.mrb[0].mxu0
        %v5750 = vadd.f32 %v5526, %v5749
        %v5751 = vpop.f32.mrb[0].mxu0
        %5752 = vmatprep.mubr.bf16.mxu0 0
        %5753 = vmatmul.mubr.bf16.gmra.mrb[0].mxu0 %v5628
        %v5754 = vpop.f32.mrb[0].mxu0
        %v5755 = vadd.f32 %v5526, %v5754
        %v5756 = vpop.f32.mrb[0].mxu0
        %v5757 = vpop.f32.mrb[0].mxu0
        %v5758 = vadd.f32 %v5526, %v5757
        %v5759 = vpop.f32.mrb[0].mxu0
        %5760 = vmatprep.mubr.bf16.mxu0 0
        %5761 = vmatmul.mubr.bf16.gmra.mrb[0].mxu0 %v5631
        %v5762 = vpop.f32.mrb[0].mxu0
        %v5763 = vadd.f32 %v5526, %v5762
        %v5764 = vpop.f32.mrb[0].mxu0
        %v5765 = vpop.f32.mrb[0].mxu0
        %v5766 = vadd.f32 %v5526, %v5765
        %v5767 = vpop.f32.mrb[0].mxu0
        %5768 = vmatprep.mubr.bf16.mxu0 0
        %5769 = vmatmul.mubr.bf16.gmra.mrb[0].mxu0 %v5634
        %v5770 = vpop.f32.mrb[0].mxu0
        %v5771 = vadd.f32 %v5526, %v5770
        %v5772 = vpop.f32.mrb[0].mxu0
        %v5773 = vpop.f32.mrb[0].mxu0
        %v5774 = vadd.f32 %v5526, %v5773
        %v5775 = vpop.f32.mrb[0].mxu0
        %5776 = vmatprep.mubr.bf16.mxu0 0
        %5777 = vmatmul.mubr.bf16.gmra.mrb[0].mxu0 %v5637
        %v5778 = vpop.f32.mrb[0].mxu0
        %v5779 = vadd.f32 %v5526, %v5778
        %v5780 = vpop.f32.mrb[0].mxu0
        %v5781 = vpop.f32.mrb[0].mxu0
        %v5782 = vadd.f32 %v5526, %v5781
        %v5783 = vpop.f32.mrb[0].mxu0
        %5784 = vmatprep.mubr.bf16.mxu0 0
        %5785 = vmatmul.mubr.bf16.gmra.mrb[0].mxu0 %v5640
        %v5786 = vpop.f32.mrb[0].mxu0
        %v5787 = vadd.f32 %v5526, %v5786
        %v5788 = vpop.f32.mrb[0].mxu0
        %v5789 = vpop.f32.mrb[0].mxu0
        %v5790 = vadd.f32 %v5526, %v5789
        %v5791 = vpop.f32.mrb[0].mxu0
        %5792 = vmatprep.mubr.bf16.mxu0 0
        %5793 = vmatmul.mubr.bf16.gmra.mrb[0].mxu0 %v5643
        %v5794 = vpop.f32.mrb[0].mxu0
        %v5795 = vadd.f32 %v5526, %v5794
        %v5796 = vpop.f32.mrb[0].mxu0
        %v5797 = vpop.f32.mrb[0].mxu0
        %v5798 = vadd.f32 %v5526, %v5797
        %v5799 = vpop.f32.mrb[0].mxu0
        %5800 = vmatprep.mubr.bf16.mxu0 0
        %5801 = vmatmul.mubr.bf16.gmra.mrb[0].mxu0 %v5646
        %v5802 = vpop.f32.mrb[0].mxu0
        %v5803 = vadd.f32 %v5526, %v5802
        %v5804 = vpop.f32.mrb[0].mxu0
        %v5805 = vpop.f32.mrb[0].mxu0
        %v5806 = vadd.f32 %v5526, %v5805
        %v5807 = vpop.f32.mrb[0].mxu0
        %5808 = vdwg.mxu0
        %v5809 = vsub.f32 0.0, %v5683
        %v5810 = vsub.f32 0.0, %v5686
        %v5811 = vsub.f32 0.0, %v5691
        %v5812 = vsub.f32 0.0, %v5694
        %v5813 = vsub.f32 0.0, %v5699
        %v5814 = vsub.f32 0.0, %v5702
        %v5815 = vsub.f32 0.0, %v5707
        %v5816 = vsub.f32 0.0, %v5710
        %v5817 = vsub.f32 0.0, %v5715
        %v5818 = vsub.f32 0.0, %v5718
        %v5819 = vsub.f32 0.0, %v5723
        %v5820 = vsub.f32 0.0, %v5726
        %v5821 = vsub.f32 0.0, %v5731
        %v5822 = vsub.f32 0.0, %v5734
        %v5823 = vsub.f32 0.0, %v5739
        %v5824 = vsub.f32 0.0, %v5742
        %v5825 = vsub.f32 0.0, %v5747
        %v5826 = vsub.f32 0.0, %v5750
        %v5827 = vsub.f32 0.0, %v5755
        %v5828 = vsub.f32 0.0, %v5758
        %v5829 = vsub.f32 0.0, %v5763
        %v5830 = vsub.f32 0.0, %v5766
        %v5831 = vsub.f32 0.0, %v5771
        %v5832 = vsub.f32 0.0, %v5774
        %v5833 = vsub.f32 0.0, %v5779
        %v5834 = vsub.f32 0.0, %v5782
        %v5835 = vsub.f32 0.0, %v5787
        %v5836 = vsub.f32 0.0, %v5790
        %v5837 = vsub.f32 0.0, %v5795
        %v5838 = vsub.f32 0.0, %v5798
        %v5839 = vsub.f32 0.0, %v5803
        %v5840 = vsub.f32 0.0, %v5806
        %v5841 = vmul.f32 %v5809, 1.442695
        %v5842 = vpow.pop %v5841
        %v5843 = vmul.f32 %v5810, 1.442695
        %v5844 = vpow.pop %v5843
        %v5845 = vmul.f32 %v5811, 1.442695
        %v5846 = vpow.pop %v5845
        %v5847 = vmul.f32 %v5812, 1.442695
        %v5848 = vpow.pop %v5847
        %v5849 = vmul.f32 %v5813, 1.442695
        %v5850 = vpow.pop %v5849
        %v5851 = vmul.f32 %v5814, 1.442695
        %v5852 = vpow.pop %v5851
        %v5853 = vmul.f32 %v5815, 1.442695
        %v5854 = vpow.pop %v5853
        %v5855 = vmul.f32 %v5816, 1.442695
        %v5856 = vpow.pop %v5855
        %v5857 = vmul.f32 %v5817, 1.442695
        %v5858 = vpow.pop %v5857
        %v5859 = vmul.f32 %v5818, 1.442695
        %v5860 = vpow.pop %v5859
        %v5861 = vmul.f32 %v5819, 1.442695
        %v5862 = vpow.pop %v5861
        %v5863 = vmul.f32 %v5820, 1.442695
        %v5864 = vpow.pop %v5863
        %v5865 = vmul.f32 %v5821, 1.442695
        %v5866 = vpow.pop %v5865
        %v5867 = vmul.f32 %v5822, 1.442695
        %v5868 = vpow.pop %v5867
        %v5869 = vmul.f32 %v5823, 1.442695
        %v5870 = vpow.pop %v5869
        %v5871 = vmul.f32 %v5824, 1.442695
        %v5872 = vpow.pop %v5871
        %v5873 = vmul.f32 %v5825, 1.442695
        %v5874 = vpow.pop %v5873
        %v5875 = vmul.f32 %v5826, 1.442695
        %v5876 = vpow.pop %v5875
        %v5877 = vmul.f32 %v5827, 1.442695
        %v5878 = vpow.pop %v5877
        %v5879 = vmul.f32 %v5828, 1.442695
        %v5880 = vpow.pop %v5879
        %v5881 = vmul.f32 %v5829, 1.442695
        %v5882 = vpow.pop %v5881
        %v5883 = vmul.f32 %v5830, 1.442695
        %v5884 = vpow.pop %v5883
        %v5885 = vmul.f32 %v5831, 1.442695
        %v5886 = vpow.pop %v5885
        %v5887 = vmul.f32 %v5832, 1.442695
        %v5888 = vpow.pop %v5887
        %v5889 = vmul.f32 %v5833, 1.442695
        %v5890 = vpow.pop %v5889
        %v5891 = vmul.f32 %v5834, 1.442695
        %v5892 = vpow.pop %v5891
        %v5893 = vmul.f32 %v5835, 1.442695
        %v5894 = vpow.pop %v5893
        %v5895 = vmul.f32 %v5836, 1.442695
        %v5896 = vpow.pop %v5895
        %v5897 = vmul.f32 %v5837, 1.442695
        %v5898 = vpow.pop %v5897
        %v5899 = vmul.f32 %v5838, 1.442695
        %v5900 = vpow.pop %v5899
        %v5901 = vmul.f32 %v5839, 1.442695
        %v5902 = vpow.pop %v5901
        %v5903 = vmul.f32 %v5840, 1.442695
        %v5904 = vpow.pop %v5903
        %v5905 = vadd.f32 %v5842, 1.0
        %v5906 = vadd.f32 %v5844, 1.0
        %v5907 = vadd.f32 %v5846, 1.0
        %v5908 = vadd.f32 %v5848, 1.0
        %v5909 = vadd.f32 %v5850, 1.0
        %v5910 = vadd.f32 %v5852, 1.0
        %v5911 = vadd.f32 %v5854, 1.0
        %v5912 = vadd.f32 %v5856, 1.0
        %v5913 = vadd.f32 %v5858, 1.0
        %v5914 = vadd.f32 %v5860, 1.0
        %v5915 = vadd.f32 %v5862, 1.0
        %v5916 = vadd.f32 %v5864, 1.0
        %v5917 = vadd.f32 %v5866, 1.0
        %v5918 = vadd.f32 %v5868, 1.0
        %v5919 = vadd.f32 %v5870, 1.0
        %v5920 = vadd.f32 %v5872, 1.0
        %v5921 = vadd.f32 %v5874, 1.0
        %v5922 = vadd.f32 %v5876, 1.0
        %v5923 = vadd.f32 %v5878, 1.0
        %v5924 = vadd.f32 %v5880, 1.0
        %v5925 = vadd.f32 %v5882, 1.0
        %v5926 = vadd.f32 %v5884, 1.0
        %v5927 = vadd.f32 %v5886, 1.0
        %v5928 = vadd.f32 %v5888, 1.0
        %v5929 = vadd.f32 %v5890, 1.0
        %v5930 = vadd.f32 %v5892, 1.0
        %v5931 = vadd.f32 %v5894, 1.0
        %v5932 = vadd.f32 %v5896, 1.0
        %v5933 = vadd.f32 %v5898, 1.0
        %v5934 = vadd.f32 %v5900, 1.0
        %v5935 = vadd.f32 %v5902, 1.0
        %v5936 = vadd.f32 %v5904, 1.0
        %v5937 = vrcp.pop %v5905
        %v5938 = vmul.f32 1.0, %v5937
        %v5939 = vrcp.pop %v5906
        %v5940 = vmul.f32 1.0, %v5939
        %v5941 = vrcp.pop %v5907
        %v5942 = vmul.f32 1.0, %v5941
        %v5943 = vrcp.pop %v5908
        %v5944 = vmul.f32 1.0, %v5943
        %v5945 = vrcp.pop %v5909
        %v5946 = vmul.f32 1.0, %v5945
        %v5947 = vrcp.pop %v5910
        %v5948 = vmul.f32 1.0, %v5947
        %v5949 = vrcp.pop %v5911
        %v5950 = vmul.f32 1.0, %v5949
        %v5951 = vrcp.pop %v5912
        %v5952 = vmul.f32 1.0, %v5951
        %v5953 = vrcp.pop %v5913
        %v5954 = vmul.f32 1.0, %v5953
        %v5955 = vrcp.pop %v5914
        %v5956 = vmul.f32 1.0, %v5955
        %v5957 = vrcp.pop %v5915
        %v5958 = vmul.f32 1.0, %v5957
        %v5959 = vrcp.pop %v5916
        %v5960 = vmul.f32 1.0, %v5959
        %v5961 = vrcp.pop %v5917
        %v5962 = vmul.f32 1.0, %v5961
        %v5963 = vrcp.pop %v5918
        %v5964 = vmul.f32 1.0, %v5963
        %v5965 = vrcp.pop %v5919
        %v5966 = vmul.f32 1.0, %v5965
        %v5967 = vrcp.pop %v5920
        %v5968 = vmul.f32 1.0, %v5967
        %v5969 = vrcp.pop %v5921
        %v5970 = vmul.f32 1.0, %v5969
        %v5971 = vrcp.pop %v5922
        %v5972 = vmul.f32 1.0, %v5971
        %v5973 = vrcp.pop %v5923
        %v5974 = vmul.f32 1.0, %v5973
        %v5975 = vrcp.pop %v5924
        %v5976 = vmul.f32 1.0, %v5975
        %v5977 = vrcp.pop %v5925
        %v5978 = vmul.f32 1.0, %v5977
        %v5979 = vrcp.pop %v5926
        %v5980 = vmul.f32 1.0, %v5979
        %v5981 = vrcp.pop %v5927
        %v5982 = vmul.f32 1.0, %v5981
        %v5983 = vrcp.pop %v5928
        %v5984 = vmul.f32 1.0, %v5983
        %v5985 = vrcp.pop %v5929
        %v5986 = vmul.f32 1.0, %v5985
        %v5987 = vrcp.pop %v5930
        %v5988 = vmul.f32 1.0, %v5987
        %v5989 = vrcp.pop %v5931
        %v5990 = vmul.f32 1.0, %v5989
        %v5991 = vrcp.pop %v5932
        %v5992 = vmul.f32 1.0, %v5991
        %v5993 = vrcp.pop %v5933
        %v5994 = vmul.f32 1.0, %v5993
        %v5995 = vrcp.pop %v5934
        %v5996 = vmul.f32 1.0, %v5995
        %v5997 = vrcp.pop %v5935
        %v5998 = vmul.f32 1.0, %v5997
        %v5999 = vrcp.pop %v5936
        %v6000 = vmul.f32 1.0, %v5999
        %v6001 = vmul.f32 %v5683, %v5938
        %v6002 = vmul.f32 %v5686, %v5940
        %v6003 = vmul.f32 %v5691, %v5942
        %v6004 = vmul.f32 %v5694, %v5944
        %v6005 = vmul.f32 %v5699, %v5946
        %v6006 = vmul.f32 %v5702, %v5948
        %v6007 = vmul.f32 %v5707, %v5950
        %v6008 = vmul.f32 %v5710, %v5952
        %v6009 = vmul.f32 %v5715, %v5954
        %v6010 = vmul.f32 %v5718, %v5956
        %v6011 = vmul.f32 %v5723, %v5958
        %v6012 = vmul.f32 %v5726, %v5960
        %v6013 = vmul.f32 %v5731, %v5962
        %v6014 = vmul.f32 %v5734, %v5964
        %v6015 = vmul.f32 %v5739, %v5966
        %v6016 = vmul.f32 %v5742, %v5968
        %v6017 = vmul.f32 %v5747, %v5970
        %v6018 = vmul.f32 %v5750, %v5972
        %v6019 = vmul.f32 %v5755, %v5974
        %v6020 = vmul.f32 %v5758, %v5976
        %v6021 = vmul.f32 %v5763, %v5978
        %v6022 = vmul.f32 %v5766, %v5980
        %v6023 = vmul.f32 %v5771, %v5982
        %v6024 = vmul.f32 %v5774, %v5984
        %v6025 = vmul.f32 %v5779, %v5986
        %v6026 = vmul.f32 %v5782, %v5988
        %v6027 = vmul.f32 %v5787, %v5990
        %v6028 = vmul.f32 %v5790, %v5992
        %v6029 = vmul.f32 %v5795, %v5994
        %v6030 = vmul.f32 %v5798, %v5996
        %v6031 = vmul.f32 %v5803, %v5998
        %v6032 = vmul.f32 %v5806, %v6000
        %v6033 = vpack.c.bf16 %v6002, %v6001
        %v6034 = vpack.c.bf16 %v6004, %v6003
        %v6035 = vpack.c.bf16 %v6006, %v6005
        %v6036 = vpack.c.bf16 %v6008, %v6007
        %v6037 = vpack.c.bf16 %v6010, %v6009
        %v6038 = vpack.c.bf16 %v6012, %v6011
        %v6039 = vpack.c.bf16 %v6014, %v6013
        %v6040 = vpack.c.bf16 %v6016, %v6015
        %v6041 = vpack.c.bf16 %v6018, %v6017
        %v6042 = vpack.c.bf16 %v6020, %v6019
        %v6043 = vpack.c.bf16 %v6022, %v6021
        %v6044 = vpack.c.bf16 %v6024, %v6023
        %v6045 = vpack.c.bf16 %v6026, %v6025
        %v6046 = vpack.c.bf16 %v6028, %v6027
        %v6047 = vpack.c.bf16 %v6030, %v6029
        %v6048 = vpack.c.bf16 %v6032, %v6031
        %v6049 = vld [vmem:[%s15] sm:$0xf]
        %v6050 = vld [vmem:[%s15 + $0x4] sm:$0xf]
        %v6051 = vld [vmem:[%s15 + $0x8] sm:$0xf]
        %v6052 = vld [vmem:[%s15 + $0xc] sm:$0xf]
        %v6053 = vld [vmem:[%s15 + $0x10] sm:$0xf]
        %v6054 = vld [vmem:[%s15 + $0x14] sm:$0xf]
        %v6055 = vld [vmem:[%s15 + $0x18] sm:$0xf]
        %v6056 = vld [vmem:[%s15 + $0x1c] sm:$0xf]
        %v6057 = vld [vmem:[%s15 + $0x20] sm:$0xf]
        %v6058 = vld [vmem:[%s15 + $0x24] sm:$0xf]
        %v6059 = vld [vmem:[%s15 + $0x28] sm:$0xf]
        %v6060 = vld [vmem:[%s15 + $0x2c] sm:$0xf]
        %v6061 = vld [vmem:[%s15 + $0x30] sm:$0xf]
        %v6062 = vld [vmem:[%s15 + $0x34] sm:$0xf]
        %v6063 = vld [vmem:[%s15 + $0x38] sm:$0xf]
        %v6064 = vld [vmem:[%s15 + $0x3c] sm:$0xf]
        %v6081 = vunpack.c.l.b16 %v6049
        %v6082 = vunpack.c.l.b16 %v6050
        %v6083 = vunpack.c.l.b16 %v6051
        %v6084 = vunpack.c.l.b16 %v6052
        %v6085 = vunpack.c.l.b16 %v6053
        %v6086 = vunpack.c.l.b16 %v6054
        %v6087 = vunpack.c.l.b16 %v6055
        %v6088 = vunpack.c.l.b16 %v6056
        %v6089 = vunpack.c.l.b16 %v6057
        %v6090 = vunpack.c.l.b16 %v6058
        %v6091 = vunpack.c.l.b16 %v6059
        %v6092 = vunpack.c.l.b16 %v6060
        %v6093 = vunpack.c.l.b16 %v6061
        %v6094 = vunpack.c.l.b16 %v6062
        %v6095 = vunpack.c.l.b16 %v6063
        %v6096 = vunpack.c.l.b16 %v6064
        %v6097 = vpack.c.b16 %v6082, %v6081
        %v6098 = vpack.c.b16 %v6084, %v6083
        %v6099 = vpack.c.b16 %v6086, %v6085
        %v6100 = vpack.c.b16 %v6088, %v6087
        %v6101 = vpack.c.b16 %v6090, %v6089
        %v6102 = vpack.c.b16 %v6092, %v6091
        %v6103 = vpack.c.b16 %v6094, %v6093
        %v6104 = vpack.c.b16 %v6096, %v6095
        %6113 = vmatprep.subr.bf16.mxu0 0
        %6114 = vmatpush1.bf16.msra.mxu0 %v6097
        %6115 = vmatprep.subr.bf16.mxu0 0
        %6116 = vmatpush1.bf16.msra.mxu0 %v6098
        %6117 = vmatprep.subr.bf16.mxu0 0
        %6118 = vmatpush1.bf16.msra.mxu0 %v6099
        %6119 = vmatprep.subr.bf16.mxu0 0
        %6120 = vmatpush1.bf16.msra.mxu0 %v6100
        %6121 = vmatprep.subr.bf16.mxu0 0
        %6122 = vmatpush1.bf16.msra.mxu0 %v6101
        %6123 = vmatprep.subr.bf16.mxu0 0
        %6124 = vmatpush1.bf16.msra.mxu0 %v6102
        %6125 = vmatprep.subr.bf16.mxu0 0
        %6126 = vmatpush1.bf16.msra.mxu0 %v6103
        %6127 = vmatprep.subr.bf16.mxu0 0
        %6128 = vmatpush1.bf16.msra.mxu0 %v6104
        %6129 = vmatprep.subr.bf16.mxu0 0
        %6130 = vmatpush1.bf16.msra.mxu0 0
        %6131 = vmatprep.subr.bf16.mxu0 0
        %6132 = vmatpush1.bf16.msra.mxu0 0
        %6133 = vmatprep.subr.bf16.mxu0 0
        %6134 = vmatpush1.bf16.msra.mxu0 0
        %6135 = vmatprep.subr.bf16.mxu0 0
        %6136 = vmatpush1.bf16.msra.mxu0 0
        %6137 = vmatprep.subr.bf16.mxu0 0
        %6138 = vmatpush1.bf16.msra.mxu0 0
        %6139 = vmatprep.subr.bf16.mxu0 0
        %6140 = vmatpush1.bf16.msra.mxu0 0
        %6141 = vmatprep.subr.bf16.mxu0 0
        %6142 = vmatpush1.bf16.msra.mxu0 0
        %6143 = vmatprep.subr.bf16.mxu0 0
        %6144 = vmatpush1.bf16.msra.mxu0 0
        %6145 = vmatprep.mubr.bf16.mxu0 0
        %6146 = vmatmul.mubr.bf16.gmra.mrb[0].mxu0 %v6033
        %v6147 = vpop.f32.mrb[0].mxu0
        %v6148 = vadd.f32 0.0, %v6147
        %v6149 = vpop.f32.mrb[0].mxu0
        %v6150 = vpop.f32.mrb[0].mxu0
        %v6151 = vadd.f32 0.0, %v6150
        %v6152 = vpop.f32.mrb[0].mxu0
        %6153 = vmatprep.mubr.bf16.mxu0 0
        %6154 = vmatmul.mubr.bf16.gmra.mrb[0].mxu0 %v6034
        %v6155 = vpop.f32.mrb[0].mxu0
        %v6156 = vadd.f32 0.0, %v6155
        %v6157 = vpop.f32.mrb[0].mxu0
        %v6158 = vpop.f32.mrb[0].mxu0
        %v6159 = vadd.f32 0.0, %v6158
        %v6160 = vpop.f32.mrb[0].mxu0
        %6161 = vmatprep.mubr.bf16.mxu0 0
        %6162 = vmatmul.mubr.bf16.gmra.mrb[0].mxu0 %v6035
        %v6163 = vpop.f32.mrb[0].mxu0
        %v6164 = vadd.f32 0.0, %v6163
        %v6165 = vpop.f32.mrb[0].mxu0
        %v6166 = vpop.f32.mrb[0].mxu0
        %v6167 = vadd.f32 0.0, %v6166
        %v6168 = vpop.f32.mrb[0].mxu0
        %6169 = vmatprep.mubr.bf16.mxu0 0
        %6170 = vmatmul.mubr.bf16.gmra.mrb[0].mxu0 %v6036
        %v6171 = vpop.f32.mrb[0].mxu0
        %v6172 = vadd.f32 0.0, %v6171
        %v6173 = vpop.f32.mrb[0].mxu0
        %v6174 = vpop.f32.mrb[0].mxu0
        %v6175 = vadd.f32 0.0, %v6174
        %v6176 = vpop.f32.mrb[0].mxu0
        %6177 = vmatprep.mubr.bf16.mxu0 0
        %6178 = vmatmul.mubr.bf16.gmra.mrb[0].mxu0 %v6037
        %v6179 = vpop.f32.mrb[0].mxu0
        %v6180 = vadd.f32 0.0, %v6179
        %v6181 = vpop.f32.mrb[0].mxu0
        %v6182 = vpop.f32.mrb[0].mxu0
        %v6183 = vadd.f32 0.0, %v6182
        %v6184 = vpop.f32.mrb[0].mxu0
        %6185 = vmatprep.mubr.bf16.mxu0 0
        %6186 = vmatmul.mubr.bf16.gmra.mrb[0].mxu0 %v6038
        %v6187 = vpop.f32.mrb[0].mxu0
        %v6188 = vadd.f32 0.0, %v6187
        %v6189 = vpop.f32.mrb[0].mxu0
        %v6190 = vpop.f32.mrb[0].mxu0
        %v6191 = vadd.f32 0.0, %v6190
        %v6192 = vpop.f32.mrb[0].mxu0
        %6193 = vmatprep.mubr.bf16.mxu0 0
        %6194 = vmatmul.mubr.bf16.gmra.mrb[0].mxu0 %v6039
        %v6195 = vpop.f32.mrb[0].mxu0
        %v6196 = vadd.f32 0.0, %v6195
        %v6197 = vpop.f32.mrb[0].mxu0
        %v6198 = vpop.f32.mrb[0].mxu0
        %v6199 = vadd.f32 0.0, %v6198
        %v6200 = vpop.f32.mrb[0].mxu0
        %6201 = vmatprep.mubr.bf16.mxu0 0
        %6202 = vmatmul.mubr.bf16.gmra.mrb[0].mxu0 %v6040
        %v6203 = vpop.f32.mrb[0].mxu0
        %v6204 = vadd.f32 0.0, %v6203
        %v6205 = vpop.f32.mrb[0].mxu0
        %v6206 = vpop.f32.mrb[0].mxu0
        %v6207 = vadd.f32 0.0, %v6206
        %v6208 = vpop.f32.mrb[0].mxu0
        %6209 = vmatprep.mubr.bf16.mxu0 0
        %6210 = vmatmul.mubr.bf16.gmra.mrb[0].mxu0 %v6041
        %v6211 = vpop.f32.mrb[0].mxu0
        %v6212 = vadd.f32 0.0, %v6211
        %v6213 = vpop.f32.mrb[0].mxu0
        %v6214 = vpop.f32.mrb[0].mxu0
        %v6215 = vadd.f32 0.0, %v6214
        %v6216 = vpop.f32.mrb[0].mxu0
        %6217 = vmatprep.mubr.bf16.mxu0 0
        %6218 = vmatmul.mubr.bf16.gmra.mrb[0].mxu0 %v6042
        %v6219 = vpop.f32.mrb[0].mxu0
        %v6220 = vadd.f32 0.0, %v6219
        %v6221 = vpop.f32.mrb[0].mxu0
        %v6222 = vpop.f32.mrb[0].mxu0
        %v6223 = vadd.f32 0.0, %v6222
        %v6224 = vpop.f32.mrb[0].mxu0
        %6225 = vmatprep.mubr.bf16.mxu0 0
        %6226 = vmatmul.mubr.bf16.gmra.mrb[0].mxu0 %v6043
        %v6227 = vpop.f32.mrb[0].mxu0
        %v6228 = vadd.f32 0.0, %v6227
        %v6229 = vpop.f32.mrb[0].mxu0
        %v6230 = vpop.f32.mrb[0].mxu0
        %v6231 = vadd.f32 0.0, %v6230
        %v6232 = vpop.f32.mrb[0].mxu0
        %6233 = vmatprep.mubr.bf16.mxu0 0
        %6234 = vmatmul.mubr.bf16.gmra.mrb[0].mxu0 %v6044
        %v6235 = vpop.f32.mrb[0].mxu0
        %v6236 = vadd.f32 0.0, %v6235
        %v6237 = vpop.f32.mrb[0].mxu0
        %v6238 = vpop.f32.mrb[0].mxu0
        %v6239 = vadd.f32 0.0, %v6238
        %v6240 = vpop.f32.mrb[0].mxu0
        %6241 = vmatprep.mubr.bf16.mxu0 0
        %6242 = vmatmul.mubr.bf16.gmra.mrb[0].mxu0 %v6045
        %v6243 = vpop.f32.mrb[0].mxu0
        %v6244 = vadd.f32 0.0, %v6243
        %v6245 = vpop.f32.mrb[0].mxu0
        %v6246 = vpop.f32.mrb[0].mxu0
        %v6247 = vadd.f32 0.0, %v6246
        %v6248 = vpop.f32.mrb[0].mxu0
        %6249 = vmatprep.mubr.bf16.mxu0 0
        %6250 = vmatmul.mubr.bf16.gmra.mrb[0].mxu0 %v6046
        %v6251 = vpop.f32.mrb[0].mxu0
        %v6252 = vadd.f32 0.0, %v6251
        %v6253 = vpop.f32.mrb[0].mxu0
        %v6254 = vpop.f32.mrb[0].mxu0
        %v6255 = vadd.f32 0.0, %v6254
        %v6256 = vpop.f32.mrb[0].mxu0
        %6257 = vmatprep.mubr.bf16.mxu0 0
        %6258 = vmatmul.mubr.bf16.gmra.mrb[0].mxu0 %v6047
        %v6259 = vpop.f32.mrb[0].mxu0
        %v6260 = vadd.f32 0.0, %v6259
        %v6261 = vpop.f32.mrb[0].mxu0
        %v6262 = vpop.f32.mrb[0].mxu0
        %v6263 = vadd.f32 0.0, %v6262
        %v6264 = vpop.f32.mrb[0].mxu0
        %6265 = vmatprep.mubr.bf16.mxu0 0
        %6266 = vmatmul.mubr.bf16.gmra.mrb[0].mxu0 %v6048
        %v6267 = vpop.f32.mrb[0].mxu0
        %v6268 = vadd.f32 0.0, %v6267
        %v6269 = vpop.f32.mrb[0].mxu0
        %v6270 = vpop.f32.mrb[0].mxu0
        %v6271 = vadd.f32 0.0, %v6270
        %v6272 = vpop.f32.mrb[0].mxu0
        %6273 = vdwg.mxu0
        %6306 = vrot.lane.b32.xlu0 %v6148, 64
        %v6307 = vpop.permute.xlu0 %6306
        %6308 = vrot.lane.b32.xlu0 %v6151, 64
        %v6309 = vpop.permute.xlu0 %6308
        %6310 = vrot.lane.b32.xlu0 %v6156, 64
        %v6311 = vpop.permute.xlu0 %6310
        %6312 = vrot.lane.b32.xlu0 %v6159, 64
        %v6313 = vpop.permute.xlu0 %6312
        %6314 = vrot.lane.b32.xlu0 %v6164, 64
        %v6315 = vpop.permute.xlu0 %6314
        %6316 = vrot.lane.b32.xlu0 %v6167, 64
        %v6317 = vpop.permute.xlu0 %6316
        %6318 = vrot.lane.b32.xlu0 %v6172, 64
        %v6319 = vpop.permute.xlu0 %6318
        %6320 = vrot.lane.b32.xlu0 %v6175, 64
        %v6321 = vpop.permute.xlu0 %6320
        %6322 = vrot.lane.b32.xlu0 %v6180, 64
        %v6323 = vpop.permute.xlu0 %6322
        %6324 = vrot.lane.b32.xlu0 %v6183, 64
        %v6325 = vpop.permute.xlu0 %6324
        %6326 = vrot.lane.b32.xlu0 %v6188, 64
        %v6327 = vpop.permute.xlu0 %6326
        %6328 = vrot.lane.b32.xlu0 %v6191, 64
        %v6329 = vpop.permute.xlu0 %6328
        %6330 = vrot.lane.b32.xlu0 %v6196, 64
        %v6331 = vpop.permute.xlu0 %6330
        %6332 = vrot.lane.b32.xlu0 %v6199, 64
        %v6333 = vpop.permute.xlu0 %6332
        %6334 = vrot.lane.b32.xlu0 %v6204, 64
        %v6335 = vpop.permute.xlu0 %6334
        %6336 = vrot.lane.b32.xlu0 %v6207, 64
        %v6337 = vpop.permute.xlu0 %6336
        %6338 = vrot.lane.b32.xlu0 %v6212, 64
        %v6339 = vpop.permute.xlu0 %6338
        %6340 = vrot.lane.b32.xlu0 %v6215, 64
        %v6341 = vpop.permute.xlu0 %6340
        %6342 = vrot.lane.b32.xlu0 %v6220, 64
        %v6343 = vpop.permute.xlu0 %6342
        %6344 = vrot.lane.b32.xlu0 %v6223, 64
        %v6345 = vpop.permute.xlu0 %6344
        %6346 = vrot.lane.b32.xlu0 %v6228, 64
        %v6347 = vpop.permute.xlu0 %6346
        %6348 = vrot.lane.b32.xlu0 %v6231, 64
        %v6349 = vpop.permute.xlu0 %6348
        %6350 = vrot.lane.b32.xlu0 %v6236, 64
        %v6351 = vpop.permute.xlu0 %6350
        %6352 = vrot.lane.b32.xlu0 %v6239, 64
        %v6353 = vpop.permute.xlu0 %6352
        %6354 = vrot.lane.b32.xlu0 %v6244, 64
        %v6355 = vpop.permute.xlu0 %6354
        %6356 = vrot.lane.b32.xlu0 %v6247, 64
        %v6357 = vpop.permute.xlu0 %6356
        %6358 = vrot.lane.b32.xlu0 %v6252, 64
        %v6359 = vpop.permute.xlu0 %6358
        %6360 = vrot.lane.b32.xlu0 %v6255, 64
        %v6361 = vpop.permute.xlu0 %6360
        %6362 = vrot.lane.b32.xlu0 %v6260, 64
        %v6363 = vpop.permute.xlu0 %6362
        %6364 = vrot.lane.b32.xlu0 %v6263, 64
        %v6365 = vpop.permute.xlu0 %6364
        %6366 = vrot.lane.b32.xlu0 %v6268, 64
        %v6367 = vpop.permute.xlu0 %6366
        %6368 = vrot.lane.b32.xlu0 %v6271, 64
        %v6369 = vpop.permute.xlu0 %6368
        %v6402 = vadd.f32 %v5465, %v6307
        %v6403 = vadd.f32 %v5466, %v6309
        %v6404 = vadd.f32 %v5467, %v6311
        %v6405 = vadd.f32 %v5468, %v6313
        %v6406 = vadd.f32 %v5469, %v6315
        %v6407 = vadd.f32 %v5470, %v6317
        %v6408 = vadd.f32 %v5471, %v6319
        %v6409 = vadd.f32 %v5472, %v6321
        %v6410 = vadd.f32 %v5473, %v6323
        %v6411 = vadd.f32 %v5474, %v6325
        %v6412 = vadd.f32 %v5475, %v6327
        %v6413 = vadd.f32 %v5476, %v6329
        %v6414 = vadd.f32 %v5477, %v6331
        %v6415 = vadd.f32 %v5478, %v6333
        %v6416 = vadd.f32 %v5479, %v6335
        %v6417 = vadd.f32 %v5480, %v6337
        %v6418 = vadd.f32 %v5481, %v6339
        %v6419 = vadd.f32 %v5482, %v6341
        %v6420 = vadd.f32 %v5483, %v6343
        %v6421 = vadd.f32 %v5484, %v6345
        %v6422 = vadd.f32 %v5485, %v6347
        %v6423 = vadd.f32 %v5486, %v6349
        %v6424 = vadd.f32 %v5487, %v6351
        %v6425 = vadd.f32 %v5488, %v6353
        %v6426 = vadd.f32 %v5489, %v6355
        %v6427 = vadd.f32 %v5490, %v6357
        %v6428 = vadd.f32 %v5491, %v6359
        %v6429 = vadd.f32 %v5492, %v6361
        %v6430 = vadd.f32 %v5493, %v6363
        %v6431 = vadd.f32 %v5494, %v6365
        %v6432 = vadd.f32 %v5495, %v6367
        %v6433 = vadd.f32 %v5496, %v6369
        %v6434 = vld [vmem:[%s16] sm:$0x1]
        %v6436 = vlaneseq
        %v6437 = vshrl.u32 %v6436, 7
        %v6438 = vsub.s32 0, %v6437
        %v6439 = vrot.slane %v6434, %v6438
        %6440 = vrot.lane.b32.xlu0 %v6439, 64
        %v6441 = vpop.permute.xlu0 %6440
        %v6443 = vadd.f32 %v6402, %v6441
        %v6444 = vadd.f32 %v6403, %v6441
        %v6445 = vadd.f32 %v6404, %v6441
        %v6446 = vadd.f32 %v6405, %v6441
        %v6447 = vadd.f32 %v6406, %v6441
        %v6448 = vadd.f32 %v6407, %v6441
        %v6449 = vadd.f32 %v6408, %v6441
        %v6450 = vadd.f32 %v6409, %v6441
        %v6451 = vadd.f32 %v6410, %v6441
        %v6452 = vadd.f32 %v6411, %v6441
        %v6453 = vadd.f32 %v6412, %v6441
        %v6454 = vadd.f32 %v6413, %v6441
        %v6455 = vadd.f32 %v6414, %v6441
        %v6456 = vadd.f32 %v6415, %v6441
        %v6457 = vadd.f32 %v6416, %v6441
        %v6458 = vadd.f32 %v6417, %v6441
        %v6459 = vadd.f32 %v6418, %v6441
        %v6460 = vadd.f32 %v6419, %v6441
        %v6461 = vadd.f32 %v6420, %v6441
        %v6462 = vadd.f32 %v6421, %v6441
        %v6463 = vadd.f32 %v6422, %v6441
        %v6464 = vadd.f32 %v6423, %v6441
        %v6465 = vadd.f32 %v6424, %v6441
        %v6466 = vadd.f32 %v6425, %v6441
        %v6467 = vadd.f32 %v6426, %v6441
        %v6468 = vadd.f32 %v6427, %v6441
        %v6469 = vadd.f32 %v6428, %v6441
        %v6470 = vadd.f32 %v6429, %v6441
        %v6471 = vadd.f32 %v6430, %v6441
        %v6472 = vadd.f32 %v6431, %v6441
        %v6473 = vadd.f32 %v6432, %v6441
        %v6474 = vadd.f32 %v6433, %v6441
        %v6475 = vpack.c.bf16 %v6444, %v6443
        %v6476 = vpack.c.bf16 %v6446, %v6445
        %v6477 = vpack.c.bf16 %v6448, %v6447
        %v6478 = vpack.c.bf16 %v6450, %v6449
        %v6479 = vpack.c.bf16 %v6452, %v6451
        %v6480 = vpack.c.bf16 %v6454, %v6453
        %v6481 = vpack.c.bf16 %v6456, %v6455
        %v6482 = vpack.c.bf16 %v6458, %v6457
        %v6483 = vpack.c.bf16 %v6460, %v6459
        %v6484 = vpack.c.bf16 %v6462, %v6461
        %v6485 = vpack.c.bf16 %v6464, %v6463
        %v6486 = vpack.c.bf16 %v6466, %v6465
        %v6487 = vpack.c.bf16 %v6468, %v6467
        %v6488 = vpack.c.bf16 %v6470, %v6469
        %v6489 = vpack.c.bf16 %v6472, %v6471
        %v6490 = vpack.c.bf16 %v6474, %v6473
        %v6493 = vsel %vm1289, %v1186, %v6475
        %v6497 = vsel %vm1289, %v1187, %v6476
        %v6501 = vsel %vm1289, %v1188, %v6477
        %v6505 = vsel %vm1289, %v1189, %v6478
        %v6509 = vsel %vm1289, %v1190, %v6479
        %v6513 = vsel %vm1289, %v1191, %v6480
        %v6517 = vsel %vm1289, %v1192, %v6481
        %v6521 = vsel %vm1289, %v1193, %v6482
        %v6525 = vsel %vm1289, %v1194, %v6483
        %v6529 = vsel %vm1289, %v1195, %v6484
        %v6533 = vsel %vm1289, %v1196, %v6485
        %v6537 = vsel %vm1289, %v1197, %v6486
        %v6541 = vsel %vm1289, %v1198, %v6487
        %v6545 = vsel %vm1289, %v1199, %v6488
        %v6549 = vsel %vm1289, %v1200, %v6489
        %v6553 = vsel %vm1289, %v1201, %v6490
        %v6555 = vld [vmem:[%s17] sm:$0xf]
        %v6556 = vld [vmem:[%s17 + $0x4] sm:$0xf]
        %v6557 = vld [vmem:[%s17 + $0x8] sm:$0xf]
        %v6558 = vld [vmem:[%s17 + $0xc] sm:$0xf]
        %v6559 = vld [vmem:[%s17 + $0x10] sm:$0xf]
        %v6560 = vld [vmem:[%s17 + $0x14] sm:$0xf]
        %v6561 = vld [vmem:[%s17 + $0x18] sm:$0xf]
        %v6562 = vld [vmem:[%s17 + $0x1c] sm:$0xf]
        %v6563 = vld [vmem:[%s17 + $0x20] sm:$0xf]
        %v6564 = vld [vmem:[%s17 + $0x24] sm:$0xf]
        %v6565 = vld [vmem:[%s17 + $0x28] sm:$0xf]
        %v6566 = vld [vmem:[%s17 + $0x2c] sm:$0xf]
        %v6567 = vld [vmem:[%s17 + $0x30] sm:$0xf]
        %v6568 = vld [vmem:[%s17 + $0x34] sm:$0xf]
        %v6569 = vld [vmem:[%s17 + $0x38] sm:$0xf]
        %v6570 = vld [vmem:[%s17 + $0x3c] sm:$0xf]
        %v6571 = vld [vmem:[%s18] sm:$0x1]
        %v6573 = vlaneseq
        %v6574 = vshrl.u32 %v6573, 7
        %v6575 = vsub.s32 0, %v6574
        %v6576 = vrot.slane %v6571, %v6575
        %v6594 = vunpack.c.l.b16 %v6555
        %v6595 = vunpack.c.l.b16 %v6556
        %v6596 = vunpack.c.l.b16 %v6557
        %v6597 = vunpack.c.l.b16 %v6558
        %v6598 = vunpack.c.l.b16 %v6559
        %v6599 = vunpack.c.l.b16 %v6560
        %v6600 = vunpack.c.l.b16 %v6561
        %v6601 = vunpack.c.l.b16 %v6562
        %v6602 = vunpack.c.l.b16 %v6563
        %v6603 = vunpack.c.l.b16 %v6564
        %v6604 = vunpack.c.l.b16 %v6565
        %v6605 = vunpack.c.l.b16 %v6566
        %v6606 = vunpack.c.l.b16 %v6567
        %v6607 = vunpack.c.l.b16 %v6568
        %v6608 = vunpack.c.l.b16 %v6569
        %v6609 = vunpack.c.l.b16 %v6570
        %v6610 = vpack.c.b16 %v6595, %v6594
        %v6611 = vpack.c.b16 %v6597, %v6596
        %v6612 = vpack.c.b16 %v6599, %v6598
        %v6613 = vpack.c.b16 %v6601, %v6600
        %v6614 = vpack.c.b16 %v6603, %v6602
        %v6615 = vpack.c.b16 %v6605, %v6604
        %v6616 = vpack.c.b16 %v6607, %v6606
        %v6617 = vpack.c.b16 %v6609, %v6608
        %6626 = vmatprep.subr.bf16.mxu0 0
        %6627 = vmatpush1.bf16.msra.mxu0 %v6610
        %6628 = vmatprep.subr.bf16.mxu0 0
        %6629 = vmatpush1.bf16.msra.mxu0 %v6611
        %6630 = vmatprep.subr.bf16.mxu0 0
        %6631 = vmatpush1.bf16.msra.mxu0 %v6612
        %6632 = vmatprep.subr.bf16.mxu0 0
        %6633 = vmatpush1.bf16.msra.mxu0 %v6613
        %6634 = vmatprep.subr.bf16.mxu0 0
        %6635 = vmatpush1.bf16.msra.mxu0 %v6614
        %6636 = vmatprep.subr.bf16.mxu0 0
        %6637 = vmatpush1.bf16.msra.mxu0 %v6615
        %6638 = vmatprep.subr.bf16.mxu0 0
        %6639 = vmatpush1.bf16.msra.mxu0 %v6616
        %6640 = vmatprep.subr.bf16.mxu0 0
        %6641 = vmatpush1.bf16.msra.mxu0 %v6617
        %6642 = vmatprep.subr.bf16.mxu0 0
        %6643 = vmatpush1.bf16.msra.mxu0 0
        %6644 = vmatprep.subr.bf16.mxu0 0
        %6645 = vmatpush1.bf16.msra.mxu0 0
        %6646 = vmatprep.subr.bf16.mxu0 0
        %6647 = vmatpush1.bf16.msra.mxu0 0
        %6648 = vmatprep.subr.bf16.mxu0 0
        %6649 = vmatpush1.bf16.msra.mxu0 0
        %6650 = vmatprep.subr.bf16.mxu0 0
        %6651 = vmatpush1.bf16.msra.mxu0 0
        %6652 = vmatprep.subr.bf16.mxu0 0
        %6653 = vmatpush1.bf16.msra.mxu0 0
        %6654 = vmatprep.subr.bf16.mxu0 0
        %6655 = vmatpush1.bf16.msra.mxu0 0
        %6656 = vmatprep.subr.bf16.mxu0 0
        %6657 = vmatpush1.bf16.msra.mxu0 0
        %6658 = vmatprep.mubr.bf16.mxu0 0
        %6659 = vmatmul.mubr.bf16.gmra.mrb[0].mxu0 %v6493
        %v6660 = vpop.f32.mrb[0].mxu0
        %v6661 = vadd.f32 %v6576, %v6660
        %v6662 = vpop.f32.mrb[0].mxu0
        %v6663 = vpop.f32.mrb[0].mxu0
        %v6664 = vadd.f32 %v6576, %v6663
        %v6665 = vpop.f32.mrb[0].mxu0
        %6666 = vmatprep.mubr.bf16.mxu0 0
        %6667 = vmatmul.mubr.bf16.gmra.mrb[0].mxu0 %v6497
        %v6668 = vpop.f32.mrb[0].mxu0
        %v6669 = vadd.f32 %v6576, %v6668
        %v6670 = vpop.f32.mrb[0].mxu0
        %v6671 = vpop.f32.mrb[0].mxu0
        %v6672 = vadd.f32 %v6576, %v6671
        %v6673 = vpop.f32.mrb[0].mxu0
        %6674 = vmatprep.mubr.bf16.mxu0 0
        %6675 = vmatmul.mubr.bf16.gmra.mrb[0].mxu0 %v6501
        %v6676 = vpop.f32.mrb[0].mxu0
        %v6677 = vadd.f32 %v6576, %v6676
        %v6678 = vpop.f32.mrb[0].mxu0
        %v6679 = vpop.f32.mrb[0].mxu0
        %v6680 = vadd.f32 %v6576, %v6679
        %v6681 = vpop.f32.mrb[0].mxu0
        %6682 = vmatprep.mubr.bf16.mxu0 0
        %6683 = vmatmul.mubr.bf16.gmra.mrb[0].mxu0 %v6505
        %v6684 = vpop.f32.mrb[0].mxu0
        %v6685 = vadd.f32 %v6576, %v6684
        %v6686 = vpop.f32.mrb[0].mxu0
        %v6687 = vpop.f32.mrb[0].mxu0
        %v6688 = vadd.f32 %v6576, %v6687
        %v6689 = vpop.f32.mrb[0].mxu0
        %6690 = vmatprep.mubr.bf16.mxu0 0
        %6691 = vmatmul.mubr.bf16.gmra.mrb[0].mxu0 %v6509
        %v6692 = vpop.f32.mrb[0].mxu0
        %v6693 = vadd.f32 %v6576, %v6692
        %v6694 = vpop.f32.mrb[0].mxu0
        %v6695 = vpop.f32.mrb[0].mxu0
        %v6696 = vadd.f32 %v6576, %v6695
        %v6697 = vpop.f32.mrb[0].mxu0
        %6698 = vmatprep.mubr.bf16.mxu0 0
        %6699 = vmatmul.mubr.bf16.gmra.mrb[0].mxu0 %v6513
        %v6700 = vpop.f32.mrb[0].mxu0
        %v6701 = vadd.f32 %v6576, %v6700
        %v6702 = vpop.f32.mrb[0].mxu0
        %v6703 = vpop.f32.mrb[0].mxu0
        %v6704 = vadd.f32 %v6576, %v6703
        %v6705 = vpop.f32.mrb[0].mxu0
        %6706 = vmatprep.mubr.bf16.mxu0 0
        %6707 = vmatmul.mubr.bf16.gmra.mrb[0].mxu0 %v6517
        %v6708 = vpop.f32.mrb[0].mxu0
        %v6709 = vadd.f32 %v6576, %v6708
        %v6710 = vpop.f32.mrb[0].mxu0
        %v6711 = vpop.f32.mrb[0].mxu0
        %v6712 = vadd.f32 %v6576, %v6711
        %v6713 = vpop.f32.mrb[0].mxu0
        %6714 = vmatprep.mubr.bf16.mxu0 0
        %6715 = vmatmul.mubr.bf16.gmra.mrb[0].mxu0 %v6521
        %v6716 = vpop.f32.mrb[0].mxu0
        %v6717 = vadd.f32 %v6576, %v6716
        %v6718 = vpop.f32.mrb[0].mxu0
        %v6719 = vpop.f32.mrb[0].mxu0
        %v6720 = vadd.f32 %v6576, %v6719
        %v6721 = vpop.f32.mrb[0].mxu0
        %6722 = vmatprep.mubr.bf16.mxu0 0
        %6723 = vmatmul.mubr.bf16.gmra.mrb[0].mxu0 %v6525
        %v6724 = vpop.f32.mrb[0].mxu0
        %v6725 = vadd.f32 %v6576, %v6724
        %v6726 = vpop.f32.mrb[0].mxu0
        %v6727 = vpop.f32.mrb[0].mxu0
        %v6728 = vadd.f32 %v6576, %v6727
        %v6729 = vpop.f32.mrb[0].mxu0
        %6730 = vmatprep.mubr.bf16.mxu0 0
        %6731 = vmatmul.mubr.bf16.gmra.mrb[0].mxu0 %v6529
        %v6732 = vpop.f32.mrb[0].mxu0
        %v6733 = vadd.f32 %v6576, %v6732
        %v6734 = vpop.f32.mrb[0].mxu0
        %v6735 = vpop.f32.mrb[0].mxu0
        %v6736 = vadd.f32 %v6576, %v6735
        %v6737 = vpop.f32.mrb[0].mxu0
        %6738 = vmatprep.mubr.bf16.mxu0 0
        %6739 = vmatmul.mubr.bf16.gmra.mrb[0].mxu0 %v6533
        %v6740 = vpop.f32.mrb[0].mxu0
        %v6741 = vadd.f32 %v6576, %v6740
        %v6742 = vpop.f32.mrb[0].mxu0
        %v6743 = vpop.f32.mrb[0].mxu0
        %v6744 = vadd.f32 %v6576, %v6743
        %v6745 = vpop.f32.mrb[0].mxu0
        %6746 = vmatprep.mubr.bf16.mxu0 0
        %6747 = vmatmul.mubr.bf16.gmra.mrb[0].mxu0 %v6537
        %v6748 = vpop.f32.mrb[0].mxu0
        %v6749 = vadd.f32 %v6576, %v6748
        %v6750 = vpop.f32.mrb[0].mxu0
        %v6751 = vpop.f32.mrb[0].mxu0
        %v6752 = vadd.f32 %v6576, %v6751
        %v6753 = vpop.f32.mrb[0].mxu0
        %6754 = vmatprep.mubr.bf16.mxu0 0
        %6755 = vmatmul.mubr.bf16.gmra.mrb[0].mxu0 %v6541
        %v6756 = vpop.f32.mrb[0].mxu0
        %v6757 = vadd.f32 %v6576, %v6756
        %v6758 = vpop.f32.mrb[0].mxu0
        %v6759 = vpop.f32.mrb[0].mxu0
        %v6760 = vadd.f32 %v6576, %v6759
        %v6761 = vpop.f32.mrb[0].mxu0
        %6762 = vmatprep.mubr.bf16.mxu0 0
        %6763 = vmatmul.mubr.bf16.gmra.mrb[0].mxu0 %v6545
        %v6764 = vpop.f32.mrb[0].mxu0
        %v6765 = vadd.f32 %v6576, %v6764
        %v6766 = vpop.f32.mrb[0].mxu0
        %v6767 = vpop.f32.mrb[0].mxu0
        %v6768 = vadd.f32 %v6576, %v6767
        %v6769 = vpop.f32.mrb[0].mxu0
        %6770 = vmatprep.mubr.bf16.mxu0 0
        %6771 = vmatmul.mubr.bf16.gmra.mrb[0].mxu0 %v6549
        %v6772 = vpop.f32.mrb[0].mxu0
        %v6773 = vadd.f32 %v6576, %v6772
        %v6774 = vpop.f32.mrb[0].mxu0
        %v6775 = vpop.f32.mrb[0].mxu0
        %v6776 = vadd.f32 %v6576, %v6775
        %v6777 = vpop.f32.mrb[0].mxu0
        %6778 = vmatprep.mubr.bf16.mxu0 0
        %6779 = vmatmul.mubr.bf16.gmra.mrb[0].mxu0 %v6553
        %v6780 = vpop.f32.mrb[0].mxu0
        %v6781 = vadd.f32 %v6576, %v6780
        %v6782 = vpop.f32.mrb[0].mxu0
        %v6783 = vpop.f32.mrb[0].mxu0
        %v6784 = vadd.f32 %v6576, %v6783
        %v6785 = vpop.f32.mrb[0].mxu0
        %6786 = vdwg.mxu0
        %v6787 = vsub.f32 0.0, %v6661
        %v6788 = vsub.f32 0.0, %v6664
        %v6789 = vsub.f32 0.0, %v6669
        %v6790 = vsub.f32 0.0, %v6672
        %v6791 = vsub.f32 0.0, %v6677
        %v6792 = vsub.f32 0.0, %v6680
        %v6793 = vsub.f32 0.0, %v6685
        %v6794 = vsub.f32 0.0, %v6688
        %v6795 = vsub.f32 0.0, %v6693
        %v6796 = vsub.f32 0.0, %v6696
        %v6797 = vsub.f32 0.0, %v6701
        %v6798 = vsub.f32 0.0, %v6704
        %v6799 = vsub.f32 0.0, %v6709
        %v6800 = vsub.f32 0.0, %v6712
        %v6801 = vsub.f32 0.0, %v6717
        %v6802 = vsub.f32 0.0, %v6720
        %v6803 = vsub.f32 0.0, %v6725
        %v6804 = vsub.f32 0.0, %v6728
        %v6805 = vsub.f32 0.0, %v6733
        %v6806 = vsub.f32 0.0, %v6736
        %v6807 = vsub.f32 0.0, %v6741
        %v6808 = vsub.f32 0.0, %v6744
        %v6809 = vsub.f32 0.0, %v6749
        %v6810 = vsub.f32 0.0, %v6752
        %v6811 = vsub.f32 0.0, %v6757
        %v6812 = vsub.f32 0.0, %v6760
        %v6813 = vsub.f32 0.0, %v6765
        %v6814 = vsub.f32 0.0, %v6768
        %v6815 = vsub.f32 0.0, %v6773
        %v6816 = vsub.f32 0.0, %v6776
        %v6817 = vsub.f32 0.0, %v6781
        %v6818 = vsub.f32 0.0, %v6784
        %v6819 = vmul.f32 %v6787, 1.442695
        %v6820 = vpow.pop %v6819
        %v6821 = vmul.f32 %v6788, 1.442695
        %v6822 = vpow.pop %v6821
        %v6823 = vmul.f32 %v6789, 1.442695
        %v6824 = vpow.pop %v6823
        %v6825 = vmul.f32 %v6790, 1.442695
        %v6826 = vpow.pop %v6825
        %v6827 = vmul.f32 %v6791, 1.442695
        %v6828 = vpow.pop %v6827
        %v6829 = vmul.f32 %v6792, 1.442695
        %v6830 = vpow.pop %v6829
        %v6831 = vmul.f32 %v6793, 1.442695
        %v6832 = vpow.pop %v6831
        %v6833 = vmul.f32 %v6794, 1.442695
        %v6834 = vpow.pop %v6833
        %v6835 = vmul.f32 %v6795, 1.442695
        %v6836 = vpow.pop %v6835
        %v6837 = vmul.f32 %v6796, 1.442695
        %v6838 = vpow.pop %v6837
        %v6839 = vmul.f32 %v6797, 1.442695
        %v6840 = vpow.pop %v6839
        %v6841 = vmul.f32 %v6798, 1.442695
        %v6842 = vpow.pop %v6841
        %v6843 = vmul.f32 %v6799, 1.442695
        %v6844 = vpow.pop %v6843
        %v6845 = vmul.f32 %v6800, 1.442695
        %v6846 = vpow.pop %v6845
        %v6847 = vmul.f32 %v6801, 1.442695
        %v6848 = vpow.pop %v6847
        %v6849 = vmul.f32 %v6802, 1.442695
        %v6850 = vpow.pop %v6849
        %v6851 = vmul.f32 %v6803, 1.442695
        %v6852 = vpow.pop %v6851
        %v6853 = vmul.f32 %v6804, 1.442695
        %v6854 = vpow.pop %v6853
        %v6855 = vmul.f32 %v6805, 1.442695
        %v6856 = vpow.pop %v6855
        %v6857 = vmul.f32 %v6806, 1.442695
        %v6858 = vpow.pop %v6857
        %v6859 = vmul.f32 %v6807, 1.442695
        %v6860 = vpow.pop %v6859
        %v6861 = vmul.f32 %v6808, 1.442695
        %v6862 = vpow.pop %v6861
        %v6863 = vmul.f32 %v6809, 1.442695
        %v6864 = vpow.pop %v6863
        %v6865 = vmul.f32 %v6810, 1.442695
        %v6866 = vpow.pop %v6865
        %v6867 = vmul.f32 %v6811, 1.442695
        %v6868 = vpow.pop %v6867
        %v6869 = vmul.f32 %v6812, 1.442695
        %v6870 = vpow.pop %v6869
        %v6871 = vmul.f32 %v6813, 1.442695
        %v6872 = vpow.pop %v6871
        %v6873 = vmul.f32 %v6814, 1.442695
        %v6874 = vpow.pop %v6873
        %v6875 = vmul.f32 %v6815, 1.442695
        %v6876 = vpow.pop %v6875
        %v6877 = vmul.f32 %v6816, 1.442695
        %v6878 = vpow.pop %v6877
        %v6879 = vmul.f32 %v6817, 1.442695
        %v6880 = vpow.pop %v6879
        %v6881 = vmul.f32 %v6818, 1.442695
        %v6882 = vpow.pop %v6881
        %v6883 = vadd.f32 %v6820, 1.0
        %v6884 = vadd.f32 %v6822, 1.0
        %v6885 = vadd.f32 %v6824, 1.0
        %v6886 = vadd.f32 %v6826, 1.0
        %v6887 = vadd.f32 %v6828, 1.0
        %v6888 = vadd.f32 %v6830, 1.0
        %v6889 = vadd.f32 %v6832, 1.0
        %v6890 = vadd.f32 %v6834, 1.0
        %v6891 = vadd.f32 %v6836, 1.0
        %v6892 = vadd.f32 %v6838, 1.0
        %v6893 = vadd.f32 %v6840, 1.0
        %v6894 = vadd.f32 %v6842, 1.0
        %v6895 = vadd.f32 %v6844, 1.0
        %v6896 = vadd.f32 %v6846, 1.0
        %v6897 = vadd.f32 %v6848, 1.0
        %v6898 = vadd.f32 %v6850, 1.0
        %v6899 = vadd.f32 %v6852, 1.0
        %v6900 = vadd.f32 %v6854, 1.0
        %v6901 = vadd.f32 %v6856, 1.0
        %v6902 = vadd.f32 %v6858, 1.0
        %v6903 = vadd.f32 %v6860, 1.0
        %v6904 = vadd.f32 %v6862, 1.0
        %v6905 = vadd.f32 %v6864, 1.0
        %v6906 = vadd.f32 %v6866, 1.0
        %v6907 = vadd.f32 %v6868, 1.0
        %v6908 = vadd.f32 %v6870, 1.0
        %v6909 = vadd.f32 %v6872, 1.0
        %v6910 = vadd.f32 %v6874, 1.0
        %v6911 = vadd.f32 %v6876, 1.0
        %v6912 = vadd.f32 %v6878, 1.0
        %v6913 = vadd.f32 %v6880, 1.0
        %v6914 = vadd.f32 %v6882, 1.0
        %v6915 = vrcp.pop %v6883
        %v6916 = vmul.f32 1.0, %v6915
        %v6917 = vrcp.pop %v6884
        %v6918 = vmul.f32 1.0, %v6917
        %v6919 = vrcp.pop %v6885
        %v6920 = vmul.f32 1.0, %v6919
        %v6921 = vrcp.pop %v6886
        %v6922 = vmul.f32 1.0, %v6921
        %v6923 = vrcp.pop %v6887
        %v6924 = vmul.f32 1.0, %v6923
        %v6925 = vrcp.pop %v6888
        %v6926 = vmul.f32 1.0, %v6925
        %v6927 = vrcp.pop %v6889
        %v6928 = vmul.f32 1.0, %v6927
        %v6929 = vrcp.pop %v6890
        %v6930 = vmul.f32 1.0, %v6929
        %v6931 = vrcp.pop %v6891
        %v6932 = vmul.f32 1.0, %v6931
        %v6933 = vrcp.pop %v6892
        %v6934 = vmul.f32 1.0, %v6933
        %v6935 = vrcp.pop %v6893
        %v6936 = vmul.f32 1.0, %v6935
        %v6937 = vrcp.pop %v6894
        %v6938 = vmul.f32 1.0, %v6937
        %v6939 = vrcp.pop %v6895
        %v6940 = vmul.f32 1.0, %v6939
        %v6941 = vrcp.pop %v6896
        %v6942 = vmul.f32 1.0, %v6941
        %v6943 = vrcp.pop %v6897
        %v6944 = vmul.f32 1.0, %v6943
        %v6945 = vrcp.pop %v6898
        %v6946 = vmul.f32 1.0, %v6945
        %v6947 = vrcp.pop %v6899
        %v6948 = vmul.f32 1.0, %v6947
        %v6949 = vrcp.pop %v6900
        %v6950 = vmul.f32 1.0, %v6949
        %v6951 = vrcp.pop %v6901
        %v6952 = vmul.f32 1.0, %v6951
        %v6953 = vrcp.pop %v6902
        %v6954 = vmul.f32 1.0, %v6953
        %v6955 = vrcp.pop %v6903
        %v6956 = vmul.f32 1.0, %v6955
        %v6957 = vrcp.pop %v6904
        %v6958 = vmul.f32 1.0, %v6957
        %v6959 = vrcp.pop %v6905
        %v6960 = vmul.f32 1.0, %v6959
        %v6961 = vrcp.pop %v6906
        %v6962 = vmul.f32 1.0, %v6961
        %v6963 = vrcp.pop %v6907
        %v6964 = vmul.f32 1.0, %v6963
        %v6965 = vrcp.pop %v6908
        %v6966 = vmul.f32 1.0, %v6965
        %v6967 = vrcp.pop %v6909
        %v6968 = vmul.f32 1.0, %v6967
        %v6969 = vrcp.pop %v6910
        %v6970 = vmul.f32 1.0, %v6969
        %v6971 = vrcp.pop %v6911
        %v6972 = vmul.f32 1.0, %v6971
        %v6973 = vrcp.pop %v6912
        %v6974 = vmul.f32 1.0, %v6973
        %v6975 = vrcp.pop %v6913
        %v6976 = vmul.f32 1.0, %v6975
        %v6977 = vrcp.pop %v6914
        %v6978 = vmul.f32 1.0, %v6977
        %v6979 = vmul.f32 %v6661, %v6916
        %v6980 = vmul.f32 %v6664, %v6918
        %v6981 = vmul.f32 %v6669, %v6920
        %v6982 = vmul.f32 %v6672, %v6922
        %v6983 = vmul.f32 %v6677, %v6924
        %v6984 = vmul.f32 %v6680, %v6926
        %v6985 = vmul.f32 %v6685, %v6928
        %v6986 = vmul.f32 %v6688, %v6930
        %v6987 = vmul.f32 %v6693, %v6932
        %v6988 = vmul.f32 %v6696, %v6934
        %v6989 = vmul.f32 %v6701, %v6936
        %v6990 = vmul.f32 %v6704, %v6938
        %v6991 = vmul.f32 %v6709, %v6940
        %v6992 = vmul.f32 %v6712, %v6942
        %v6993 = vmul.f32 %v6717, %v6944
        %v6994 = vmul.f32 %v6720, %v6946
        %v6995 = vmul.f32 %v6725, %v6948
        %v6996 = vmul.f32 %v6728, %v6950
        %v6997 = vmul.f32 %v6733, %v6952
        %v6998 = vmul.f32 %v6736, %v6954
        %v6999 = vmul.f32 %v6741, %v6956
        %v7000 = vmul.f32 %v6744, %v6958
        %v7001 = vmul.f32 %v6749, %v6960
        %v7002 = vmul.f32 %v6752, %v6962
        %v7003 = vmul.f32 %v6757, %v6964
        %v7004 = vmul.f32 %v6760, %v6966
        %v7005 = vmul.f32 %v6765, %v6968
        %v7006 = vmul.f32 %v6768, %v6970
        %v7007 = vmul.f32 %v6773, %v6972
        %v7008 = vmul.f32 %v6776, %v6974
        %v7009 = vmul.f32 %v6781, %v6976
        %v7010 = vmul.f32 %v6784, %v6978
        %7011 = vst [vmem:[%s595] sm:$0xff] %v6979
        %7012 = vst [vmem:[%s595 + $0x8] sm:$0xff] %v6980
        %7013 = vst [vmem:[%s595 + $0x10] sm:$0xff] %v6981
        %7014 = vst [vmem:[%s595 + $0x18] sm:$0xff] %v6982
        %7015 = vst [vmem:[%s595 + $0x20] sm:$0xff] %v6983
        %7016 = vst [vmem:[%s595 + $0x28] sm:$0xff] %v6984
        %7017 = vst [vmem:[%s595 + $0x30] sm:$0xff] %v6985
        %7018 = vst [vmem:[%s595 + $0x38] sm:$0xff] %v6986
        %7019 = vst [vmem:[%s595 + $0x40] sm:$0xff] %v6987
        %7020 = vst [vmem:[%s595 + $0x48] sm:$0xff] %v6988
        %7021 = vst [vmem:[%s595 + $0x50] sm:$0xff] %v6989
        %7022 = vst [vmem:[%s595 + $0x58] sm:$0xff] %v6990
        %7023 = vst [vmem:[%s595 + $0x60] sm:$0xff] %v6991
        %7024 = vst [vmem:[%s595 + $0x68] sm:$0xff] %v6992
        %7025 = vst [vmem:[%s595 + $0x70] sm:$0xff] %v6993
        %7026 = vst [vmem:[%s595 + $0x78] sm:$0xff] %v6994
        %7027 = vst [vmem:[%s595 + $0x80] sm:$0xff] %v6995
        %7028 = vst [vmem:[%s595 + $0x88] sm:$0xff] %v6996
        %7029 = vst [vmem:[%s595 + $0x90] sm:$0xff] %v6997
        %7030 = vst [vmem:[%s595 + $0x98] sm:$0xff] %v6998
        %7031 = vst [vmem:[%s595 + $0xa0] sm:$0xff] %v6999
        %7032 = vst [vmem:[%s595 + $0xa8] sm:$0xff] %v7000
        %7033 = vst [vmem:[%s595 + $0xb0] sm:$0xff] %v7001
        %7034 = vst [vmem:[%s595 + $0xb8] sm:$0xff] %v7002
        %7035 = vst [vmem:[%s595 + $0xc0] sm:$0xff] %v7003
        %7036 = vst [vmem:[%s595 + $0xc8] sm:$0xff] %v7004
        %7037 = vst [vmem:[%s595 + $0xd0] sm:$0xff] %v7005
        %7038 = vst [vmem:[%s595 + $0xd8] sm:$0xff] %v7006
        %7039 = vst [vmem:[%s595 + $0xe0] sm:$0xff] %v7007
        %7040 = vst [vmem:[%s595 + $0xe8] sm:$0xff] %v7008
        %7041 = vst [vmem:[%s595 + $0xf0] sm:$0xff] %v7009
        %7042 = vst [vmem:[%s595 + $0xf8] sm:$0xff] %v7010
        %s7043 = sand.u32 %s445, 1
        %s7044 = scalar_lea.sflag [#allocation3], %s7043
        %s7045 = sand.u32 %s445, 1
        %s7046 = smul.addr %s7045, 256
        %s7047 = scalar_lea.vmem [#allocation2], %s7046
        // Predicated region
        $region97: #{_lambda_.1} parent=95 // pred_check
          %p7048 = pneg %p455
        $region98: #{_lambda_.1} parent=95 // pred_check_branch
          %7050 = sbr.rel (%p7048) target = $region100
        $region99: #{_lambda_.1} parent=95 // pred_region
          %s7052 = ssub.s32 4096, 4096
          %7053 = vsyncadd %s7044, %s7052
          %s7054 = smul.addr %s33, 32
          %s7055 = smul.addr %s7054, 128
          %s7056 = scalar_lea.hbm %s19, %s7055
          %s7057 = sshll.u32 %s7047, 4
          %s7058 = int_to_ptr.vmem [resolvable:$true] %s7057
          %7063 = dma.vmem_to_hbm [thread:$0]  %s7058, 4096, %s7056, %s7044, 128, 128, 8
        $region100: #{_lambda_.1} parent=95 // pred_fallthru
          _
      $region96: #{_lambda_.1} parent=5 // pred_fallthru
        _
      %p7064 = scmp.le.s32.totalorder 2, %s28
      // Predicated region
      $region101: #{_lambda_.1} parent=5 // pred_check
        %p7065 = pneg %p7064
      $region102: #{_lambda_.1} parent=5 // pred_check_branch
        %7067 = sbr.rel (%p7065) target = $region104
      $region103: #{_lambda_.1} parent=5 // pred_region
        %s7068 = ssub.s32 %s28, 2
        // Predicated region
        $region105: #{_lambda_.1} parent=103 // pred_check
          %p7069 = pneg %p461
        $region106: #{_lambda_.1} parent=103 // pred_check_branch
          %7071 = sbr.rel (%p7069) target = $region108
        $region107: #{_lambda_.1} parent=103 // pred_region
          %s7072 = sand.u32 %s446, 1
          %s7073 = scalar_lea.sflag [#allocation3], %s7072
          %s7074 = sand.u32 %s446, 1
          %s7075 = smul.addr %s7074, 256
          %s7076 = scalar_lea.vmem [#allocation2], %s7075
          %7077 = dma.done %s7073, 4096
        $region108: #{_lambda_.1} parent=103 // pred_fallthru
          _
      $region104: #{_lambda_.1} parent=5 // pred_fallthru
        _
    $region6: #{_lambda_.1} parent=1 // loop_footer
      %s32 = sadd.s32 1, %s28
    $region7: #{_lambda_.1} parent=1 // loop_footer_branch
      %27 = sbr.rel target = $region3
    $region8: #{_lambda_.1} parent=1 // loop_exit
      _
    %7078 = vsyncpa [#allocation3], 1
    %s7079 = scalar_lea.sflag [#allocation3], 1
    %7080 = vsyncpa %s7079, 1

</llo_original>
